<compile_context>
chip_gen: v7x
topology: tpu7x:2x2x1
jax: 0.10.0
libtpu: 0.0.40
codegen_flags: <defaults>
</compile_context>

<pallas_src>
import math
import jax
import jax.numpy as jnp
from jax.experimental import pallas as pl
from jax.experimental.pallas import tpu as pltpu

EMB = 128          # embedding_dim
HEADS = 4          # num_heads
HEAD_DIM = EMB // HEADS
FFN = 512          # hidden_dim (dim_feedforward)
LAYERS = 4         # num_encoder_layers
LN_EPS = 1e-5
NEG_INF = -1e30    # finite sentinel (keep: -inf would create 0*inf NaN paths)
VMEM_LIMIT = 32 * 1024 * 1024   # explicit scoped-VMEM budget, safe on v5e/v6e/v7x


def _round_up(v, m):
    return (v + m - 1) // m * m


def _tile(total, target, quantum):
    """Largest multiple of `quantum` <= target that evenly divides `total`;
    falls back to the full dimension (always a legal block size)."""
    if total <= target:
        return total
    t = (target // quantum) * quantum
    while t >= quantum:
        if total % t == 0:
            return t
        t -= quantum
    return total


# ---------------------------------------------------------------------------
# Exact GELU.  Uses the Abramowitz & Stegun 7.1.26 erf polynomial
# (|err| < 1.5e-7, i.e. below f32 matmul noise) built from ops that are
# guaranteed to lower in Mosaic (exp / mul / add / select).
# ---------------------------------------------------------------------------
def _erf(x):
    a = jnp.abs(x)
    t = 1.0 / (1.0 + 0.3275911 * a)
    poly = ((((1.061405429 * t - 1.453152027) * t + 1.421413741) * t
             - 0.284496736) * t + 0.254829592) * t
    y = 1.0 - poly * jnp.exp(-a * a)
    return jnp.where(x >= 0, y, -y)


def _gelu_exact(x):
    return 0.5 * x * (1.0 + _erf(x * 0.7071067811865476))


# ---------------------------------------------------------------------------
# Kernel 1: masked pathway embedding    out[b] = (mask * x[b]) @ embedding
# Grid: (P_tiles, G_tiles); G is the reduction axis (last, "arbitrary"), the
# output block is resident across it and accumulated in f32.  The batch lives
# inside the block so each mask / embedding tile is DMA'd once, not B times.
# ---------------------------------------------------------------------------
def embed(x, mask, emb):
    B, _, G = x.shape
    P = mask.shape[0]
    # Defaults fit v5e's 16 MiB default scoped VMEM; v6e (128 MiB) tolerates
    # much larger Gt/Pt if desired.
    Gt = _tile(G, 4096, 128)
    Pt = _tile(P, 256, 16)          # bf16 sublane quantum = 16

    def kernel(x_ref, mask_ref, emb_ref, o_ref):
        # x_ref: (B,1,Gt) f32  mask_ref: (Pt,Gt) bf16  emb_ref: (Gt,EMB) bf16
        # o_ref: (B,Pt,EMB) f32, resident/accumulated across the g axis.
        @pl.when(pl.program_id(1) == 0)
        def _init():
            o_ref[...] = jnp.zeros_like(o_ref)

        m = mask_ref[...]                      # exact 0/1 in bf16
        e = emb_ref[...]
        for b in range(B):                     # unrolled; B is static & small
            xb = x_ref[b].astype(jnp.bfloat16)            # (1, Gt)
            masked = m * xb                                # (Pt, Gt) bf16
            # bf16 MXU matmul, f32 accumulation across the long G reduction.
            o_ref[b] += jnp.dot(masked, e, preferred_element_type=jnp.float32)

    return pl.pallas_call(
        kernel,
        out_shape=jax.ShapeDtypeStruct((B, P, EMB), jnp.float32),
        grid=(pl.cdiv(P, Pt), pl.cdiv(G, Gt)),
        in_specs=[
            pl.BlockSpec((B, 1, Gt), lambda p, g: (0, 0, g)),
            pl.BlockSpec((Pt, Gt), lambda p, g: (p, g)),
            pl.BlockSpec((Gt, EMB), lambda p, g: (g, 0)),
        ],
        out_specs=pl.BlockSpec((B, Pt, EMB), lambda p, g: (0, p, 0)),
        compiler_params=pltpu.CompilerParams(
            dimension_semantics=("parallel", "arbitrary"),
            vmem_limit_bytes=VMEM_LIMIT),
    )(x, mask, emb)


# ---------------------------------------------------------------------------
# Kernel 2: fused 4-layer post-LN transformer encoder.
# Grid: (batch_tiles,).  All 4 layers run inside one grid step (unrolled);
# per-layer weights (stacked on a leading LAYERS axis, bf16) stay resident in
# VMEM.  QKV / out-proj / FFN matmuls run on flattened (Bt*S_pad, E) rows;
# attention itself is per-sample via batched einsum.  Outputs: CLS rows only
# plus the head-averaged last-layer attention of each tile's first sample.
# ---------------------------------------------------------------------------
_LAYER_KEYS = ("wqkv", "bqkv", "wo", "bo", "ln1g", "ln1b",
               "w1", "b1", "w2", "b2", "ln2g", "ln2b")


def _batch_tile(B, S_pad, target_rows=512):
    """Batch elements folded per grid step (rows = Bt*S_pad fill the MXU M dim).
    Keeps >= 2 tiles when B >= 2 so both v7x TensorCores get work; always
    returns a divisor of B (worst case 1), never an uncontrolled full fold."""
    bt = max(1, min(B, target_rows // max(S_pad, 1)))
    if B >= 2:
        bt = min(bt, max(1, B // 2))
    while B % bt:
        bt -= 1
    return bt


def fused_encoder(h_pad, S, layers):
    """h_pad: (B, S_pad, EMB) f32 with rows >= S zero-padded.
    Returns (cls (B, EMB) f32, attn of global sample 0 (S_pad, S_pad) f32)."""
    B, S_pad, _ = h_pad.shape
    Bt = _batch_tile(B, S_pad)
    n_bt = B // Bt
    N = Bt * S_pad
    scale = 1.0 / math.sqrt(HEAD_DIM)

    def kernel(x_ref, wqkv_ref, bqkv_ref, wo_ref, bo_ref,
               ln1g_ref, ln1b_ref, w1_ref, b1_ref,
               w2_ref, b2_ref, ln2g_ref, ln2b_ref,
               cls_ref, attn_ref):
        # Additive key mask for padded sequence positions, built in-kernel
        # (no (N, N) bias input): shape (1, S_pad), broadcasts over keys.
        col = jax.lax.broadcasted_iota(jnp.int32, (1, S_pad), 1)
        key_bias = jnp.where(col < S, 0.0, NEG_INF).astype(jnp.float32)

        def layer_norm(y, g, b):
            mu = jnp.mean(y, axis=-1, keepdims=True)
            var = jnp.mean((y - mu) ** 2, axis=-1, keepdims=True)
            return (y - mu) * jax.lax.rsqrt(var + LN_EPS) * g + b

        h = x_ref[...].reshape(N, EMB)            # f32 rows, batch folded in M
        attn_sum = jnp.zeros((S_pad, S_pad), jnp.float32)

        for l in range(LAYERS):                   # unrolled, weights resident
            # ---- self-attention -------------------------------------------
            qkv = jnp.dot(h.astype(jnp.bfloat16), wqkv_ref[l],
                          preferred_element_type=jnp.float32) + bqkv_ref[l]
            qkv3 = qkv.reshape(Bt, S_pad, 3 * EMB)
            wo_l = wo_ref[l]                      # (EMB, EMB) bf16, in VMEM

            attn_out = jnp.zeros((N, EMB), jnp.float32)
            for hd in range(HEADS):
                lo = hd * HEAD_DIM
                qh = (qkv3[:, :, lo:lo + HEAD_DIM] * scale).astype(jnp.bfloat16)
                kh = qkv3[:, :, EMB + lo:EMB + lo + HEAD_DIM].astype(jnp.bfloat16)
                vh = qkv3[:, :, 2 * EMB + lo:2 * EMB + lo + HEAD_DIM].astype(
                    jnp.bfloat16)
                # per-sample scores: (Bt, S_pad, S_pad)
                s = jnp.einsum('bqd,bkd->bqk', qh, kh,
                               preferred_element_type=jnp.float32) + key_bias
                s = s - jnp.max(s, axis=-1, keepdims=True)
                e = jnp.exp(s)
                inv = 1.0 / jnp.sum(e, axis=-1, keepdims=True)  # 1 recip / row
                p = e * inv                                     # f32 softmax
                if l == LAYERS - 1:
                    # head-averaged attention, only last layer, only the
                    # tile-local sample 0 (what the caller consumes).
                    attn_sum = attn_sum + p[0]
                ctx = jnp.einsum('bqk,bkd->bqd', p.astype(jnp.bfloat16), vh,
                                 preferred_element_type=jnp.float32)
                # accumulate straight into the output projection (no concat)
                attn_out = attn_out + jnp.dot(
                    ctx.reshape(N, HEAD_DIM).astype(jnp.bfloat16),
                    wo_l[lo:lo + HEAD_DIM, :],
                    preferred_element_type=jnp.float32)
            attn_out = attn_out + bo_ref[l]

            # ---- post-LN residual blocks (norm_first=False) ----------------
            x1 = layer_norm(h + attn_out, ln1g_ref[l], ln1b_ref[l])
            h1 = jnp.dot(x1.astype(jnp.bfloat16), w1_ref[l],
                         preferred_element_type=jnp.float32) + b1_ref[l]
            h1 = _gelu_exact(h1)                                # exact F.gelu
            ffn = jnp.dot(h1.astype(jnp.bfloat16), w2_ref[l],
                          preferred_element_type=jnp.float32) + b2_ref[l]
            h = layer_norm(x1 + ffn, ln2g_ref[l], ln2b_ref[l])

        # Only the CLS rows leave the kernel.
        cls_ref[0] = h.reshape(Bt, S_pad, EMB)[:, 0, :]
        attn_ref[0] = attn_sum * (1.0 / HEADS)

    def _full_spec(arr):
        nd = arr.ndim
        return pl.BlockSpec(arr.shape, lambda b, _nd=nd: (0,) * _nd)

    weights = [layers[k] for k in _LAYER_KEYS]
    in_specs = ([pl.BlockSpec((Bt, S_pad, EMB), lambda b: (b, 0, 0))]
                + [_full_spec(w) for w in weights])
    out_specs = (pl.BlockSpec((1, Bt, EMB), lambda b: (b, 0, 0)),
                 pl.BlockSpec((1, S_pad, S_pad), lambda b: (b, 0, 0)))

    cls, attn = pl.pallas_call(
        kernel,
        out_shape=(jax.ShapeDtypeStruct((n_bt, Bt, EMB), jnp.float32),
                   jax.ShapeDtypeStruct((n_bt, S_pad, S_pad), jnp.float32)),
        grid=(n_bt,),
        in_specs=in_specs,
        out_specs=out_specs,
        compiler_params=pltpu.CompilerParams(
            dimension_semantics=("parallel",),
            vmem_limit_bytes=VMEM_LIMIT),
    )(h_pad, *weights)

    return cls.reshape(B, EMB), attn[0]


# ---------------------------------------------------------------------------
# Full forward
# ---------------------------------------------------------------------------
def deconformer_forward(x, params):
    # x: (B, 1, G)
    B = x.shape[0]
    emb_tok = embed(x, params["mask"], params["embedding_matrix"])   # (B,P,E)
    cls = jnp.broadcast_to(params["cls_token"], (B, 1, EMB)).astype(jnp.float32)
    h = jnp.concatenate([cls, emb_tok], axis=1)                      # (B,S,E)
    S = h.shape[1]
    S_pad = _round_up(S, 8)
    if S_pad != S:
        h = jnp.concatenate(
            [h, jnp.zeros((B, S_pad - S, EMB), jnp.float32)], axis=1)

    cls_out, attn = fused_encoder(h, S, params["layers"])

    # fraction head in plain XLA (tiny (B,128)x(128,C) matmul + softmax)
    logits = cls_out @ params["frac_w"] + params["frac_b"]
    probs = jax.nn.softmax(logits, axis=-1)

    # PyTorch returns (softmax_output, attention_scores[-1][0]):
    # last layer, batch sample 0, head-averaged attention, shape (S, S).
    attn0 = attn[:S, :S]
    return probs, attn0


# ---------------------------------------------------------------------------
# Deterministic parameter construction (synthetic init, not a checkpoint).
# Per-layer weights are stacked along a leading LAYERS axis, stored bf16 and
# pre-transposed to (in, out) so kernels compute x @ W + b.
# NOTE: loading a real PyTorch in_proj_weight requires an explicit
# transpose/split into this layout.
# ---------------------------------------------------------------------------
def make_params(key, num_genes, num_pathways, num_cell_types):
    keys = iter(jax.random.split(key, 16))

    def nk():
        return next(keys)

    params = {
        # 0/1 mask and embedding matrix stored bf16 (halves HBM/DMA footprint;
        # mask is exact, accumulation stays f32)
        "mask": jax.random.bernoulli(nk(), 0.5, (num_pathways, num_genes)
                                     ).astype(jnp.bfloat16),
        "embedding_matrix": jax.random.uniform(
            nk(), (num_genes, EMB), dtype=jnp.float32).astype(jnp.bfloat16),
        "cls_token": jax.random.normal(nk(), (1, 1, EMB), dtype=jnp.float32),
        "frac_w": 0.05 * jax.random.normal(nk(), (EMB, num_cell_types),
                                           dtype=jnp.float32),
        "frac_b": jnp.zeros((num_cell_types,), jnp.float32),
    }

    def stacked(shape, scale=0.05):
        return (scale * jax.random.normal(nk(), (LAYERS,) + shape,
                                          jnp.float32)).astype(jnp.bfloat16)

    params["layers"] = {
        "wqkv": stacked((EMB, 3 * EMB)),
        "bqkv": jnp.zeros((LAYERS, 1, 3 * EMB), jnp.float32),
        "wo":   stacked((EMB, EMB)),
        "bo":   jnp.zeros((LAYERS, 1, EMB), jnp.float32),
        "ln1g": jnp.ones((LAYERS, 1, EMB), jnp.float32),
        "ln1b": jnp.zeros((LAYERS, 1, EMB), jnp.float32),
        "w1":   stacked((EMB, FFN)),
        "b1":   jnp.zeros((LAYERS, 1, FFN), jnp.float32),
        "w2":   stacked((FFN, EMB)),
        "b2":   jnp.zeros((LAYERS, 1, EMB), jnp.float32),
        "ln2g": jnp.ones((LAYERS, 1, EMB), jnp.float32),
        "ln2b": jnp.zeros((LAYERS, 1, EMB), jnp.float32),
    }
    return params


if __name__ == "__main__":
    B = 2                 # batch
    G = 32                # num genes (mask.shape[1])
    P = 8                 # num pathways (mask.shape[0]) -> seq len S = P + 1 = 9
    C = 4                 # num cell types

    root = jax.random.PRNGKey(0)
    k_params, k_x = jax.random.split(root)
    params = make_params(k_params, num_genes=G, num_pathways=P, num_cell_types=C)
    x = jax.random.uniform(k_x, (B, 1, G), dtype=jnp.float32)

    fwd = jax.jit(deconformer_forward)
    probs, attn0 = fwd(x, params)
    probs = jax.block_until_ready(probs)
    attn0 = jax.block_until_ready(attn0)

    assert probs.shape == (B, C)
    assert attn0.shape == (P + 1, P + 1)
    # softmax rows must sum to 1
    assert bool(jnp.all(jnp.abs(jnp.sum(probs, axis=1) - 1.0) < 1e-4))
    assert bool(jnp.all(jnp.abs(jnp.sum(attn0, axis=-1) - 1.0) < 1e-4))
    print("KERNEL_OK")
</pallas_src>

<mosaic_0001>
module attributes {stable_mosaic.version = 11 : i64} {
  func.func @kernel(%arg0: i32, %arg1: i32, %arg2: memref<2x1x32xf32, #tpu.memory_space<vmem>>, %arg3: memref<8x32xbf16, #tpu.memory_space<vmem>>, %arg4: memref<32x128xbf16, #tpu.memory_space<vmem>>, %arg5: memref<2x8x128xf32, #tpu.memory_space<vmem>>) attributes {dimension_semantics = [#tpu.dimension_semantics<parallel>, #tpu.dimension_semantics<arbitrary>], iteration_bounds = array<i64: 1, 1>, scalar_prefetch = 0 : i64, scratch_operands = 0 : i64, tpu.core_type = #tpu.core_type<tc>, window_params = [{transform_indices = @transform_0, window_bounds = array<i64: 2, 1, 32>}, {transform_indices = @transform_1, window_bounds = array<i64: 8, 32>}, {transform_indices = @transform_2, window_bounds = array<i64: 32, 128>}, {transform_indices = @transform_3, window_bounds = array<i64: 2, 8, 128>}]} {
    %c0_i32 = arith.constant 0 : i32
    %0 = arith.cmpi eq, %arg1, %c0_i32 : i32
    %1 = arith.extui %0 : i1 to i32
    %c0_i32_0 = arith.constant 0 : i32
    %2 = arith.cmpi ne, %1, %c0_i32_0 : i32
    scf.if %2 {
      %cst_22 = arith.constant 0.000000e+00 : f32
      %29 = vector.broadcast %cst_22 : f32 to vector<2x8x128xf32>
      %c0_23 = arith.constant 0 : index
      %c0_24 = arith.constant 0 : index
      %c0_25 = arith.constant 0 : index
      %30 = vector.load %arg5[%c0_23, %c0_24, %c0_25] : memref<2x8x128xf32, #tpu.memory_space<vmem>>, vector<2x8x128xf32>
      tpu.vector_store %arg5[%c0_23, %c0_24, %c0_25], %29 {strides = array<i32>} : memref<2x8x128xf32, #tpu.memory_space<vmem>>, vector<2x8x128xf32>,
    } else {
    }
    %c0 = arith.constant 0 : index
    %c0_1 = arith.constant 0 : index
    %3 = vector.load %arg3[%c0, %c0_1] : memref<8x32xbf16, #tpu.memory_space<vmem>>, vector<8x32xbf16>
    %c0_2 = arith.constant 0 : index
    %c0_3 = arith.constant 0 : index
    %4 = vector.load %arg4[%c0_2, %c0_3] : memref<32x128xbf16, #tpu.memory_space<vmem>>, vector<32x128xbf16>
    %c0_4 = arith.constant 0 : index
    %c0_5 = arith.constant 0 : index
    %c0_6 = arith.constant 0 : index
    %5 = vector.load %arg2[%c0_4, %c0_5, %c0_6] : memref<2x1x32xf32, #tpu.memory_space<vmem>>, vector<1x1x32xf32>
    %6 = vector.shape_cast %5 : vector<1x1x32xf32> to vector<1x32xf32>
    %7 = arith.truncf %6 : vector<1x32xf32> to vector<1x32xbf16>
    %8 = vector.broadcast %7 : vector<1x32xbf16> to vector<8x32xbf16>
    %9 = arith.mulf %3, %8 : vector<8x32xbf16>
    %c0_7 = arith.constant 0 : index
    %c0_8 = arith.constant 0 : index
    %c0_9 = arith.constant 0 : index
    %10 = vector.load %arg5[%c0_7, %c0_8, %c0_9] : memref<2x8x128xf32, #tpu.memory_space<vmem>>, vector<1x8x128xf32>
    %11 = vector.shape_cast %10 : vector<1x8x128xf32> to vector<8x128xf32>
    %cst = arith.constant dense<0.000000e+00> : vector<8x128xf32>
    %12 = tpu.matmul %9, %4, %cst {dimension_numbers = #tpu.dot_dimension_numbers<[1], [0], [0], [1], [0, 0, 1, 1], [], []>} : vector<8x32xbf16>, vector<32x128xbf16>, vector<8x128xf32> -> vector<8x128xf32>
    %13 = arith.addf %11, %12 : vector<8x128xf32>
    %c0_10 = arith.constant 0 : index
    %c0_11 = arith.constant 0 : index
    %c0_12 = arith.constant 0 : index
    %14 = vector.load %arg5[%c0_10, %c0_11, %c0_12] : memref<2x8x128xf32, #tpu.memory_space<vmem>>, vector<1x8x128xf32>
    %15 = vector.shape_cast %14 : vector<1x8x128xf32> to vector<8x128xf32>
    %16 = vector.shape_cast %13 : vector<8x128xf32> to vector<1x8x128xf32>
    tpu.vector_store %arg5[%c0_10, %c0_11, %c0_12], %16 {strides = array<i32>} : memref<2x8x128xf32, #tpu.memory_space<vmem>>, vector<1x8x128xf32>,
    %c1 = arith.constant 1 : index
    %c0_13 = arith.constant 0 : index
    %c0_14 = arith.constant 0 : index
    %17 = vector.load %arg2[%c1, %c0_13, %c0_14] : memref<2x1x32xf32, #tpu.memory_space<vmem>>, vector<1x1x32xf32>
    %18 = vector.shape_cast %17 : vector<1x1x32xf32> to vector<1x32xf32>
    %19 = arith.truncf %18 : vector<1x32xf32> to vector<1x32xbf16>
    %20 = vector.broadcast %19 : vector<1x32xbf16> to vector<8x32xbf16>
    %21 = arith.mulf %3, %20 : vector<8x32xbf16>
    %c1_15 = arith.constant 1 : index
    %c0_16 = arith.constant 0 : index
    %c0_17 = arith.constant 0 : index
    %22 = vector.load %arg5[%c1_15, %c0_16, %c0_17] : memref<2x8x128xf32, #tpu.memory_space<vmem>>, vector<1x8x128xf32>
    %23 = vector.shape_cast %22 : vector<1x8x128xf32> to vector<8x128xf32>
    %cst_18 = arith.constant dense<0.000000e+00> : vector<8x128xf32>
    %24 = tpu.matmul %21, %4, %cst_18 {dimension_numbers = #tpu.dot_dimension_numbers<[1], [0], [0], [1], [0, 0, 1, 1], [], []>} : vector<8x32xbf16>, vector<32x128xbf16>, vector<8x128xf32> -> vector<8x128xf32>
    %25 = arith.addf %23, %24 : vector<8x128xf32>
    %c1_19 = arith.constant 1 : index
    %c0_20 = arith.constant 0 : index
    %c0_21 = arith.constant 0 : index
    %26 = vector.load %arg5[%c1_19, %c0_20, %c0_21] : memref<2x8x128xf32, #tpu.memory_space<vmem>>, vector<1x8x128xf32>
    %27 = vector.shape_cast %26 : vector<1x8x128xf32> to vector<8x128xf32>
    %28 = vector.shape_cast %25 : vector<8x128xf32> to vector<1x8x128xf32>
    tpu.vector_store %arg5[%c1_19, %c0_20, %c0_21], %28 {strides = array<i32>} : memref<2x8x128xf32, #tpu.memory_space<vmem>>, vector<1x8x128xf32>,
    return
  }
  func.func @transform_0(%arg0: i32, %arg1: i32) -> (i32, i32, i32) {
    %c0_i32 = arith.constant 0 : i32
    %c0_i32_0 = arith.constant 0 : i32
    %c0_i32_1 = arith.constant 0 : i32
    return %c0_i32, %c0_i32_0, %arg1 : i32, i32, i32
  }
  func.func @transform_1(%arg0: i32, %arg1: i32) -> (i32, i32) {
    %c0_i32 = arith.constant 0 : i32
    return %arg0, %arg1 : i32, i32
  }
  func.func @transform_2(%arg0: i32, %arg1: i32) -> (i32, i32) {
    %c0_i32 = arith.constant 0 : i32
    %c0_i32_0 = arith.constant 0 : i32
    return %arg1, %c0_i32 : i32, i32
  }
  func.func @transform_3(%arg0: i32, %arg1: i32) -> (i32, i32, i32) {
    %c0_i32 = arith.constant 0 : i32
    %c0_i32_0 = arith.constant 0 : i32
    %c0_i32_1 = arith.constant 0 : i32
    return %c0_i32, %arg0, %c0_i32_0 : i32, i32, i32
  }
}

module attributes {stable_mosaic.version = 11 : i64} {
  func.func @kernel(%arg0: i32, %arg1: memref<1x16x128xf32, #tpu.memory_space<vmem>>, %arg2: memref<4x128x384xbf16, #tpu.memory_space<vmem>>, %arg3: memref<4x1x384xf32, #tpu.memory_space<vmem>>, %arg4: memref<4x128x128xbf16, #tpu.memory_space<vmem>>, %arg5: memref<4x1x128xf32, #tpu.memory_space<vmem>>, %arg6: memref<4x1x128xf32, #tpu.memory_space<vmem>>, %arg7: memref<4x1x128xf32, #tpu.memory_space<vmem>>, %arg8: memref<4x128x512xbf16, #tpu.memory_space<vmem>>, %arg9: memref<4x1x512xf32, #tpu.memory_space<vmem>>, %arg10: memref<4x512x128xbf16, #tpu.memory_space<vmem>>, %arg11: memref<4x1x128xf32, #tpu.memory_space<vmem>>, %arg12: memref<4x1x128xf32, #tpu.memory_space<vmem>>, %arg13: memref<4x1x128xf32, #tpu.memory_space<vmem>>, %arg14: memref<1x1x128xf32, #tpu.memory_space<vmem>>, %arg15: memref<1x16x16xf32, #tpu.memory_space<vmem>>) attributes {dimension_semantics = [#tpu.dimension_semantics<parallel>], iteration_bounds = array<i64: 2>, scalar_prefetch = 0 : i64, scratch_operands = 0 : i64, tpu.core_type = #tpu.core_type<tc>, window_params = [{transform_indices = @transform_0, window_bounds = array<i64: 1, 16, 128>}, {pipeline_mode = #tpu.pipeline_mode<synchronous>, transform_indices = @transform_1, window_bounds = array<i64: 4, 128, 384>}, {pipeline_mode = #tpu.pipeline_mode<synchronous>, transform_indices = @transform_2, window_bounds = array<i64: 4, 1, 384>}, {pipeline_mode = #tpu.pipeline_mode<synchronous>, transform_indices = @transform_3, window_bounds = array<i64: 4, 128, 128>}, {pipeline_mode = #tpu.pipeline_mode<synchronous>, transform_indices = @transform_4, window_bounds = array<i64: 4, 1, 128>}, {pipeline_mode = #tpu.pipeline_mode<synchronous>, transform_indices = @transform_5, window_bounds = array<i64: 4, 1, 128>}, {pipeline_mode = #tpu.pipeline_mode<synchronous>, transform_indices = @transform_6, window_bounds = array<i64: 4, 1, 128>}, {pipeline_mode = #tpu.pipeline_mode<synchronous>, transform_indices = @transform_7, window_bounds = array<i64: 4, 128, 512>}, {pipeline_mode = #tpu.pipeline_mode<synchronous>, transform_indices = @transform_8, window_bounds = array<i64: 4, 1, 512>}, {pipeline_mode = #tpu.pipeline_mode<synchronous>, transform_indices = @transform_9, window_bounds = array<i64: 4, 512, 128>}, {pipeline_mode = #tpu.pipeline_mode<synchronous>, transform_indices = @transform_10, window_bounds = array<i64: 4, 1, 128>}, {pipeline_mode = #tpu.pipeline_mode<synchronous>, transform_indices = @transform_11, window_bounds = array<i64: 4, 1, 128>}, {pipeline_mode = #tpu.pipeline_mode<synchronous>, transform_indices = @transform_12, window_bounds = array<i64: 4, 1, 128>}, {transform_indices = @transform_13, window_bounds = array<i64: 1, 1, 128>}, {transform_indices = @transform_14, window_bounds = array<i64: 1, 16, 16>}]} {
    %0 = tpu.iota {dimensions = array<i32: 1>} : vector<1x16xi32>
    %c9_i32 = arith.constant 9 : i32
    %1 = vector.broadcast %c9_i32 : i32 to vector<1x16xi32>
    %2 = arith.cmpi slt, %0, %1 : vector<1x16xi32>
    %cst = arith.constant 0.000000e+00 : f32
    %cst_0 = arith.constant -1.000000e+30 : f32
    %3 = vector.broadcast %cst : f32 to vector<1x16xf32>
    %4 = vector.broadcast %cst_0 : f32 to vector<1x16xf32>
    %5 = arith.select %2, %3, %4 : vector<1x16xi1>, vector<1x16xf32>
    %c0 = arith.constant 0 : index
    %c0_1 = arith.constant 0 : index
    %c0_2 = arith.constant 0 : index
    %6 = vector.load %arg1[%c0, %c0_1, %c0_2] : memref<1x16x128xf32, #tpu.memory_space<vmem>>, vector<1x16x128xf32>
    %7 = vector.shape_cast %6 : vector<1x16x128xf32> to vector<16x128xf32>
    %cst_3 = arith.constant 0.000000e+00 : f32
    %8 = vector.broadcast %cst_3 : f32 to vector<16x16xf32>
    %9 = arith.truncf %7 : vector<16x128xf32> to vector<16x128xbf16>
    %c0_4 = arith.constant 0 : index
    %c0_5 = arith.constant 0 : index
    %c0_6 = arith.constant 0 : index
    %10 = vector.load %arg2[%c0_4, %c0_5, %c0_6] : memref<4x128x384xbf16, #tpu.memory_space<vmem>>, vector<1x128x384xbf16>
    %11 = vector.shape_cast %10 : vector<1x128x384xbf16> to vector<128x384xbf16>
    %cst_7 = arith.constant dense<0.000000e+00> : vector<16x384xf32>
    %12 = tpu.matmul %9, %11, %cst_7 {dimension_numbers = #tpu.dot_dimension_numbers<[1], [0], [0], [1], [0, 0, 1, 1], [], []>} : vector<16x128xbf16>, vector<128x384xbf16>, vector<16x384xf32> -> vector<16x384xf32>
    %c0_8 = arith.constant 0 : index
    %c0_9 = arith.constant 0 : index
    %c0_10 = arith.constant 0 : index
    %13 = vector.load %arg3[%c0_8, %c0_9, %c0_10] : memref<4x1x384xf32, #tpu.memory_space<vmem>>, vector<1x1x384xf32>
    %14 = vector.shape_cast %13 : vector<1x1x384xf32> to vector<1x384xf32>
    %15 = vector.broadcast %14 : vector<1x384xf32> to vector<16x384xf32>
    %16 = arith.addf %12, %15 : vector<16x384xf32>
    %17 = vector.shape_cast %16 : vector<16x384xf32> to vector<1x16x384xf32>
    %c0_11 = arith.constant 0 : index
    %c0_12 = arith.constant 0 : index
    %c0_13 = arith.constant 0 : index
    %18 = vector.load %arg4[%c0_11, %c0_12, %c0_13] : memref<4x128x128xbf16, #tpu.memory_space<vmem>>, vector<1x128x128xbf16>
    %19 = vector.shape_cast %18 : vector<1x128x128xbf16> to vector<128x128xbf16>
    %cst_14 = arith.constant 0.000000e+00 : f32
    %20 = vector.broadcast %cst_14 : f32 to vector<16x128xf32>
    %21 = vector.extract_strided_slice %17 {offsets = [0, 0, 0], sizes = [1, 16, 32], strides = [1, 1, 1]} : vector<1x16x384xf32> to vector<1x16x32xf32>
    %cst_15 = arith.constant 0.176776692 : f32
    %22 = vector.broadcast %cst_15 : f32 to vector<1x16x32xf32>
    %23 = arith.mulf %21, %22 : vector<1x16x32xf32>
    %24 = arith.truncf %23 : vector<1x16x32xf32> to vector<1x16x32xbf16>
    %25 = vector.extract_strided_slice %17 {offsets = [0, 0, 128], sizes = [1, 16, 32], strides = [1, 1, 1]} : vector<1x16x384xf32> to vector<1x16x32xf32>
    %26 = arith.truncf %25 : vector<1x16x32xf32> to vector<1x16x32xbf16>
    %27 = vector.extract_strided_slice %17 {offsets = [0, 0, 256], sizes = [1, 16, 32], strides = [1, 1, 1]} : vector<1x16x384xf32> to vector<1x16x32xf32>
    %28 = arith.truncf %27 : vector<1x16x32xf32> to vector<1x16x32xbf16>
    "tpu.trace_start"() <{level = 10 : i32, message = "bqd,bkd->bqk"}> : () -> ()
    %cst_16 = arith.constant dense<0.000000e+00> : vector<1x16x16xf32>
    %29 = tpu.matmul %24, %26, %cst_16 {dimension_numbers = #tpu.dot_dimension_numbers<[2], [2], [1], [1], [0, 0, 0, 1, 1, 1], [0], [0]>} : vector<1x16x32xbf16>, vector<1x16x32xbf16>, vector<1x16x16xf32> -> vector<1x16x16xf32>
    "tpu.trace_stop"() : () -> ()
    %30 = vector.shape_cast %5 : vector<1x16xf32> to vector<1x1x16xf32>
    %31 = vector.broadcast %30 : vector<1x1x16xf32> to vector<1x16x16xf32>
    %32 = arith.addf %29, %31 : vector<1x16x16xf32>
    %cst_17 = arith.constant dense<0xFF800000> : vector<1x16xf32>
    %33 = vector.multi_reduction <maximumf>, %32, %cst_17 [2] : vector<1x16x16xf32> to vector<1x16xf32>
    %34 = vector.shape_cast %33 : vector<1x16xf32> to vector<1x16x1xf32>
    %35 = vector.broadcast %34 : vector<1x16x1xf32> to vector<1x16x16xf32>
    %36 = arith.subf %32, %35 : vector<1x16x16xf32>
    %37 = math.exp %36 : vector<1x16x16xf32>
    %cst_18 = arith.constant dense<0.000000e+00> : vector<1x16xf32>
    %38 = vector.multi_reduction <add>, %37, %cst_18 [2] : vector<1x16x16xf32> to vector<1x16xf32>
    %39 = vector.shape_cast %38 : vector<1x16xf32> to vector<1x16x1xf32>
    %cst_19 = arith.constant 1.000000e+00 : f32
    %40 = vector.broadcast %cst_19 : f32 to vector<1x16x1xf32>
    %41 = arith.divf %40, %39 : vector<1x16x1xf32>
    %42 = vector.broadcast %41 : vector<1x16x1xf32> to vector<1x16x16xf32>
    %43 = arith.mulf %37, %42 : vector<1x16x16xf32>
    %44 = arith.truncf %43 : vector<1x16x16xf32> to vector<1x16x16xbf16>
    "tpu.trace_start"() <{level = 10 : i32, message = "bqk,bkd->bqd"}> : () -> ()
    %cst_20 = arith.constant dense<0.000000e+00> : vector<1x16x32xf32>
    %45 = tpu.matmul %44, %28, %cst_20 {dimension_numbers = #tpu.dot_dimension_numbers<[2], [1], [1], [2], [0, 0, 0, 1, 1, 2], [0], [0]>} : vector<1x16x16xbf16>, vector<1x16x32xbf16>, vector<1x16x32xf32> -> vector<1x16x32xf32>
    "tpu.trace_stop"() : () -> ()
    %46 = vector.shape_cast %45 : vector<1x16x32xf32> to vector<16x32xf32>
    %47 = arith.truncf %46 : vector<16x32xf32> to vector<16x32xbf16>
    %48 = vector.extract_strided_slice %19 {offsets = [0, 0], sizes = [32, 128], strides = [1, 1]} : vector<128x128xbf16> to vector<32x128xbf16>
    %cst_21 = arith.constant dense<0.000000e+00> : vector<16x128xf32>
    %49 = tpu.matmul %47, %48, %cst_21 {dimension_numbers = #tpu.dot_dimension_numbers<[1], [0], [0], [1], [0, 0, 1, 1], [], []>} : vector<16x32xbf16>, vector<32x128xbf16>, vector<16x128xf32> -> vector<16x128xf32>
    %50 = arith.addf %20, %49 : vector<16x128xf32>
    %51 = vector.extract_strided_slice %17 {offsets = [0, 0, 32], sizes = [1, 16, 32], strides = [1, 1, 1]} : vector<1x16x384xf32> to vector<1x16x32xf32>
    %cst_22 = arith.constant 0.176776692 : f32
    %52 = vector.broadcast %cst_22 : f32 to vector<1x16x32xf32>
    %53 = arith.mulf %51, %52 : vector<1x16x32xf32>
    %54 = arith.truncf %53 : vector<1x16x32xf32> to vector<1x16x32xbf16>
    %55 = vector.extract_strided_slice %17 {offsets = [0, 0, 160], sizes = [1, 16, 32], strides = [1, 1, 1]} : vector<1x16x384xf32> to vector<1x16x32xf32>
    %56 = arith.truncf %55 : vector<1x16x32xf32> to vector<1x16x32xbf16>
    %57 = vector.extract_strided_slice %17 {offsets = [0, 0, 288], sizes = [1, 16, 32], strides = [1, 1, 1]} : vector<1x16x384xf32> to vector<1x16x32xf32>
    %58 = arith.truncf %57 : vector<1x16x32xf32> to vector<1x16x32xbf16>
    "tpu.trace_start"() <{level = 10 : i32, message = "bqd,bkd->bqk"}> : () -> ()
    %cst_23 = arith.constant dense<0.000000e+00> : vector<1x16x16xf32>
    %59 = tpu.matmul %54, %56, %cst_23 {dimension_numbers = #tpu.dot_dimension_numbers<[2], [2], [1], [1], [0, 0, 0, 1, 1, 1], [0], [0]>} : vector<1x16x32xbf16>, vector<1x16x32xbf16>, vector<1x16x16xf32> -> vector<1x16x16xf32>
    "tpu.trace_stop"() : () -> ()
    %60 = vector.shape_cast %5 : vector<1x16xf32> to vector<1x1x16xf32>
    %61 = vector.broadcast %60 : vector<1x1x16xf32> to vector<1x16x16xf32>
    %62 = arith.addf %59, %61 : vector<1x16x16xf32>
    %cst_24 = arith.constant dense<0xFF800000> : vector<1x16xf32>
    %63 = vector.multi_reduction <maximumf>, %62, %cst_24 [2] : vector<1x16x16xf32> to vector<1x16xf32>
    %64 = vector.shape_cast %63 : vector<1x16xf32> to vector<1x16x1xf32>
    %65 = vector.broadcast %64 : vector<1x16x1xf32> to vector<1x16x16xf32>
    %66 = arith.subf %62, %65 : vector<1x16x16xf32>
    %67 = math.exp %66 : vector<1x16x16xf32>
    %cst_25 = arith.constant dense<0.000000e+00> : vector<1x16xf32>
    %68 = vector.multi_reduction <add>, %67, %cst_25 [2] : vector<1x16x16xf32> to vector<1x16xf32>
    %69 = vector.shape_cast %68 : vector<1x16xf32> to vector<1x16x1xf32>
    %cst_26 = arith.constant 1.000000e+00 : f32
    %70 = vector.broadcast %cst_26 : f32 to vector<1x16x1xf32>
    %71 = arith.divf %70, %69 : vector<1x16x1xf32>
    %72 = vector.broadcast %71 : vector<1x16x1xf32> to vector<1x16x16xf32>
    %73 = arith.mulf %67, %72 : vector<1x16x16xf32>
    %74 = arith.truncf %73 : vector<1x16x16xf32> to vector<1x16x16xbf16>
    "tpu.trace_start"() <{level = 10 : i32, message = "bqk,bkd->bqd"}> : () -> ()
    %cst_27 = arith.constant dense<0.000000e+00> : vector<1x16x32xf32>
    %75 = tpu.matmul %74, %58, %cst_27 {dimension_numbers = #tpu.dot_dimension_numbers<[2], [1], [1], [2], [0, 0, 0, 1, 1, 2], [0], [0]>} : vector<1x16x16xbf16>, vector<1x16x32xbf16>, vector<1x16x32xf32> -> vector<1x16x32xf32>
    "tpu.trace_stop"() : () -> ()
    %76 = vector.shape_cast %75 : vector<1x16x32xf32> to vector<16x32xf32>
    %77 = arith.truncf %76 : vector<16x32xf32> to vector<16x32xbf16>
    %78 = vector.extract_strided_slice %19 {offsets = [32, 0], sizes = [32, 128], strides = [1, 1]} : vector<128x128xbf16> to vector<32x128xbf16>
    %cst_28 = arith.constant dense<0.000000e+00> : vector<16x128xf32>
    %79 = tpu.matmul %77, %78, %cst_28 {dimension_numbers = #tpu.dot_dimension_numbers<[1], [0], [0], [1], [0, 0, 1, 1], [], []>} : vector<16x32xbf16>, vector<32x128xbf16>, vector<16x128xf32> -> vector<16x128xf32>
    %80 = arith.addf %50, %79 : vector<16x128xf32>
    %81 = vector.extract_strided_slice %17 {offsets = [0, 0, 64], sizes = [1, 16, 32], strides = [1, 1, 1]} : vector<1x16x384xf32> to vector<1x16x32xf32>
    %cst_29 = arith.constant 0.176776692 : f32
    %82 = vector.broadcast %cst_29 : f32 to vector<1x16x32xf32>
    %83 = arith.mulf %81, %82 : vector<1x16x32xf32>
    %84 = arith.truncf %83 : vector<1x16x32xf32> to vector<1x16x32xbf16>
    %85 = vector.extract_strided_slice %17 {offsets = [0, 0, 192], sizes = [1, 16, 32], strides = [1, 1, 1]} : vector<1x16x384xf32> to vector<1x16x32xf32>
    %86 = arith.truncf %85 : vector<1x16x32xf32> to vector<1x16x32xbf16>
    %87 = vector.extract_strided_slice %17 {offsets = [0, 0, 320], sizes = [1, 16, 32], strides = [1, 1, 1]} : vector<1x16x384xf32> to vector<1x16x32xf32>
    %88 = arith.truncf %87 : vector<1x16x32xf32> to vector<1x16x32xbf16>
    "tpu.trace_start"() <{level = 10 : i32, message = "bqd,bkd->bqk"}> : () -> ()
    %cst_30 = arith.constant dense<0.000000e+00> : vector<1x16x16xf32>
    %89 = tpu.matmul %84, %86, %cst_30 {dimension_numbers = #tpu.dot_dimension_numbers<[2], [2], [1], [1], [0, 0, 0, 1, 1, 1], [0], [0]>} : vector<1x16x32xbf16>, vector<1x16x32xbf16>, vector<1x16x16xf32> -> vector<1x16x16xf32>
    "tpu.trace_stop"() : () -> ()
    %90 = vector.shape_cast %5 : vector<1x16xf32> to vector<1x1x16xf32>
    %91 = vector.broadcast %90 : vector<1x1x16xf32> to vector<1x16x16xf32>
    %92 = arith.addf %89, %91 : vector<1x16x16xf32>
    %cst_31 = arith.constant dense<0xFF800000> : vector<1x16xf32>
    %93 = vector.multi_reduction <maximumf>, %92, %cst_31 [2] : vector<1x16x16xf32> to vector<1x16xf32>
    %94 = vector.shape_cast %93 : vector<1x16xf32> to vector<1x16x1xf32>
    %95 = vector.broadcast %94 : vector<1x16x1xf32> to vector<1x16x16xf32>
    %96 = arith.subf %92, %95 : vector<1x16x16xf32>
    %97 = math.exp %96 : vector<1x16x16xf32>
    %cst_32 = arith.constant dense<0.000000e+00> : vector<1x16xf32>
    %98 = vector.multi_reduction <add>, %97, %cst_32 [2] : vector<1x16x16xf32> to vector<1x16xf32>
    %99 = vector.shape_cast %98 : vector<1x16xf32> to vector<1x16x1xf32>
    %cst_33 = arith.constant 1.000000e+00 : f32
    %100 = vector.broadcast %cst_33 : f32 to vector<1x16x1xf32>
    %101 = arith.divf %100, %99 : vector<1x16x1xf32>
    %102 = vector.broadcast %101 : vector<1x16x1xf32> to vector<1x16x16xf32>
    %103 = arith.mulf %97, %102 : vector<1x16x16xf32>
    %104 = arith.truncf %103 : vector<1x16x16xf32> to vector<1x16x16xbf16>
    "tpu.trace_start"() <{level = 10 : i32, message = "bqk,bkd->bqd"}> : () -> ()
    %cst_34 = arith.constant dense<0.000000e+00> : vector<1x16x32xf32>
    %105 = tpu.matmul %104, %88, %cst_34 {dimension_numbers = #tpu.dot_dimension_numbers<[2], [1], [1], [2], [0, 0, 0, 1, 1, 2], [0], [0]>} : vector<1x16x16xbf16>, vector<1x16x32xbf16>, vector<1x16x32xf32> -> vector<1x16x32xf32>
    "tpu.trace_stop"() : () -> ()
    %106 = vector.shape_cast %105 : vector<1x16x32xf32> to vector<16x32xf32>
    %107 = arith.truncf %106 : vector<16x32xf32> to vector<16x32xbf16>
    %108 = vector.extract_strided_slice %19 {offsets = [64, 0], sizes = [32, 128], strides = [1, 1]} : vector<128x128xbf16> to vector<32x128xbf16>
    %cst_35 = arith.constant dense<0.000000e+00> : vector<16x128xf32>
    %109 = tpu.matmul %107, %108, %cst_35 {dimension_numbers = #tpu.dot_dimension_numbers<[1], [0], [0], [1], [0, 0, 1, 1], [], []>} : vector<16x32xbf16>, vector<32x128xbf16>, vector<16x128xf32> -> vector<16x128xf32>
    %110 = arith.addf %80, %109 : vector<16x128xf32>
    %111 = vector.extract_strided_slice %17 {offsets = [0, 0, 96], sizes = [1, 16, 32], strides = [1, 1, 1]} : vector<1x16x384xf32> to vector<1x16x32xf32>
    %cst_36 = arith.constant 0.176776692 : f32
    %112 = vector.broadcast %cst_36 : f32 to vector<1x16x32xf32>
    %113 = arith.mulf %111, %112 : vector<1x16x32xf32>
    %114 = arith.truncf %113 : vector<1x16x32xf32> to vector<1x16x32xbf16>
    %115 = vector.extract_strided_slice %17 {offsets = [0, 0, 224], sizes = [1, 16, 32], strides = [1, 1, 1]} : vector<1x16x384xf32> to vector<1x16x32xf32>
    %116 = arith.truncf %115 : vector<1x16x32xf32> to vector<1x16x32xbf16>
    %117 = vector.extract_strided_slice %17 {offsets = [0, 0, 352], sizes = [1, 16, 32], strides = [1, 1, 1]} : vector<1x16x384xf32> to vector<1x16x32xf32>
    %118 = arith.truncf %117 : vector<1x16x32xf32> to vector<1x16x32xbf16>
    "tpu.trace_start"() <{level = 10 : i32, message = "bqd,bkd->bqk"}> : () -> ()
    %cst_37 = arith.constant dense<0.000000e+00> : vector<1x16x16xf32>
    %119 = tpu.matmul %114, %116, %cst_37 {dimension_numbers = #tpu.dot_dimension_numbers<[2], [2], [1], [1], [0, 0, 0, 1, 1, 1], [0], [0]>} : vector<1x16x32xbf16>, vector<1x16x32xbf16>, vector<1x16x16xf32> -> vector<1x16x16xf32>
    "tpu.trace_stop"() : () -> ()
    %120 = vector.shape_cast %5 : vector<1x16xf32> to vector<1x1x16xf32>
    %121 = vector.broadcast %120 : vector<1x1x16xf32> to vector<1x16x16xf32>
    %122 = arith.addf %119, %121 : vector<1x16x16xf32>
    %cst_38 = arith.constant dense<0xFF800000> : vector<1x16xf32>
    %123 = vector.multi_reduction <maximumf>, %122, %cst_38 [2] : vector<1x16x16xf32> to vector<1x16xf32>
    %124 = vector.shape_cast %123 : vector<1x16xf32> to vector<1x16x1xf32>
    %125 = vector.broadcast %124 : vector<1x16x1xf32> to vector<1x16x16xf32>
    %126 = arith.subf %122, %125 : vector<1x16x16xf32>
    %127 = math.exp %126 : vector<1x16x16xf32>
    %cst_39 = arith.constant dense<0.000000e+00> : vector<1x16xf32>
    %128 = vector.multi_reduction <add>, %127, %cst_39 [2] : vector<1x16x16xf32> to vector<1x16xf32>
    %129 = vector.shape_cast %128 : vector<1x16xf32> to vector<1x16x1xf32>
    %cst_40 = arith.constant 1.000000e+00 : f32
    %130 = vector.broadcast %cst_40 : f32 to vector<1x16x1xf32>
    %131 = arith.divf %130, %129 : vector<1x16x1xf32>
    %132 = vector.broadcast %131 : vector<1x16x1xf32> to vector<1x16x16xf32>
    %133 = arith.mulf %127, %132 : vector<1x16x16xf32>
    %134 = arith.truncf %133 : vector<1x16x16xf32> to vector<1x16x16xbf16>
    "tpu.trace_start"() <{level = 10 : i32, message = "bqk,bkd->bqd"}> : () -> ()
    %cst_41 = arith.constant dense<0.000000e+00> : vector<1x16x32xf32>
    %135 = tpu.matmul %134, %118, %cst_41 {dimension_numbers = #tpu.dot_dimension_numbers<[2], [1], [1], [2], [0, 0, 0, 1, 1, 2], [0], [0]>} : vector<1x16x16xbf16>, vector<1x16x32xbf16>, vector<1x16x32xf32> -> vector<1x16x32xf32>
    "tpu.trace_stop"() : () -> ()
    %136 = vector.shape_cast %135 : vector<1x16x32xf32> to vector<16x32xf32>
    %137 = arith.truncf %136 : vector<16x32xf32> to vector<16x32xbf16>
    %138 = vector.extract_strided_slice %19 {offsets = [96, 0], sizes = [32, 128], strides = [1, 1]} : vector<128x128xbf16> to vector<32x128xbf16>
    %cst_42 = arith.constant dense<0.000000e+00> : vector<16x128xf32>
    %139 = tpu.matmul %137, %138, %cst_42 {dimension_numbers = #tpu.dot_dimension_numbers<[1], [0], [0], [1], [0, 0, 1, 1], [], []>} : vector<16x32xbf16>, vector<32x128xbf16>, vector<16x128xf32> -> vector<16x128xf32>
    %140 = arith.addf %110, %139 : vector<16x128xf32>
    %c0_43 = arith.constant 0 : index
    %c0_44 = arith.constant 0 : index
    %c0_45 = arith.constant 0 : index
    %141 = vector.load %arg5[%c0_43, %c0_44, %c0_45] : memref<4x1x128xf32, #tpu.memory_space<vmem>>, vector<1x1x128xf32>
    %142 = vector.shape_cast %141 : vector<1x1x128xf32> to vector<1x128xf32>
    %143 = vector.broadcast %142 : vector<1x128xf32> to vector<16x128xf32>
    %144 = arith.addf %140, %143 : vector<16x128xf32>
    %145 = arith.addf %7, %144 : vector<16x128xf32>
    %c0_46 = arith.constant 0 : index
    %c0_47 = arith.constant 0 : index
    %c0_48 = arith.constant 0 : index
    %146 = vector.load %arg6[%c0_46, %c0_47, %c0_48] : memref<4x1x128xf32, #tpu.memory_space<vmem>>, vector<1x1x128xf32>
    %147 = vector.shape_cast %146 : vector<1x1x128xf32> to vector<1x128xf32>
    %c0_49 = arith.constant 0 : index
    %c0_50 = arith.constant 0 : index
    %c0_51 = arith.constant 0 : index
    %148 = vector.load %arg7[%c0_49, %c0_50, %c0_51] : memref<4x1x128xf32, #tpu.memory_space<vmem>>, vector<1x1x128xf32>
    %149 = vector.shape_cast %148 : vector<1x1x128xf32> to vector<1x128xf32>
    %cst_52 = arith.constant dense<0.000000e+00> : vector<16xf32>
    %150 = vector.multi_reduction <add>, %145, %cst_52 [1] : vector<16x128xf32> to vector<16xf32>
    %151 = vector.shape_cast %150 : vector<16xf32> to vector<16x1xf32>
    %cst_53 = arith.constant 1.280000e+02 : f32
    %152 = vector.broadcast %cst_53 : f32 to vector<16x1xf32>
    %153 = arith.divf %151, %152 : vector<16x1xf32>
    %154 = vector.broadcast %153 : vector<16x1xf32> to vector<16x128xf32>
    %155 = arith.subf %145, %154 : vector<16x128xf32>
    %156 = arith.mulf %155, %155 : vector<16x128xf32>
    %cst_54 = arith.constant dense<0.000000e+00> : vector<16xf32>
    %157 = vector.multi_reduction <add>, %156, %cst_54 [1] : vector<16x128xf32> to vector<16xf32>
    %158 = vector.shape_cast %157 : vector<16xf32> to vector<16x1xf32>
    %cst_55 = arith.constant 1.280000e+02 : f32
    %159 = vector.broadcast %cst_55 : f32 to vector<16x1xf32>
    %160 = arith.divf %158, %159 : vector<16x1xf32>
    %161 = vector.broadcast %153 : vector<16x1xf32> to vector<16x128xf32>
    %162 = arith.subf %145, %161 : vector<16x128xf32>
    %cst_56 = arith.constant 9.99999974E-6 : f32
    %163 = vector.broadcast %cst_56 : f32 to vector<16x1xf32>
    %164 = arith.addf %160, %163 : vector<16x1xf32>
    %165 = math.rsqrt %164 : vector<16x1xf32>
    %166 = vector.broadcast %165 : vector<16x1xf32> to vector<16x128xf32>
    %167 = arith.mulf %162, %166 : vector<16x128xf32>
    %168 = vector.broadcast %147 : vector<1x128xf32> to vector<16x128xf32>
    %169 = arith.mulf %167, %168 : vector<16x128xf32>
    %170 = vector.broadcast %149 : vector<1x128xf32> to vector<16x128xf32>
    %171 = arith.addf %169, %170 : vector<16x128xf32>
    %172 = arith.truncf %171 : vector<16x128xf32> to vector<16x128xbf16>
    %c0_57 = arith.constant 0 : index
    %c0_58 = arith.constant 0 : index
    %c0_59 = arith.constant 0 : index
    %173 = vector.load %arg8[%c0_57, %c0_58, %c0_59] : memref<4x128x512xbf16, #tpu.memory_space<vmem>>, vector<1x128x512xbf16>
    %174 = vector.shape_cast %173 : vector<1x128x512xbf16> to vector<128x512xbf16>
    %cst_60 = arith.constant dense<0.000000e+00> : vector<16x512xf32>
    %175 = tpu.matmul %172, %174, %cst_60 {dimension_numbers = #tpu.dot_dimension_numbers<[1], [0], [0], [1], [0, 0, 1, 1], [], []>} : vector<16x128xbf16>, vector<128x512xbf16>, vector<16x512xf32> -> vector<16x512xf32>
    %c0_61 = arith.constant 0 : index
    %c0_62 = arith.constant 0 : index
    %c0_63 = arith.constant 0 : index
    %176 = vector.load %arg9[%c0_61, %c0_62, %c0_63] : memref<4x1x512xf32, #tpu.memory_space<vmem>>, vector<1x1x512xf32>
    %177 = vector.shape_cast %176 : vector<1x1x512xf32> to vector<1x512xf32>
    %178 = vector.broadcast %177 : vector<1x512xf32> to vector<16x512xf32>
    %179 = arith.addf %175, %178 : vector<16x512xf32>
    %cst_64 = arith.constant 5.000000e-01 : f32
    %180 = vector.broadcast %cst_64 : f32 to vector<16x512xf32>
    %181 = arith.mulf %180, %179 : vector<16x512xf32>
    %cst_65 = arith.constant 0.707106769 : f32
    %182 = vector.broadcast %cst_65 : f32 to vector<16x512xf32>
    %183 = arith.mulf %179, %182 : vector<16x512xf32>
    %184 = math.absf %183 : vector<16x512xf32>
    %cst_66 = arith.constant 0.327591091 : f32
    %185 = vector.broadcast %cst_66 : f32 to vector<16x512xf32>
    %186 = arith.mulf %185, %184 : vector<16x512xf32>
    %cst_67 = arith.constant 1.000000e+00 : f32
    %187 = vector.broadcast %cst_67 : f32 to vector<16x512xf32>
    %188 = arith.addf %187, %186 : vector<16x512xf32>
    %cst_68 = arith.constant 1.000000e+00 : f32
    %189 = vector.broadcast %cst_68 : f32 to vector<16x512xf32>
    %190 = arith.divf %189, %188 : vector<16x512xf32>
    %cst_69 = arith.constant 1.06140542 : f32
    %191 = vector.broadcast %cst_69 : f32 to vector<16x512xf32>
    %192 = arith.mulf %191, %190 : vector<16x512xf32>
    %cst_70 = arith.constant 1.45315206 : f32
    %193 = vector.broadcast %cst_70 : f32 to vector<16x512xf32>
    %194 = arith.subf %192, %193 : vector<16x512xf32>
    %195 = arith.mulf %194, %190 : vector<16x512xf32>
    %cst_71 = arith.constant 1.42141378 : f32
    %196 = vector.broadcast %cst_71 : f32 to vector<16x512xf32>
    %197 = arith.addf %195, %196 : vector<16x512xf32>
    %198 = arith.mulf %197, %190 : vector<16x512xf32>
    %cst_72 = arith.constant 0.284496725 : f32
    %199 = vector.broadcast %cst_72 : f32 to vector<16x512xf32>
    %200 = arith.subf %198, %199 : vector<16x512xf32>
    %201 = arith.mulf %200, %190 : vector<16x512xf32>
    %cst_73 = arith.constant 0.254829586 : f32
    %202 = vector.broadcast %cst_73 : f32 to vector<16x512xf32>
    %203 = arith.addf %201, %202 : vector<16x512xf32>
    %204 = arith.mulf %203, %190 : vector<16x512xf32>
    %cst_74 = arith.constant 0.000000e+00 : f32
    %205 = vector.broadcast %cst_74 : f32 to vector<16x512xf32>
    %206 = arith.subf %205, %184 : vector<16x512xf32>
    %207 = arith.mulf %206, %184 : vector<16x512xf32>
    %208 = math.exp %207 : vector<16x512xf32>
    %209 = arith.mulf %204, %208 : vector<16x512xf32>
    %cst_75 = arith.constant 1.000000e+00 : f32
    %210 = vector.broadcast %cst_75 : f32 to vector<16x512xf32>
    %211 = arith.subf %210, %209 : vector<16x512xf32>
    %cst_76 = arith.constant 0.000000e+00 : f32
    %212 = vector.broadcast %cst_76 : f32 to vector<16x512xf32>
    %213 = arith.cmpf oge, %183, %212 : vector<16x512xf32>
    %cst_77 = arith.constant 0.000000e+00 : f32
    %214 = vector.broadcast %cst_77 : f32 to vector<16x512xf32>
    %215 = arith.subf %214, %211 : vector<16x512xf32>
    %216 = arith.select %213, %211, %215 : vector<16x512xi1>, vector<16x512xf32>
    %cst_78 = arith.constant 1.000000e+00 : f32
    %217 = vector.broadcast %cst_78 : f32 to vector<16x512xf32>
    %218 = arith.addf %217, %216 : vector<16x512xf32>
    %219 = arith.mulf %181, %218 : vector<16x512xf32>
    %220 = arith.truncf %219 : vector<16x512xf32> to vector<16x512xbf16>
    %c0_79 = arith.constant 0 : index
    %c0_80 = arith.constant 0 : index
    %c0_81 = arith.constant 0 : index
    %221 = vector.load %arg10[%c0_79, %c0_80, %c0_81] : memref<4x512x128xbf16, #tpu.memory_space<vmem>>, vector<1x512x128xbf16>
    %222 = vector.shape_cast %221 : vector<1x512x128xbf16> to vector<512x128xbf16>
    %cst_82 = arith.constant dense<0.000000e+00> : vector<16x128xf32>
    %223 = tpu.matmul %220, %222, %cst_82 {dimension_numbers = #tpu.dot_dimension_numbers<[1], [0], [0], [1], [0, 0, 1, 1], [], []>} : vector<16x512xbf16>, vector<512x128xbf16>, vector<16x128xf32> -> vector<16x128xf32>
    %c0_83 = arith.constant 0 : index
    %c0_84 = arith.constant 0 : index
    %c0_85 = arith.constant 0 : index
    %224 = vector.load %arg11[%c0_83, %c0_84, %c0_85] : memref<4x1x128xf32, #tpu.memory_space<vmem>>, vector<1x1x128xf32>
    %225 = vector.shape_cast %224 : vector<1x1x128xf32> to vector<1x128xf32>
    %226 = vector.broadcast %225 : vector<1x128xf32> to vector<16x128xf32>
    %227 = arith.addf %223, %226 : vector<16x128xf32>
    %228 = arith.addf %171, %227 : vector<16x128xf32>
    %c0_86 = arith.constant 0 : index
    %c0_87 = arith.constant 0 : index
    %c0_88 = arith.constant 0 : index
    %229 = vector.load %arg12[%c0_86, %c0_87, %c0_88] : memref<4x1x128xf32, #tpu.memory_space<vmem>>, vector<1x1x128xf32>
    %230 = vector.shape_cast %229 : vector<1x1x128xf32> to vector<1x128xf32>
    %c0_89 = arith.constant 0 : index
    %c0_90 = arith.constant 0 : index
    %c0_91 = arith.constant 0 : index
    %231 = vector.load %arg13[%c0_89, %c0_90, %c0_91] : memref<4x1x128xf32, #tpu.memory_space<vmem>>, vector<1x1x128xf32>
    %232 = vector.shape_cast %231 : vector<1x1x128xf32> to vector<1x128xf32>
    %cst_92 = arith.constant dense<0.000000e+00> : vector<16xf32>
    %233 = vector.multi_reduction <add>, %228, %cst_92 [1] : vector<16x128xf32> to vector<16xf32>
    %234 = vector.shape_cast %233 : vector<16xf32> to vector<16x1xf32>
    %cst_93 = arith.constant 1.280000e+02 : f32
    %235 = vector.broadcast %cst_93 : f32 to vector<16x1xf32>
    %236 = arith.divf %234, %235 : vector<16x1xf32>
    %237 = vector.broadcast %236 : vector<16x1xf32> to vector<16x128xf32>
    %238 = arith.subf %228, %237 : vector<16x128xf32>
    %239 = arith.mulf %238, %238 : vector<16x128xf32>
    %cst_94 = arith.constant dense<0.000000e+00> : vector<16xf32>
    %240 = vector.multi_reduction <add>, %239, %cst_94 [1] : vector<16x128xf32> to vector<16xf32>
    %241 = vector.shape_cast %240 : vector<16xf32> to vector<16x1xf32>
    %cst_95 = arith.constant 1.280000e+02 : f32
    %242 = vector.broadcast %cst_95 : f32 to vector<16x1xf32>
    %243 = arith.divf %241, %242 : vector<16x1xf32>
    %244 = vector.broadcast %236 : vector<16x1xf32> to vector<16x128xf32>
    %245 = arith.subf %228, %244 : vector<16x128xf32>
    %cst_96 = arith.constant 9.99999974E-6 : f32
    %246 = vector.broadcast %cst_96 : f32 to vector<16x1xf32>
    %247 = arith.addf %243, %246 : vector<16x1xf32>
    %248 = math.rsqrt %247 : vector<16x1xf32>
    %249 = vector.broadcast %248 : vector<16x1xf32> to vector<16x128xf32>
    %250 = arith.mulf %245, %249 : vector<16x128xf32>
    %251 = vector.broadcast %230 : vector<1x128xf32> to vector<16x128xf32>
    %252 = arith.mulf %250, %251 : vector<16x128xf32>
    %253 = vector.broadcast %232 : vector<1x128xf32> to vector<16x128xf32>
    %254 = arith.addf %252, %253 : vector<16x128xf32>
    %255 = arith.truncf %254 : vector<16x128xf32> to vector<16x128xbf16>
    %c1 = arith.constant 1 : index
    %c0_97 = arith.constant 0 : index
    %c0_98 = arith.constant 0 : index
    %256 = vector.load %arg2[%c1, %c0_97, %c0_98] : memref<4x128x384xbf16, #tpu.memory_space<vmem>>, vector<1x128x384xbf16>
    %257 = vector.shape_cast %256 : vector<1x128x384xbf16> to vector<128x384xbf16>
    %cst_99 = arith.constant dense<0.000000e+00> : vector<16x384xf32>
    %258 = tpu.matmul %255, %257, %cst_99 {dimension_numbers = #tpu.dot_dimension_numbers<[1], [0], [0], [1], [0, 0, 1, 1], [], []>} : vector<16x128xbf16>, vector<128x384xbf16>, vector<16x384xf32> -> vector<16x384xf32>
    %c1_100 = arith.constant 1 : index
    %c0_101 = arith.constant 0 : index
    %c0_102 = arith.constant 0 : index
    %259 = vector.load %arg3[%c1_100, %c0_101, %c0_102] : memref<4x1x384xf32, #tpu.memory_space<vmem>>, vector<1x1x384xf32>
    %260 = vector.shape_cast %259 : vector<1x1x384xf32> to vector<1x384xf32>
    %261 = vector.broadcast %260 : vector<1x384xf32> to vector<16x384xf32>
    %262 = arith.addf %258, %261 : vector<16x384xf32>
    %263 = vector.shape_cast %262 : vector<16x384xf32> to vector<1x16x384xf32>
    %c1_103 = arith.constant 1 : index
    %c0_104 = arith.constant 0 : index
    %c0_105 = arith.constant 0 : index
    %264 = vector.load %arg4[%c1_103, %c0_104, %c0_105] : memref<4x128x128xbf16, #tpu.memory_space<vmem>>, vector<1x128x128xbf16>
    %265 = vector.shape_cast %264 : vector<1x128x128xbf16> to vector<128x128xbf16>
    %cst_106 = arith.constant 0.000000e+00 : f32
    %266 = vector.broadcast %cst_106 : f32 to vector<16x128xf32>
    %267 = vector.extract_strided_slice %263 {offsets = [0, 0, 0], sizes = [1, 16, 32], strides = [1, 1, 1]} : vector<1x16x384xf32> to vector<1x16x32xf32>
    %cst_107 = arith.constant 0.176776692 : f32
    %268 = vector.broadcast %cst_107 : f32 to vector<1x16x32xf32>
    %269 = arith.mulf %267, %268 : vector<1x16x32xf32>
    %270 = arith.truncf %269 : vector<1x16x32xf32> to vector<1x16x32xbf16>
    %271 = vector.extract_strided_slice %263 {offsets = [0, 0, 128], sizes = [1, 16, 32], strides = [1, 1, 1]} : vector<1x16x384xf32> to vector<1x16x32xf32>
    %272 = arith.truncf %271 : vector<1x16x32xf32> to vector<1x16x32xbf16>
    %273 = vector.extract_strided_slice %263 {offsets = [0, 0, 256], sizes = [1, 16, 32], strides = [1, 1, 1]} : vector<1x16x384xf32> to vector<1x16x32xf32>
    %274 = arith.truncf %273 : vector<1x16x32xf32> to vector<1x16x32xbf16>
    "tpu.trace_start"() <{level = 10 : i32, message = "bqd,bkd->bqk"}> : () -> ()
    %cst_108 = arith.constant dense<0.000000e+00> : vector<1x16x16xf32>
    %275 = tpu.matmul %270, %272, %cst_108 {dimension_numbers = #tpu.dot_dimension_numbers<[2], [2], [1], [1], [0, 0, 0, 1, 1, 1], [0], [0]>} : vector<1x16x32xbf16>, vector<1x16x32xbf16>, vector<1x16x16xf32> -> vector<1x16x16xf32>
    "tpu.trace_stop"() : () -> ()
    %276 = vector.shape_cast %5 : vector<1x16xf32> to vector<1x1x16xf32>
    %277 = vector.broadcast %276 : vector<1x1x16xf32> to vector<1x16x16xf32>
    %278 = arith.addf %275, %277 : vector<1x16x16xf32>
    %cst_109 = arith.constant dense<0xFF800000> : vector<1x16xf32>
    %279 = vector.multi_reduction <maximumf>, %278, %cst_109 [2] : vector<1x16x16xf32> to vector<1x16xf32>
    %280 = vector.shape_cast %279 : vector<1x16xf32> to vector<1x16x1xf32>
    %281 = vector.broadcast %280 : vector<1x16x1xf32> to vector<1x16x16xf32>
    %282 = arith.subf %278, %281 : vector<1x16x16xf32>
    %283 = math.exp %282 : vector<1x16x16xf32>
    %cst_110 = arith.constant dense<0.000000e+00> : vector<1x16xf32>
    %284 = vector.multi_reduction <add>, %283, %cst_110 [2] : vector<1x16x16xf32> to vector<1x16xf32>
    %285 = vector.shape_cast %284 : vector<1x16xf32> to vector<1x16x1xf32>
    %cst_111 = arith.constant 1.000000e+00 : f32
    %286 = vector.broadcast %cst_111 : f32 to vector<1x16x1xf32>
    %287 = arith.divf %286, %285 : vector<1x16x1xf32>
    %288 = vector.broadcast %287 : vector<1x16x1xf32> to vector<1x16x16xf32>
    %289 = arith.mulf %283, %288 : vector<1x16x16xf32>
    %290 = arith.truncf %289 : vector<1x16x16xf32> to vector<1x16x16xbf16>
    "tpu.trace_start"() <{level = 10 : i32, message = "bqk,bkd->bqd"}> : () -> ()
    %cst_112 = arith.constant dense<0.000000e+00> : vector<1x16x32xf32>
    %291 = tpu.matmul %290, %274, %cst_112 {dimension_numbers = #tpu.dot_dimension_numbers<[2], [1], [1], [2], [0, 0, 0, 1, 1, 2], [0], [0]>} : vector<1x16x16xbf16>, vector<1x16x32xbf16>, vector<1x16x32xf32> -> vector<1x16x32xf32>
    "tpu.trace_stop"() : () -> ()
    %292 = vector.shape_cast %291 : vector<1x16x32xf32> to vector<16x32xf32>
    %293 = arith.truncf %292 : vector<16x32xf32> to vector<16x32xbf16>
    %294 = vector.extract_strided_slice %265 {offsets = [0, 0], sizes = [32, 128], strides = [1, 1]} : vector<128x128xbf16> to vector<32x128xbf16>
    %cst_113 = arith.constant dense<0.000000e+00> : vector<16x128xf32>
    %295 = tpu.matmul %293, %294, %cst_113 {dimension_numbers = #tpu.dot_dimension_numbers<[1], [0], [0], [1], [0, 0, 1, 1], [], []>} : vector<16x32xbf16>, vector<32x128xbf16>, vector<16x128xf32> -> vector<16x128xf32>
    %296 = arith.addf %266, %295 : vector<16x128xf32>
    %297 = vector.extract_strided_slice %263 {offsets = [0, 0, 32], sizes = [1, 16, 32], strides = [1, 1, 1]} : vector<1x16x384xf32> to vector<1x16x32xf32>
    %cst_114 = arith.constant 0.176776692 : f32
    %298 = vector.broadcast %cst_114 : f32 to vector<1x16x32xf32>
    %299 = arith.mulf %297, %298 : vector<1x16x32xf32>
    %300 = arith.truncf %299 : vector<1x16x32xf32> to vector<1x16x32xbf16>
    %301 = vector.extract_strided_slice %263 {offsets = [0, 0, 160], sizes = [1, 16, 32], strides = [1, 1, 1]} : vector<1x16x384xf32> to vector<1x16x32xf32>
    %302 = arith.truncf %301 : vector<1x16x32xf32> to vector<1x16x32xbf16>
    %303 = vector.extract_strided_slice %263 {offsets = [0, 0, 288], sizes = [1, 16, 32], strides = [1, 1, 1]} : vector<1x16x384xf32> to vector<1x16x32xf32>
    %304 = arith.truncf %303 : vector<1x16x32xf32> to vector<1x16x32xbf16>
    "tpu.trace_start"() <{level = 10 : i32, message = "bqd,bkd->bqk"}> : () -> ()
    %cst_115 = arith.constant dense<0.000000e+00> : vector<1x16x16xf32>
    %305 = tpu.matmul %300, %302, %cst_115 {dimension_numbers = #tpu.dot_dimension_numbers<[2], [2], [1], [1], [0, 0, 0, 1, 1, 1], [0], [0]>} : vector<1x16x32xbf16>, vector<1x16x32xbf16>, vector<1x16x16xf32> -> vector<1x16x16xf32>
    "tpu.trace_stop"() : () -> ()
    %306 = vector.shape_cast %5 : vector<1x16xf32> to vector<1x1x16xf32>
    %307 = vector.broadcast %306 : vector<1x1x16xf32> to vector<1x16x16xf32>
    %308 = arith.addf %305, %307 : vector<1x16x16xf32>
    %cst_116 = arith.constant dense<0xFF800000> : vector<1x16xf32>
    %309 = vector.multi_reduction <maximumf>, %308, %cst_116 [2] : vector<1x16x16xf32> to vector<1x16xf32>
    %310 = vector.shape_cast %309 : vector<1x16xf32> to vector<1x16x1xf32>
    %311 = vector.broadcast %310 : vector<1x16x1xf32> to vector<1x16x16xf32>
    %312 = arith.subf %308, %311 : vector<1x16x16xf32>
    %313 = math.exp %312 : vector<1x16x16xf32>
    %cst_117 = arith.constant dense<0.000000e+00> : vector<1x16xf32>
    %314 = vector.multi_reduction <add>, %313, %cst_117 [2] : vector<1x16x16xf32> to vector<1x16xf32>
    %315 = vector.shape_cast %314 : vector<1x16xf32> to vector<1x16x1xf32>
    %cst_118 = arith.constant 1.000000e+00 : f32
    %316 = vector.broadcast %cst_118 : f32 to vector<1x16x1xf32>
    %317 = arith.divf %316, %315 : vector<1x16x1xf32>
    %318 = vector.broadcast %317 : vector<1x16x1xf32> to vector<1x16x16xf32>
    %319 = arith.mulf %313, %318 : vector<1x16x16xf32>
    %320 = arith.truncf %319 : vector<1x16x16xf32> to vector<1x16x16xbf16>
    "tpu.trace_start"() <{level = 10 : i32, message = "bqk,bkd->bqd"}> : () -> ()
    %cst_119 = arith.constant dense<0.000000e+00> : vector<1x16x32xf32>
    %321 = tpu.matmul %320, %304, %cst_119 {dimension_numbers = #tpu.dot_dimension_numbers<[2], [1], [1], [2], [0, 0, 0, 1, 1, 2], [0], [0]>} : vector<1x16x16xbf16>, vector<1x16x32xbf16>, vector<1x16x32xf32> -> vector<1x16x32xf32>
    "tpu.trace_stop"() : () -> ()
    %322 = vector.shape_cast %321 : vector<1x16x32xf32> to vector<16x32xf32>
    %323 = arith.truncf %322 : vector<16x32xf32> to vector<16x32xbf16>
    %324 = vector.extract_strided_slice %265 {offsets = [32, 0], sizes = [32, 128], strides = [1, 1]} : vector<128x128xbf16> to vector<32x128xbf16>
    %cst_120 = arith.constant dense<0.000000e+00> : vector<16x128xf32>
    %325 = tpu.matmul %323, %324, %cst_120 {dimension_numbers = #tpu.dot_dimension_numbers<[1], [0], [0], [1], [0, 0, 1, 1], [], []>} : vector<16x32xbf16>, vector<32x128xbf16>, vector<16x128xf32> -> vector<16x128xf32>
    %326 = arith.addf %296, %325 : vector<16x128xf32>
    %327 = vector.extract_strided_slice %263 {offsets = [0, 0, 64], sizes = [1, 16, 32], strides = [1, 1, 1]} : vector<1x16x384xf32> to vector<1x16x32xf32>
    %cst_121 = arith.constant 0.176776692 : f32
    %328 = vector.broadcast %cst_121 : f32 to vector<1x16x32xf32>
    %329 = arith.mulf %327, %328 : vector<1x16x32xf32>
    %330 = arith.truncf %329 : vector<1x16x32xf32> to vector<1x16x32xbf16>
    %331 = vector.extract_strided_slice %263 {offsets = [0, 0, 192], sizes = [1, 16, 32], strides = [1, 1, 1]} : vector<1x16x384xf32> to vector<1x16x32xf32>
    %332 = arith.truncf %331 : vector<1x16x32xf32> to vector<1x16x32xbf16>
    %333 = vector.extract_strided_slice %263 {offsets = [0, 0, 320], sizes = [1, 16, 32], strides = [1, 1, 1]} : vector<1x16x384xf32> to vector<1x16x32xf32>
    %334 = arith.truncf %333 : vector<1x16x32xf32> to vector<1x16x32xbf16>
    "tpu.trace_start"() <{level = 10 : i32, message = "bqd,bkd->bqk"}> : () -> ()
    %cst_122 = arith.constant dense<0.000000e+00> : vector<1x16x16xf32>
    %335 = tpu.matmul %330, %332, %cst_122 {dimension_numbers = #tpu.dot_dimension_numbers<[2], [2], [1], [1], [0, 0, 0, 1, 1, 1], [0], [0]>} : vector<1x16x32xbf16>, vector<1x16x32xbf16>, vector<1x16x16xf32> -> vector<1x16x16xf32>
    "tpu.trace_stop"() : () -> ()
    %336 = vector.shape_cast %5 : vector<1x16xf32> to vector<1x1x16xf32>
    %337 = vector.broadcast %336 : vector<1x1x16xf32> to vector<1x16x16xf32>
    %338 = arith.addf %335, %337 : vector<1x16x16xf32>
    %cst_123 = arith.constant dense<0xFF800000> : vector<1x16xf32>
    %339 = vector.multi_reduction <maximumf>, %338, %cst_123 [2] : vector<1x16x16xf32> to vector<1x16xf32>
    %340 = vector.shape_cast %339 : vector<1x16xf32> to vector<1x16x1xf32>
    %341 = vector.broadcast %340 : vector<1x16x1xf32> to vector<1x16x16xf32>
    %342 = arith.subf %338, %341 : vector<1x16x16xf32>
    %343 = math.exp %342 : vector<1x16x16xf32>
    %cst_124 = arith.constant dense<0.000000e+00> : vector<1x16xf32>
    %344 = vector.multi_reduction <add>, %343, %cst_124 [2] : vector<1x16x16xf32> to vector<1x16xf32>
    %345 = vector.shape_cast %344 : vector<1x16xf32> to vector<1x16x1xf32>
    %cst_125 = arith.constant 1.000000e+00 : f32
    %346 = vector.broadcast %cst_125 : f32 to vector<1x16x1xf32>
    %347 = arith.divf %346, %345 : vector<1x16x1xf32>
    %348 = vector.broadcast %347 : vector<1x16x1xf32> to vector<1x16x16xf32>
    %349 = arith.mulf %343, %348 : vector<1x16x16xf32>
    %350 = arith.truncf %349 : vector<1x16x16xf32> to vector<1x16x16xbf16>
    "tpu.trace_start"() <{level = 10 : i32, message = "bqk,bkd->bqd"}> : () -> ()
    %cst_126 = arith.constant dense<0.000000e+00> : vector<1x16x32xf32>
    %351 = tpu.matmul %350, %334, %cst_126 {dimension_numbers = #tpu.dot_dimension_numbers<[2], [1], [1], [2], [0, 0, 0, 1, 1, 2], [0], [0]>} : vector<1x16x16xbf16>, vector<1x16x32xbf16>, vector<1x16x32xf32> -> vector<1x16x32xf32>
    "tpu.trace_stop"() : () -> ()
    %352 = vector.shape_cast %351 : vector<1x16x32xf32> to vector<16x32xf32>
    %353 = arith.truncf %352 : vector<16x32xf32> to vector<16x32xbf16>
    %354 = vector.extract_strided_slice %265 {offsets = [64, 0], sizes = [32, 128], strides = [1, 1]} : vector<128x128xbf16> to vector<32x128xbf16>
    %cst_127 = arith.constant dense<0.000000e+00> : vector<16x128xf32>
    %355 = tpu.matmul %353, %354, %cst_127 {dimension_numbers = #tpu.dot_dimension_numbers<[1], [0], [0], [1], [0, 0, 1, 1], [], []>} : vector<16x32xbf16>, vector<32x128xbf16>, vector<16x128xf32> -> vector<16x128xf32>
    %356 = arith.addf %326, %355 : vector<16x128xf32>
    %357 = vector.extract_strided_slice %263 {offsets = [0, 0, 96], sizes = [1, 16, 32], strides = [1, 1, 1]} : vector<1x16x384xf32> to vector<1x16x32xf32>
    %cst_128 = arith.constant 0.176776692 : f32
    %358 = vector.broadcast %cst_128 : f32 to vector<1x16x32xf32>
    %359 = arith.mulf %357, %358 : vector<1x16x32xf32>
    %360 = arith.truncf %359 : vector<1x16x32xf32> to vector<1x16x32xbf16>
    %361 = vector.extract_strided_slice %263 {offsets = [0, 0, 224], sizes = [1, 16, 32], strides = [1, 1, 1]} : vector<1x16x384xf32> to vector<1x16x32xf32>
    %362 = arith.truncf %361 : vector<1x16x32xf32> to vector<1x16x32xbf16>
    %363 = vector.extract_strided_slice %263 {offsets = [0, 0, 352], sizes = [1, 16, 32], strides = [1, 1, 1]} : vector<1x16x384xf32> to vector<1x16x32xf32>
    %364 = arith.truncf %363 : vector<1x16x32xf32> to vector<1x16x32xbf16>
    "tpu.trace_start"() <{level = 10 : i32, message = "bqd,bkd->bqk"}> : () -> ()
    %cst_129 = arith.constant dense<0.000000e+00> : vector<1x16x16xf32>
    %365 = tpu.matmul %360, %362, %cst_129 {dimension_numbers = #tpu.dot_dimension_numbers<[2], [2], [1], [1], [0, 0, 0, 1, 1, 1], [0], [0]>} : vector<1x16x32xbf16>, vector<1x16x32xbf16>, vector<1x16x16xf32> -> vector<1x16x16xf32>
    "tpu.trace_stop"() : () -> ()
    %366 = vector.shape_cast %5 : vector<1x16xf32> to vector<1x1x16xf32>
    %367 = vector.broadcast %366 : vector<1x1x16xf32> to vector<1x16x16xf32>
    %368 = arith.addf %365, %367 : vector<1x16x16xf32>
    %cst_130 = arith.constant dense<0xFF800000> : vector<1x16xf32>
    %369 = vector.multi_reduction <maximumf>, %368, %cst_130 [2] : vector<1x16x16xf32> to vector<1x16xf32>
    %370 = vector.shape_cast %369 : vector<1x16xf32> to vector<1x16x1xf32>
    %371 = vector.broadcast %370 : vector<1x16x1xf32> to vector<1x16x16xf32>
    %372 = arith.subf %368, %371 : vector<1x16x16xf32>
    %373 = math.exp %372 : vector<1x16x16xf32>
    %cst_131 = arith.constant dense<0.000000e+00> : vector<1x16xf32>
    %374 = vector.multi_reduction <add>, %373, %cst_131 [2] : vector<1x16x16xf32> to vector<1x16xf32>
    %375 = vector.shape_cast %374 : vector<1x16xf32> to vector<1x16x1xf32>
    %cst_132 = arith.constant 1.000000e+00 : f32
    %376 = vector.broadcast %cst_132 : f32 to vector<1x16x1xf32>
    %377 = arith.divf %376, %375 : vector<1x16x1xf32>
    %378 = vector.broadcast %377 : vector<1x16x1xf32> to vector<1x16x16xf32>
    %379 = arith.mulf %373, %378 : vector<1x16x16xf32>
    %380 = arith.truncf %379 : vector<1x16x16xf32> to vector<1x16x16xbf16>
    "tpu.trace_start"() <{level = 10 : i32, message = "bqk,bkd->bqd"}> : () -> ()
    %cst_133 = arith.constant dense<0.000000e+00> : vector<1x16x32xf32>
    %381 = tpu.matmul %380, %364, %cst_133 {dimension_numbers = #tpu.dot_dimension_numbers<[2], [1], [1], [2], [0, 0, 0, 1, 1, 2], [0], [0]>} : vector<1x16x16xbf16>, vector<1x16x32xbf16>, vector<1x16x32xf32> -> vector<1x16x32xf32>
    "tpu.trace_stop"() : () -> ()
    %382 = vector.shape_cast %381 : vector<1x16x32xf32> to vector<16x32xf32>
    %383 = arith.truncf %382 : vector<16x32xf32> to vector<16x32xbf16>
    %384 = vector.extract_strided_slice %265 {offsets = [96, 0], sizes = [32, 128], strides = [1, 1]} : vector<128x128xbf16> to vector<32x128xbf16>
    %cst_134 = arith.constant dense<0.000000e+00> : vector<16x128xf32>
    %385 = tpu.matmul %383, %384, %cst_134 {dimension_numbers = #tpu.dot_dimension_numbers<[1], [0], [0], [1], [0, 0, 1, 1], [], []>} : vector<16x32xbf16>, vector<32x128xbf16>, vector<16x128xf32> -> vector<16x128xf32>
    %386 = arith.addf %356, %385 : vector<16x128xf32>
    %c1_135 = arith.constant 1 : index
    %c0_136 = arith.constant 0 : index
    %c0_137 = arith.constant 0 : index
    %387 = vector.load %arg5[%c1_135, %c0_136, %c0_137] : memref<4x1x128xf32, #tpu.memory_space<vmem>>, vector<1x1x128xf32>
    %388 = vector.shape_cast %387 : vector<1x1x128xf32> to vector<1x128xf32>
    %389 = vector.broadcast %388 : vector<1x128xf32> to vector<16x128xf32>
    %390 = arith.addf %386, %389 : vector<16x128xf32>
    %391 = arith.addf %254, %390 : vector<16x128xf32>
    %c1_138 = arith.constant 1 : index
    %c0_139 = arith.constant 0 : index
    %c0_140 = arith.constant 0 : index
    %392 = vector.load %arg6[%c1_138, %c0_139, %c0_140] : memref<4x1x128xf32, #tpu.memory_space<vmem>>, vector<1x1x128xf32>
    %393 = vector.shape_cast %392 : vector<1x1x128xf32> to vector<1x128xf32>
    %c1_141 = arith.constant 1 : index
    %c0_142 = arith.constant 0 : index
    %c0_143 = arith.constant 0 : index
    %394 = vector.load %arg7[%c1_141, %c0_142, %c0_143] : memref<4x1x128xf32, #tpu.memory_space<vmem>>, vector<1x1x128xf32>
    %395 = vector.shape_cast %394 : vector<1x1x128xf32> to vector<1x128xf32>
    %cst_144 = arith.constant dense<0.000000e+00> : vector<16xf32>
    %396 = vector.multi_reduction <add>, %391, %cst_144 [1] : vector<16x128xf32> to vector<16xf32>
    %397 = vector.shape_cast %396 : vector<16xf32> to vector<16x1xf32>
    %cst_145 = arith.constant 1.280000e+02 : f32
    %398 = vector.broadcast %cst_145 : f32 to vector<16x1xf32>
    %399 = arith.divf %397, %398 : vector<16x1xf32>
    %400 = vector.broadcast %399 : vector<16x1xf32> to vector<16x128xf32>
    %401 = arith.subf %391, %400 : vector<16x128xf32>
    %402 = arith.mulf %401, %401 : vector<16x128xf32>
    %cst_146 = arith.constant dense<0.000000e+00> : vector<16xf32>
    %403 = vector.multi_reduction <add>, %402, %cst_146 [1] : vector<16x128xf32> to vector<16xf32>
    %404 = vector.shape_cast %403 : vector<16xf32> to vector<16x1xf32>
    %cst_147 = arith.constant 1.280000e+02 : f32
    %405 = vector.broadcast %cst_147 : f32 to vector<16x1xf32>
    %406 = arith.divf %404, %405 : vector<16x1xf32>
    %407 = vector.broadcast %399 : vector<16x1xf32> to vector<16x128xf32>
    %408 = arith.subf %391, %407 : vector<16x128xf32>
    %cst_148 = arith.constant 9.99999974E-6 : f32
    %409 = vector.broadcast %cst_148 : f32 to vector<16x1xf32>
    %410 = arith.addf %406, %409 : vector<16x1xf32>
    %411 = math.rsqrt %410 : vector<16x1xf32>
    %412 = vector.broadcast %411 : vector<16x1xf32> to vector<16x128xf32>
    %413 = arith.mulf %408, %412 : vector<16x128xf32>
    %414 = vector.broadcast %393 : vector<1x128xf32> to vector<16x128xf32>
    %415 = arith.mulf %413, %414 : vector<16x128xf32>
    %416 = vector.broadcast %395 : vector<1x128xf32> to vector<16x128xf32>
    %417 = arith.addf %415, %416 : vector<16x128xf32>
    %418 = arith.truncf %417 : vector<16x128xf32> to vector<16x128xbf16>
    %c1_149 = arith.constant 1 : index
    %c0_150 = arith.constant 0 : index
    %c0_151 = arith.constant 0 : index
    %419 = vector.load %arg8[%c1_149, %c0_150, %c0_151] : memref<4x128x512xbf16, #tpu.memory_space<vmem>>, vector<1x128x512xbf16>
    %420 = vector.shape_cast %419 : vector<1x128x512xbf16> to vector<128x512xbf16>
    %cst_152 = arith.constant dense<0.000000e+00> : vector<16x512xf32>
    %421 = tpu.matmul %418, %420, %cst_152 {dimension_numbers = #tpu.dot_dimension_numbers<[1], [0], [0], [1], [0, 0, 1, 1], [], []>} : vector<16x128xbf16>, vector<128x512xbf16>, vector<16x512xf32> -> vector<16x512xf32>
    %c1_153 = arith.constant 1 : index
    %c0_154 = arith.constant 0 : index
    %c0_155 = arith.constant 0 : index
    %422 = vector.load %arg9[%c1_153, %c0_154, %c0_155] : memref<4x1x512xf32, #tpu.memory_space<vmem>>, vector<1x1x512xf32>
    %423 = vector.shape_cast %422 : vector<1x1x512xf32> to vector<1x512xf32>
    %424 = vector.broadcast %423 : vector<1x512xf32> to vector<16x512xf32>
    %425 = arith.addf %421, %424 : vector<16x512xf32>
    %cst_156 = arith.constant 5.000000e-01 : f32
    %426 = vector.broadcast %cst_156 : f32 to vector<16x512xf32>
    %427 = arith.mulf %426, %425 : vector<16x512xf32>
    %cst_157 = arith.constant 0.707106769 : f32
    %428 = vector.broadcast %cst_157 : f32 to vector<16x512xf32>
    %429 = arith.mulf %425, %428 : vector<16x512xf32>
    %430 = math.absf %429 : vector<16x512xf32>
    %cst_158 = arith.constant 0.327591091 : f32
    %431 = vector.broadcast %cst_158 : f32 to vector<16x512xf32>
    %432 = arith.mulf %431, %430 : vector<16x512xf32>
    %cst_159 = arith.constant 1.000000e+00 : f32
    %433 = vector.broadcast %cst_159 : f32 to vector<16x512xf32>
    %434 = arith.addf %433, %432 : vector<16x512xf32>
    %cst_160 = arith.constant 1.000000e+00 : f32
    %435 = vector.broadcast %cst_160 : f32 to vector<16x512xf32>
    %436 = arith.divf %435, %434 : vector<16x512xf32>
    %cst_161 = arith.constant 1.06140542 : f32
    %437 = vector.broadcast %cst_161 : f32 to vector<16x512xf32>
    %438 = arith.mulf %437, %436 : vector<16x512xf32>
    %cst_162 = arith.constant 1.45315206 : f32
    %439 = vector.broadcast %cst_162 : f32 to vector<16x512xf32>
    %440 = arith.subf %438, %439 : vector<16x512xf32>
    %441 = arith.mulf %440, %436 : vector<16x512xf32>
    %cst_163 = arith.constant 1.42141378 : f32
    %442 = vector.broadcast %cst_163 : f32 to vector<16x512xf32>
    %443 = arith.addf %441, %442 : vector<16x512xf32>
    %444 = arith.mulf %443, %436 : vector<16x512xf32>
    %cst_164 = arith.constant 0.284496725 : f32
    %445 = vector.broadcast %cst_164 : f32 to vector<16x512xf32>
    %446 = arith.subf %444, %445 : vector<16x512xf32>
    %447 = arith.mulf %446, %436 : vector<16x512xf32>
    %cst_165 = arith.constant 0.254829586 : f32
    %448 = vector.broadcast %cst_165 : f32 to vector<16x512xf32>
    %449 = arith.addf %447, %448 : vector<16x512xf32>
    %450 = arith.mulf %449, %436 : vector<16x512xf32>
    %cst_166 = arith.constant 0.000000e+00 : f32
    %451 = vector.broadcast %cst_166 : f32 to vector<16x512xf32>
    %452 = arith.subf %451, %430 : vector<16x512xf32>
    %453 = arith.mulf %452, %430 : vector<16x512xf32>
    %454 = math.exp %453 : vector<16x512xf32>
    %455 = arith.mulf %450, %454 : vector<16x512xf32>
    %cst_167 = arith.constant 1.000000e+00 : f32
    %456 = vector.broadcast %cst_167 : f32 to vector<16x512xf32>
    %457 = arith.subf %456, %455 : vector<16x512xf32>
    %cst_168 = arith.constant 0.000000e+00 : f32
    %458 = vector.broadcast %cst_168 : f32 to vector<16x512xf32>
    %459 = arith.cmpf oge, %429, %458 : vector<16x512xf32>
    %cst_169 = arith.constant 0.000000e+00 : f32
    %460 = vector.broadcast %cst_169 : f32 to vector<16x512xf32>
    %461 = arith.subf %460, %457 : vector<16x512xf32>
    %462 = arith.select %459, %457, %461 : vector<16x512xi1>, vector<16x512xf32>
    %cst_170 = arith.constant 1.000000e+00 : f32
    %463 = vector.broadcast %cst_170 : f32 to vector<16x512xf32>
    %464 = arith.addf %463, %462 : vector<16x512xf32>
    %465 = arith.mulf %427, %464 : vector<16x512xf32>
    %466 = arith.truncf %465 : vector<16x512xf32> to vector<16x512xbf16>
    %c1_171 = arith.constant 1 : index
    %c0_172 = arith.constant 0 : index
    %c0_173 = arith.constant 0 : index
    %467 = vector.load %arg10[%c1_171, %c0_172, %c0_173] : memref<4x512x128xbf16, #tpu.memory_space<vmem>>, vector<1x512x128xbf16>
    %468 = vector.shape_cast %467 : vector<1x512x128xbf16> to vector<512x128xbf16>
    %cst_174 = arith.constant dense<0.000000e+00> : vector<16x128xf32>
    %469 = tpu.matmul %466, %468, %cst_174 {dimension_numbers = #tpu.dot_dimension_numbers<[1], [0], [0], [1], [0, 0, 1, 1], [], []>} : vector<16x512xbf16>, vector<512x128xbf16>, vector<16x128xf32> -> vector<16x128xf32>
    %c1_175 = arith.constant 1 : index
    %c0_176 = arith.constant 0 : index
    %c0_177 = arith.constant 0 : index
    %470 = vector.load %arg11[%c1_175, %c0_176, %c0_177] : memref<4x1x128xf32, #tpu.memory_space<vmem>>, vector<1x1x128xf32>
    %471 = vector.shape_cast %470 : vector<1x1x128xf32> to vector<1x128xf32>
    %472 = vector.broadcast %471 : vector<1x128xf32> to vector<16x128xf32>
    %473 = arith.addf %469, %472 : vector<16x128xf32>
    %474 = arith.addf %417, %473 : vector<16x128xf32>
    %c1_178 = arith.constant 1 : index
    %c0_179 = arith.constant 0 : index
    %c0_180 = arith.constant 0 : index
    %475 = vector.load %arg12[%c1_178, %c0_179, %c0_180] : memref<4x1x128xf32, #tpu.memory_space<vmem>>, vector<1x1x128xf32>
    %476 = vector.shape_cast %475 : vector<1x1x128xf32> to vector<1x128xf32>
    %c1_181 = arith.constant 1 : index
    %c0_182 = arith.constant 0 : index
    %c0_183 = arith.constant 0 : index
    %477 = vector.load %arg13[%c1_181, %c0_182, %c0_183] : memref<4x1x128xf32, #tpu.memory_space<vmem>>, vector<1x1x128xf32>
    %478 = vector.shape_cast %477 : vector<1x1x128xf32> to vector<1x128xf32>
    %cst_184 = arith.constant dense<0.000000e+00> : vector<16xf32>
    %479 = vector.multi_reduction <add>, %474, %cst_184 [1] : vector<16x128xf32> to vector<16xf32>
    %480 = vector.shape_cast %479 : vector<16xf32> to vector<16x1xf32>
    %cst_185 = arith.constant 1.280000e+02 : f32
    %481 = vector.broadcast %cst_185 : f32 to vector<16x1xf32>
    %482 = arith.divf %480, %481 : vector<16x1xf32>
    %483 = vector.broadcast %482 : vector<16x1xf32> to vector<16x128xf32>
    %484 = arith.subf %474, %483 : vector<16x128xf32>
    %485 = arith.mulf %484, %484 : vector<16x128xf32>
    %cst_186 = arith.constant dense<0.000000e+00> : vector<16xf32>
    %486 = vector.multi_reduction <add>, %485, %cst_186 [1] : vector<16x128xf32> to vector<16xf32>
    %487 = vector.shape_cast %486 : vector<16xf32> to vector<16x1xf32>
    %cst_187 = arith.constant 1.280000e+02 : f32
    %488 = vector.broadcast %cst_187 : f32 to vector<16x1xf32>
    %489 = arith.divf %487, %488 : vector<16x1xf32>
    %490 = vector.broadcast %482 : vector<16x1xf32> to vector<16x128xf32>
    %491 = arith.subf %474, %490 : vector<16x128xf32>
    %cst_188 = arith.constant 9.99999974E-6 : f32
    %492 = vector.broadcast %cst_188 : f32 to vector<16x1xf32>
    %493 = arith.addf %489, %492 : vector<16x1xf32>
    %494 = math.rsqrt %493 : vector<16x1xf32>
    %495 = vector.broadcast %494 : vector<16x1xf32> to vector<16x128xf32>
    %496 = arith.mulf %491, %495 : vector<16x128xf32>
    %497 = vector.broadcast %476 : vector<1x128xf32> to vector<16x128xf32>
    %498 = arith.mulf %496, %497 : vector<16x128xf32>
    %499 = vector.broadcast %478 : vector<1x128xf32> to vector<16x128xf32>
    %500 = arith.addf %498, %499 : vector<16x128xf32>
    %501 = arith.truncf %500 : vector<16x128xf32> to vector<16x128xbf16>
    %c2 = arith.constant 2 : index
    %c0_189 = arith.constant 0 : index
    %c0_190 = arith.constant 0 : index
    %502 = vector.load %arg2[%c2, %c0_189, %c0_190] : memref<4x128x384xbf16, #tpu.memory_space<vmem>>, vector<1x128x384xbf16>
    %503 = vector.shape_cast %502 : vector<1x128x384xbf16> to vector<128x384xbf16>
    %cst_191 = arith.constant dense<0.000000e+00> : vector<16x384xf32>
    %504 = tpu.matmul %501, %503, %cst_191 {dimension_numbers = #tpu.dot_dimension_numbers<[1], [0], [0], [1], [0, 0, 1, 1], [], []>} : vector<16x128xbf16>, vector<128x384xbf16>, vector<16x384xf32> -> vector<16x384xf32>
    %c2_192 = arith.constant 2 : index
    %c0_193 = arith.constant 0 : index
    %c0_194 = arith.constant 0 : index
    %505 = vector.load %arg3[%c2_192, %c0_193, %c0_194] : memref<4x1x384xf32, #tpu.memory_space<vmem>>, vector<1x1x384xf32>
    %506 = vector.shape_cast %505 : vector<1x1x384xf32> to vector<1x384xf32>
    %507 = vector.broadcast %506 : vector<1x384xf32> to vector<16x384xf32>
    %508 = arith.addf %504, %507 : vector<16x384xf32>
    %509 = vector.shape_cast %508 : vector<16x384xf32> to vector<1x16x384xf32>
    %c2_195 = arith.constant 2 : index
    %c0_196 = arith.constant 0 : index
    %c0_197 = arith.constant 0 : index
    %510 = vector.load %arg4[%c2_195, %c0_196, %c0_197] : memref<4x128x128xbf16, #tpu.memory_space<vmem>>, vector<1x128x128xbf16>
    %511 = vector.shape_cast %510 : vector<1x128x128xbf16> to vector<128x128xbf16>
    %cst_198 = arith.constant 0.000000e+00 : f32
    %512 = vector.broadcast %cst_198 : f32 to vector<16x128xf32>
    %513 = vector.extract_strided_slice %509 {offsets = [0, 0, 0], sizes = [1, 16, 32], strides = [1, 1, 1]} : vector<1x16x384xf32> to vector<1x16x32xf32>
    %cst_199 = arith.constant 0.176776692 : f32
    %514 = vector.broadcast %cst_199 : f32 to vector<1x16x32xf32>
    %515 = arith.mulf %513, %514 : vector<1x16x32xf32>
    %516 = arith.truncf %515 : vector<1x16x32xf32> to vector<1x16x32xbf16>
    %517 = vector.extract_strided_slice %509 {offsets = [0, 0, 128], sizes = [1, 16, 32], strides = [1, 1, 1]} : vector<1x16x384xf32> to vector<1x16x32xf32>
    %518 = arith.truncf %517 : vector<1x16x32xf32> to vector<1x16x32xbf16>
    %519 = vector.extract_strided_slice %509 {offsets = [0, 0, 256], sizes = [1, 16, 32], strides = [1, 1, 1]} : vector<1x16x384xf32> to vector<1x16x32xf32>
    %520 = arith.truncf %519 : vector<1x16x32xf32> to vector<1x16x32xbf16>
    "tpu.trace_start"() <{level = 10 : i32, message = "bqd,bkd->bqk"}> : () -> ()
    %cst_200 = arith.constant dense<0.000000e+00> : vector<1x16x16xf32>
    %521 = tpu.matmul %516, %518, %cst_200 {dimension_numbers = #tpu.dot_dimension_numbers<[2], [2], [1], [1], [0, 0, 0, 1, 1, 1], [0], [0]>} : vector<1x16x32xbf16>, vector<1x16x32xbf16>, vector<1x16x16xf32> -> vector<1x16x16xf32>
    "tpu.trace_stop"() : () -> ()
    %522 = vector.shape_cast %5 : vector<1x16xf32> to vector<1x1x16xf32>
    %523 = vector.broadcast %522 : vector<1x1x16xf32> to vector<1x16x16xf32>
    %524 = arith.addf %521, %523 : vector<1x16x16xf32>
    %cst_201 = arith.constant dense<0xFF800000> : vector<1x16xf32>
    %525 = vector.multi_reduction <maximumf>, %524, %cst_201 [2] : vector<1x16x16xf32> to vector<1x16xf32>
    %526 = vector.shape_cast %525 : vector<1x16xf32> to vector<1x16x1xf32>
    %527 = vector.broadcast %526 : vector<1x16x1xf32> to vector<1x16x16xf32>
    %528 = arith.subf %524, %527 : vector<1x16x16xf32>
    %529 = math.exp %528 : vector<1x16x16xf32>
    %cst_202 = arith.constant dense<0.000000e+00> : vector<1x16xf32>
    %530 = vector.multi_reduction <add>, %529, %cst_202 [2] : vector<1x16x16xf32> to vector<1x16xf32>
    %531 = vector.shape_cast %530 : vector<1x16xf32> to vector<1x16x1xf32>
    %cst_203 = arith.constant 1.000000e+00 : f32
    %532 = vector.broadcast %cst_203 : f32 to vector<1x16x1xf32>
    %533 = arith.divf %532, %531 : vector<1x16x1xf32>
    %534 = vector.broadcast %533 : vector<1x16x1xf32> to vector<1x16x16xf32>
    %535 = arith.mulf %529, %534 : vector<1x16x16xf32>
    %536 = arith.truncf %535 : vector<1x16x16xf32> to vector<1x16x16xbf16>
    "tpu.trace_start"() <{level = 10 : i32, message = "bqk,bkd->bqd"}> : () -> ()
    %cst_204 = arith.constant dense<0.000000e+00> : vector<1x16x32xf32>
    %537 = tpu.matmul %536, %520, %cst_204 {dimension_numbers = #tpu.dot_dimension_numbers<[2], [1], [1], [2], [0, 0, 0, 1, 1, 2], [0], [0]>} : vector<1x16x16xbf16>, vector<1x16x32xbf16>, vector<1x16x32xf32> -> vector<1x16x32xf32>
    "tpu.trace_stop"() : () -> ()
    %538 = vector.shape_cast %537 : vector<1x16x32xf32> to vector<16x32xf32>
    %539 = arith.truncf %538 : vector<16x32xf32> to vector<16x32xbf16>
    %540 = vector.extract_strided_slice %511 {offsets = [0, 0], sizes = [32, 128], strides = [1, 1]} : vector<128x128xbf16> to vector<32x128xbf16>
    %cst_205 = arith.constant dense<0.000000e+00> : vector<16x128xf32>
    %541 = tpu.matmul %539, %540, %cst_205 {dimension_numbers = #tpu.dot_dimension_numbers<[1], [0], [0], [1], [0, 0, 1, 1], [], []>} : vector<16x32xbf16>, vector<32x128xbf16>, vector<16x128xf32> -> vector<16x128xf32>
    %542 = arith.addf %512, %541 : vector<16x128xf32>
    %543 = vector.extract_strided_slice %509 {offsets = [0, 0, 32], sizes = [1, 16, 32], strides = [1, 1, 1]} : vector<1x16x384xf32> to vector<1x16x32xf32>
    %cst_206 = arith.constant 0.176776692 : f32
    %544 = vector.broadcast %cst_206 : f32 to vector<1x16x32xf32>
    %545 = arith.mulf %543, %544 : vector<1x16x32xf32>
    %546 = arith.truncf %545 : vector<1x16x32xf32> to vector<1x16x32xbf16>
    %547 = vector.extract_strided_slice %509 {offsets = [0, 0, 160], sizes = [1, 16, 32], strides = [1, 1, 1]} : vector<1x16x384xf32> to vector<1x16x32xf32>
    %548 = arith.truncf %547 : vector<1x16x32xf32> to vector<1x16x32xbf16>
    %549 = vector.extract_strided_slice %509 {offsets = [0, 0, 288], sizes = [1, 16, 32], strides = [1, 1, 1]} : vector<1x16x384xf32> to vector<1x16x32xf32>
    %550 = arith.truncf %549 : vector<1x16x32xf32> to vector<1x16x32xbf16>
    "tpu.trace_start"() <{level = 10 : i32, message = "bqd,bkd->bqk"}> : () -> ()
    %cst_207 = arith.constant dense<0.000000e+00> : vector<1x16x16xf32>
    %551 = tpu.matmul %546, %548, %cst_207 {dimension_numbers = #tpu.dot_dimension_numbers<[2], [2], [1], [1], [0, 0, 0, 1, 1, 1], [0], [0]>} : vector<1x16x32xbf16>, vector<1x16x32xbf16>, vector<1x16x16xf32> -> vector<1x16x16xf32>
    "tpu.trace_stop"() : () -> ()
    %552 = vector.shape_cast %5 : vector<1x16xf32> to vector<1x1x16xf32>
    %553 = vector.broadcast %552 : vector<1x1x16xf32> to vector<1x16x16xf32>
    %554 = arith.addf %551, %553 : vector<1x16x16xf32>
    %cst_208 = arith.constant dense<0xFF800000> : vector<1x16xf32>
    %555 = vector.multi_reduction <maximumf>, %554, %cst_208 [2] : vector<1x16x16xf32> to vector<1x16xf32>
    %556 = vector.shape_cast %555 : vector<1x16xf32> to vector<1x16x1xf32>
    %557 = vector.broadcast %556 : vector<1x16x1xf32> to vector<1x16x16xf32>
    %558 = arith.subf %554, %557 : vector<1x16x16xf32>
    %559 = math.exp %558 : vector<1x16x16xf32>
    %cst_209 = arith.constant dense<0.000000e+00> : vector<1x16xf32>
    %560 = vector.multi_reduction <add>, %559, %cst_209 [2] : vector<1x16x16xf32> to vector<1x16xf32>
    %561 = vector.shape_cast %560 : vector<1x16xf32> to vector<1x16x1xf32>
    %cst_210 = arith.constant 1.000000e+00 : f32
    %562 = vector.broadcast %cst_210 : f32 to vector<1x16x1xf32>
    %563 = arith.divf %562, %561 : vector<1x16x1xf32>
    %564 = vector.broadcast %563 : vector<1x16x1xf32> to vector<1x16x16xf32>
    %565 = arith.mulf %559, %564 : vector<1x16x16xf32>
    %566 = arith.truncf %565 : vector<1x16x16xf32> to vector<1x16x16xbf16>
    "tpu.trace_start"() <{level = 10 : i32, message = "bqk,bkd->bqd"}> : () -> ()
    %cst_211 = arith.constant dense<0.000000e+00> : vector<1x16x32xf32>
    %567 = tpu.matmul %566, %550, %cst_211 {dimension_numbers = #tpu.dot_dimension_numbers<[2], [1], [1], [2], [0, 0, 0, 1, 1, 2], [0], [0]>} : vector<1x16x16xbf16>, vector<1x16x32xbf16>, vector<1x16x32xf32> -> vector<1x16x32xf32>
    "tpu.trace_stop"() : () -> ()
    %568 = vector.shape_cast %567 : vector<1x16x32xf32> to vector<16x32xf32>
    %569 = arith.truncf %568 : vector<16x32xf32> to vector<16x32xbf16>
    %570 = vector.extract_strided_slice %511 {offsets = [32, 0], sizes = [32, 128], strides = [1, 1]} : vector<128x128xbf16> to vector<32x128xbf16>
    %cst_212 = arith.constant dense<0.000000e+00> : vector<16x128xf32>
    %571 = tpu.matmul %569, %570, %cst_212 {dimension_numbers = #tpu.dot_dimension_numbers<[1], [0], [0], [1], [0, 0, 1, 1], [], []>} : vector<16x32xbf16>, vector<32x128xbf16>, vector<16x128xf32> -> vector<16x128xf32>
    %572 = arith.addf %542, %571 : vector<16x128xf32>
    %573 = vector.extract_strided_slice %509 {offsets = [0, 0, 64], sizes = [1, 16, 32], strides = [1, 1, 1]} : vector<1x16x384xf32> to vector<1x16x32xf32>
    %cst_213 = arith.constant 0.176776692 : f32
    %574 = vector.broadcast %cst_213 : f32 to vector<1x16x32xf32>
    %575 = arith.mulf %573, %574 : vector<1x16x32xf32>
    %576 = arith.truncf %575 : vector<1x16x32xf32> to vector<1x16x32xbf16>
    %577 = vector.extract_strided_slice %509 {offsets = [0, 0, 192], sizes = [1, 16, 32], strides = [1, 1, 1]} : vector<1x16x384xf32> to vector<1x16x32xf32>
    %578 = arith.truncf %577 : vector<1x16x32xf32> to vector<1x16x32xbf16>
    %579 = vector.extract_strided_slice %509 {offsets = [0, 0, 320], sizes = [1, 16, 32], strides = [1, 1, 1]} : vector<1x16x384xf32> to vector<1x16x32xf32>
    %580 = arith.truncf %579 : vector<1x16x32xf32> to vector<1x16x32xbf16>
    "tpu.trace_start"() <{level = 10 : i32, message = "bqd,bkd->bqk"}> : () -> ()
    %cst_214 = arith.constant dense<0.000000e+00> : vector<1x16x16xf32>
    %581 = tpu.matmul %576, %578, %cst_214 {dimension_numbers = #tpu.dot_dimension_numbers<[2], [2], [1], [1], [0, 0, 0, 1, 1, 1], [0], [0]>} : vector<1x16x32xbf16>, vector<1x16x32xbf16>, vector<1x16x16xf32> -> vector<1x16x16xf32>
    "tpu.trace_stop"() : () -> ()
    %582 = vector.shape_cast %5 : vector<1x16xf32> to vector<1x1x16xf32>
    %583 = vector.broadcast %582 : vector<1x1x16xf32> to vector<1x16x16xf32>
    %584 = arith.addf %581, %583 : vector<1x16x16xf32>
    %cst_215 = arith.constant dense<0xFF800000> : vector<1x16xf32>
    %585 = vector.multi_reduction <maximumf>, %584, %cst_215 [2] : vector<1x16x16xf32> to vector<1x16xf32>
    %586 = vector.shape_cast %585 : vector<1x16xf32> to vector<1x16x1xf32>
    %587 = vector.broadcast %586 : vector<1x16x1xf32> to vector<1x16x16xf32>
    %588 = arith.subf %584, %587 : vector<1x16x16xf32>
    %589 = math.exp %588 : vector<1x16x16xf32>
    %cst_216 = arith.constant dense<0.000000e+00> : vector<1x16xf32>
    %590 = vector.multi_reduction <add>, %589, %cst_216 [2] : vector<1x16x16xf32> to vector<1x16xf32>
    %591 = vector.shape_cast %590 : vector<1x16xf32> to vector<1x16x1xf32>
    %cst_217 = arith.constant 1.000000e+00 : f32
    %592 = vector.broadcast %cst_217 : f32 to vector<1x16x1xf32>
    %593 = arith.divf %592, %591 : vector<1x16x1xf32>
    %594 = vector.broadcast %593 : vector<1x16x1xf32> to vector<1x16x16xf32>
    %595 = arith.mulf %589, %594 : vector<1x16x16xf32>
    %596 = arith.truncf %595 : vector<1x16x16xf32> to vector<1x16x16xbf16>
    "tpu.trace_start"() <{level = 10 : i32, message = "bqk,bkd->bqd"}> : () -> ()
    %cst_218 = arith.constant dense<0.000000e+00> : vector<1x16x32xf32>
    %597 = tpu.matmul %596, %580, %cst_218 {dimension_numbers = #tpu.dot_dimension_numbers<[2], [1], [1], [2], [0, 0, 0, 1, 1, 2], [0], [0]>} : vector<1x16x16xbf16>, vector<1x16x32xbf16>, vector<1x16x32xf32> -> vector<1x16x32xf32>
    "tpu.trace_stop"() : () -> ()
    %598 = vector.shape_cast %597 : vector<1x16x32xf32> to vector<16x32xf32>
    %599 = arith.truncf %598 : vector<16x32xf32> to vector<16x32xbf16>
    %600 = vector.extract_strided_slice %511 {offsets = [64, 0], sizes = [32, 128], strides = [1, 1]} : vector<128x128xbf16> to vector<32x128xbf16>
    %cst_219 = arith.constant dense<0.000000e+00> : vector<16x128xf32>
    %601 = tpu.matmul %599, %600, %cst_219 {dimension_numbers = #tpu.dot_dimension_numbers<[1], [0], [0], [1], [0, 0, 1, 1], [], []>} : vector<16x32xbf16>, vector<32x128xbf16>, vector<16x128xf32> -> vector<16x128xf32>
    %602 = arith.addf %572, %601 : vector<16x128xf32>
    %603 = vector.extract_strided_slice %509 {offsets = [0, 0, 96], sizes = [1, 16, 32], strides = [1, 1, 1]} : vector<1x16x384xf32> to vector<1x16x32xf32>
    %cst_220 = arith.constant 0.176776692 : f32
    %604 = vector.broadcast %cst_220 : f32 to vector<1x16x32xf32>
    %605 = arith.mulf %603, %604 : vector<1x16x32xf32>
    %606 = arith.truncf %605 : vector<1x16x32xf32> to vector<1x16x32xbf16>
    %607 = vector.extract_strided_slice %509 {offsets = [0, 0, 224], sizes = [1, 16, 32], strides = [1, 1, 1]} : vector<1x16x384xf32> to vector<1x16x32xf32>
    %608 = arith.truncf %607 : vector<1x16x32xf32> to vector<1x16x32xbf16>
    %609 = vector.extract_strided_slice %509 {offsets = [0, 0, 352], sizes = [1, 16, 32], strides = [1, 1, 1]} : vector<1x16x384xf32> to vector<1x16x32xf32>
    %610 = arith.truncf %609 : vector<1x16x32xf32> to vector<1x16x32xbf16>
    "tpu.trace_start"() <{level = 10 : i32, message = "bqd,bkd->bqk"}> : () -> ()
    %cst_221 = arith.constant dense<0.000000e+00> : vector<1x16x16xf32>
    %611 = tpu.matmul %606, %608, %cst_221 {dimension_numbers = #tpu.dot_dimension_numbers<[2], [2], [1], [1], [0, 0, 0, 1, 1, 1], [0], [0]>} : vector<1x16x32xbf16>, vector<1x16x32xbf16>, vector<1x16x16xf32> -> vector<1x16x16xf32>
    "tpu.trace_stop"() : () -> ()
    %612 = vector.shape_cast %5 : vector<1x16xf32> to vector<1x1x16xf32>
    %613 = vector.broadcast %612 : vector<1x1x16xf32> to vector<1x16x16xf32>
    %614 = arith.addf %611, %613 : vector<1x16x16xf32>
    %cst_222 = arith.constant dense<0xFF800000> : vector<1x16xf32>
    %615 = vector.multi_reduction <maximumf>, %614, %cst_222 [2] : vector<1x16x16xf32> to vector<1x16xf32>
    %616 = vector.shape_cast %615 : vector<1x16xf32> to vector<1x16x1xf32>
    %617 = vector.broadcast %616 : vector<1x16x1xf32> to vector<1x16x16xf32>
    %618 = arith.subf %614, %617 : vector<1x16x16xf32>
    %619 = math.exp %618 : vector<1x16x16xf32>
    %cst_223 = arith.constant dense<0.000000e+00> : vector<1x16xf32>
    %620 = vector.multi_reduction <add>, %619, %cst_223 [2] : vector<1x16x16xf32> to vector<1x16xf32>
    %621 = vector.shape_cast %620 : vector<1x16xf32> to vector<1x16x1xf32>
    %cst_224 = arith.constant 1.000000e+00 : f32
    %622 = vector.broadcast %cst_224 : f32 to vector<1x16x1xf32>
    %623 = arith.divf %622, %621 : vector<1x16x1xf32>
    %624 = vector.broadcast %623 : vector<1x16x1xf32> to vector<1x16x16xf32>
    %625 = arith.mulf %619, %624 : vector<1x16x16xf32>
    %626 = arith.truncf %625 : vector<1x16x16xf32> to vector<1x16x16xbf16>
    "tpu.trace_start"() <{level = 10 : i32, message = "bqk,bkd->bqd"}> : () -> ()
    %cst_225 = arith.constant dense<0.000000e+00> : vector<1x16x32xf32>
    %627 = tpu.matmul %626, %610, %cst_225 {dimension_numbers = #tpu.dot_dimension_numbers<[2], [1], [1], [2], [0, 0, 0, 1, 1, 2], [0], [0]>} : vector<1x16x16xbf16>, vector<1x16x32xbf16>, vector<1x16x32xf32> -> vector<1x16x32xf32>
    "tpu.trace_stop"() : () -> ()
    %628 = vector.shape_cast %627 : vector<1x16x32xf32> to vector<16x32xf32>
    %629 = arith.truncf %628 : vector<16x32xf32> to vector<16x32xbf16>
    %630 = vector.extract_strided_slice %511 {offsets = [96, 0], sizes = [32, 128], strides = [1, 1]} : vector<128x128xbf16> to vector<32x128xbf16>
    %cst_226 = arith.constant dense<0.000000e+00> : vector<16x128xf32>
    %631 = tpu.matmul %629, %630, %cst_226 {dimension_numbers = #tpu.dot_dimension_numbers<[1], [0], [0], [1], [0, 0, 1, 1], [], []>} : vector<16x32xbf16>, vector<32x128xbf16>, vector<16x128xf32> -> vector<16x128xf32>
    %632 = arith.addf %602, %631 : vector<16x128xf32>
    %c2_227 = arith.constant 2 : index
    %c0_228 = arith.constant 0 : index
    %c0_229 = arith.constant 0 : index
    %633 = vector.load %arg5[%c2_227, %c0_228, %c0_229] : memref<4x1x128xf32, #tpu.memory_space<vmem>>, vector<1x1x128xf32>
    %634 = vector.shape_cast %633 : vector<1x1x128xf32> to vector<1x128xf32>
    %635 = vector.broadcast %634 : vector<1x128xf32> to vector<16x128xf32>
    %636 = arith.addf %632, %635 : vector<16x128xf32>
    %637 = arith.addf %500, %636 : vector<16x128xf32>
    %c2_230 = arith.constant 2 : index
    %c0_231 = arith.constant 0 : index
    %c0_232 = arith.constant 0 : index
    %638 = vector.load %arg6[%c2_230, %c0_231, %c0_232] : memref<4x1x128xf32, #tpu.memory_space<vmem>>, vector<1x1x128xf32>
    %639 = vector.shape_cast %638 : vector<1x1x128xf32> to vector<1x128xf32>
    %c2_233 = arith.constant 2 : index
    %c0_234 = arith.constant 0 : index
    %c0_235 = arith.constant 0 : index
    %640 = vector.load %arg7[%c2_233, %c0_234, %c0_235] : memref<4x1x128xf32, #tpu.memory_space<vmem>>, vector<1x1x128xf32>
    %641 = vector.shape_cast %640 : vector<1x1x128xf32> to vector<1x128xf32>
    %cst_236 = arith.constant dense<0.000000e+00> : vector<16xf32>
    %642 = vector.multi_reduction <add>, %637, %cst_236 [1] : vector<16x128xf32> to vector<16xf32>
    %643 = vector.shape_cast %642 : vector<16xf32> to vector<16x1xf32>
    %cst_237 = arith.constant 1.280000e+02 : f32
    %644 = vector.broadcast %cst_237 : f32 to vector<16x1xf32>
    %645 = arith.divf %643, %644 : vector<16x1xf32>
    %646 = vector.broadcast %645 : vector<16x1xf32> to vector<16x128xf32>
    %647 = arith.subf %637, %646 : vector<16x128xf32>
    %648 = arith.mulf %647, %647 : vector<16x128xf32>
    %cst_238 = arith.constant dense<0.000000e+00> : vector<16xf32>
    %649 = vector.multi_reduction <add>, %648, %cst_238 [1] : vector<16x128xf32> to vector<16xf32>
    %650 = vector.shape_cast %649 : vector<16xf32> to vector<16x1xf32>
    %cst_239 = arith.constant 1.280000e+02 : f32
    %651 = vector.broadcast %cst_239 : f32 to vector<16x1xf32>
    %652 = arith.divf %650, %651 : vector<16x1xf32>
    %653 = vector.broadcast %645 : vector<16x1xf32> to vector<16x128xf32>
    %654 = arith.subf %637, %653 : vector<16x128xf32>
    %cst_240 = arith.constant 9.99999974E-6 : f32
    %655 = vector.broadcast %cst_240 : f32 to vector<16x1xf32>
    %656 = arith.addf %652, %655 : vector<16x1xf32>
    %657 = math.rsqrt %656 : vector<16x1xf32>
    %658 = vector.broadcast %657 : vector<16x1xf32> to vector<16x128xf32>
    %659 = arith.mulf %654, %658 : vector<16x128xf32>
    %660 = vector.broadcast %639 : vector<1x128xf32> to vector<16x128xf32>
    %661 = arith.mulf %659, %660 : vector<16x128xf32>
    %662 = vector.broadcast %641 : vector<1x128xf32> to vector<16x128xf32>
    %663 = arith.addf %661, %662 : vector<16x128xf32>
    %664 = arith.truncf %663 : vector<16x128xf32> to vector<16x128xbf16>
    %c2_241 = arith.constant 2 : index
    %c0_242 = arith.constant 0 : index
    %c0_243 = arith.constant 0 : index
    %665 = vector.load %arg8[%c2_241, %c0_242, %c0_243] : memref<4x128x512xbf16, #tpu.memory_space<vmem>>, vector<1x128x512xbf16>
    %666 = vector.shape_cast %665 : vector<1x128x512xbf16> to vector<128x512xbf16>
    %cst_244 = arith.constant dense<0.000000e+00> : vector<16x512xf32>
    %667 = tpu.matmul %664, %666, %cst_244 {dimension_numbers = #tpu.dot_dimension_numbers<[1], [0], [0], [1], [0, 0, 1, 1], [], []>} : vector<16x128xbf16>, vector<128x512xbf16>, vector<16x512xf32> -> vector<16x512xf32>
    %c2_245 = arith.constant 2 : index
    %c0_246 = arith.constant 0 : index
    %c0_247 = arith.constant 0 : index
    %668 = vector.load %arg9[%c2_245, %c0_246, %c0_247] : memref<4x1x512xf32, #tpu.memory_space<vmem>>, vector<1x1x512xf32>
    %669 = vector.shape_cast %668 : vector<1x1x512xf32> to vector<1x512xf32>
    %670 = vector.broadcast %669 : vector<1x512xf32> to vector<16x512xf32>
    %671 = arith.addf %667, %670 : vector<16x512xf32>
    %cst_248 = arith.constant 5.000000e-01 : f32
    %672 = vector.broadcast %cst_248 : f32 to vector<16x512xf32>
    %673 = arith.mulf %672, %671 : vector<16x512xf32>
    %cst_249 = arith.constant 0.707106769 : f32
    %674 = vector.broadcast %cst_249 : f32 to vector<16x512xf32>
    %675 = arith.mulf %671, %674 : vector<16x512xf32>
    %676 = math.absf %675 : vector<16x512xf32>
    %cst_250 = arith.constant 0.327591091 : f32
    %677 = vector.broadcast %cst_250 : f32 to vector<16x512xf32>
    %678 = arith.mulf %677, %676 : vector<16x512xf32>
    %cst_251 = arith.constant 1.000000e+00 : f32
    %679 = vector.broadcast %cst_251 : f32 to vector<16x512xf32>
    %680 = arith.addf %679, %678 : vector<16x512xf32>
    %cst_252 = arith.constant 1.000000e+00 : f32
    %681 = vector.broadcast %cst_252 : f32 to vector<16x512xf32>
    %682 = arith.divf %681, %680 : vector<16x512xf32>
    %cst_253 = arith.constant 1.06140542 : f32
    %683 = vector.broadcast %cst_253 : f32 to vector<16x512xf32>
    %684 = arith.mulf %683, %682 : vector<16x512xf32>
    %cst_254 = arith.constant 1.45315206 : f32
    %685 = vector.broadcast %cst_254 : f32 to vector<16x512xf32>
    %686 = arith.subf %684, %685 : vector<16x512xf32>
    %687 = arith.mulf %686, %682 : vector<16x512xf32>
    %cst_255 = arith.constant 1.42141378 : f32
    %688 = vector.broadcast %cst_255 : f32 to vector<16x512xf32>
    %689 = arith.addf %687, %688 : vector<16x512xf32>
    %690 = arith.mulf %689, %682 : vector<16x512xf32>
    %cst_256 = arith.constant 0.284496725 : f32
    %691 = vector.broadcast %cst_256 : f32 to vector<16x512xf32>
    %692 = arith.subf %690, %691 : vector<16x512xf32>
    %693 = arith.mulf %692, %682 : vector<16x512xf32>
    %cst_257 = arith.constant 0.254829586 : f32
    %694 = vector.broadcast %cst_257 : f32 to vector<16x512xf32>
    %695 = arith.addf %693, %694 : vector<16x512xf32>
    %696 = arith.mulf %695, %682 : vector<16x512xf32>
    %cst_258 = arith.constant 0.000000e+00 : f32
    %697 = vector.broadcast %cst_258 : f32 to vector<16x512xf32>
    %698 = arith.subf %697, %676 : vector<16x512xf32>
    %699 = arith.mulf %698, %676 : vector<16x512xf32>
    %700 = math.exp %699 : vector<16x512xf32>
    %701 = arith.mulf %696, %700 : vector<16x512xf32>
    %cst_259 = arith.constant 1.000000e+00 : f32
    %702 = vector.broadcast %cst_259 : f32 to vector<16x512xf32>
    %703 = arith.subf %702, %701 : vector<16x512xf32>
    %cst_260 = arith.constant 0.000000e+00 : f32
    %704 = vector.broadcast %cst_260 : f32 to vector<16x512xf32>
    %705 = arith.cmpf oge, %675, %704 : vector<16x512xf32>
    %cst_261 = arith.constant 0.000000e+00 : f32
    %706 = vector.broadcast %cst_261 : f32 to vector<16x512xf32>
    %707 = arith.subf %706, %703 : vector<16x512xf32>
    %708 = arith.select %705, %703, %707 : vector<16x512xi1>, vector<16x512xf32>
    %cst_262 = arith.constant 1.000000e+00 : f32
    %709 = vector.broadcast %cst_262 : f32 to vector<16x512xf32>
    %710 = arith.addf %709, %708 : vector<16x512xf32>
    %711 = arith.mulf %673, %710 : vector<16x512xf32>
    %712 = arith.truncf %711 : vector<16x512xf32> to vector<16x512xbf16>
    %c2_263 = arith.constant 2 : index
    %c0_264 = arith.constant 0 : index
    %c0_265 = arith.constant 0 : index
    %713 = vector.load %arg10[%c2_263, %c0_264, %c0_265] : memref<4x512x128xbf16, #tpu.memory_space<vmem>>, vector<1x512x128xbf16>
    %714 = vector.shape_cast %713 : vector<1x512x128xbf16> to vector<512x128xbf16>
    %cst_266 = arith.constant dense<0.000000e+00> : vector<16x128xf32>
    %715 = tpu.matmul %712, %714, %cst_266 {dimension_numbers = #tpu.dot_dimension_numbers<[1], [0], [0], [1], [0, 0, 1, 1], [], []>} : vector<16x512xbf16>, vector<512x128xbf16>, vector<16x128xf32> -> vector<16x128xf32>
    %c2_267 = arith.constant 2 : index
    %c0_268 = arith.constant 0 : index
    %c0_269 = arith.constant 0 : index
    %716 = vector.load %arg11[%c2_267, %c0_268, %c0_269] : memref<4x1x128xf32, #tpu.memory_space<vmem>>, vector<1x1x128xf32>
    %717 = vector.shape_cast %716 : vector<1x1x128xf32> to vector<1x128xf32>
    %718 = vector.broadcast %717 : vector<1x128xf32> to vector<16x128xf32>
    %719 = arith.addf %715, %718 : vector<16x128xf32>
    %720 = arith.addf %663, %719 : vector<16x128xf32>
    %c2_270 = arith.constant 2 : index
    %c0_271 = arith.constant 0 : index
    %c0_272 = arith.constant 0 : index
    %721 = vector.load %arg12[%c2_270, %c0_271, %c0_272] : memref<4x1x128xf32, #tpu.memory_space<vmem>>, vector<1x1x128xf32>
    %722 = vector.shape_cast %721 : vector<1x1x128xf32> to vector<1x128xf32>
    %c2_273 = arith.constant 2 : index
    %c0_274 = arith.constant 0 : index
    %c0_275 = arith.constant 0 : index
    %723 = vector.load %arg13[%c2_273, %c0_274, %c0_275] : memref<4x1x128xf32, #tpu.memory_space<vmem>>, vector<1x1x128xf32>
    %724 = vector.shape_cast %723 : vector<1x1x128xf32> to vector<1x128xf32>
    %cst_276 = arith.constant dense<0.000000e+00> : vector<16xf32>
    %725 = vector.multi_reduction <add>, %720, %cst_276 [1] : vector<16x128xf32> to vector<16xf32>
    %726 = vector.shape_cast %725 : vector<16xf32> to vector<16x1xf32>
    %cst_277 = arith.constant 1.280000e+02 : f32
    %727 = vector.broadcast %cst_277 : f32 to vector<16x1xf32>
    %728 = arith.divf %726, %727 : vector<16x1xf32>
    %729 = vector.broadcast %728 : vector<16x1xf32> to vector<16x128xf32>
    %730 = arith.subf %720, %729 : vector<16x128xf32>
    %731 = arith.mulf %730, %730 : vector<16x128xf32>
    %cst_278 = arith.constant dense<0.000000e+00> : vector<16xf32>
    %732 = vector.multi_reduction <add>, %731, %cst_278 [1] : vector<16x128xf32> to vector<16xf32>
    %733 = vector.shape_cast %732 : vector<16xf32> to vector<16x1xf32>
    %cst_279 = arith.constant 1.280000e+02 : f32
    %734 = vector.broadcast %cst_279 : f32 to vector<16x1xf32>
    %735 = arith.divf %733, %734 : vector<16x1xf32>
    %736 = vector.broadcast %728 : vector<16x1xf32> to vector<16x128xf32>
    %737 = arith.subf %720, %736 : vector<16x128xf32>
    %cst_280 = arith.constant 9.99999974E-6 : f32
    %738 = vector.broadcast %cst_280 : f32 to vector<16x1xf32>
    %739 = arith.addf %735, %738 : vector<16x1xf32>
    %740 = math.rsqrt %739 : vector<16x1xf32>
    %741 = vector.broadcast %740 : vector<16x1xf32> to vector<16x128xf32>
    %742 = arith.mulf %737, %741 : vector<16x128xf32>
    %743 = vector.broadcast %722 : vector<1x128xf32> to vector<16x128xf32>
    %744 = arith.mulf %742, %743 : vector<16x128xf32>
    %745 = vector.broadcast %724 : vector<1x128xf32> to vector<16x128xf32>
    %746 = arith.addf %744, %745 : vector<16x128xf32>
    %747 = arith.truncf %746 : vector<16x128xf32> to vector<16x128xbf16>
    %c3 = arith.constant 3 : index
    %c0_281 = arith.constant 0 : index
    %c0_282 = arith.constant 0 : index
    %748 = vector.load %arg2[%c3, %c0_281, %c0_282] : memref<4x128x384xbf16, #tpu.memory_space<vmem>>, vector<1x128x384xbf16>
    %749 = vector.shape_cast %748 : vector<1x128x384xbf16> to vector<128x384xbf16>
    %cst_283 = arith.constant dense<0.000000e+00> : vector<16x384xf32>
    %750 = tpu.matmul %747, %749, %cst_283 {dimension_numbers = #tpu.dot_dimension_numbers<[1], [0], [0], [1], [0, 0, 1, 1], [], []>} : vector<16x128xbf16>, vector<128x384xbf16>, vector<16x384xf32> -> vector<16x384xf32>
    %c3_284 = arith.constant 3 : index
    %c0_285 = arith.constant 0 : index
    %c0_286 = arith.constant 0 : index
    %751 = vector.load %arg3[%c3_284, %c0_285, %c0_286] : memref<4x1x384xf32, #tpu.memory_space<vmem>>, vector<1x1x384xf32>
    %752 = vector.shape_cast %751 : vector<1x1x384xf32> to vector<1x384xf32>
    %753 = vector.broadcast %752 : vector<1x384xf32> to vector<16x384xf32>
    %754 = arith.addf %750, %753 : vector<16x384xf32>
    %755 = vector.shape_cast %754 : vector<16x384xf32> to vector<1x16x384xf32>
    %c3_287 = arith.constant 3 : index
    %c0_288 = arith.constant 0 : index
    %c0_289 = arith.constant 0 : index
    %756 = vector.load %arg4[%c3_287, %c0_288, %c0_289] : memref<4x128x128xbf16, #tpu.memory_space<vmem>>, vector<1x128x128xbf16>
    %757 = vector.shape_cast %756 : vector<1x128x128xbf16> to vector<128x128xbf16>
    %cst_290 = arith.constant 0.000000e+00 : f32
    %758 = vector.broadcast %cst_290 : f32 to vector<16x128xf32>
    %759 = vector.extract_strided_slice %755 {offsets = [0, 0, 0], sizes = [1, 16, 32], strides = [1, 1, 1]} : vector<1x16x384xf32> to vector<1x16x32xf32>
    %cst_291 = arith.constant 0.176776692 : f32
    %760 = vector.broadcast %cst_291 : f32 to vector<1x16x32xf32>
    %761 = arith.mulf %759, %760 : vector<1x16x32xf32>
    %762 = arith.truncf %761 : vector<1x16x32xf32> to vector<1x16x32xbf16>
    %763 = vector.extract_strided_slice %755 {offsets = [0, 0, 128], sizes = [1, 16, 32], strides = [1, 1, 1]} : vector<1x16x384xf32> to vector<1x16x32xf32>
    %764 = arith.truncf %763 : vector<1x16x32xf32> to vector<1x16x32xbf16>
    %765 = vector.extract_strided_slice %755 {offsets = [0, 0, 256], sizes = [1, 16, 32], strides = [1, 1, 1]} : vector<1x16x384xf32> to vector<1x16x32xf32>
    %766 = arith.truncf %765 : vector<1x16x32xf32> to vector<1x16x32xbf16>
    "tpu.trace_start"() <{level = 10 : i32, message = "bqd,bkd->bqk"}> : () -> ()
    %cst_292 = arith.constant dense<0.000000e+00> : vector<1x16x16xf32>
    %767 = tpu.matmul %762, %764, %cst_292 {dimension_numbers = #tpu.dot_dimension_numbers<[2], [2], [1], [1], [0, 0, 0, 1, 1, 1], [0], [0]>} : vector<1x16x32xbf16>, vector<1x16x32xbf16>, vector<1x16x16xf32> -> vector<1x16x16xf32>
    "tpu.trace_stop"() : () -> ()
    %768 = vector.shape_cast %5 : vector<1x16xf32> to vector<1x1x16xf32>
    %769 = vector.broadcast %768 : vector<1x1x16xf32> to vector<1x16x16xf32>
    %770 = arith.addf %767, %769 : vector<1x16x16xf32>
    %cst_293 = arith.constant dense<0xFF800000> : vector<1x16xf32>
    %771 = vector.multi_reduction <maximumf>, %770, %cst_293 [2] : vector<1x16x16xf32> to vector<1x16xf32>
    %772 = vector.shape_cast %771 : vector<1x16xf32> to vector<1x16x1xf32>
    %773 = vector.broadcast %772 : vector<1x16x1xf32> to vector<1x16x16xf32>
    %774 = arith.subf %770, %773 : vector<1x16x16xf32>
    %775 = math.exp %774 : vector<1x16x16xf32>
    %cst_294 = arith.constant dense<0.000000e+00> : vector<1x16xf32>
    %776 = vector.multi_reduction <add>, %775, %cst_294 [2] : vector<1x16x16xf32> to vector<1x16xf32>
    %777 = vector.shape_cast %776 : vector<1x16xf32> to vector<1x16x1xf32>
    %cst_295 = arith.constant 1.000000e+00 : f32
    %778 = vector.broadcast %cst_295 : f32 to vector<1x16x1xf32>
    %779 = arith.divf %778, %777 : vector<1x16x1xf32>
    %780 = vector.broadcast %779 : vector<1x16x1xf32> to vector<1x16x16xf32>
    %781 = arith.mulf %775, %780 : vector<1x16x16xf32>
    %782 = vector.shape_cast %781 : vector<1x16x16xf32> to vector<16x16xf32>
    %783 = arith.addf %8, %782 : vector<16x16xf32>
    %784 = arith.truncf %781 : vector<1x16x16xf32> to vector<1x16x16xbf16>
    "tpu.trace_start"() <{level = 10 : i32, message = "bqk,bkd->bqd"}> : () -> ()
    %cst_296 = arith.constant dense<0.000000e+00> : vector<1x16x32xf32>
    %785 = tpu.matmul %784, %766, %cst_296 {dimension_numbers = #tpu.dot_dimension_numbers<[2], [1], [1], [2], [0, 0, 0, 1, 1, 2], [0], [0]>} : vector<1x16x16xbf16>, vector<1x16x32xbf16>, vector<1x16x32xf32> -> vector<1x16x32xf32>
    "tpu.trace_stop"() : () -> ()
    %786 = vector.shape_cast %785 : vector<1x16x32xf32> to vector<16x32xf32>
    %787 = arith.truncf %786 : vector<16x32xf32> to vector<16x32xbf16>
    %788 = vector.extract_strided_slice %757 {offsets = [0, 0], sizes = [32, 128], strides = [1, 1]} : vector<128x128xbf16> to vector<32x128xbf16>
    %cst_297 = arith.constant dense<0.000000e+00> : vector<16x128xf32>
    %789 = tpu.matmul %787, %788, %cst_297 {dimension_numbers = #tpu.dot_dimension_numbers<[1], [0], [0], [1], [0, 0, 1, 1], [], []>} : vector<16x32xbf16>, vector<32x128xbf16>, vector<16x128xf32> -> vector<16x128xf32>
    %790 = arith.addf %758, %789 : vector<16x128xf32>
    %791 = vector.extract_strided_slice %755 {offsets = [0, 0, 32], sizes = [1, 16, 32], strides = [1, 1, 1]} : vector<1x16x384xf32> to vector<1x16x32xf32>
    %cst_298 = arith.constant 0.176776692 : f32
    %792 = vector.broadcast %cst_298 : f32 to vector<1x16x32xf32>
    %793 = arith.mulf %791, %792 : vector<1x16x32xf32>
    %794 = arith.truncf %793 : vector<1x16x32xf32> to vector<1x16x32xbf16>
    %795 = vector.extract_strided_slice %755 {offsets = [0, 0, 160], sizes = [1, 16, 32], strides = [1, 1, 1]} : vector<1x16x384xf32> to vector<1x16x32xf32>
    %796 = arith.truncf %795 : vector<1x16x32xf32> to vector<1x16x32xbf16>
    %797 = vector.extract_strided_slice %755 {offsets = [0, 0, 288], sizes = [1, 16, 32], strides = [1, 1, 1]} : vector<1x16x384xf32> to vector<1x16x32xf32>
    %798 = arith.truncf %797 : vector<1x16x32xf32> to vector<1x16x32xbf16>
    "tpu.trace_start"() <{level = 10 : i32, message = "bqd,bkd->bqk"}> : () -> ()
    %cst_299 = arith.constant dense<0.000000e+00> : vector<1x16x16xf32>
    %799 = tpu.matmul %794, %796, %cst_299 {dimension_numbers = #tpu.dot_dimension_numbers<[2], [2], [1], [1], [0, 0, 0, 1, 1, 1], [0], [0]>} : vector<1x16x32xbf16>, vector<1x16x32xbf16>, vector<1x16x16xf32> -> vector<1x16x16xf32>
    "tpu.trace_stop"() : () -> ()
    %800 = vector.shape_cast %5 : vector<1x16xf32> to vector<1x1x16xf32>
    %801 = vector.broadcast %800 : vector<1x1x16xf32> to vector<1x16x16xf32>
    %802 = arith.addf %799, %801 : vector<1x16x16xf32>
    %cst_300 = arith.constant dense<0xFF800000> : vector<1x16xf32>
    %803 = vector.multi_reduction <maximumf>, %802, %cst_300 [2] : vector<1x16x16xf32> to vector<1x16xf32>
    %804 = vector.shape_cast %803 : vector<1x16xf32> to vector<1x16x1xf32>
    %805 = vector.broadcast %804 : vector<1x16x1xf32> to vector<1x16x16xf32>
    %806 = arith.subf %802, %805 : vector<1x16x16xf32>
    %807 = math.exp %806 : vector<1x16x16xf32>
    %cst_301 = arith.constant dense<0.000000e+00> : vector<1x16xf32>
    %808 = vector.multi_reduction <add>, %807, %cst_301 [2] : vector<1x16x16xf32> to vector<1x16xf32>
    %809 = vector.shape_cast %808 : vector<1x16xf32> to vector<1x16x1xf32>
    %cst_302 = arith.constant 1.000000e+00 : f32
    %810 = vector.broadcast %cst_302 : f32 to vector<1x16x1xf32>
    %811 = arith.divf %810, %809 : vector<1x16x1xf32>
    %812 = vector.broadcast %811 : vector<1x16x1xf32> to vector<1x16x16xf32>
    %813 = arith.mulf %807, %812 : vector<1x16x16xf32>
    %814 = vector.shape_cast %813 : vector<1x16x16xf32> to vector<16x16xf32>
    %815 = arith.addf %783, %814 : vector<16x16xf32>
    %816 = arith.truncf %813 : vector<1x16x16xf32> to vector<1x16x16xbf16>
    "tpu.trace_start"() <{level = 10 : i32, message = "bqk,bkd->bqd"}> : () -> ()
    %cst_303 = arith.constant dense<0.000000e+00> : vector<1x16x32xf32>
    %817 = tpu.matmul %816, %798, %cst_303 {dimension_numbers = #tpu.dot_dimension_numbers<[2], [1], [1], [2], [0, 0, 0, 1, 1, 2], [0], [0]>} : vector<1x16x16xbf16>, vector<1x16x32xbf16>, vector<1x16x32xf32> -> vector<1x16x32xf32>
    "tpu.trace_stop"() : () -> ()
    %818 = vector.shape_cast %817 : vector<1x16x32xf32> to vector<16x32xf32>
    %819 = arith.truncf %818 : vector<16x32xf32> to vector<16x32xbf16>
    %820 = vector.extract_strided_slice %757 {offsets = [32, 0], sizes = [32, 128], strides = [1, 1]} : vector<128x128xbf16> to vector<32x128xbf16>
    %cst_304 = arith.constant dense<0.000000e+00> : vector<16x128xf32>
    %821 = tpu.matmul %819, %820, %cst_304 {dimension_numbers = #tpu.dot_dimension_numbers<[1], [0], [0], [1], [0, 0, 1, 1], [], []>} : vector<16x32xbf16>, vector<32x128xbf16>, vector<16x128xf32> -> vector<16x128xf32>
    %822 = arith.addf %790, %821 : vector<16x128xf32>
    %823 = vector.extract_strided_slice %755 {offsets = [0, 0, 64], sizes = [1, 16, 32], strides = [1, 1, 1]} : vector<1x16x384xf32> to vector<1x16x32xf32>
    %cst_305 = arith.constant 0.176776692 : f32
    %824 = vector.broadcast %cst_305 : f32 to vector<1x16x32xf32>
    %825 = arith.mulf %823, %824 : vector<1x16x32xf32>
    %826 = arith.truncf %825 : vector<1x16x32xf32> to vector<1x16x32xbf16>
    %827 = vector.extract_strided_slice %755 {offsets = [0, 0, 192], sizes = [1, 16, 32], strides = [1, 1, 1]} : vector<1x16x384xf32> to vector<1x16x32xf32>
    %828 = arith.truncf %827 : vector<1x16x32xf32> to vector<1x16x32xbf16>
    %829 = vector.extract_strided_slice %755 {offsets = [0, 0, 320], sizes = [1, 16, 32], strides = [1, 1, 1]} : vector<1x16x384xf32> to vector<1x16x32xf32>
    %830 = arith.truncf %829 : vector<1x16x32xf32> to vector<1x16x32xbf16>
    "tpu.trace_start"() <{level = 10 : i32, message = "bqd,bkd->bqk"}> : () -> ()
    %cst_306 = arith.constant dense<0.000000e+00> : vector<1x16x16xf32>
    %831 = tpu.matmul %826, %828, %cst_306 {dimension_numbers = #tpu.dot_dimension_numbers<[2], [2], [1], [1], [0, 0, 0, 1, 1, 1], [0], [0]>} : vector<1x16x32xbf16>, vector<1x16x32xbf16>, vector<1x16x16xf32> -> vector<1x16x16xf32>
    "tpu.trace_stop"() : () -> ()
    %832 = vector.shape_cast %5 : vector<1x16xf32> to vector<1x1x16xf32>
    %833 = vector.broadcast %832 : vector<1x1x16xf32> to vector<1x16x16xf32>
    %834 = arith.addf %831, %833 : vector<1x16x16xf32>
    %cst_307 = arith.constant dense<0xFF800000> : vector<1x16xf32>
    %835 = vector.multi_reduction <maximumf>, %834, %cst_307 [2] : vector<1x16x16xf32> to vector<1x16xf32>
    %836 = vector.shape_cast %835 : vector<1x16xf32> to vector<1x16x1xf32>
    %837 = vector.broadcast %836 : vector<1x16x1xf32> to vector<1x16x16xf32>
    %838 = arith.subf %834, %837 : vector<1x16x16xf32>
    %839 = math.exp %838 : vector<1x16x16xf32>
    %cst_308 = arith.constant dense<0.000000e+00> : vector<1x16xf32>
    %840 = vector.multi_reduction <add>, %839, %cst_308 [2] : vector<1x16x16xf32> to vector<1x16xf32>
    %841 = vector.shape_cast %840 : vector<1x16xf32> to vector<1x16x1xf32>
    %cst_309 = arith.constant 1.000000e+00 : f32
    %842 = vector.broadcast %cst_309 : f32 to vector<1x16x1xf32>
    %843 = arith.divf %842, %841 : vector<1x16x1xf32>
    %844 = vector.broadcast %843 : vector<1x16x1xf32> to vector<1x16x16xf32>
    %845 = arith.mulf %839, %844 : vector<1x16x16xf32>
    %846 = vector.shape_cast %845 : vector<1x16x16xf32> to vector<16x16xf32>
    %847 = arith.addf %815, %846 : vector<16x16xf32>
    %848 = arith.truncf %845 : vector<1x16x16xf32> to vector<1x16x16xbf16>
    "tpu.trace_start"() <{level = 10 : i32, message = "bqk,bkd->bqd"}> : () -> ()
    %cst_310 = arith.constant dense<0.000000e+00> : vector<1x16x32xf32>
    %849 = tpu.matmul %848, %830, %cst_310 {dimension_numbers = #tpu.dot_dimension_numbers<[2], [1], [1], [2], [0, 0, 0, 1, 1, 2], [0], [0]>} : vector<1x16x16xbf16>, vector<1x16x32xbf16>, vector<1x16x32xf32> -> vector<1x16x32xf32>
    "tpu.trace_stop"() : () -> ()
    %850 = vector.shape_cast %849 : vector<1x16x32xf32> to vector<16x32xf32>
    %851 = arith.truncf %850 : vector<16x32xf32> to vector<16x32xbf16>
    %852 = vector.extract_strided_slice %757 {offsets = [64, 0], sizes = [32, 128], strides = [1, 1]} : vector<128x128xbf16> to vector<32x128xbf16>
    %cst_311 = arith.constant dense<0.000000e+00> : vector<16x128xf32>
    %853 = tpu.matmul %851, %852, %cst_311 {dimension_numbers = #tpu.dot_dimension_numbers<[1], [0], [0], [1], [0, 0, 1, 1], [], []>} : vector<16x32xbf16>, vector<32x128xbf16>, vector<16x128xf32> -> vector<16x128xf32>
    %854 = arith.addf %822, %853 : vector<16x128xf32>
    %855 = vector.extract_strided_slice %755 {offsets = [0, 0, 96], sizes = [1, 16, 32], strides = [1, 1, 1]} : vector<1x16x384xf32> to vector<1x16x32xf32>
    %cst_312 = arith.constant 0.176776692 : f32
    %856 = vector.broadcast %cst_312 : f32 to vector<1x16x32xf32>
    %857 = arith.mulf %855, %856 : vector<1x16x32xf32>
    %858 = arith.truncf %857 : vector<1x16x32xf32> to vector<1x16x32xbf16>
    %859 = vector.extract_strided_slice %755 {offsets = [0, 0, 224], sizes = [1, 16, 32], strides = [1, 1, 1]} : vector<1x16x384xf32> to vector<1x16x32xf32>
    %860 = arith.truncf %859 : vector<1x16x32xf32> to vector<1x16x32xbf16>
    %861 = vector.extract_strided_slice %755 {offsets = [0, 0, 352], sizes = [1, 16, 32], strides = [1, 1, 1]} : vector<1x16x384xf32> to vector<1x16x32xf32>
    %862 = arith.truncf %861 : vector<1x16x32xf32> to vector<1x16x32xbf16>
    "tpu.trace_start"() <{level = 10 : i32, message = "bqd,bkd->bqk"}> : () -> ()
    %cst_313 = arith.constant dense<0.000000e+00> : vector<1x16x16xf32>
    %863 = tpu.matmul %858, %860, %cst_313 {dimension_numbers = #tpu.dot_dimension_numbers<[2], [2], [1], [1], [0, 0, 0, 1, 1, 1], [0], [0]>} : vector<1x16x32xbf16>, vector<1x16x32xbf16>, vector<1x16x16xf32> -> vector<1x16x16xf32>
    "tpu.trace_stop"() : () -> ()
    %864 = vector.shape_cast %5 : vector<1x16xf32> to vector<1x1x16xf32>
    %865 = vector.broadcast %864 : vector<1x1x16xf32> to vector<1x16x16xf32>
    %866 = arith.addf %863, %865 : vector<1x16x16xf32>
    %cst_314 = arith.constant dense<0xFF800000> : vector<1x16xf32>
    %867 = vector.multi_reduction <maximumf>, %866, %cst_314 [2] : vector<1x16x16xf32> to vector<1x16xf32>
    %868 = vector.shape_cast %867 : vector<1x16xf32> to vector<1x16x1xf32>
    %869 = vector.broadcast %868 : vector<1x16x1xf32> to vector<1x16x16xf32>
    %870 = arith.subf %866, %869 : vector<1x16x16xf32>
    %871 = math.exp %870 : vector<1x16x16xf32>
    %cst_315 = arith.constant dense<0.000000e+00> : vector<1x16xf32>
    %872 = vector.multi_reduction <add>, %871, %cst_315 [2] : vector<1x16x16xf32> to vector<1x16xf32>
    %873 = vector.shape_cast %872 : vector<1x16xf32> to vector<1x16x1xf32>
    %cst_316 = arith.constant 1.000000e+00 : f32
    %874 = vector.broadcast %cst_316 : f32 to vector<1x16x1xf32>
    %875 = arith.divf %874, %873 : vector<1x16x1xf32>
    %876 = vector.broadcast %875 : vector<1x16x1xf32> to vector<1x16x16xf32>
    %877 = arith.mulf %871, %876 : vector<1x16x16xf32>
    %878 = vector.shape_cast %877 : vector<1x16x16xf32> to vector<16x16xf32>
    %879 = arith.addf %847, %878 : vector<16x16xf32>
    %880 = arith.truncf %877 : vector<1x16x16xf32> to vector<1x16x16xbf16>
    "tpu.trace_start"() <{level = 10 : i32, message = "bqk,bkd->bqd"}> : () -> ()
    %cst_317 = arith.constant dense<0.000000e+00> : vector<1x16x32xf32>
    %881 = tpu.matmul %880, %862, %cst_317 {dimension_numbers = #tpu.dot_dimension_numbers<[2], [1], [1], [2], [0, 0, 0, 1, 1, 2], [0], [0]>} : vector<1x16x16xbf16>, vector<1x16x32xbf16>, vector<1x16x32xf32> -> vector<1x16x32xf32>
    "tpu.trace_stop"() : () -> ()
    %882 = vector.shape_cast %881 : vector<1x16x32xf32> to vector<16x32xf32>
    %883 = arith.truncf %882 : vector<16x32xf32> to vector<16x32xbf16>
    %884 = vector.extract_strided_slice %757 {offsets = [96, 0], sizes = [32, 128], strides = [1, 1]} : vector<128x128xbf16> to vector<32x128xbf16>
    %cst_318 = arith.constant dense<0.000000e+00> : vector<16x128xf32>
    %885 = tpu.matmul %883, %884, %cst_318 {dimension_numbers = #tpu.dot_dimension_numbers<[1], [0], [0], [1], [0, 0, 1, 1], [], []>} : vector<16x32xbf16>, vector<32x128xbf16>, vector<16x128xf32> -> vector<16x128xf32>
    %886 = arith.addf %854, %885 : vector<16x128xf32>
    %c3_319 = arith.constant 3 : index
    %c0_320 = arith.constant 0 : index
    %c0_321 = arith.constant 0 : index
    %887 = vector.load %arg5[%c3_319, %c0_320, %c0_321] : memref<4x1x128xf32, #tpu.memory_space<vmem>>, vector<1x1x128xf32>
    %888 = vector.shape_cast %887 : vector<1x1x128xf32> to vector<1x128xf32>
    %889 = vector.broadcast %888 : vector<1x128xf32> to vector<16x128xf32>
    %890 = arith.addf %886, %889 : vector<16x128xf32>
    %891 = arith.addf %746, %890 : vector<16x128xf32>
    %c3_322 = arith.constant 3 : index
    %c0_323 = arith.constant 0 : index
    %c0_324 = arith.constant 0 : index
    %892 = vector.load %arg6[%c3_322, %c0_323, %c0_324] : memref<4x1x128xf32, #tpu.memory_space<vmem>>, vector<1x1x128xf32>
    %893 = vector.shape_cast %892 : vector<1x1x128xf32> to vector<1x128xf32>
    %c3_325 = arith.constant 3 : index
    %c0_326 = arith.constant 0 : index
    %c0_327 = arith.constant 0 : index
    %894 = vector.load %arg7[%c3_325, %c0_326, %c0_327] : memref<4x1x128xf32, #tpu.memory_space<vmem>>, vector<1x1x128xf32>
    %895 = vector.shape_cast %894 : vector<1x1x128xf32> to vector<1x128xf32>
    %cst_328 = arith.constant dense<0.000000e+00> : vector<16xf32>
    %896 = vector.multi_reduction <add>, %891, %cst_328 [1] : vector<16x128xf32> to vector<16xf32>
    %897 = vector.shape_cast %896 : vector<16xf32> to vector<16x1xf32>
    %cst_329 = arith.constant 1.280000e+02 : f32
    %898 = vector.broadcast %cst_329 : f32 to vector<16x1xf32>
    %899 = arith.divf %897, %898 : vector<16x1xf32>
    %900 = vector.broadcast %899 : vector<16x1xf32> to vector<16x128xf32>
    %901 = arith.subf %891, %900 : vector<16x128xf32>
    %902 = arith.mulf %901, %901 : vector<16x128xf32>
    %cst_330 = arith.constant dense<0.000000e+00> : vector<16xf32>
    %903 = vector.multi_reduction <add>, %902, %cst_330 [1] : vector<16x128xf32> to vector<16xf32>
    %904 = vector.shape_cast %903 : vector<16xf32> to vector<16x1xf32>
    %cst_331 = arith.constant 1.280000e+02 : f32
    %905 = vector.broadcast %cst_331 : f32 to vector<16x1xf32>
    %906 = arith.divf %904, %905 : vector<16x1xf32>
    %907 = vector.broadcast %899 : vector<16x1xf32> to vector<16x128xf32>
    %908 = arith.subf %891, %907 : vector<16x128xf32>
    %cst_332 = arith.constant 9.99999974E-6 : f32
    %909 = vector.broadcast %cst_332 : f32 to vector<16x1xf32>
    %910 = arith.addf %906, %909 : vector<16x1xf32>
    %911 = math.rsqrt %910 : vector<16x1xf32>
    %912 = vector.broadcast %911 : vector<16x1xf32> to vector<16x128xf32>
    %913 = arith.mulf %908, %912 : vector<16x128xf32>
    %914 = vector.broadcast %893 : vector<1x128xf32> to vector<16x128xf32>
    %915 = arith.mulf %913, %914 : vector<16x128xf32>
    %916 = vector.broadcast %895 : vector<1x128xf32> to vector<16x128xf32>
    %917 = arith.addf %915, %916 : vector<16x128xf32>
    %918 = arith.truncf %917 : vector<16x128xf32> to vector<16x128xbf16>
    %c3_333 = arith.constant 3 : index
    %c0_334 = arith.constant 0 : index
    %c0_335 = arith.constant 0 : index
    %919 = vector.load %arg8[%c3_333, %c0_334, %c0_335] : memref<4x128x512xbf16, #tpu.memory_space<vmem>>, vector<1x128x512xbf16>
    %920 = vector.shape_cast %919 : vector<1x128x512xbf16> to vector<128x512xbf16>
    %cst_336 = arith.constant dense<0.000000e+00> : vector<16x512xf32>
    %921 = tpu.matmul %918, %920, %cst_336 {dimension_numbers = #tpu.dot_dimension_numbers<[1], [0], [0], [1], [0, 0, 1, 1], [], []>} : vector<16x128xbf16>, vector<128x512xbf16>, vector<16x512xf32> -> vector<16x512xf32>
    %c3_337 = arith.constant 3 : index
    %c0_338 = arith.constant 0 : index
    %c0_339 = arith.constant 0 : index
    %922 = vector.load %arg9[%c3_337, %c0_338, %c0_339] : memref<4x1x512xf32, #tpu.memory_space<vmem>>, vector<1x1x512xf32>
    %923 = vector.shape_cast %922 : vector<1x1x512xf32> to vector<1x512xf32>
    %924 = vector.broadcast %923 : vector<1x512xf32> to vector<16x512xf32>
    %925 = arith.addf %921, %924 : vector<16x512xf32>
    %cst_340 = arith.constant 5.000000e-01 : f32
    %926 = vector.broadcast %cst_340 : f32 to vector<16x512xf32>
    %927 = arith.mulf %926, %925 : vector<16x512xf32>
    %cst_341 = arith.constant 0.707106769 : f32
    %928 = vector.broadcast %cst_341 : f32 to vector<16x512xf32>
    %929 = arith.mulf %925, %928 : vector<16x512xf32>
    %930 = math.absf %929 : vector<16x512xf32>
    %cst_342 = arith.constant 0.327591091 : f32
    %931 = vector.broadcast %cst_342 : f32 to vector<16x512xf32>
    %932 = arith.mulf %931, %930 : vector<16x512xf32>
    %cst_343 = arith.constant 1.000000e+00 : f32
    %933 = vector.broadcast %cst_343 : f32 to vector<16x512xf32>
    %934 = arith.addf %933, %932 : vector<16x512xf32>
    %cst_344 = arith.constant 1.000000e+00 : f32
    %935 = vector.broadcast %cst_344 : f32 to vector<16x512xf32>
    %936 = arith.divf %935, %934 : vector<16x512xf32>
    %cst_345 = arith.constant 1.06140542 : f32
    %937 = vector.broadcast %cst_345 : f32 to vector<16x512xf32>
    %938 = arith.mulf %937, %936 : vector<16x512xf32>
    %cst_346 = arith.constant 1.45315206 : f32
    %939 = vector.broadcast %cst_346 : f32 to vector<16x512xf32>
    %940 = arith.subf %938, %939 : vector<16x512xf32>
    %941 = arith.mulf %940, %936 : vector<16x512xf32>
    %cst_347 = arith.constant 1.42141378 : f32
    %942 = vector.broadcast %cst_347 : f32 to vector<16x512xf32>
    %943 = arith.addf %941, %942 : vector<16x512xf32>
    %944 = arith.mulf %943, %936 : vector<16x512xf32>
    %cst_348 = arith.constant 0.284496725 : f32
    %945 = vector.broadcast %cst_348 : f32 to vector<16x512xf32>
    %946 = arith.subf %944, %945 : vector<16x512xf32>
    %947 = arith.mulf %946, %936 : vector<16x512xf32>
    %cst_349 = arith.constant 0.254829586 : f32
    %948 = vector.broadcast %cst_349 : f32 to vector<16x512xf32>
    %949 = arith.addf %947, %948 : vector<16x512xf32>
    %950 = arith.mulf %949, %936 : vector<16x512xf32>
    %cst_350 = arith.constant 0.000000e+00 : f32
    %951 = vector.broadcast %cst_350 : f32 to vector<16x512xf32>
    %952 = arith.subf %951, %930 : vector<16x512xf32>
    %953 = arith.mulf %952, %930 : vector<16x512xf32>
    %954 = math.exp %953 : vector<16x512xf32>
    %955 = arith.mulf %950, %954 : vector<16x512xf32>
    %cst_351 = arith.constant 1.000000e+00 : f32
    %956 = vector.broadcast %cst_351 : f32 to vector<16x512xf32>
    %957 = arith.subf %956, %955 : vector<16x512xf32>
    %cst_352 = arith.constant 0.000000e+00 : f32
    %958 = vector.broadcast %cst_352 : f32 to vector<16x512xf32>
    %959 = arith.cmpf oge, %929, %958 : vector<16x512xf32>
    %cst_353 = arith.constant 0.000000e+00 : f32
    %960 = vector.broadcast %cst_353 : f32 to vector<16x512xf32>
    %961 = arith.subf %960, %957 : vector<16x512xf32>
    %962 = arith.select %959, %957, %961 : vector<16x512xi1>, vector<16x512xf32>
    %cst_354 = arith.constant 1.000000e+00 : f32
    %963 = vector.broadcast %cst_354 : f32 to vector<16x512xf32>
    %964 = arith.addf %963, %962 : vector<16x512xf32>
    %965 = arith.mulf %927, %964 : vector<16x512xf32>
    %966 = arith.truncf %965 : vector<16x512xf32> to vector<16x512xbf16>
    %c3_355 = arith.constant 3 : index
    %c0_356 = arith.constant 0 : index
    %c0_357 = arith.constant 0 : index
    %967 = vector.load %arg10[%c3_355, %c0_356, %c0_357] : memref<4x512x128xbf16, #tpu.memory_space<vmem>>, vector<1x512x128xbf16>
    %968 = vector.shape_cast %967 : vector<1x512x128xbf16> to vector<512x128xbf16>
    %cst_358 = arith.constant dense<0.000000e+00> : vector<16x128xf32>
    %969 = tpu.matmul %966, %968, %cst_358 {dimension_numbers = #tpu.dot_dimension_numbers<[1], [0], [0], [1], [0, 0, 1, 1], [], []>} : vector<16x512xbf16>, vector<512x128xbf16>, vector<16x128xf32> -> vector<16x128xf32>
    %c3_359 = arith.constant 3 : index
    %c0_360 = arith.constant 0 : index
    %c0_361 = arith.constant 0 : index
    %970 = vector.load %arg11[%c3_359, %c0_360, %c0_361] : memref<4x1x128xf32, #tpu.memory_space<vmem>>, vector<1x1x128xf32>
    %971 = vector.shape_cast %970 : vector<1x1x128xf32> to vector<1x128xf32>
    %972 = vector.broadcast %971 : vector<1x128xf32> to vector<16x128xf32>
    %973 = arith.addf %969, %972 : vector<16x128xf32>
    %974 = arith.addf %917, %973 : vector<16x128xf32>
    %c3_362 = arith.constant 3 : index
    %c0_363 = arith.constant 0 : index
    %c0_364 = arith.constant 0 : index
    %975 = vector.load %arg12[%c3_362, %c0_363, %c0_364] : memref<4x1x128xf32, #tpu.memory_space<vmem>>, vector<1x1x128xf32>
    %976 = vector.shape_cast %975 : vector<1x1x128xf32> to vector<1x128xf32>
    %c3_365 = arith.constant 3 : index
    %c0_366 = arith.constant 0 : index
    %c0_367 = arith.constant 0 : index
    %977 = vector.load %arg13[%c3_365, %c0_366, %c0_367] : memref<4x1x128xf32, #tpu.memory_space<vmem>>, vector<1x1x128xf32>
    %978 = vector.shape_cast %977 : vector<1x1x128xf32> to vector<1x128xf32>
    %cst_368 = arith.constant dense<0.000000e+00> : vector<16xf32>
    %979 = vector.multi_reduction <add>, %974, %cst_368 [1] : vector<16x128xf32> to vector<16xf32>
    %980 = vector.shape_cast %979 : vector<16xf32> to vector<16x1xf32>
    %cst_369 = arith.constant 1.280000e+02 : f32
    %981 = vector.broadcast %cst_369 : f32 to vector<16x1xf32>
    %982 = arith.divf %980, %981 : vector<16x1xf32>
    %983 = vector.broadcast %982 : vector<16x1xf32> to vector<16x128xf32>
    %984 = arith.subf %974, %983 : vector<16x128xf32>
    %985 = arith.mulf %984, %984 : vector<16x128xf32>
    %cst_370 = arith.constant dense<0.000000e+00> : vector<16xf32>
    %986 = vector.multi_reduction <add>, %985, %cst_370 [1] : vector<16x128xf32> to vector<16xf32>
    %987 = vector.shape_cast %986 : vector<16xf32> to vector<16x1xf32>
    %cst_371 = arith.constant 1.280000e+02 : f32
    %988 = vector.broadcast %cst_371 : f32 to vector<16x1xf32>
    %989 = arith.divf %987, %988 : vector<16x1xf32>
    %990 = vector.broadcast %982 : vector<16x1xf32> to vector<16x128xf32>
    %991 = arith.subf %974, %990 : vector<16x128xf32>
    %cst_372 = arith.constant 9.99999974E-6 : f32
    %992 = vector.broadcast %cst_372 : f32 to vector<16x1xf32>
    %993 = arith.addf %989, %992 : vector<16x1xf32>
    %994 = math.rsqrt %993 : vector<16x1xf32>
    %995 = vector.broadcast %994 : vector<16x1xf32> to vector<16x128xf32>
    %996 = arith.mulf %991, %995 : vector<16x128xf32>
    %997 = vector.broadcast %976 : vector<1x128xf32> to vector<16x128xf32>
    %998 = arith.mulf %996, %997 : vector<16x128xf32>
    %999 = vector.broadcast %978 : vector<1x128xf32> to vector<16x128xf32>
    %1000 = arith.addf %998, %999 : vector<16x128xf32>
    %1001 = vector.shape_cast %1000 : vector<16x128xf32> to vector<1x16x128xf32>
    %1002 = vector.extract_strided_slice %1001 {offsets = [0, 0, 0], sizes = [1, 1, 128], strides = [1, 1, 1]} : vector<1x16x128xf32> to vector<1x1x128xf32>
    %1003 = vector.shape_cast %1002 : vector<1x1x128xf32> to vector<1x128xf32>
    %c0_373 = arith.constant 0 : index
    %c0_374 = arith.constant 0 : index
    %c0_375 = arith.constant 0 : index
    %1004 = vector.load %arg14[%c0_373, %c0_374, %c0_375] : memref<1x1x128xf32, #tpu.memory_space<vmem>>, vector<1x1x128xf32>
    %1005 = vector.shape_cast %1004 : vector<1x1x128xf32> to vector<1x128xf32>
    %1006 = vector.shape_cast %1003 : vector<1x128xf32> to vector<1x1x128xf32>
    tpu.vector_store %arg14[%c0_373, %c0_374, %c0_375], %1006 {strides = array<i32>} : memref<1x1x128xf32, #tpu.memory_space<vmem>>, vector<1x1x128xf32>,
    %cst_376 = arith.constant 2.500000e-01 : f32
    %1007 = vector.broadcast %cst_376 : f32 to vector<16x16xf32>
    %1008 = arith.mulf %879, %1007 : vector<16x16xf32>
    %c0_377 = arith.constant 0 : index
    %c0_378 = arith.constant 0 : index
    %c0_379 = arith.constant 0 : index
    %1009 = vector.load %arg15[%c0_377, %c0_378, %c0_379] : memref<1x16x16xf32, #tpu.memory_space<vmem>>, vector<1x16x16xf32>
    %1010 = vector.shape_cast %1009 : vector<1x16x16xf32> to vector<16x16xf32>
    %1011 = vector.shape_cast %1008 : vector<16x16xf32> to vector<1x16x16xf32>
    tpu.vector_store %arg15[%c0_377, %c0_378, %c0_379], %1011 {strides = array<i32>} : memref<1x16x16xf32, #tpu.memory_space<vmem>>, vector<1x16x16xf32>,
    return
  }
  func.func @transform_0(%arg0: i32) -> (i32, i32, i32) {
    %c0_i32 = arith.constant 0 : i32
    %c0_i32_0 = arith.constant 0 : i32
    %c0_i32_1 = arith.constant 0 : i32
    return %arg0, %c0_i32, %c0_i32_0 : i32, i32, i32
  }
  func.func @transform_1(%arg0: i32) -> (i32, i32, i32) {
    %c0_i32 = arith.constant 0 : i32
    %c0_i32_0 = arith.constant 0 : i32
    %c0_i32_1 = arith.constant 0 : i32
    %c0_i32_2 = arith.constant 0 : i32
    return %c0_i32, %c0_i32_0, %c0_i32_1 : i32, i32, i32
  }
  func.func @transform_2(%arg0: i32) -> (i32, i32, i32) {
    %c0_i32 = arith.constant 0 : i32
    %c0_i32_0 = arith.constant 0 : i32
    %c0_i32_1 = arith.constant 0 : i32
    %c0_i32_2 = arith.constant 0 : i32
    return %c0_i32, %c0_i32_0, %c0_i32_1 : i32, i32, i32
  }
  func.func @transform_3(%arg0: i32) -> (i32, i32, i32) {
    %c0_i32 = arith.constant 0 : i32
    %c0_i32_0 = arith.constant 0 : i32
    %c0_i32_1 = arith.constant 0 : i32
    %c0_i32_2 = arith.constant 0 : i32
    return %c0_i32, %c0_i32_0, %c0_i32_1 : i32, i32, i32
  }
  func.func @transform_4(%arg0: i32) -> (i32, i32, i32) {
    %c0_i32 = arith.constant 0 : i32
    %c0_i32_0 = arith.constant 0 : i32
    %c0_i32_1 = arith.constant 0 : i32
    %c0_i32_2 = arith.constant 0 : i32
    return %c0_i32, %c0_i32_0, %c0_i32_1 : i32, i32, i32
  }
  func.func @transform_5(%arg0: i32) -> (i32, i32, i32) {
    %c0_i32 = arith.constant 0 : i32
    %c0_i32_0 = arith.constant 0 : i32
    %c0_i32_1 = arith.constant 0 : i32
    %c0_i32_2 = arith.constant 0 : i32
    return %c0_i32, %c0_i32_0, %c0_i32_1 : i32, i32, i32
  }
  func.func @transform_6(%arg0: i32) -> (i32, i32, i32) {
    %c0_i32 = arith.constant 0 : i32
    %c0_i32_0 = arith.constant 0 : i32
    %c0_i32_1 = arith.constant 0 : i32
    %c0_i32_2 = arith.constant 0 : i32
    return %c0_i32, %c0_i32_0, %c0_i32_1 : i32, i32, i32
  }
  func.func @transform_7(%arg0: i32) -> (i32, i32, i32) {
    %c0_i32 = arith.constant 0 : i32
    %c0_i32_0 = arith.constant 0 : i32
    %c0_i32_1 = arith.constant 0 : i32
    %c0_i32_2 = arith.constant 0 : i32
    return %c0_i32, %c0_i32_0, %c0_i32_1 : i32, i32, i32
  }
  func.func @transform_8(%arg0: i32) -> (i32, i32, i32) {
    %c0_i32 = arith.constant 0 : i32
    %c0_i32_0 = arith.constant 0 : i32
    %c0_i32_1 = arith.constant 0 : i32
    %c0_i32_2 = arith.constant 0 : i32
    return %c0_i32, %c0_i32_0, %c0_i32_1 : i32, i32, i32
  }
  func.func @transform_9(%arg0: i32) -> (i32, i32, i32) {
    %c0_i32 = arith.constant 0 : i32
    %c0_i32_0 = arith.constant 0 : i32
    %c0_i32_1 = arith.constant 0 : i32
    %c0_i32_2 = arith.constant 0 : i32
    return %c0_i32, %c0_i32_0, %c0_i32_1 : i32, i32, i32
  }
  func.func @transform_10(%arg0: i32) -> (i32, i32, i32) {
    %c0_i32 = arith.constant 0 : i32
    %c0_i32_0 = arith.constant 0 : i32
    %c0_i32_1 = arith.constant 0 : i32
    %c0_i32_2 = arith.constant 0 : i32
    return %c0_i32, %c0_i32_0, %c0_i32_1 : i32, i32, i32
  }
  func.func @transform_11(%arg0: i32) -> (i32, i32, i32) {
    %c0_i32 = arith.constant 0 : i32
    %c0_i32_0 = arith.constant 0 : i32
    %c0_i32_1 = arith.constant 0 : i32
    %c0_i32_2 = arith.constant 0 : i32
    return %c0_i32, %c0_i32_0, %c0_i32_1 : i32, i32, i32
  }
  func.func @transform_12(%arg0: i32) -> (i32, i32, i32) {
    %c0_i32 = arith.constant 0 : i32
    %c0_i32_0 = arith.constant 0 : i32
    %c0_i32_1 = arith.constant 0 : i32
    %c0_i32_2 = arith.constant 0 : i32
    return %c0_i32, %c0_i32_0, %c0_i32_1 : i32, i32, i32
  }
  func.func @transform_13(%arg0: i32) -> (i32, i32, i32) {
    %c0_i32 = arith.constant 0 : i32
    %c0_i32_0 = arith.constant 0 : i32
    %c0_i32_1 = arith.constant 0 : i32
    return %arg0, %c0_i32, %c0_i32_0 : i32, i32, i32
  }
  func.func @transform_14(%arg0: i32) -> (i32, i32, i32) {
    %c0_i32 = arith.constant 0 : i32
    %c0_i32_0 = arith.constant 0 : i32
    %c0_i32_1 = arith.constant 0 : i32
    return %arg0, %c0_i32, %c0_i32_0 : i32, i32, i32
  }
}

</mosaic_0001>

<llo_original>
// kernel: deconformer_forward.2
$region0: #{deconformer_forward.2}
  #allocation0 [shape = 'u32[]', space=smem, size = 0x4, offset = 0x4, fixed_abs, tag = 'smem constant byte address 0x4 - core index']
  #allocation1 [shape = 'u32[144,128]{1,0:T(1,128)}', space=vmem, size = 0x12000, scoped, tag = 'internal scratch']
  %s0 = inlined_call_operand.vmem [shape: f32[2,1,32], index: 0, kind: input, shape index: {}]
  %s1 = inlined_call_operand.vmem [shape: bf16[8,32], index: 1, kind: input, shape index: {}]
  %s2 = inlined_call_operand.vmem [shape: bf16[32,128], index: 2, kind: input, shape index: {}]
  %s3 = inlined_call_operand.vmem [shape: f32[2,8,128], index: 3, kind: output, shape index: {}]
  %s4 = sld [smem:[#allocation0]]
  $region26: #{deconformer_forward.2} parent=0
    _
  %s6 = ssub.s32 1, %s4
  %s7 = scalar_select 0, %s6, %s4
  // Predicated region
  $region2: #{deconformer_forward.2} parent=0 // pred_check
    _
  $region3: #{deconformer_forward.2} parent=0 // pred_check_branch
    %9 = sbr.rel (0) target = $region5
  $region4: #{deconformer_forward.2} parent=0 // pred_region
    _
  $region5: #{deconformer_forward.2} parent=0 // pred_fallthru
    _
  // Predicated region
  $region6: #{deconformer_forward.2} parent=0 // pred_check
    _
  $region7: #{deconformer_forward.2} parent=0 // pred_check_branch
    %11 = sbr.rel (0) target = $region9
  $region8: #{deconformer_forward.2} parent=0 // pred_region
    _
  $region9: #{deconformer_forward.2} parent=0 // pred_fallthru
    _
  // Predicated region
  $region10: #{deconformer_forward.2} parent=0 // pred_check
    _
  $region11: #{deconformer_forward.2} parent=0 // pred_check_branch
    %13 = sbr.rel (0) target = $region13
  $region12: #{deconformer_forward.2} parent=0 // pred_region
    _
  $region13: #{deconformer_forward.2} parent=0 // pred_fallthru
    _
  %p15 = scmp.eq.s32.totalorder 0, 0
  // Predicated region
  $region14: #{deconformer_forward.2} parent=0 // pred_check
    %p16 = pneg %p15
  $region15: #{deconformer_forward.2} parent=0 // pred_check_branch
    %18 = sbr.rel (%p16) target = $region17
  $region16: #{deconformer_forward.2} parent=0 // pred_region
    %19 = vst [vmem:[%s3] sm:$0xff] 0.0
    %20 = vst [vmem:[%s3 + $0x8] sm:$0xff] 0.0
  $region17: #{deconformer_forward.2} parent=0 // pred_fallthru
    _
  %v21 = vld [vmem:[%s1] sm:$0xf]
  %v22 = vld [vmem:[%s2] sm:$0xf]
  %v23 = vld [vmem:[%s2 + $0x4] sm:$0xf]
  %v24 = vld [vmem:[%s2 + $0x8] sm:$0xf]
  %v25 = vld [vmem:[%s2 + $0xc] sm:$0xf]
  %v26 = vld [vmem:[%s0] sm:$0x1]
  %v27 = vpack.c.bf16 %v26, %v26
  %v29 = vpack.i.b16 %v27, %v27
  %v31 = vlaneseq
  %v32 = vshrl.u32 %v31, 7
  %v33 = vsub.s32 0, %v32
  %v34 = vrot.slane %v29, %v33
  %v35 = vmul.bf16 %v21, %v34
  %v36 = vld [vmem:[%s3] sm:$0xff]
  %v41 = vunpack.c.l.b16 %v22
  %v42 = vunpack.c.l.b16 %v23
  %v43 = vunpack.c.l.b16 %v24
  %v44 = vunpack.c.l.b16 %v25
  %v45 = vpack.c.b16 %v42, %v41
  %v46 = vpack.c.b16 %v44, %v43
  %vm49 = vcmask 261120
  %v51 = vsel %vm49, %v35, 0
  %53 = vmatprep.subr.bf16.mxu0 0
  %54 = vmatpush1.bf16.msra.mxu0 %v45
  %55 = vmatprep.subr.bf16.mxu0 0
  %56 = vmatpush1.bf16.msra.mxu0 %v46
  %57 = vmatprep.subr.bf16.mxu0 0
  %58 = vmatpush1.bf16.msra.mxu0 0
  %59 = vmatprep.subr.bf16.mxu0 0
  %60 = vmatpush1.bf16.msra.mxu0 0
  %61 = vmatprep.subr.bf16.mxu0 0
  %62 = vmatpush1.bf16.msra.mxu0 0
  %63 = vmatprep.subr.bf16.mxu0 0
  %64 = vmatpush1.bf16.msra.mxu0 0
  %65 = vmatprep.subr.bf16.mxu0 0
  %66 = vmatpush1.bf16.msra.mxu0 0
  %67 = vmatprep.subr.bf16.mxu0 0
  %68 = vmatpush1.bf16.msra.mxu0 0
  %69 = vmatprep.subr.bf16.mxu0 0
  %70 = vmatpush1.bf16.msra.mxu0 0
  %71 = vmatprep.subr.bf16.mxu0 0
  %72 = vmatpush1.bf16.msra.mxu0 0
  %73 = vmatprep.subr.bf16.mxu0 0
  %74 = vmatpush1.bf16.msra.mxu0 0
  %75 = vmatprep.subr.bf16.mxu0 0
  %76 = vmatpush1.bf16.msra.mxu0 0
  %77 = vmatprep.subr.bf16.mxu0 0
  %78 = vmatpush1.bf16.msra.mxu0 0
  %79 = vmatprep.subr.bf16.mxu0 0
  %80 = vmatpush1.bf16.msra.mxu0 0
  %81 = vmatprep.subr.bf16.mxu0 0
  %82 = vmatpush1.bf16.msra.mxu0 0
  %83 = vmatprep.subr.bf16.mxu0 0
  %84 = vmatpush1.bf16.msra.mxu0 0
  %85 = vmatprep.mubr.bf16.mxu0 0
  %86 = vmatmul.mubr.bf16.gmra.mrb[0].mxu0 %v51
  %v87 = vpop.f32.mrb[0].mxu0
  %v88 = vadd.f32 0.0, %v87
  %v89 = vpop.f32.mrb[0].mxu0
  %v90 = vpop.f32.mrb[0].mxu0
  %v91 = vpop.f32.mrb[0].mxu0
  %92 = vdwg.mxu0
  %v93 = vadd.f32 %v36, %v88
  %94 = vst [vmem:[%s3] sm:$0xff] %v93
  %s95 = scalar_lea.vmem %s0, 1
  %v96 = vld [vmem:[%s95] sm:$0x1]
  %v97 = vpack.c.bf16 %v96, %v96
  %v99 = vpack.i.b16 %v97, %v97
  %v101 = vlaneseq
  %v102 = vshrl.u32 %v101, 7
  %v103 = vsub.s32 0, %v102
  %v104 = vrot.slane %v99, %v103
  %v105 = vmul.bf16 %v21, %v104
  %s106 = scalar_lea.vmem %s3, 8
  %v107 = vld [vmem:[%s106] sm:$0xff]
  %v109 = vsel %vm49, %v105, 0
  %111 = vmatprep.subr.bf16.mxu0 0
  %112 = vmatpush1.bf16.msra.mxu0 %v45
  %113 = vmatprep.subr.bf16.mxu0 0
  %114 = vmatpush1.bf16.msra.mxu0 %v46
  %115 = vmatprep.subr.bf16.mxu0 0
  %116 = vmatpush1.bf16.msra.mxu0 0
  %117 = vmatprep.subr.bf16.mxu0 0
  %118 = vmatpush1.bf16.msra.mxu0 0
  %119 = vmatprep.subr.bf16.mxu0 0
  %120 = vmatpush1.bf16.msra.mxu0 0
  %121 = vmatprep.subr.bf16.mxu0 0
  %122 = vmatpush1.bf16.msra.mxu0 0
  %123 = vmatprep.subr.bf16.mxu0 0
  %124 = vmatpush1.bf16.msra.mxu0 0
  %125 = vmatprep.subr.bf16.mxu0 0
  %126 = vmatpush1.bf16.msra.mxu0 0
  %127 = vmatprep.subr.bf16.mxu0 0
  %128 = vmatpush1.bf16.msra.mxu0 0
  %129 = vmatprep.subr.bf16.mxu0 0
  %130 = vmatpush1.bf16.msra.mxu0 0
  %131 = vmatprep.subr.bf16.mxu0 0
  %132 = vmatpush1.bf16.msra.mxu0 0
  %133 = vmatprep.subr.bf16.mxu0 0
  %134 = vmatpush1.bf16.msra.mxu0 0
  %135 = vmatprep.subr.bf16.mxu0 0
  %136 = vmatpush1.bf16.msra.mxu0 0
  %137 = vmatprep.subr.bf16.mxu0 0
  %138 = vmatpush1.bf16.msra.mxu0 0
  %139 = vmatprep.subr.bf16.mxu0 0
  %140 = vmatpush1.bf16.msra.mxu0 0
  %141 = vmatprep.subr.bf16.mxu0 0
  %142 = vmatpush1.bf16.msra.mxu0 0
  %143 = vmatprep.mubr.bf16.mxu0 0
  %144 = vmatmul.mubr.bf16.gmra.mrb[0].mxu0 %v109
  %v145 = vpop.f32.mrb[0].mxu0
  %v146 = vadd.f32 0.0, %v145
  %v147 = vpop.f32.mrb[0].mxu0
  %v148 = vpop.f32.mrb[0].mxu0
  %v149 = vpop.f32.mrb[0].mxu0
  %150 = vdwg.mxu0
  %v151 = vadd.f32 %v107, %v146
  %152 = vst [vmem:[%s106] sm:$0xff] %v151
  // Predicated region
  $region18: #{deconformer_forward.2} parent=0 // pred_check
    _
  $region19: #{deconformer_forward.2} parent=0 // pred_check_branch
    %154 = sbr.rel (0) target = $region21
  $region20: #{deconformer_forward.2} parent=0 // pred_region
    _
  $region21: #{deconformer_forward.2} parent=0 // pred_fallthru
    _
  // Predicated region
  $region22: #{deconformer_forward.2} parent=0 // pred_check
    _
  $region23: #{deconformer_forward.2} parent=0 // pred_check_branch
    %156 = sbr.rel (0) target = $region25
  $region24: #{deconformer_forward.2} parent=0 // pred_region
    _
  $region25: #{deconformer_forward.2} parent=0 // pred_fallthru
    _

// kernel: deconformer_forward.3
$region0: #{deconformer_forward.3}
  #allocation0 [shape = 'u32[]', space=smem, size = 0x4, offset = 0x4, fixed_abs, tag = 'smem constant byte address 0x4 - core index']
  #allocation1 [shape = 'u32[144,128]{1,0:T(1,128)}', space=vmem, size = 0x12000, scoped, tag = 'internal scratch']
  %s0 = inlined_call_operand.vmem [shape: f32[2,16,128], index: 0, kind: input, shape index: {}]
  %s1 = inlined_call_operand.hbm [shape: bf16[4,128,384], index: 1, kind: input, shape index: {}]
  %s2 = inlined_call_operand.vmem [shape: f32[4,1,384], index: 2, kind: input, shape index: {}]
  %s3 = inlined_call_operand.hbm [shape: bf16[4,128,128], index: 3, kind: input, shape index: {}]
  %s4 = inlined_call_operand.vmem [shape: f32[4,1,128], index: 4, kind: input, shape index: {}]
  %s5 = inlined_call_operand.vmem [shape: f32[4,1,128], index: 5, kind: input, shape index: {}]
  %s6 = inlined_call_operand.vmem [shape: f32[4,1,128], index: 6, kind: input, shape index: {}]
  %s7 = inlined_call_operand.hbm [shape: bf16[4,128,512], index: 7, kind: input, shape index: {}]
  %s8 = inlined_call_operand.vmem [shape: f32[4,1,512], index: 8, kind: input, shape index: {}]
  %s9 = inlined_call_operand.hbm [shape: bf16[4,512,128], index: 9, kind: input, shape index: {}]
  %s10 = inlined_call_operand.vmem [shape: f32[4,1,128], index: 10, kind: input, shape index: {}]
  %s11 = inlined_call_operand.vmem [shape: f32[4,1,128], index: 11, kind: input, shape index: {}]
  %s12 = inlined_call_operand.vmem [shape: f32[4,1,128], index: 12, kind: input, shape index: {}]
  %s13 = inlined_call_operand.vmem [shape: f32[2,1,128], index: 13, kind: output, shape index: {0}]
  %s14 = inlined_call_operand.vmem [shape: f32[2,16,16], index: 14, kind: output, shape index: {1}]
  %15 = xla_tuple %s13, %s14
  %s16 = sld [smem:[#allocation0]]
  $region109: #{deconformer_forward.3} parent=0
    _
  %s18 = ssub.s32 1, %s16
  %s19 = scalar_select 0, %s18, %s16
  $region1: #{deconformer_forward.3} parent=0
    #allocation2 [shape = 'u8[393216]{0}', space=vmem, size = 0x60000, scoped, tag = 'input window, operand 1, single buffered']
    #allocation3 [shape = 's32[2]{0}', space=sflag, size = 0x8, scoped, tag = 'scoped memory for deconformer_forward.3']
    #allocation4 [shape = 'u8[131072]{0}', space=vmem, size = 0x20000, scoped, tag = 'input window, operand 3, single buffered']
    #allocation5 [shape = 's32[1]{0}', space=sflag, size = 0x4, scoped, tag = 'scoped memory for deconformer_forward.3']
    #allocation6 [shape = 'u8[524288]{0}', space=vmem, size = 0x80000, scoped, tag = 'input window, operand 7, single buffered']
    #allocation7 [shape = 'u8[524288]{0}', space=vmem, size = 0x80000, scoped, tag = 'input window, operand 9, single buffered']
    #allocation8 [shape = 's32[1]{0}', space=sflag, size = 0x4, scoped, tag = 'scoped memory for deconformer_forward.3']
    %20 = vsyncpa [#allocation3], 0
    %21 = vsyncpa [#allocation5], 0
    %22 = vsyncpa [#allocation8], 0
    loop: start=0, step=1, limit=4
    $region2: #{deconformer_forward.3} parent=1 // loop_pre_header
      _
    $region3: #{deconformer_forward.3} parent=1 // loop_header
      %s24 = sphi 0, %s28
      %p25 = scmp.ge.s32.totalorder %s24, 4
      %s34 = sphi 0, %s36
      %s37 = sphi 0, %s34
      %s38 = sphi 0, %s37
      %s54 = sphi 0, %s38
      %s58 = sphi 0, %s58
      %s60 = sphi 0, %s58
      %s61 = sphi 0, %s60
      %s75 = sphi 0, %s61
      %s79 = sphi 0, %s79
      %s81 = sphi 0, %s79
      %s82 = sphi 0, %s81
      %s96 = sphi 0, %s82
      %s100 = sphi 0, %s100
      %s102 = sphi 0, %s100
      %s103 = sphi 0, %s102
      %s117 = sphi 0, %s103
      %s121 = sphi 0, %s121
      %s123 = sphi 0, %s121
      %s124 = sphi 0, %s123
      %s138 = sphi 0, %s124
      %s142 = sphi 0, %s142
      %s144 = sphi 0, %s142
      %s145 = sphi 0, %s144
      %s159 = sphi 0, %s145
      %s163 = sphi 0, %s163
      %s165 = sphi 0, %s163
      %s166 = sphi 0, %s165
      %s180 = sphi 0, %s166
      %s184 = sphi 0, %s184
      %s186 = sphi 0, %s184
      %s187 = sphi 0, %s186
      %s201 = sphi 0, %s187
      %s205 = sphi 0, %s205
      %s207 = sphi 0, %s205
      %s208 = sphi 0, %s207
      %s222 = sphi 0, %s208
      %s226 = sphi 0, %s226
      %s228 = sphi 0, %s226
      %s229 = sphi 0, %s228
      %s243 = sphi 0, %s229
      %s247 = sphi 0, %s247
      %s249 = sphi 0, %s247
      %s250 = sphi 0, %s249
      %s264 = sphi 0, %s250
      %s268 = sphi 0, %s268
      %s270 = sphi 0, %s268
      %s271 = sphi 0, %s270
      %s285 = sphi 0, %s271
      %s289 = sphi 0, %s289
      %s291 = sphi 0, %s289
      %s292 = sphi 0, %s291
      %s306 = sphi 0, %s292
      %s312 = sphi 0, %s314
      %s315 = sphi 0, %s312
      %s316 = sphi 0, %s315
      %s332 = sphi 0, %s316
      %s338 = sphi 0, %s340
      %s341 = sphi 0, %s338
      %s342 = sphi 0, %s341
      %s358 = sphi 0, %s342
    $region4: #{deconformer_forward.3} parent=1 // loop_header_branch
      %27 = sbr.rel (%p25) target = $region8
    $region5: #{deconformer_forward.3} parent=1 // loop_body
      %s29 = ssub.s32 %s24, 1
      %s30 = ssub.s32 %s24, 2
      %s31 = sadd.s32 %s24, 1
      %s32 = ssub.s32 %s24, %s31
      %p33 = scmp.eq.s32.totalorder %s32, 0
      %s35 = sadd.s32 %s34, 1
      %s36 = scalar_select %p33, %s34, %s35
      %p39 = pneg %p33
      %p40 = scmp.eq.s32.totalorder %s24, 1
      %p41 = por %p39, %p40
      %p42 = scmp.ne.s32.totalorder %s34, %s37
      %p43 = scmp.eq.s32.totalorder %s24, 0
      %p44 = por %p42, %p43
      %p45 = scmp.ne.s32.totalorder %s34, %s37
      %p46 = scmp.eq.s32.totalorder %s29, 1
      %p47 = por %p45, %p46
      %p48 = scmp.ne.s32.totalorder %s37, %s38
      %p49 = scmp.eq.s32.totalorder %s29, 0
      %p50 = por %p48, %p49
      %p51 = scmp.ne.s32.totalorder %s37, %s38
      %p52 = scmp.eq.s32.totalorder %s30, 1
      %p53 = por %p51, %p52
      %p55 = scmp.ne.s32.totalorder %s38, %s54
      %p56 = scmp.eq.s32.totalorder %s30, 0
      %p57 = por %p55, %p56
      %s59 = sadd.s32 %s58, 1
      %p62 = scmp.eq.s32.totalorder %s24, 1
      %p63 = scmp.ne.s32.totalorder %s58, %s60
      %p64 = scmp.eq.s32.totalorder %s24, 0
      %p65 = por %p63, %p64
      %p66 = scmp.ne.s32.totalorder %s58, %s60
      %p67 = scmp.eq.s32.totalorder %s29, 1
      %p68 = por %p66, %p67
      %p69 = scmp.ne.s32.totalorder %s60, %s61
      %p70 = scmp.eq.s32.totalorder %s29, 0
      %p71 = por %p69, %p70
      %p72 = scmp.ne.s32.totalorder %s60, %s61
      %p73 = scmp.eq.s32.totalorder %s30, 1
      %p74 = por %p72, %p73
      %p76 = scmp.ne.s32.totalorder %s61, %s75
      %p77 = scmp.eq.s32.totalorder %s30, 0
      %p78 = por %p76, %p77
      %s80 = sadd.s32 %s79, 1
      %p83 = scmp.eq.s32.totalorder %s24, 1
      %p84 = scmp.ne.s32.totalorder %s79, %s81
      %p85 = scmp.eq.s32.totalorder %s24, 0
      %p86 = por %p84, %p85
      %p87 = scmp.ne.s32.totalorder %s79, %s81
      %p88 = scmp.eq.s32.totalorder %s29, 1
      %p89 = por %p87, %p88
      %p90 = scmp.ne.s32.totalorder %s81, %s82
      %p91 = scmp.eq.s32.totalorder %s29, 0
      %p92 = por %p90, %p91
      %p93 = scmp.ne.s32.totalorder %s81, %s82
      %p94 = scmp.eq.s32.totalorder %s30, 1
      %p95 = por %p93, %p94
      %p97 = scmp.ne.s32.totalorder %s82, %s96
      %p98 = scmp.eq.s32.totalorder %s30, 0
      %p99 = por %p97, %p98
      %s101 = sadd.s32 %s100, 1
      %p104 = scmp.eq.s32.totalorder %s24, 1
      %p105 = scmp.ne.s32.totalorder %s100, %s102
      %p106 = scmp.eq.s32.totalorder %s24, 0
      %p107 = por %p105, %p106
      %p108 = scmp.ne.s32.totalorder %s100, %s102
      %p109 = scmp.eq.s32.totalorder %s29, 1
      %p110 = por %p108, %p109
      %p111 = scmp.ne.s32.totalorder %s102, %s103
      %p112 = scmp.eq.s32.totalorder %s29, 0
      %p113 = por %p111, %p112
      %p114 = scmp.ne.s32.totalorder %s102, %s103
      %p115 = scmp.eq.s32.totalorder %s30, 1
      %p116 = por %p114, %p115
      %p118 = scmp.ne.s32.totalorder %s103, %s117
      %p119 = scmp.eq.s32.totalorder %s30, 0
      %p120 = por %p118, %p119
      %s122 = sadd.s32 %s121, 1
      %p125 = scmp.eq.s32.totalorder %s24, 1
      %p126 = scmp.ne.s32.totalorder %s121, %s123
      %p127 = scmp.eq.s32.totalorder %s24, 0
      %p128 = por %p126, %p127
      %p129 = scmp.ne.s32.totalorder %s121, %s123
      %p130 = scmp.eq.s32.totalorder %s29, 1
      %p131 = por %p129, %p130
      %p132 = scmp.ne.s32.totalorder %s123, %s124
      %p133 = scmp.eq.s32.totalorder %s29, 0
      %p134 = por %p132, %p133
      %p135 = scmp.ne.s32.totalorder %s123, %s124
      %p136 = scmp.eq.s32.totalorder %s30, 1
      %p137 = por %p135, %p136
      %p139 = scmp.ne.s32.totalorder %s124, %s138
      %p140 = scmp.eq.s32.totalorder %s30, 0
      %p141 = por %p139, %p140
      %s143 = sadd.s32 %s142, 1
      %p146 = scmp.eq.s32.totalorder %s24, 1
      %p147 = scmp.ne.s32.totalorder %s142, %s144
      %p148 = scmp.eq.s32.totalorder %s24, 0
      %p149 = por %p147, %p148
      %p150 = scmp.ne.s32.totalorder %s142, %s144
      %p151 = scmp.eq.s32.totalorder %s29, 1
      %p152 = por %p150, %p151
      %p153 = scmp.ne.s32.totalorder %s144, %s145
      %p154 = scmp.eq.s32.totalorder %s29, 0
      %p155 = por %p153, %p154
      %p156 = scmp.ne.s32.totalorder %s144, %s145
      %p157 = scmp.eq.s32.totalorder %s30, 1
      %p158 = por %p156, %p157
      %p160 = scmp.ne.s32.totalorder %s145, %s159
      %p161 = scmp.eq.s32.totalorder %s30, 0
      %p162 = por %p160, %p161
      %s164 = sadd.s32 %s163, 1
      %p167 = scmp.eq.s32.totalorder %s24, 1
      %p168 = scmp.ne.s32.totalorder %s163, %s165
      %p169 = scmp.eq.s32.totalorder %s24, 0
      %p170 = por %p168, %p169
      %p171 = scmp.ne.s32.totalorder %s163, %s165
      %p172 = scmp.eq.s32.totalorder %s29, 1
      %p173 = por %p171, %p172
      %p174 = scmp.ne.s32.totalorder %s165, %s166
      %p175 = scmp.eq.s32.totalorder %s29, 0
      %p176 = por %p174, %p175
      %p177 = scmp.ne.s32.totalorder %s165, %s166
      %p178 = scmp.eq.s32.totalorder %s30, 1
      %p179 = por %p177, %p178
      %p181 = scmp.ne.s32.totalorder %s166, %s180
      %p182 = scmp.eq.s32.totalorder %s30, 0
      %p183 = por %p181, %p182
      %s185 = sadd.s32 %s184, 1
      %p188 = scmp.eq.s32.totalorder %s24, 1
      %p189 = scmp.ne.s32.totalorder %s184, %s186
      %p190 = scmp.eq.s32.totalorder %s24, 0
      %p191 = por %p189, %p190
      %p192 = scmp.ne.s32.totalorder %s184, %s186
      %p193 = scmp.eq.s32.totalorder %s29, 1
      %p194 = por %p192, %p193
      %p195 = scmp.ne.s32.totalorder %s186, %s187
      %p196 = scmp.eq.s32.totalorder %s29, 0
      %p197 = por %p195, %p196
      %p198 = scmp.ne.s32.totalorder %s186, %s187
      %p199 = scmp.eq.s32.totalorder %s30, 1
      %p200 = por %p198, %p199
      %p202 = scmp.ne.s32.totalorder %s187, %s201
      %p203 = scmp.eq.s32.totalorder %s30, 0
      %p204 = por %p202, %p203
      %s206 = sadd.s32 %s205, 1
      %p209 = scmp.eq.s32.totalorder %s24, 1
      %p210 = scmp.ne.s32.totalorder %s205, %s207
      %p211 = scmp.eq.s32.totalorder %s24, 0
      %p212 = por %p210, %p211
      %p213 = scmp.ne.s32.totalorder %s205, %s207
      %p214 = scmp.eq.s32.totalorder %s29, 1
      %p215 = por %p213, %p214
      %p216 = scmp.ne.s32.totalorder %s207, %s208
      %p217 = scmp.eq.s32.totalorder %s29, 0
      %p218 = por %p216, %p217
      %p219 = scmp.ne.s32.totalorder %s207, %s208
      %p220 = scmp.eq.s32.totalorder %s30, 1
      %p221 = por %p219, %p220
      %p223 = scmp.ne.s32.totalorder %s208, %s222
      %p224 = scmp.eq.s32.totalorder %s30, 0
      %p225 = por %p223, %p224
      %s227 = sadd.s32 %s226, 1
      %p230 = scmp.eq.s32.totalorder %s24, 1
      %p231 = scmp.ne.s32.totalorder %s226, %s228
      %p232 = scmp.eq.s32.totalorder %s24, 0
      %p233 = por %p231, %p232
      %p234 = scmp.ne.s32.totalorder %s226, %s228
      %p235 = scmp.eq.s32.totalorder %s29, 1
      %p236 = por %p234, %p235
      %p237 = scmp.ne.s32.totalorder %s228, %s229
      %p238 = scmp.eq.s32.totalorder %s29, 0
      %p239 = por %p237, %p238
      %p240 = scmp.ne.s32.totalorder %s228, %s229
      %p241 = scmp.eq.s32.totalorder %s30, 1
      %p242 = por %p240, %p241
      %p244 = scmp.ne.s32.totalorder %s229, %s243
      %p245 = scmp.eq.s32.totalorder %s30, 0
      %p246 = por %p244, %p245
      %s248 = sadd.s32 %s247, 1
      %p251 = scmp.eq.s32.totalorder %s24, 1
      %p252 = scmp.ne.s32.totalorder %s247, %s249
      %p253 = scmp.eq.s32.totalorder %s24, 0
      %p254 = por %p252, %p253
      %p255 = scmp.ne.s32.totalorder %s247, %s249
      %p256 = scmp.eq.s32.totalorder %s29, 1
      %p257 = por %p255, %p256
      %p258 = scmp.ne.s32.totalorder %s249, %s250
      %p259 = scmp.eq.s32.totalorder %s29, 0
      %p260 = por %p258, %p259
      %p261 = scmp.ne.s32.totalorder %s249, %s250
      %p262 = scmp.eq.s32.totalorder %s30, 1
      %p263 = por %p261, %p262
      %p265 = scmp.ne.s32.totalorder %s250, %s264
      %p266 = scmp.eq.s32.totalorder %s30, 0
      %p267 = por %p265, %p266
      %s269 = sadd.s32 %s268, 1
      %p272 = scmp.eq.s32.totalorder %s24, 1
      %p273 = scmp.ne.s32.totalorder %s268, %s270
      %p274 = scmp.eq.s32.totalorder %s24, 0
      %p275 = por %p273, %p274
      %p276 = scmp.ne.s32.totalorder %s268, %s270
      %p277 = scmp.eq.s32.totalorder %s29, 1
      %p278 = por %p276, %p277
      %p279 = scmp.ne.s32.totalorder %s270, %s271
      %p280 = scmp.eq.s32.totalorder %s29, 0
      %p281 = por %p279, %p280
      %p282 = scmp.ne.s32.totalorder %s270, %s271
      %p283 = scmp.eq.s32.totalorder %s30, 1
      %p284 = por %p282, %p283
      %p286 = scmp.ne.s32.totalorder %s271, %s285
      %p287 = scmp.eq.s32.totalorder %s30, 0
      %p288 = por %p286, %p287
      %s290 = sadd.s32 %s289, 1
      %p293 = scmp.eq.s32.totalorder %s24, 1
      %p294 = scmp.ne.s32.totalorder %s289, %s291
      %p295 = scmp.eq.s32.totalorder %s24, 0
      %p296 = por %p294, %p295
      %p297 = scmp.ne.s32.totalorder %s289, %s291
      %p298 = scmp.eq.s32.totalorder %s29, 1
      %p299 = por %p297, %p298
      %p300 = scmp.ne.s32.totalorder %s291, %s292
      %p301 = scmp.eq.s32.totalorder %s29, 0
      %p302 = por %p300, %p301
      %p303 = scmp.ne.s32.totalorder %s291, %s292
      %p304 = scmp.eq.s32.totalorder %s30, 1
      %p305 = por %p303, %p304
      %p307 = scmp.ne.s32.totalorder %s292, %s306
      %p308 = scmp.eq.s32.totalorder %s30, 0
      %p309 = por %p307, %p308
      %s310 = ssub.s32 %s24, %s31
      %p311 = scmp.eq.s32.totalorder %s310, 0
      %s313 = sadd.s32 %s312, 1
      %s314 = scalar_select %p311, %s312, %s313
      %p317 = pneg %p311
      %p318 = scmp.eq.s32.totalorder %s24, 1
      %p319 = por %p317, %p318
      %p320 = scmp.ne.s32.totalorder %s312, %s315
      %p321 = scmp.eq.s32.totalorder %s24, 0
      %p322 = por %p320, %p321
      %p323 = scmp.ne.s32.totalorder %s312, %s315
      %p324 = scmp.eq.s32.totalorder %s29, 1
      %p325 = por %p323, %p324
      %p326 = scmp.ne.s32.totalorder %s315, %s316
      %p327 = scmp.eq.s32.totalorder %s29, 0
      %p328 = por %p326, %p327
      %p329 = scmp.ne.s32.totalorder %s315, %s316
      %p330 = scmp.eq.s32.totalorder %s30, 1
      %p331 = por %p329, %p330
      %p333 = scmp.ne.s32.totalorder %s316, %s332
      %p334 = scmp.eq.s32.totalorder %s30, 0
      %p335 = por %p333, %p334
      %s336 = ssub.s32 %s24, %s31
      %p337 = scmp.eq.s32.totalorder %s336, 0
      %s339 = sadd.s32 %s338, 1
      %s340 = scalar_select %p337, %s338, %s339
      %p343 = pneg %p337
      %p344 = scmp.eq.s32.totalorder %s24, 1
      %p345 = por %p343, %p344
      %p346 = scmp.ne.s32.totalorder %s338, %s341
      %p347 = scmp.eq.s32.totalorder %s24, 0
      %p348 = por %p346, %p347
      %p349 = scmp.ne.s32.totalorder %s338, %s341
      %p350 = scmp.eq.s32.totalorder %s29, 1
      %p351 = por %p349, %p350
      %p352 = scmp.ne.s32.totalorder %s341, %s342
      %p353 = scmp.eq.s32.totalorder %s29, 0
      %p354 = por %p352, %p353
      %p355 = scmp.ne.s32.totalorder %s341, %s342
      %p356 = scmp.eq.s32.totalorder %s30, 1
      %p357 = por %p355, %p356
      %p359 = scmp.ne.s32.totalorder %s342, %s358
      %p360 = scmp.eq.s32.totalorder %s30, 0
      %p361 = por %p359, %p360
      %p362 = scmp.le.s32.totalorder 1, %s24
      %p363 = scmp.lt.s32.totalorder %s24, 3
      %p364 = pnand %p362, %p363
      %p365 = pneg %p364
      // Predicated region
      $region9: #{deconformer_forward.3} parent=5 // pred_check
        _
      $region10: #{deconformer_forward.3} parent=5 // pred_check_branch
        %367 = sbr.rel (%p364) target = $region12
      $region11: #{deconformer_forward.3} parent=5 // pred_region
        %s368 = ssub.s32 %s24, 1
        // Predicated region
        $region13: #{deconformer_forward.3} parent=11 // pred_check
          %p369 = pneg %p71
        $region14: #{deconformer_forward.3} parent=11 // pred_check_branch
          %371 = sbr.rel (%p369) target = $region16
        $region15: #{deconformer_forward.3} parent=11 // pred_region
          %s373 = ssub.s32 12288, 12288
          %374 = vsyncadd [#allocation3], %s373
          %s375 = sshll.u32 [#allocation2], 4
          %s376 = int_to_ptr.vmem [resolvable:$true] %s375
          %381 = dma.hbm_to_vmem [thread:$0]  %s1, 12288, %s376, [#allocation3], 192, 192, 12
        $region16: #{deconformer_forward.3} parent=11 // pred_fallthru
          _
        // Predicated region
        $region17: #{deconformer_forward.3} parent=11 // pred_check
          %p382 = pneg %p92
        $region18: #{deconformer_forward.3} parent=11 // pred_check_branch
          %384 = sbr.rel (%p382) target = $region20
        $region19: #{deconformer_forward.3} parent=11 // pred_region
          _
        $region20: #{deconformer_forward.3} parent=11 // pred_fallthru
          _
        // Predicated region
        $region21: #{deconformer_forward.3} parent=11 // pred_check
          %p385 = pneg %p113
        $region22: #{deconformer_forward.3} parent=11 // pred_check_branch
          %387 = sbr.rel (%p385) target = $region24
        $region23: #{deconformer_forward.3} parent=11 // pred_region
          %s389 = ssub.s32 4096, 4096
          %390 = vsyncadd [#allocation5], %s389
          %s391 = sshll.u32 [#allocation4], 4
          %s392 = int_to_ptr.vmem [resolvable:$true] %s391
          %397 = dma.hbm_to_vmem [thread:$0]  %s3, 4096, %s392, [#allocation5], 64, 64, 4
        $region24: #{deconformer_forward.3} parent=11 // pred_fallthru
          _
        // Predicated region
        $region25: #{deconformer_forward.3} parent=11 // pred_check
          %p398 = pneg %p134
        $region26: #{deconformer_forward.3} parent=11 // pred_check_branch
          %400 = sbr.rel (%p398) target = $region28
        $region27: #{deconformer_forward.3} parent=11 // pred_region
          _
        $region28: #{deconformer_forward.3} parent=11 // pred_fallthru
          _
        // Predicated region
        $region29: #{deconformer_forward.3} parent=11 // pred_check
          %p401 = pneg %p155
        $region30: #{deconformer_forward.3} parent=11 // pred_check_branch
          %403 = sbr.rel (%p401) target = $region32
        $region31: #{deconformer_forward.3} parent=11 // pred_region
          _
        $region32: #{deconformer_forward.3} parent=11 // pred_fallthru
          _
        // Predicated region
        $region33: #{deconformer_forward.3} parent=11 // pred_check
          %p404 = pneg %p176
        $region34: #{deconformer_forward.3} parent=11 // pred_check_branch
          %406 = sbr.rel (%p404) target = $region36
        $region35: #{deconformer_forward.3} parent=11 // pred_region
          _
        $region36: #{deconformer_forward.3} parent=11 // pred_fallthru
          _
        // Predicated region
        $region37: #{deconformer_forward.3} parent=11 // pred_check
          %p407 = pneg %p197
        $region38: #{deconformer_forward.3} parent=11 // pred_check_branch
          %409 = sbr.rel (%p407) target = $region40
        $region39: #{deconformer_forward.3} parent=11 // pred_region
          %s411 = ssub.s32 16384, 16384
          %412 = vsyncadd [#allocation5], %s411
          %s413 = sshll.u32 [#allocation6], 4
          %s414 = int_to_ptr.vmem [resolvable:$true] %s413
          %419 = dma.hbm_to_vmem [thread:$0]  %s7, 16384, %s414, [#allocation5], 256, 256, 16
        $region40: #{deconformer_forward.3} parent=11 // pred_fallthru
          _
        // Predicated region
        $region41: #{deconformer_forward.3} parent=11 // pred_check
          %p420 = pneg %p218
        $region42: #{deconformer_forward.3} parent=11 // pred_check_branch
          %422 = sbr.rel (%p420) target = $region44
        $region43: #{deconformer_forward.3} parent=11 // pred_region
          _
        $region44: #{deconformer_forward.3} parent=11 // pred_fallthru
          _
        // Predicated region
        $region45: #{deconformer_forward.3} parent=11 // pred_check
          %p423 = pneg %p239
        $region46: #{deconformer_forward.3} parent=11 // pred_check_branch
          %425 = sbr.rel (%p423) target = $region48
        $region47: #{deconformer_forward.3} parent=11 // pred_region
          %s427 = ssub.s32 16384, 16384
          %428 = vsyncadd [#allocation8], %s427
          %s429 = sshll.u32 [#allocation7], 4
          %s430 = int_to_ptr.vmem [resolvable:$true] %s429
          %435 = dma.hbm_to_vmem [thread:$0]  %s9, 16384, %s430, [#allocation8], 64, 64, 4
        $region48: #{deconformer_forward.3} parent=11 // pred_fallthru
          _
        // Predicated region
        $region49: #{deconformer_forward.3} parent=11 // pred_check
          %p436 = pneg %p260
        $region50: #{deconformer_forward.3} parent=11 // pred_check_branch
          %438 = sbr.rel (%p436) target = $region52
        $region51: #{deconformer_forward.3} parent=11 // pred_region
          _
        $region52: #{deconformer_forward.3} parent=11 // pred_fallthru
          _
        // Predicated region
        $region53: #{deconformer_forward.3} parent=11 // pred_check
          %p439 = pneg %p281
        $region54: #{deconformer_forward.3} parent=11 // pred_check_branch
          %441 = sbr.rel (%p439) target = $region56
        $region55: #{deconformer_forward.3} parent=11 // pred_region
          _
        $region56: #{deconformer_forward.3} parent=11 // pred_fallthru
          _
        // Predicated region
        $region57: #{deconformer_forward.3} parent=11 // pred_check
          %p442 = pneg %p302
        $region58: #{deconformer_forward.3} parent=11 // pred_check_branch
          %444 = sbr.rel (%p442) target = $region60
        $region59: #{deconformer_forward.3} parent=11 // pred_region
          _
        $region60: #{deconformer_forward.3} parent=11 // pred_fallthru
          _
      $region12: #{deconformer_forward.3} parent=5 // pred_fallthru
        _
      %p445 = scmp.lt.s32.totalorder %s24, 2
      // Predicated region
      $region61: #{deconformer_forward.3} parent=5 // pred_check
        %p446 = pneg %p445
      $region62: #{deconformer_forward.3} parent=5 // pred_check_branch
        %448 = sbr.rel (%p446) target = $region64
      $region63: #{deconformer_forward.3} parent=5 // pred_region
        // Predicated region
        $region65: #{deconformer_forward.3} parent=63 // pred_check
          %p449 = pneg %p44
        $region66: #{deconformer_forward.3} parent=63 // pred_check_branch
          %451 = sbr.rel (%p449) target = $region68
        $region67: #{deconformer_forward.3} parent=63 // pred_region
          %p452 = scmp.lt.s32.totalorder %s24, 1
          %s453 = scalar_select %p452, %s24, 1
          %s454 = smul.addr %s453, 2
          %s455 = smul.addr %s454, 8
          %s456 = scalar_lea.vmem %s0, %s455
        $region68: #{deconformer_forward.3} parent=63 // pred_fallthru
          _
      $region64: #{deconformer_forward.3} parent=5 // pred_fallthru
        _
      %p457 = scmp.le.s32.totalorder 1, %s24
      %p458 = scmp.lt.s32.totalorder %s24, 3
      %p459 = pnand %p457, %p458
      %p460 = pneg %p459
      // Predicated region
      $region69: #{deconformer_forward.3} parent=5 // pred_check
        _
      $region70: #{deconformer_forward.3} parent=5 // pred_check_branch
        %462 = sbr.rel (%p459) target = $region72
      $region71: #{deconformer_forward.3} parent=5 // pred_region
        %s463 = ssub.s32 %s24, 1
        // Predicated region
        $region73: #{deconformer_forward.3} parent=71 // pred_check
          %p464 = pneg %p71
        $region74: #{deconformer_forward.3} parent=71 // pred_check_branch
          %466 = sbr.rel (%p464) target = $region76
        $region75: #{deconformer_forward.3} parent=71 // pred_region
          %467 = dma.done [#allocation3], 12288
        $region76: #{deconformer_forward.3} parent=71 // pred_fallthru
          _
        // Predicated region
        $region77: #{deconformer_forward.3} parent=71 // pred_check
          %p468 = pneg %p113
        $region78: #{deconformer_forward.3} parent=71 // pred_check_branch
          %470 = sbr.rel (%p468) target = $region80
        $region79: #{deconformer_forward.3} parent=71 // pred_region
          %471 = dma.done [#allocation5], 4096
        $region80: #{deconformer_forward.3} parent=71 // pred_fallthru
          _
        // Predicated region
        $region81: #{deconformer_forward.3} parent=71 // pred_check
          %p472 = pneg %p197
        $region82: #{deconformer_forward.3} parent=71 // pred_check_branch
          %474 = sbr.rel (%p472) target = $region84
        $region83: #{deconformer_forward.3} parent=71 // pred_region
          %475 = dma.done [#allocation5], 16384
        $region84: #{deconformer_forward.3} parent=71 // pred_fallthru
          _
        // Predicated region
        $region85: #{deconformer_forward.3} parent=71 // pred_check
          %p476 = pneg %p239
        $region86: #{deconformer_forward.3} parent=71 // pred_check_branch
          %478 = sbr.rel (%p476) target = $region88
        $region87: #{deconformer_forward.3} parent=71 // pred_region
          %479 = dma.done [#allocation8], 16384
        $region88: #{deconformer_forward.3} parent=71 // pred_fallthru
          _
        %p480 = scmp.lt.s32.totalorder %s29, 1
        %s481 = scalar_select %p480, %s29, 1
        %s482 = smul.addr %s481, 2
        %s483 = smul.addr %s482, 8
        %s484 = scalar_lea.vmem %s0, %s483
        %p485 = pneg %p50
        %p486 = pneg %p47
        %p487 = pneg %p71
        %p488 = pneg %p68
        %p489 = pneg %p92
        %p490 = pneg %p89
        %p491 = pneg %p113
        %p492 = pneg %p110
        %p493 = pneg %p134
        %p494 = pneg %p131
        %p495 = pneg %p155
        %p496 = pneg %p152
        %p497 = pneg %p176
        %p498 = pneg %p173
        %p499 = pneg %p197
        %p500 = pneg %p194
        %p501 = pneg %p218
        %p502 = pneg %p215
        %p503 = pneg %p239
        %p504 = pneg %p236
        %p505 = pneg %p260
        %p506 = pneg %p257
        %p507 = pneg %p281
        %p508 = pneg %p278
        %p509 = pneg %p302
        %p510 = pneg %p299
        %p511 = pneg %p328
        %p512 = pneg %p325
        %p513 = scmp.lt.s32.totalorder %s29, 1
        %s514 = scalar_select %p513, %s29, 1
        %s515 = scalar_lea.vmem %s13, %s514
        %p516 = pneg %p354
        %p517 = pneg %p351
        %p518 = scmp.lt.s32.totalorder %s29, 1
        %s519 = scalar_select %p518, %s29, 1
        %s520 = smul.addr %s519, 2
        %s521 = smul.addr %s520, 8
        %s522 = scalar_lea.vmem %s14, %s521
        %p523 = scmp.lt.s32.totalorder %s29, 1
        %s524 = scalar_select %p523, %s29, 1
        %s525 = smul.addr %s524, 2
        %s526 = smul.addr %s525, 8
        %s527 = scalar_lea.vmem %s0, %s526
        %p528 = scmp.lt.s32.totalorder %s29, 1
        %s529 = scalar_select %p528, %s29, 1
        %s530 = scalar_lea.vmem %s13, %s529
        %p531 = scmp.lt.s32.totalorder %s29, 1
        %s532 = scalar_select %p531, %s29, 1
        %s533 = smul.addr %s532, 2
        %s534 = smul.addr %s533, 8
        %s535 = scalar_lea.vmem %s14, %s534
        %v537 = vlaneseq
        %v538 = vand.u32 %v537, 127
        %vm539 = vcmp.lt.s32.totalorder %v538, 9
        %v540 = vsel %vm539, 0.0, -1e+30
        %v541 = vld [vmem:[%s527] sm:$0xff]
        %v542 = vld [vmem:[%s527 + $0x8] sm:$0xff]
        %v543 = vpack.c.bf16 %v542, %v541
        %v544 = vld [vmem:[#allocation2] sm:$0xff]
        %v545 = vld [vmem:[#allocation2 + $0x8] sm:$0xf]
        %v546 = vld [vmem:[#allocation2 + $0xc] sm:$0xff]
        %v547 = vld [vmem:[#allocation2 + $0x14] sm:$0xf]
        %v548 = vld [vmem:[#allocation2 + $0x18] sm:$0xff]
        %v549 = vld [vmem:[#allocation2 + $0x20] sm:$0xf]
        %v550 = vld [vmem:[#allocation2 + $0x24] sm:$0xff]
        %v551 = vld [vmem:[#allocation2 + $0x2c] sm:$0xf]
        %v552 = vld [vmem:[#allocation2 + $0x30] sm:$0xff]
        %v553 = vld [vmem:[#allocation2 + $0x38] sm:$0xf]
        %v554 = vld [vmem:[#allocation2 + $0x3c] sm:$0xff]
        %v555 = vld [vmem:[#allocation2 + $0x44] sm:$0xf]
        %v556 = vld [vmem:[#allocation2 + $0x48] sm:$0xff]
        %v557 = vld [vmem:[#allocation2 + $0x50] sm:$0xf]
        %v558 = vld [vmem:[#allocation2 + $0x54] sm:$0xff]
        %v559 = vld [vmem:[#allocation2 + $0x5c] sm:$0xf]
        %v560 = vld [vmem:[#allocation2 + $0x60] sm:$0xff]
        %v561 = vld [vmem:[#allocation2 + $0x68] sm:$0xf]
        %v562 = vld [vmem:[#allocation2 + $0x6c] sm:$0xff]
        %v563 = vld [vmem:[#allocation2 + $0x74] sm:$0xf]
        %v564 = vld [vmem:[#allocation2 + $0x78] sm:$0xff]
        %v565 = vld [vmem:[#allocation2 + $0x80] sm:$0xf]
        %v566 = vld [vmem:[#allocation2 + $0x84] sm:$0xff]
        %v567 = vld [vmem:[#allocation2 + $0x8c] sm:$0xf]
        %v568 = vld [vmem:[#allocation2 + $0x90] sm:$0xff]
        %v569 = vld [vmem:[#allocation2 + $0x98] sm:$0xf]
        %v570 = vld [vmem:[#allocation2 + $0x9c] sm:$0xff]
        %v571 = vld [vmem:[#allocation2 + $0xa4] sm:$0xf]
        %v572 = vld [vmem:[#allocation2 + $0xa8] sm:$0xff]
        %v573 = vld [vmem:[#allocation2 + $0xb0] sm:$0xf]
        %v574 = vld [vmem:[#allocation2 + $0xb4] sm:$0xff]
        %v575 = vld [vmem:[#allocation2 + $0xbc] sm:$0xf]
        %v576 = vld [vmem:[%s2] sm:$0x7]
        %v578 = vlaneseq
        %v579 = vshrl.u32 %v578, 7
        %v580 = vsub.s32 0, %v579
        %v581 = vrot.slane %v576, %v580
        %v582 = vlaneseq
        %v583 = vshrl.u32 %v582, 7
        %v584 = vsub.s32 1, %v583
        %v585 = vrot.slane %v576, %v584
        %v586 = vlaneseq
        %v587 = vshrl.u32 %v586, 7
        %v588 = vsub.s32 2, %v587
        %v589 = vrot.slane %v576, %v588
        %v625 = vunpack.c.l.b16 %v544
        %v626 = vunpack.c.h.b16 %v544
        %v627 = vunpack.c.l.b16 %v545
        %v628 = vunpack.c.l.b16 %v546
        %v629 = vunpack.c.h.b16 %v546
        %v630 = vunpack.c.l.b16 %v547
        %v631 = vunpack.c.l.b16 %v548
        %v632 = vunpack.c.h.b16 %v548
        %v633 = vunpack.c.l.b16 %v549
        %v634 = vunpack.c.l.b16 %v550
        %v635 = vunpack.c.h.b16 %v550
        %v636 = vunpack.c.l.b16 %v551
        %v637 = vunpack.c.l.b16 %v552
        %v638 = vunpack.c.h.b16 %v552
        %v639 = vunpack.c.l.b16 %v553
        %v640 = vunpack.c.l.b16 %v554
        %v641 = vunpack.c.h.b16 %v554
        %v642 = vunpack.c.l.b16 %v555
        %v643 = vunpack.c.l.b16 %v556
        %v644 = vunpack.c.h.b16 %v556
        %v645 = vunpack.c.l.b16 %v557
        %v646 = vunpack.c.l.b16 %v558
        %v647 = vunpack.c.h.b16 %v558
        %v648 = vunpack.c.l.b16 %v559
        %v649 = vunpack.c.l.b16 %v560
        %v650 = vunpack.c.h.b16 %v560
        %v651 = vunpack.c.l.b16 %v561
        %v652 = vunpack.c.l.b16 %v562
        %v653 = vunpack.c.h.b16 %v562
        %v654 = vunpack.c.l.b16 %v563
        %v655 = vunpack.c.l.b16 %v564
        %v656 = vunpack.c.h.b16 %v564
        %v657 = vunpack.c.l.b16 %v565
        %v658 = vunpack.c.l.b16 %v566
        %v659 = vunpack.c.h.b16 %v566
        %v660 = vunpack.c.l.b16 %v567
        %v661 = vunpack.c.l.b16 %v568
        %v662 = vunpack.c.h.b16 %v568
        %v663 = vunpack.c.l.b16 %v569
        %v664 = vunpack.c.l.b16 %v570
        %v665 = vunpack.c.h.b16 %v570
        %v666 = vunpack.c.l.b16 %v571
        %v667 = vunpack.c.l.b16 %v572
        %v668 = vunpack.c.h.b16 %v572
        %v669 = vunpack.c.l.b16 %v573
        %v670 = vunpack.c.l.b16 %v574
        %v671 = vunpack.c.h.b16 %v574
        %v672 = vunpack.c.l.b16 %v575
        %v673 = vpack.c.b16 %v628, %v625
        %v674 = vpack.c.b16 %v629, %v626
        %v675 = vpack.c.b16 %v630, %v627
        %v676 = vpack.c.b16 %v634, %v631
        %v677 = vpack.c.b16 %v635, %v632
        %v678 = vpack.c.b16 %v636, %v633
        %v679 = vpack.c.b16 %v640, %v637
        %v680 = vpack.c.b16 %v641, %v638
        %v681 = vpack.c.b16 %v642, %v639
        %v682 = vpack.c.b16 %v646, %v643
        %v683 = vpack.c.b16 %v647, %v644
        %v684 = vpack.c.b16 %v648, %v645
        %v685 = vpack.c.b16 %v652, %v649
        %v686 = vpack.c.b16 %v653, %v650
        %v687 = vpack.c.b16 %v654, %v651
        %v688 = vpack.c.b16 %v658, %v655
        %v689 = vpack.c.b16 %v659, %v656
        %v690 = vpack.c.b16 %v660, %v657
        %v691 = vpack.c.b16 %v664, %v661
        %v692 = vpack.c.b16 %v665, %v662
        %v693 = vpack.c.b16 %v666, %v663
        %v694 = vpack.c.b16 %v670, %v667
        %v695 = vpack.c.b16 %v671, %v668
        %v696 = vpack.c.b16 %v672, %v669
        %721 = vmatprep.subr.bf16.mxu0 %v674
        %722 = vmatpush1.bf16.msra.mxu0 %v673
        %723 = vmatprep.subr.bf16.mxu0 %v677
        %724 = vmatpush1.bf16.msra.mxu0 %v676
        %725 = vmatprep.subr.bf16.mxu0 %v680
        %726 = vmatpush1.bf16.msra.mxu0 %v679
        %727 = vmatprep.subr.bf16.mxu0 %v683
        %728 = vmatpush1.bf16.msra.mxu0 %v682
        %729 = vmatprep.subr.bf16.mxu0 %v686
        %730 = vmatpush1.bf16.msra.mxu0 %v685
        %731 = vmatprep.subr.bf16.mxu0 %v689
        %732 = vmatpush1.bf16.msra.mxu0 %v688
        %733 = vmatprep.subr.bf16.mxu0 %v692
        %734 = vmatpush1.bf16.msra.mxu0 %v691
        %735 = vmatprep.subr.bf16.mxu0 %v695
        %736 = vmatpush1.bf16.msra.mxu0 %v694
        %737 = vmatprep.subr.bf16.mxu0 0
        %738 = vmatpush1.bf16.msra.mxu0 0
        %739 = vmatprep.subr.bf16.mxu0 0
        %740 = vmatpush1.bf16.msra.mxu0 0
        %741 = vmatprep.subr.bf16.mxu0 0
        %742 = vmatpush1.bf16.msra.mxu0 0
        %743 = vmatprep.subr.bf16.mxu0 0
        %744 = vmatpush1.bf16.msra.mxu0 0
        %745 = vmatprep.subr.bf16.mxu0 0
        %746 = vmatpush1.bf16.msra.mxu0 0
        %747 = vmatprep.subr.bf16.mxu0 0
        %748 = vmatpush1.bf16.msra.mxu0 0
        %749 = vmatprep.subr.bf16.mxu0 0
        %750 = vmatpush1.bf16.msra.mxu0 0
        %751 = vmatprep.subr.bf16.mxu0 0
        %752 = vmatpush1.bf16.msra.mxu0 0
        %753 = vmatprep.mubr.bf16.mxu0 0
        %754 = vmatmul.mubr.bf16.gmra.mrb[0].mxu0 %v543
        %v755 = vpop.f32.mrb[0].mxu0
        %v756 = vadd.f32 %v581, %v755
        %v757 = vpop.f32.mrb[0].mxu0
        %v758 = vadd.f32 %v585, %v757
        %v759 = vpop.f32.mrb[0].mxu0
        %v760 = vadd.f32 %v581, %v759
        %v761 = vpop.f32.mrb[0].mxu0
        %v762 = vadd.f32 %v585, %v761
        %763 = vdwg.mxu0
        %764 = vmatprep.subr.bf16.mxu0 0
        %765 = vmatpush1.bf16.msra.mxu0 %v675
        %766 = vmatprep.subr.bf16.mxu0 0
        %767 = vmatpush1.bf16.msra.mxu0 %v678
        %768 = vmatprep.subr.bf16.mxu0 0
        %769 = vmatpush1.bf16.msra.mxu0 %v681
        %770 = vmatprep.subr.bf16.mxu0 0
        %771 = vmatpush1.bf16.msra.mxu0 %v684
        %772 = vmatprep.subr.bf16.mxu0 0
        %773 = vmatpush1.bf16.msra.mxu0 %v687
        %774 = vmatprep.subr.bf16.mxu0 0
        %775 = vmatpush1.bf16.msra.mxu0 %v690
        %776 = vmatprep.subr.bf16.mxu0 0
        %777 = vmatpush1.bf16.msra.mxu0 %v693
        %778 = vmatprep.subr.bf16.mxu0 0
        %779 = vmatpush1.bf16.msra.mxu0 %v696
        %780 = vmatprep.subr.bf16.mxu0 0
        %781 = vmatpush1.bf16.msra.mxu0 0
        %782 = vmatprep.subr.bf16.mxu0 0
        %783 = vmatpush1.bf16.msra.mxu0 0
        %784 = vmatprep.subr.bf16.mxu0 0
        %785 = vmatpush1.bf16.msra.mxu0 0
        %786 = vmatprep.subr.bf16.mxu0 0
        %787 = vmatpush1.bf16.msra.mxu0 0
        %788 = vmatprep.subr.bf16.mxu0 0
        %789 = vmatpush1.bf16.msra.mxu0 0
        %790 = vmatprep.subr.bf16.mxu0 0
        %791 = vmatpush1.bf16.msra.mxu0 0
        %792 = vmatprep.subr.bf16.mxu0 0
        %793 = vmatpush1.bf16.msra.mxu0 0
        %794 = vmatprep.subr.bf16.mxu0 0
        %795 = vmatpush1.bf16.msra.mxu0 0
        %796 = vmatprep.mubr.bf16.mxu0 0
        %797 = vmatmul.mubr.bf16.gmra.mrb[0].mxu0 %v543
        %v798 = vpop.f32.mrb[0].mxu0
        %v799 = vadd.f32 %v589, %v798
        %v800 = vpop.f32.mrb[0].mxu0
        %v801 = vpop.f32.mrb[0].mxu0
        %v802 = vadd.f32 %v589, %v801
        %v803 = vpop.f32.mrb[0].mxu0
        %804 = vdwg.mxu0
        %v805 = vld [vmem:[#allocation4] sm:$0xf]
        %v806 = vld [vmem:[#allocation4 + $0x4] sm:$0xf]
        %v807 = vld [vmem:[#allocation4 + $0x8] sm:$0xf]
        %v808 = vld [vmem:[#allocation4 + $0xc] sm:$0xf]
        %v809 = vld [vmem:[#allocation4 + $0x10] sm:$0xf]
        %v810 = vld [vmem:[#allocation4 + $0x14] sm:$0xf]
        %v811 = vld [vmem:[#allocation4 + $0x18] sm:$0xf]
        %v812 = vld [vmem:[#allocation4 + $0x1c] sm:$0xf]
        %v813 = vld [vmem:[#allocation4 + $0x20] sm:$0xf]
        %v814 = vld [vmem:[#allocation4 + $0x24] sm:$0xf]
        %v815 = vld [vmem:[#allocation4 + $0x28] sm:$0xf]
        %v816 = vld [vmem:[#allocation4 + $0x2c] sm:$0xf]
        %v817 = vld [vmem:[#allocation4 + $0x30] sm:$0xf]
        %v818 = vld [vmem:[#allocation4 + $0x34] sm:$0xf]
        %v819 = vld [vmem:[#allocation4 + $0x38] sm:$0xf]
        %v820 = vld [vmem:[#allocation4 + $0x3c] sm:$0xf]
        %v821 = vmul.f32 %v756, 0.17677669
        %v822 = vmul.f32 %v760, 0.17677669
        %v823 = vpack.c.bf16 %v822, %v821
        %v824 = vpack.c.bf16 %v762, %v758
        %v825 = vpack.c.bf16 %v802, %v799
        %vm826 = vcmask 261120
        %v828 = vsel %vm826, %v823, 0
        %v831 = vsel %vm826, %v824, 0
        %833 = vmatprep.subr.bf16.mxu0 0
        %834 = vmatpush1.bf16.xpose.msra.mxu0 %v831
        %835 = vmatprep.subr.bf16.mxu0 0
        %836 = vmatpush1.bf16.xpose.msra.mxu0 0
        %837 = vmatprep.subr.bf16.mxu0 0
        %838 = vmatpush1.bf16.xpose.msra.mxu0 0
        %839 = vmatprep.subr.bf16.mxu0 0
        %840 = vmatpush1.bf16.xpose.msra.mxu0 0
        %841 = vmatprep.subr.bf16.mxu0 0
        %842 = vmatpush1.bf16.xpose.msra.mxu0 0
        %843 = vmatprep.subr.bf16.mxu0 0
        %844 = vmatpush1.bf16.xpose.msra.mxu0 0
        %845 = vmatprep.subr.bf16.mxu0 0
        %846 = vmatpush1.bf16.xpose.msra.mxu0 0
        %847 = vmatprep.subr.bf16.mxu0 0
        %848 = vmatpush1.bf16.xpose.msra.mxu0 0
        %849 = vmatprep.subr.bf16.mxu0 0
        %850 = vmatpush1.bf16.xpose.msra.mxu0 0
        %851 = vmatprep.subr.bf16.mxu0 0
        %852 = vmatpush1.bf16.xpose.msra.mxu0 0
        %853 = vmatprep.subr.bf16.mxu0 0
        %854 = vmatpush1.bf16.xpose.msra.mxu0 0
        %855 = vmatprep.subr.bf16.mxu0 0
        %856 = vmatpush1.bf16.xpose.msra.mxu0 0
        %857 = vmatprep.subr.bf16.mxu0 0
        %858 = vmatpush1.bf16.xpose.msra.mxu0 0
        %859 = vmatprep.subr.bf16.mxu0 0
        %860 = vmatpush1.bf16.xpose.msra.mxu0 0
        %861 = vmatprep.subr.bf16.mxu0 0
        %862 = vmatpush1.bf16.xpose.msra.mxu0 0
        %863 = vmatprep.subr.bf16.mxu0 0
        %864 = vmatpush1.bf16.xpose.msra.mxu0 0
        %865 = vmatprep.mubr.bf16.mxu0 0
        %866 = vmatmul.mubr.bf16.gmra.mrb[0].mxu0 %v828
        %v867 = vpop.f32.mrb[0].mxu0
        %v868 = vadd.f32 %v540, %v867
        %v869 = vpop.f32.mrb[0].mxu0
        %v870 = vpop.f32.mrb[0].mxu0
        %v871 = vadd.f32 %v540, %v870
        %v872 = vpop.f32.mrb[0].mxu0
        %873 = vdwg.mxu0
        %vm874 = vcmask 130048
        %v875 = vsel %vm874, %v868, -inf
        %876 = vmax.xlane.f32.xlu0 %v875
        %v877 = vpop.xlane.xlu0 %876
        %v878 = vsel %vm874, %v871, -inf
        %879 = vmax.xlane.f32.xlu0 %v878
        %v880 = vpop.xlane.xlu0 %879
        %v881 = vsub.f32 %v868, %v877
        %v882 = vsub.f32 %v871, %v880
        %v883 = vmul.f32 %v881, 1.442695
        %v884 = vpow.pop %v883
        %v885 = vmul.f32 %v882, 1.442695
        %v886 = vpow.pop %v885
        %v887 = vsel %vm874, %v884, 0.0
        %888 = vadd.xlane.f32.xlu0 %v887
        %v889 = vpop.xlane.xlu0 %888
        %v890 = vsel %vm874, %v886, 0.0
        %891 = vadd.xlane.f32.xlu0 %v890
        %v892 = vpop.xlane.xlu0 %891
        %v893 = vrcp.pop %v889
        %v894 = vmul.f32 1.0, %v893
        %v895 = vrcp.pop %v892
        %v896 = vmul.f32 1.0, %v895
        %v897 = vmul.f32 %v884, %v894
        %v898 = vmul.f32 %v886, %v896
        %v899 = vpack.c.bf16 %v898, %v897
        %v901 = vsel %vm874, %v899, 0
        %903 = vmatprep.subr.bf16.mxu0 0
        %904 = vmatpush1.bf16.msra.mxu0 %v825
        %905 = vmatprep.subr.bf16.mxu0 0
        %906 = vmatpush1.bf16.msra.mxu0 0
        %907 = vmatprep.subr.bf16.mxu0 0
        %908 = vmatpush1.bf16.msra.mxu0 0
        %909 = vmatprep.subr.bf16.mxu0 0
        %910 = vmatpush1.bf16.msra.mxu0 0
        %911 = vmatprep.subr.bf16.mxu0 0
        %912 = vmatpush1.bf16.msra.mxu0 0
        %913 = vmatprep.subr.bf16.mxu0 0
        %914 = vmatpush1.bf16.msra.mxu0 0
        %915 = vmatprep.subr.bf16.mxu0 0
        %916 = vmatpush1.bf16.msra.mxu0 0
        %917 = vmatprep.subr.bf16.mxu0 0
        %918 = vmatpush1.bf16.msra.mxu0 0
        %919 = vmatprep.subr.bf16.mxu0 0
        %920 = vmatpush1.bf16.msra.mxu0 0
        %921 = vmatprep.subr.bf16.mxu0 0
        %922 = vmatpush1.bf16.msra.mxu0 0
        %923 = vmatprep.subr.bf16.mxu0 0
        %924 = vmatpush1.bf16.msra.mxu0 0
        %925 = vmatprep.subr.bf16.mxu0 0
        %926 = vmatpush1.bf16.msra.mxu0 0
        %927 = vmatprep.subr.bf16.mxu0 0
        %928 = vmatpush1.bf16.msra.mxu0 0
        %929 = vmatprep.subr.bf16.mxu0 0
        %930 = vmatpush1.bf16.msra.mxu0 0
        %931 = vmatprep.subr.bf16.mxu0 0
        %932 = vmatpush1.bf16.msra.mxu0 0
        %933 = vmatprep.subr.bf16.mxu0 0
        %934 = vmatpush1.bf16.msra.mxu0 0
        %935 = vmatprep.mubr.bf16.mxu0 0
        %936 = vmatmul.mubr.bf16.gmra.mrb[0].mxu0 %v901
        %v937 = vpop.f32.mrb[0].mxu0
        %v938 = vadd.f32 0.0, %v937
        %v939 = vpop.f32.mrb[0].mxu0
        %v940 = vpop.f32.mrb[0].mxu0
        %v941 = vadd.f32 0.0, %v940
        %v942 = vpop.f32.mrb[0].mxu0
        %943 = vdwg.mxu0
        %v944 = vpack.c.bf16 %v941, %v938
        %946 = vrot.lane.b32.xlu0 %v823, 96
        %v947 = vpop.permute.xlu0 %946
        %949 = vrot.lane.b32.xlu0 %v824, 96
        %v950 = vpop.permute.xlu0 %949
        %v952 = vsel %vm826, %v947, 0
        %v955 = vsel %vm826, %v950, 0
        %957 = vmatprep.subr.bf16.mxu0 0
        %958 = vmatpush1.bf16.xpose.msra.mxu0 %v955
        %959 = vmatprep.subr.bf16.mxu0 0
        %960 = vmatpush1.bf16.xpose.msra.mxu0 0
        %961 = vmatprep.subr.bf16.mxu0 0
        %962 = vmatpush1.bf16.xpose.msra.mxu0 0
        %963 = vmatprep.subr.bf16.mxu0 0
        %964 = vmatpush1.bf16.xpose.msra.mxu0 0
        %965 = vmatprep.subr.bf16.mxu0 0
        %966 = vmatpush1.bf16.xpose.msra.mxu0 0
        %967 = vmatprep.subr.bf16.mxu0 0
        %968 = vmatpush1.bf16.xpose.msra.mxu0 0
        %969 = vmatprep.subr.bf16.mxu0 0
        %970 = vmatpush1.bf16.xpose.msra.mxu0 0
        %971 = vmatprep.subr.bf16.mxu0 0
        %972 = vmatpush1.bf16.xpose.msra.mxu0 0
        %973 = vmatprep.subr.bf16.mxu0 0
        %974 = vmatpush1.bf16.xpose.msra.mxu0 0
        %975 = vmatprep.subr.bf16.mxu0 0
        %976 = vmatpush1.bf16.xpose.msra.mxu0 0
        %977 = vmatprep.subr.bf16.mxu0 0
        %978 = vmatpush1.bf16.xpose.msra.mxu0 0
        %979 = vmatprep.subr.bf16.mxu0 0
        %980 = vmatpush1.bf16.xpose.msra.mxu0 0
        %981 = vmatprep.subr.bf16.mxu0 0
        %982 = vmatpush1.bf16.xpose.msra.mxu0 0
        %983 = vmatprep.subr.bf16.mxu0 0
        %984 = vmatpush1.bf16.xpose.msra.mxu0 0
        %985 = vmatprep.subr.bf16.mxu0 0
        %986 = vmatpush1.bf16.xpose.msra.mxu0 0
        %987 = vmatprep.subr.bf16.mxu0 0
        %988 = vmatpush1.bf16.xpose.msra.mxu0 0
        %989 = vmatprep.mubr.bf16.mxu0 0
        %990 = vmatmul.mubr.bf16.gmra.mrb[0].mxu0 %v952
        %v991 = vpop.f32.mrb[0].mxu0
        %v992 = vadd.f32 %v540, %v991
        %v993 = vpop.f32.mrb[0].mxu0
        %v994 = vpop.f32.mrb[0].mxu0
        %v995 = vadd.f32 %v540, %v994
        %v996 = vpop.f32.mrb[0].mxu0
        %997 = vdwg.mxu0
        %v998 = vsel %vm874, %v992, -inf
        %999 = vmax.xlane.f32.xlu0 %v998
        %v1000 = vpop.xlane.xlu0 %999
        %v1001 = vsel %vm874, %v995, -inf
        %1002 = vmax.xlane.f32.xlu0 %v1001
        %v1003 = vpop.xlane.xlu0 %1002
        %v1004 = vsub.f32 %v992, %v1000
        %v1005 = vsub.f32 %v995, %v1003
        %v1006 = vmul.f32 %v1004, 1.442695
        %v1007 = vpow.pop %v1006
        %v1008 = vmul.f32 %v1005, 1.442695
        %v1009 = vpow.pop %v1008
        %v1010 = vsel %vm874, %v1007, 0.0
        %1011 = vadd.xlane.f32.xlu0 %v1010
        %v1012 = vpop.xlane.xlu0 %1011
        %v1013 = vsel %vm874, %v1009, 0.0
        %1014 = vadd.xlane.f32.xlu0 %v1013
        %v1015 = vpop.xlane.xlu0 %1014
        %v1016 = vrcp.pop %v1012
        %v1017 = vmul.f32 1.0, %v1016
        %v1018 = vrcp.pop %v1015
        %v1019 = vmul.f32 1.0, %v1018
        %v1020 = vmul.f32 %v1007, %v1017
        %v1021 = vmul.f32 %v1009, %v1019
        %v1022 = vpack.c.bf16 %v1021, %v1020
        %1024 = vrot.lane.b32.xlu0 %v825, 96
        %v1025 = vpop.permute.xlu0 %1024
        %v1028 = vsel %vm874, %v1022, 0
        %1030 = vmatprep.subr.bf16.mxu0 0
        %1031 = vmatpush1.bf16.msra.mxu0 %v1025
        %1032 = vmatprep.subr.bf16.mxu0 0
        %1033 = vmatpush1.bf16.msra.mxu0 0
        %1034 = vmatprep.subr.bf16.mxu0 0
        %1035 = vmatpush1.bf16.msra.mxu0 0
        %1036 = vmatprep.subr.bf16.mxu0 0
        %1037 = vmatpush1.bf16.msra.mxu0 0
        %1038 = vmatprep.subr.bf16.mxu0 0
        %1039 = vmatpush1.bf16.msra.mxu0 0
        %1040 = vmatprep.subr.bf16.mxu0 0
        %1041 = vmatpush1.bf16.msra.mxu0 0
        %1042 = vmatprep.subr.bf16.mxu0 0
        %1043 = vmatpush1.bf16.msra.mxu0 0
        %1044 = vmatprep.subr.bf16.mxu0 0
        %1045 = vmatpush1.bf16.msra.mxu0 0
        %1046 = vmatprep.subr.bf16.mxu0 0
        %1047 = vmatpush1.bf16.msra.mxu0 0
        %1048 = vmatprep.subr.bf16.mxu0 0
        %1049 = vmatpush1.bf16.msra.mxu0 0
        %1050 = vmatprep.subr.bf16.mxu0 0
        %1051 = vmatpush1.bf16.msra.mxu0 0
        %1052 = vmatprep.subr.bf16.mxu0 0
        %1053 = vmatpush1.bf16.msra.mxu0 0
        %1054 = vmatprep.subr.bf16.mxu0 0
        %1055 = vmatpush1.bf16.msra.mxu0 0
        %1056 = vmatprep.subr.bf16.mxu0 0
        %1057 = vmatpush1.bf16.msra.mxu0 0
        %1058 = vmatprep.subr.bf16.mxu0 0
        %1059 = vmatpush1.bf16.msra.mxu0 0
        %1060 = vmatprep.subr.bf16.mxu0 0
        %1061 = vmatpush1.bf16.msra.mxu0 0
        %1062 = vmatprep.mubr.bf16.mxu0 0
        %1063 = vmatmul.mubr.bf16.gmra.mrb[0].mxu0 %v1028
        %v1064 = vpop.f32.mrb[0].mxu0
        %v1065 = vadd.f32 0.0, %v1064
        %v1066 = vpop.f32.mrb[0].mxu0
        %v1067 = vpop.f32.mrb[0].mxu0
        %v1068 = vadd.f32 0.0, %v1067
        %v1069 = vpop.f32.mrb[0].mxu0
        %1070 = vdwg.mxu0
        %v1071 = vpack.c.bf16 %v1068, %v1065
        %v1076 = vunpack.c.l.b16 %v809
        %v1077 = vunpack.c.l.b16 %v810
        %v1078 = vunpack.c.l.b16 %v811
        %v1079 = vunpack.c.l.b16 %v812
        %v1080 = vpack.c.b16 %v1077, %v1076
        %v1081 = vpack.c.b16 %v1079, %v1078
        %v1085 = vsel %vm826, %v1071, 0
        %1087 = vmatprep.subr.bf16.mxu0 0
        %1088 = vmatpush1.bf16.msra.mxu0 %v1080
        %1089 = vmatprep.subr.bf16.mxu0 0
        %1090 = vmatpush1.bf16.msra.mxu0 %v1081
        %1091 = vmatprep.subr.bf16.mxu0 0
        %1092 = vmatpush1.bf16.msra.mxu0 0
        %1093 = vmatprep.subr.bf16.mxu0 0
        %1094 = vmatpush1.bf16.msra.mxu0 0
        %1095 = vmatprep.subr.bf16.mxu0 0
        %1096 = vmatpush1.bf16.msra.mxu0 0
        %1097 = vmatprep.subr.bf16.mxu0 0
        %1098 = vmatpush1.bf16.msra.mxu0 0
        %1099 = vmatprep.subr.bf16.mxu0 0
        %1100 = vmatpush1.bf16.msra.mxu0 0
        %1101 = vmatprep.subr.bf16.mxu0 0
        %1102 = vmatpush1.bf16.msra.mxu0 0
        %1103 = vmatprep.subr.bf16.mxu0 0
        %1104 = vmatpush1.bf16.msra.mxu0 0
        %1105 = vmatprep.subr.bf16.mxu0 0
        %1106 = vmatpush1.bf16.msra.mxu0 0
        %1107 = vmatprep.subr.bf16.mxu0 0
        %1108 = vmatpush1.bf16.msra.mxu0 0
        %1109 = vmatprep.subr.bf16.mxu0 0
        %1110 = vmatpush1.bf16.msra.mxu0 0
        %1111 = vmatprep.subr.bf16.mxu0 0
        %1112 = vmatpush1.bf16.msra.mxu0 0
        %1113 = vmatprep.subr.bf16.mxu0 0
        %1114 = vmatpush1.bf16.msra.mxu0 0
        %1115 = vmatprep.subr.bf16.mxu0 0
        %1116 = vmatpush1.bf16.msra.mxu0 0
        %1117 = vmatprep.subr.bf16.mxu0 0
        %1118 = vmatpush1.bf16.msra.mxu0 0
        %1119 = vmatprep.mubr.bf16.mxu0 0
        %1120 = vmatmul.mubr.bf16.gmra.mrb[0].mxu0 %v1085
        %v1121 = vpop.f32.mrb[0].mxu0
        %v1122 = vadd.f32 0.0, %v1121
        %v1123 = vpop.f32.mrb[0].mxu0
        %v1124 = vpop.f32.mrb[0].mxu0
        %v1125 = vadd.f32 0.0, %v1124
        %v1126 = vpop.f32.mrb[0].mxu0
        %1127 = vdwg.mxu0
        %v1132 = vunpack.c.l.b16 %v805
        %v1133 = vunpack.c.l.b16 %v806
        %v1134 = vunpack.c.l.b16 %v807
        %v1135 = vunpack.c.l.b16 %v808
        %v1136 = vpack.c.b16 %v1133, %v1132
        %v1137 = vpack.c.b16 %v1135, %v1134
        %v1141 = vsel %vm826, %v944, 0
        %1143 = vmatprep.subr.bf16.mxu0 0
        %1144 = vmatpush1.bf16.msra.mxu0 %v1136
        %1145 = vmatprep.subr.bf16.mxu0 0
        %1146 = vmatpush1.bf16.msra.mxu0 %v1137
        %1147 = vmatprep.subr.bf16.mxu0 0
        %1148 = vmatpush1.bf16.msra.mxu0 0
        %1149 = vmatprep.subr.bf16.mxu0 0
        %1150 = vmatpush1.bf16.msra.mxu0 0
        %1151 = vmatprep.subr.bf16.mxu0 0
        %1152 = vmatpush1.bf16.msra.mxu0 0
        %1153 = vmatprep.subr.bf16.mxu0 0
        %1154 = vmatpush1.bf16.msra.mxu0 0
        %1155 = vmatprep.subr.bf16.mxu0 0
        %1156 = vmatpush1.bf16.msra.mxu0 0
        %1157 = vmatprep.subr.bf16.mxu0 0
        %1158 = vmatpush1.bf16.msra.mxu0 0
        %1159 = vmatprep.subr.bf16.mxu0 0
        %1160 = vmatpush1.bf16.msra.mxu0 0
        %1161 = vmatprep.subr.bf16.mxu0 0
        %1162 = vmatpush1.bf16.msra.mxu0 0
        %1163 = vmatprep.subr.bf16.mxu0 0
        %1164 = vmatpush1.bf16.msra.mxu0 0
        %1165 = vmatprep.subr.bf16.mxu0 0
        %1166 = vmatpush1.bf16.msra.mxu0 0
        %1167 = vmatprep.subr.bf16.mxu0 0
        %1168 = vmatpush1.bf16.msra.mxu0 0
        %1169 = vmatprep.subr.bf16.mxu0 0
        %1170 = vmatpush1.bf16.msra.mxu0 0
        %1171 = vmatprep.subr.bf16.mxu0 0
        %1172 = vmatpush1.bf16.msra.mxu0 0
        %1173 = vmatprep.subr.bf16.mxu0 0
        %1174 = vmatpush1.bf16.msra.mxu0 0
        %1175 = vmatprep.mubr.bf16.mxu0 0
        %1176 = vmatmul.mubr.bf16.gmra.mrb[0].mxu0 %v1141
        %v1177 = vpop.f32.mrb[0].mxu0
        %v1178 = vadd.f32 %v1122, %v1177
        %v1179 = vpop.f32.mrb[0].mxu0
        %v1180 = vpop.f32.mrb[0].mxu0
        %v1181 = vadd.f32 %v1125, %v1180
        %v1182 = vpop.f32.mrb[0].mxu0
        %1183 = vdwg.mxu0
        %1184 = vrot.lane.b32.xlu0 %v823, 64
        %v1185 = vpop.permute.xlu0 %1184
        %1186 = vrot.lane.b32.xlu0 %v824, 64
        %v1187 = vpop.permute.xlu0 %1186
        %v1189 = vsel %vm826, %v1185, 0
        %v1192 = vsel %vm826, %v1187, 0
        %1194 = vmatprep.subr.bf16.mxu0 0
        %1195 = vmatpush1.bf16.xpose.msra.mxu0 %v1192
        %1196 = vmatprep.subr.bf16.mxu0 0
        %1197 = vmatpush1.bf16.xpose.msra.mxu0 0
        %1198 = vmatprep.subr.bf16.mxu0 0
        %1199 = vmatpush1.bf16.xpose.msra.mxu0 0
        %1200 = vmatprep.subr.bf16.mxu0 0
        %1201 = vmatpush1.bf16.xpose.msra.mxu0 0
        %1202 = vmatprep.subr.bf16.mxu0 0
        %1203 = vmatpush1.bf16.xpose.msra.mxu0 0
        %1204 = vmatprep.subr.bf16.mxu0 0
        %1205 = vmatpush1.bf16.xpose.msra.mxu0 0
        %1206 = vmatprep.subr.bf16.mxu0 0
        %1207 = vmatpush1.bf16.xpose.msra.mxu0 0
        %1208 = vmatprep.subr.bf16.mxu0 0
        %1209 = vmatpush1.bf16.xpose.msra.mxu0 0
        %1210 = vmatprep.subr.bf16.mxu0 0
        %1211 = vmatpush1.bf16.xpose.msra.mxu0 0
        %1212 = vmatprep.subr.bf16.mxu0 0
        %1213 = vmatpush1.bf16.xpose.msra.mxu0 0
        %1214 = vmatprep.subr.bf16.mxu0 0
        %1215 = vmatpush1.bf16.xpose.msra.mxu0 0
        %1216 = vmatprep.subr.bf16.mxu0 0
        %1217 = vmatpush1.bf16.xpose.msra.mxu0 0
        %1218 = vmatprep.subr.bf16.mxu0 0
        %1219 = vmatpush1.bf16.xpose.msra.mxu0 0
        %1220 = vmatprep.subr.bf16.mxu0 0
        %1221 = vmatpush1.bf16.xpose.msra.mxu0 0
        %1222 = vmatprep.subr.bf16.mxu0 0
        %1223 = vmatpush1.bf16.xpose.msra.mxu0 0
        %1224 = vmatprep.subr.bf16.mxu0 0
        %1225 = vmatpush1.bf16.xpose.msra.mxu0 0
        %1226 = vmatprep.mubr.bf16.mxu0 0
        %1227 = vmatmul.mubr.bf16.gmra.mrb[0].mxu0 %v1189
        %v1228 = vpop.f32.mrb[0].mxu0
        %v1229 = vadd.f32 %v540, %v1228
        %v1230 = vpop.f32.mrb[0].mxu0
        %v1231 = vpop.f32.mrb[0].mxu0
        %v1232 = vadd.f32 %v540, %v1231
        %v1233 = vpop.f32.mrb[0].mxu0
        %1234 = vdwg.mxu0
        %v1235 = vsel %vm874, %v1229, -inf
        %1236 = vmax.xlane.f32.xlu0 %v1235
        %v1237 = vpop.xlane.xlu0 %1236
        %v1238 = vsel %vm874, %v1232, -inf
        %1239 = vmax.xlane.f32.xlu0 %v1238
        %v1240 = vpop.xlane.xlu0 %1239
        %v1241 = vsub.f32 %v1229, %v1237
        %v1242 = vsub.f32 %v1232, %v1240
        %v1243 = vmul.f32 %v1241, 1.442695
        %v1244 = vpow.pop %v1243
        %v1245 = vmul.f32 %v1242, 1.442695
        %v1246 = vpow.pop %v1245
        %v1247 = vsel %vm874, %v1244, 0.0
        %1248 = vadd.xlane.f32.xlu0 %v1247
        %v1249 = vpop.xlane.xlu0 %1248
        %v1250 = vsel %vm874, %v1246, 0.0
        %1251 = vadd.xlane.f32.xlu0 %v1250
        %v1252 = vpop.xlane.xlu0 %1251
        %v1253 = vrcp.pop %v1249
        %v1254 = vmul.f32 1.0, %v1253
        %v1255 = vrcp.pop %v1252
        %v1256 = vmul.f32 1.0, %v1255
        %v1257 = vmul.f32 %v1244, %v1254
        %v1258 = vmul.f32 %v1246, %v1256
        %v1259 = vpack.c.bf16 %v1258, %v1257
        %1260 = vrot.lane.b32.xlu0 %v825, 64
        %v1261 = vpop.permute.xlu0 %1260
        %v1264 = vsel %vm874, %v1259, 0
        %1266 = vmatprep.subr.bf16.mxu0 0
        %1267 = vmatpush1.bf16.msra.mxu0 %v1261
        %1268 = vmatprep.subr.bf16.mxu0 0
        %1269 = vmatpush1.bf16.msra.mxu0 0
        %1270 = vmatprep.subr.bf16.mxu0 0
        %1271 = vmatpush1.bf16.msra.mxu0 0
        %1272 = vmatprep.subr.bf16.mxu0 0
        %1273 = vmatpush1.bf16.msra.mxu0 0
        %1274 = vmatprep.subr.bf16.mxu0 0
        %1275 = vmatpush1.bf16.msra.mxu0 0
        %1276 = vmatprep.subr.bf16.mxu0 0
        %1277 = vmatpush1.bf16.msra.mxu0 0
        %1278 = vmatprep.subr.bf16.mxu0 0
        %1279 = vmatpush1.bf16.msra.mxu0 0
        %1280 = vmatprep.subr.bf16.mxu0 0
        %1281 = vmatpush1.bf16.msra.mxu0 0
        %1282 = vmatprep.subr.bf16.mxu0 0
        %1283 = vmatpush1.bf16.msra.mxu0 0
        %1284 = vmatprep.subr.bf16.mxu0 0
        %1285 = vmatpush1.bf16.msra.mxu0 0
        %1286 = vmatprep.subr.bf16.mxu0 0
        %1287 = vmatpush1.bf16.msra.mxu0 0
        %1288 = vmatprep.subr.bf16.mxu0 0
        %1289 = vmatpush1.bf16.msra.mxu0 0
        %1290 = vmatprep.subr.bf16.mxu0 0
        %1291 = vmatpush1.bf16.msra.mxu0 0
        %1292 = vmatprep.subr.bf16.mxu0 0
        %1293 = vmatpush1.bf16.msra.mxu0 0
        %1294 = vmatprep.subr.bf16.mxu0 0
        %1295 = vmatpush1.bf16.msra.mxu0 0
        %1296 = vmatprep.subr.bf16.mxu0 0
        %1297 = vmatpush1.bf16.msra.mxu0 0
        %1298 = vmatprep.mubr.bf16.mxu0 0
        %1299 = vmatmul.mubr.bf16.gmra.mrb[0].mxu0 %v1264
        %v1300 = vpop.f32.mrb[0].mxu0
        %v1301 = vadd.f32 0.0, %v1300
        %v1302 = vpop.f32.mrb[0].mxu0
        %v1303 = vpop.f32.mrb[0].mxu0
        %v1304 = vadd.f32 0.0, %v1303
        %v1305 = vpop.f32.mrb[0].mxu0
        %1306 = vdwg.mxu0
        %v1307 = vpack.c.bf16 %v1304, %v1301
        %v1312 = vunpack.c.l.b16 %v813
        %v1313 = vunpack.c.l.b16 %v814
        %v1314 = vunpack.c.l.b16 %v815
        %v1315 = vunpack.c.l.b16 %v816
        %v1316 = vpack.c.b16 %v1313, %v1312
        %v1317 = vpack.c.b16 %v1315, %v1314
        %v1321 = vsel %vm826, %v1307, 0
        %1323 = vmatprep.subr.bf16.mxu0 0
        %1324 = vmatpush1.bf16.msra.mxu0 %v1316
        %1325 = vmatprep.subr.bf16.mxu0 0
        %1326 = vmatpush1.bf16.msra.mxu0 %v1317
        %1327 = vmatprep.subr.bf16.mxu0 0
        %1328 = vmatpush1.bf16.msra.mxu0 0
        %1329 = vmatprep.subr.bf16.mxu0 0
        %1330 = vmatpush1.bf16.msra.mxu0 0
        %1331 = vmatprep.subr.bf16.mxu0 0
        %1332 = vmatpush1.bf16.msra.mxu0 0
        %1333 = vmatprep.subr.bf16.mxu0 0
        %1334 = vmatpush1.bf16.msra.mxu0 0
        %1335 = vmatprep.subr.bf16.mxu0 0
        %1336 = vmatpush1.bf16.msra.mxu0 0
        %1337 = vmatprep.subr.bf16.mxu0 0
        %1338 = vmatpush1.bf16.msra.mxu0 0
        %1339 = vmatprep.subr.bf16.mxu0 0
        %1340 = vmatpush1.bf16.msra.mxu0 0
        %1341 = vmatprep.subr.bf16.mxu0 0
        %1342 = vmatpush1.bf16.msra.mxu0 0
        %1343 = vmatprep.subr.bf16.mxu0 0
        %1344 = vmatpush1.bf16.msra.mxu0 0
        %1345 = vmatprep.subr.bf16.mxu0 0
        %1346 = vmatpush1.bf16.msra.mxu0 0
        %1347 = vmatprep.subr.bf16.mxu0 0
        %1348 = vmatpush1.bf16.msra.mxu0 0
        %1349 = vmatprep.subr.bf16.mxu0 0
        %1350 = vmatpush1.bf16.msra.mxu0 0
        %1351 = vmatprep.subr.bf16.mxu0 0
        %1352 = vmatpush1.bf16.msra.mxu0 0
        %1353 = vmatprep.subr.bf16.mxu0 0
        %1354 = vmatpush1.bf16.msra.mxu0 0
        %1355 = vmatprep.mubr.bf16.mxu0 0
        %1356 = vmatmul.mubr.bf16.gmra.mrb[0].mxu0 %v1321
        %v1357 = vpop.f32.mrb[0].mxu0
        %v1358 = vadd.f32 0.0, %v1357
        %v1359 = vpop.f32.mrb[0].mxu0
        %v1360 = vpop.f32.mrb[0].mxu0
        %v1361 = vadd.f32 0.0, %v1360
        %v1362 = vpop.f32.mrb[0].mxu0
        %1363 = vdwg.mxu0
        %v1364 = vadd.f32 %v1178, %v1358
        %v1365 = vadd.f32 %v1181, %v1361
        %1366 = vrot.lane.b32.xlu0 %v823, 32
        %v1367 = vpop.permute.xlu0 %1366
        %1368 = vrot.lane.b32.xlu0 %v824, 32
        %v1369 = vpop.permute.xlu0 %1368
        %v1371 = vsel %vm826, %v1367, 0
        %v1374 = vsel %vm826, %v1369, 0
        %1376 = vmatprep.subr.bf16.mxu0 0
        %1377 = vmatpush1.bf16.xpose.msra.mxu0 %v1374
        %1378 = vmatprep.subr.bf16.mxu0 0
        %1379 = vmatpush1.bf16.xpose.msra.mxu0 0
        %1380 = vmatprep.subr.bf16.mxu0 0
        %1381 = vmatpush1.bf16.xpose.msra.mxu0 0
        %1382 = vmatprep.subr.bf16.mxu0 0
        %1383 = vmatpush1.bf16.xpose.msra.mxu0 0
        %1384 = vmatprep.subr.bf16.mxu0 0
        %1385 = vmatpush1.bf16.xpose.msra.mxu0 0
        %1386 = vmatprep.subr.bf16.mxu0 0
        %1387 = vmatpush1.bf16.xpose.msra.mxu0 0
        %1388 = vmatprep.subr.bf16.mxu0 0
        %1389 = vmatpush1.bf16.xpose.msra.mxu0 0
        %1390 = vmatprep.subr.bf16.mxu0 0
        %1391 = vmatpush1.bf16.xpose.msra.mxu0 0
        %1392 = vmatprep.subr.bf16.mxu0 0
        %1393 = vmatpush1.bf16.xpose.msra.mxu0 0
        %1394 = vmatprep.subr.bf16.mxu0 0
        %1395 = vmatpush1.bf16.xpose.msra.mxu0 0
        %1396 = vmatprep.subr.bf16.mxu0 0
        %1397 = vmatpush1.bf16.xpose.msra.mxu0 0
        %1398 = vmatprep.subr.bf16.mxu0 0
        %1399 = vmatpush1.bf16.xpose.msra.mxu0 0
        %1400 = vmatprep.subr.bf16.mxu0 0
        %1401 = vmatpush1.bf16.xpose.msra.mxu0 0
        %1402 = vmatprep.subr.bf16.mxu0 0
        %1403 = vmatpush1.bf16.xpose.msra.mxu0 0
        %1404 = vmatprep.subr.bf16.mxu0 0
        %1405 = vmatpush1.bf16.xpose.msra.mxu0 0
        %1406 = vmatprep.subr.bf16.mxu0 0
        %1407 = vmatpush1.bf16.xpose.msra.mxu0 0
        %1408 = vmatprep.mubr.bf16.mxu0 0
        %1409 = vmatmul.mubr.bf16.gmra.mrb[0].mxu0 %v1371
        %v1410 = vpop.f32.mrb[0].mxu0
        %v1411 = vadd.f32 %v540, %v1410
        %v1412 = vpop.f32.mrb[0].mxu0
        %v1413 = vpop.f32.mrb[0].mxu0
        %v1414 = vadd.f32 %v540, %v1413
        %v1415 = vpop.f32.mrb[0].mxu0
        %1416 = vdwg.mxu0
        %v1417 = vsel %vm874, %v1411, -inf
        %1418 = vmax.xlane.f32.xlu0 %v1417
        %v1419 = vpop.xlane.xlu0 %1418
        %v1420 = vsel %vm874, %v1414, -inf
        %1421 = vmax.xlane.f32.xlu0 %v1420
        %v1422 = vpop.xlane.xlu0 %1421
        %v1423 = vsub.f32 %v1411, %v1419
        %v1424 = vsub.f32 %v1414, %v1422
        %v1425 = vmul.f32 %v1423, 1.442695
        %v1426 = vpow.pop %v1425
        %v1427 = vmul.f32 %v1424, 1.442695
        %v1428 = vpow.pop %v1427
        %v1429 = vsel %vm874, %v1426, 0.0
        %1430 = vadd.xlane.f32.xlu0 %v1429
        %v1431 = vpop.xlane.xlu0 %1430
        %v1432 = vsel %vm874, %v1428, 0.0
        %1433 = vadd.xlane.f32.xlu0 %v1432
        %v1434 = vpop.xlane.xlu0 %1433
        %v1435 = vrcp.pop %v1431
        %v1436 = vmul.f32 1.0, %v1435
        %v1437 = vrcp.pop %v1434
        %v1438 = vmul.f32 1.0, %v1437
        %v1439 = vmul.f32 %v1426, %v1436
        %v1440 = vmul.f32 %v1428, %v1438
        %v1441 = vpack.c.bf16 %v1440, %v1439
        %1442 = vrot.lane.b32.xlu0 %v825, 32
        %v1443 = vpop.permute.xlu0 %1442
        %v1446 = vsel %vm874, %v1441, 0
        %1448 = vmatprep.subr.bf16.mxu0 0
        %1449 = vmatpush1.bf16.msra.mxu0 %v1443
        %1450 = vmatprep.subr.bf16.mxu0 0
        %1451 = vmatpush1.bf16.msra.mxu0 0
        %1452 = vmatprep.subr.bf16.mxu0 0
        %1453 = vmatpush1.bf16.msra.mxu0 0
        %1454 = vmatprep.subr.bf16.mxu0 0
        %1455 = vmatpush1.bf16.msra.mxu0 0
        %1456 = vmatprep.subr.bf16.mxu0 0
        %1457 = vmatpush1.bf16.msra.mxu0 0
        %1458 = vmatprep.subr.bf16.mxu0 0
        %1459 = vmatpush1.bf16.msra.mxu0 0
        %1460 = vmatprep.subr.bf16.mxu0 0
        %1461 = vmatpush1.bf16.msra.mxu0 0
        %1462 = vmatprep.subr.bf16.mxu0 0
        %1463 = vmatpush1.bf16.msra.mxu0 0
        %1464 = vmatprep.subr.bf16.mxu0 0
        %1465 = vmatpush1.bf16.msra.mxu0 0
        %1466 = vmatprep.subr.bf16.mxu0 0
        %1467 = vmatpush1.bf16.msra.mxu0 0
        %1468 = vmatprep.subr.bf16.mxu0 0
        %1469 = vmatpush1.bf16.msra.mxu0 0
        %1470 = vmatprep.subr.bf16.mxu0 0
        %1471 = vmatpush1.bf16.msra.mxu0 0
        %1472 = vmatprep.subr.bf16.mxu0 0
        %1473 = vmatpush1.bf16.msra.mxu0 0
        %1474 = vmatprep.subr.bf16.mxu0 0
        %1475 = vmatpush1.bf16.msra.mxu0 0
        %1476 = vmatprep.subr.bf16.mxu0 0
        %1477 = vmatpush1.bf16.msra.mxu0 0
        %1478 = vmatprep.subr.bf16.mxu0 0
        %1479 = vmatpush1.bf16.msra.mxu0 0
        %1480 = vmatprep.mubr.bf16.mxu0 0
        %1481 = vmatmul.mubr.bf16.gmra.mrb[0].mxu0 %v1446
        %v1482 = vpop.f32.mrb[0].mxu0
        %v1483 = vadd.f32 0.0, %v1482
        %v1484 = vpop.f32.mrb[0].mxu0
        %v1485 = vpop.f32.mrb[0].mxu0
        %v1486 = vadd.f32 0.0, %v1485
        %v1487 = vpop.f32.mrb[0].mxu0
        %1488 = vdwg.mxu0
        %v1489 = vpack.c.bf16 %v1486, %v1483
        %v1494 = vunpack.c.l.b16 %v817
        %v1495 = vunpack.c.l.b16 %v818
        %v1496 = vunpack.c.l.b16 %v819
        %v1497 = vunpack.c.l.b16 %v820
        %v1498 = vpack.c.b16 %v1495, %v1494
        %v1499 = vpack.c.b16 %v1497, %v1496
        %v1503 = vsel %vm826, %v1489, 0
        %1505 = vmatprep.subr.bf16.mxu0 0
        %1506 = vmatpush1.bf16.msra.mxu0 %v1498
        %1507 = vmatprep.subr.bf16.mxu0 0
        %1508 = vmatpush1.bf16.msra.mxu0 %v1499
        %1509 = vmatprep.subr.bf16.mxu0 0
        %1510 = vmatpush1.bf16.msra.mxu0 0
        %1511 = vmatprep.subr.bf16.mxu0 0
        %1512 = vmatpush1.bf16.msra.mxu0 0
        %1513 = vmatprep.subr.bf16.mxu0 0
        %1514 = vmatpush1.bf16.msra.mxu0 0
        %1515 = vmatprep.subr.bf16.mxu0 0
        %1516 = vmatpush1.bf16.msra.mxu0 0
        %1517 = vmatprep.subr.bf16.mxu0 0
        %1518 = vmatpush1.bf16.msra.mxu0 0
        %1519 = vmatprep.subr.bf16.mxu0 0
        %1520 = vmatpush1.bf16.msra.mxu0 0
        %1521 = vmatprep.subr.bf16.mxu0 0
        %1522 = vmatpush1.bf16.msra.mxu0 0
        %1523 = vmatprep.subr.bf16.mxu0 0
        %1524 = vmatpush1.bf16.msra.mxu0 0
        %1525 = vmatprep.subr.bf16.mxu0 0
        %1526 = vmatpush1.bf16.msra.mxu0 0
        %1527 = vmatprep.subr.bf16.mxu0 0
        %1528 = vmatpush1.bf16.msra.mxu0 0
        %1529 = vmatprep.subr.bf16.mxu0 0
        %1530 = vmatpush1.bf16.msra.mxu0 0
        %1531 = vmatprep.subr.bf16.mxu0 0
        %1532 = vmatpush1.bf16.msra.mxu0 0
        %1533 = vmatprep.subr.bf16.mxu0 0
        %1534 = vmatpush1.bf16.msra.mxu0 0
        %1535 = vmatprep.subr.bf16.mxu0 0
        %1536 = vmatpush1.bf16.msra.mxu0 0
        %1537 = vmatprep.mubr.bf16.mxu0 0
        %1538 = vmatmul.mubr.bf16.gmra.mrb[0].mxu0 %v1503
        %v1539 = vpop.f32.mrb[0].mxu0
        %v1540 = vadd.f32 0.0, %v1539
        %v1541 = vpop.f32.mrb[0].mxu0
        %v1542 = vpop.f32.mrb[0].mxu0
        %v1543 = vadd.f32 0.0, %v1542
        %v1544 = vpop.f32.mrb[0].mxu0
        %1545 = vdwg.mxu0
        %v1546 = vadd.f32 %v1364, %v1540
        %v1547 = vadd.f32 %v1365, %v1543
        %v1548 = vld [vmem:[%s4] sm:$0x1]
        %v1550 = vlaneseq
        %v1551 = vshrl.u32 %v1550, 7
        %v1552 = vsub.s32 0, %v1551
        %v1553 = vrot.slane %v1548, %v1552
        %v1555 = vadd.f32 %v1546, %v1553
        %v1556 = vadd.f32 %v1547, %v1553
        %v1557 = vadd.f32 %v541, %v1555
        %v1558 = vadd.f32 %v542, %v1556
        %v1559 = vld [vmem:[%s5] sm:$0x1]
        %v1560 = vld [vmem:[%s6] sm:$0x1]
        %1561 = vadd.xlane.f32.xlu0 %v1557
        %v1562 = vpop.xlane.xlu0 %1561
        %1563 = vadd.xlane.f32.xlu0 %v1558
        %v1564 = vpop.xlane.xlu0 %1563
        %v1565 = vrcp.pop 128.0
        %v1566 = vmul.f32 %v1562, %v1565
        %v1567 = vmul.f32 %v1564, %v1565
        %v1568 = vsub.f32 %v1557, %v1566
        %v1569 = vsub.f32 %v1558, %v1567
        %v1570 = vmul.f32 %v1568, %v1568
        %v1571 = vmul.f32 %v1569, %v1569
        %1572 = vadd.xlane.f32.xlu0 %v1570
        %v1573 = vpop.xlane.xlu0 %1572
        %1574 = vadd.xlane.f32.xlu0 %v1571
        %v1575 = vpop.xlane.xlu0 %1574
        %v1576 = vmul.f32 %v1573, %v1565
        %v1577 = vmul.f32 %v1575, %v1565
        %v1578 = vadd.f32 %v1576, 1e-05
        %v1579 = vadd.f32 %v1577, 1e-05
        %v1580 = vrsqrt.pop %v1578
        %v1581 = vrsqrt.pop %v1579
        %v1582 = vmul.f32 %v1568, %v1580
        %v1583 = vmul.f32 %v1569, %v1581
        %v1585 = vlaneseq
        %v1586 = vshrl.u32 %v1585, 7
        %v1587 = vsub.s32 0, %v1586
        %v1588 = vrot.slane %v1559, %v1587
        %v1590 = vmul.f32 %v1582, %v1588
        %v1591 = vmul.f32 %v1583, %v1588
        %v1593 = vlaneseq
        %v1594 = vshrl.u32 %v1593, 7
        %v1595 = vsub.s32 0, %v1594
        %v1596 = vrot.slane %v1560, %v1595
        %v1598 = vadd.f32 %v1590, %v1596
        %v1599 = vadd.f32 %v1591, %v1596
        %v1600 = vpack.c.bf16 %v1599, %v1598
        %v1601 = vld [vmem:[#allocation6] sm:$0xff]
        %v1602 = vld [vmem:[#allocation6 + $0x8] sm:$0xff]
        %v1603 = vld [vmem:[#allocation6 + $0x10] sm:$0xff]
        %v1604 = vld [vmem:[#allocation6 + $0x18] sm:$0xff]
        %v1605 = vld [vmem:[#allocation6 + $0x20] sm:$0xff]
        %v1606 = vld [vmem:[#allocation6 + $0x28] sm:$0xff]
        %v1607 = vld [vmem:[#allocation6 + $0x30] sm:$0xff]
        %v1608 = vld [vmem:[#allocation6 + $0x38] sm:$0xff]
        %v1609 = vld [vmem:[#allocation6 + $0x40] sm:$0xff]
        %v1610 = vld [vmem:[#allocation6 + $0x48] sm:$0xff]
        %v1611 = vld [vmem:[#allocation6 + $0x50] sm:$0xff]
        %v1612 = vld [vmem:[#allocation6 + $0x58] sm:$0xff]
        %v1613 = vld [vmem:[#allocation6 + $0x60] sm:$0xff]
        %v1614 = vld [vmem:[#allocation6 + $0x68] sm:$0xff]
        %v1615 = vld [vmem:[#allocation6 + $0x70] sm:$0xff]
        %v1616 = vld [vmem:[#allocation6 + $0x78] sm:$0xff]
        %v1617 = vld [vmem:[#allocation6 + $0x80] sm:$0xff]
        %v1618 = vld [vmem:[#allocation6 + $0x88] sm:$0xff]
        %v1619 = vld [vmem:[#allocation6 + $0x90] sm:$0xff]
        %v1620 = vld [vmem:[#allocation6 + $0x98] sm:$0xff]
        %v1621 = vld [vmem:[#allocation6 + $0xa0] sm:$0xff]
        %v1622 = vld [vmem:[#allocation6 + $0xa8] sm:$0xff]
        %v1623 = vld [vmem:[#allocation6 + $0xb0] sm:$0xff]
        %v1624 = vld [vmem:[#allocation6 + $0xb8] sm:$0xff]
        %v1625 = vld [vmem:[#allocation6 + $0xc0] sm:$0xff]
        %v1626 = vld [vmem:[#allocation6 + $0xc8] sm:$0xff]
        %v1627 = vld [vmem:[#allocation6 + $0xd0] sm:$0xff]
        %v1628 = vld [vmem:[#allocation6 + $0xd8] sm:$0xff]
        %v1629 = vld [vmem:[#allocation6 + $0xe0] sm:$0xff]
        %v1630 = vld [vmem:[#allocation6 + $0xe8] sm:$0xff]
        %v1631 = vld [vmem:[#allocation6 + $0xf0] sm:$0xff]
        %v1632 = vld [vmem:[#allocation6 + $0xf8] sm:$0xff]
        %v1633 = vld [vmem:[%s8] sm:$0xf]
        %v1635 = vlaneseq
        %v1636 = vshrl.u32 %v1635, 7
        %v1637 = vsub.s32 0, %v1636
        %v1638 = vrot.slane %v1633, %v1637
        %v1639 = vlaneseq
        %v1640 = vshrl.u32 %v1639, 7
        %v1641 = vsub.s32 1, %v1640
        %v1642 = vrot.slane %v1633, %v1641
        %v1643 = vlaneseq
        %v1644 = vshrl.u32 %v1643, 7
        %v1645 = vsub.s32 2, %v1644
        %v1646 = vrot.slane %v1633, %v1645
        %v1647 = vlaneseq
        %v1648 = vshrl.u32 %v1647, 7
        %v1649 = vsub.s32 3, %v1648
        %v1650 = vrot.slane %v1633, %v1649
        %v1687 = vunpack.c.l.b16 %v1601
        %v1688 = vunpack.c.h.b16 %v1601
        %v1689 = vunpack.c.l.b16 %v1602
        %v1690 = vunpack.c.h.b16 %v1602
        %v1691 = vunpack.c.l.b16 %v1603
        %v1692 = vunpack.c.h.b16 %v1603
        %v1693 = vunpack.c.l.b16 %v1604
        %v1694 = vunpack.c.h.b16 %v1604
        %v1695 = vunpack.c.l.b16 %v1605
        %v1696 = vunpack.c.h.b16 %v1605
        %v1697 = vunpack.c.l.b16 %v1606
        %v1698 = vunpack.c.h.b16 %v1606
        %v1699 = vunpack.c.l.b16 %v1607
        %v1700 = vunpack.c.h.b16 %v1607
        %v1701 = vunpack.c.l.b16 %v1608
        %v1702 = vunpack.c.h.b16 %v1608
        %v1703 = vunpack.c.l.b16 %v1609
        %v1704 = vunpack.c.h.b16 %v1609
        %v1705 = vunpack.c.l.b16 %v1610
        %v1706 = vunpack.c.h.b16 %v1610
        %v1707 = vunpack.c.l.b16 %v1611
        %v1708 = vunpack.c.h.b16 %v1611
        %v1709 = vunpack.c.l.b16 %v1612
        %v1710 = vunpack.c.h.b16 %v1612
        %v1711 = vunpack.c.l.b16 %v1613
        %v1712 = vunpack.c.h.b16 %v1613
        %v1713 = vunpack.c.l.b16 %v1614
        %v1714 = vunpack.c.h.b16 %v1614
        %v1715 = vunpack.c.l.b16 %v1615
        %v1716 = vunpack.c.h.b16 %v1615
        %v1717 = vunpack.c.l.b16 %v1616
        %v1718 = vunpack.c.h.b16 %v1616
        %v1719 = vunpack.c.l.b16 %v1617
        %v1720 = vunpack.c.h.b16 %v1617
        %v1721 = vunpack.c.l.b16 %v1618
        %v1722 = vunpack.c.h.b16 %v1618
        %v1723 = vunpack.c.l.b16 %v1619
        %v1724 = vunpack.c.h.b16 %v1619
        %v1725 = vunpack.c.l.b16 %v1620
        %v1726 = vunpack.c.h.b16 %v1620
        %v1727 = vunpack.c.l.b16 %v1621
        %v1728 = vunpack.c.h.b16 %v1621
        %v1729 = vunpack.c.l.b16 %v1622
        %v1730 = vunpack.c.h.b16 %v1622
        %v1731 = vunpack.c.l.b16 %v1623
        %v1732 = vunpack.c.h.b16 %v1623
        %v1733 = vunpack.c.l.b16 %v1624
        %v1734 = vunpack.c.h.b16 %v1624
        %v1735 = vunpack.c.l.b16 %v1625
        %v1736 = vunpack.c.h.b16 %v1625
        %v1737 = vunpack.c.l.b16 %v1626
        %v1738 = vunpack.c.h.b16 %v1626
        %v1739 = vunpack.c.l.b16 %v1627
        %v1740 = vunpack.c.h.b16 %v1627
        %v1741 = vunpack.c.l.b16 %v1628
        %v1742 = vunpack.c.h.b16 %v1628
        %v1743 = vunpack.c.l.b16 %v1629
        %v1744 = vunpack.c.h.b16 %v1629
        %v1745 = vunpack.c.l.b16 %v1630
        %v1746 = vunpack.c.h.b16 %v1630
        %v1747 = vunpack.c.l.b16 %v1631
        %v1748 = vunpack.c.h.b16 %v1631
        %v1749 = vunpack.c.l.b16 %v1632
        %v1750 = vunpack.c.h.b16 %v1632
        %v1751 = vpack.c.b16 %v1691, %v1687
        %v1752 = vpack.c.b16 %v1692, %v1688
        %v1753 = vpack.c.b16 %v1693, %v1689
        %v1754 = vpack.c.b16 %v1694, %v1690
        %v1755 = vpack.c.b16 %v1699, %v1695
        %v1756 = vpack.c.b16 %v1700, %v1696
        %v1757 = vpack.c.b16 %v1701, %v1697
        %v1758 = vpack.c.b16 %v1702, %v1698
        %v1759 = vpack.c.b16 %v1707, %v1703
        %v1760 = vpack.c.b16 %v1708, %v1704
        %v1761 = vpack.c.b16 %v1709, %v1705
        %v1762 = vpack.c.b16 %v1710, %v1706
        %v1763 = vpack.c.b16 %v1715, %v1711
        %v1764 = vpack.c.b16 %v1716, %v1712
        %v1765 = vpack.c.b16 %v1717, %v1713
        %v1766 = vpack.c.b16 %v1718, %v1714
        %v1767 = vpack.c.b16 %v1723, %v1719
        %v1768 = vpack.c.b16 %v1724, %v1720
        %v1769 = vpack.c.b16 %v1725, %v1721
        %v1770 = vpack.c.b16 %v1726, %v1722
        %v1771 = vpack.c.b16 %v1731, %v1727
        %v1772 = vpack.c.b16 %v1732, %v1728
        %v1773 = vpack.c.b16 %v1733, %v1729
        %v1774 = vpack.c.b16 %v1734, %v1730
        %v1775 = vpack.c.b16 %v1739, %v1735
        %v1776 = vpack.c.b16 %v1740, %v1736
        %v1777 = vpack.c.b16 %v1741, %v1737
        %v1778 = vpack.c.b16 %v1742, %v1738
        %v1779 = vpack.c.b16 %v1747, %v1743
        %v1780 = vpack.c.b16 %v1748, %v1744
        %v1781 = vpack.c.b16 %v1749, %v1745
        %v1782 = vpack.c.b16 %v1750, %v1746
        %1815 = vmatprep.subr.bf16.mxu0 %v1752
        %1816 = vmatpush1.bf16.msra.mxu0 %v1751
        %1817 = vmatprep.subr.bf16.mxu0 %v1756
        %1818 = vmatpush1.bf16.msra.mxu0 %v1755
        %1819 = vmatprep.subr.bf16.mxu0 %v1760
        %1820 = vmatpush1.bf16.msra.mxu0 %v1759
        %1821 = vmatprep.subr.bf16.mxu0 %v1764
        %1822 = vmatpush1.bf16.msra.mxu0 %v1763
        %1823 = vmatprep.subr.bf16.mxu0 %v1768
        %1824 = vmatpush1.bf16.msra.mxu0 %v1767
        %1825 = vmatprep.subr.bf16.mxu0 %v1772
        %1826 = vmatpush1.bf16.msra.mxu0 %v1771
        %1827 = vmatprep.subr.bf16.mxu0 %v1776
        %1828 = vmatpush1.bf16.msra.mxu0 %v1775
        %1829 = vmatprep.subr.bf16.mxu0 %v1780
        %1830 = vmatpush1.bf16.msra.mxu0 %v1779
        %1831 = vmatprep.subr.bf16.mxu0 0
        %1832 = vmatpush1.bf16.msra.mxu0 0
        %1833 = vmatprep.subr.bf16.mxu0 0
        %1834 = vmatpush1.bf16.msra.mxu0 0
        %1835 = vmatprep.subr.bf16.mxu0 0
        %1836 = vmatpush1.bf16.msra.mxu0 0
        %1837 = vmatprep.subr.bf16.mxu0 0
        %1838 = vmatpush1.bf16.msra.mxu0 0
        %1839 = vmatprep.subr.bf16.mxu0 0
        %1840 = vmatpush1.bf16.msra.mxu0 0
        %1841 = vmatprep.subr.bf16.mxu0 0
        %1842 = vmatpush1.bf16.msra.mxu0 0
        %1843 = vmatprep.subr.bf16.mxu0 0
        %1844 = vmatpush1.bf16.msra.mxu0 0
        %1845 = vmatprep.subr.bf16.mxu0 0
        %1846 = vmatpush1.bf16.msra.mxu0 0
        %1847 = vmatprep.mubr.bf16.mxu0 0
        %1848 = vmatmul.mubr.bf16.gmra.mrb[0].mxu0 %v1600
        %v1849 = vpop.f32.mrb[0].mxu0
        %v1850 = vadd.f32 %v1638, %v1849
        %v1851 = vpop.f32.mrb[0].mxu0
        %v1852 = vadd.f32 %v1642, %v1851
        %v1853 = vpop.f32.mrb[0].mxu0
        %v1854 = vadd.f32 %v1638, %v1853
        %v1855 = vpop.f32.mrb[0].mxu0
        %v1856 = vadd.f32 %v1642, %v1855
        %1857 = vdwg.mxu0
        %1858 = vmatprep.subr.bf16.mxu0 %v1754
        %1859 = vmatpush1.bf16.msra.mxu0 %v1753
        %1860 = vmatprep.subr.bf16.mxu0 %v1758
        %1861 = vmatpush1.bf16.msra.mxu0 %v1757
        %1862 = vmatprep.subr.bf16.mxu0 %v1762
        %1863 = vmatpush1.bf16.msra.mxu0 %v1761
        %1864 = vmatprep.subr.bf16.mxu0 %v1766
        %1865 = vmatpush1.bf16.msra.mxu0 %v1765
        %1866 = vmatprep.subr.bf16.mxu0 %v1770
        %1867 = vmatpush1.bf16.msra.mxu0 %v1769
        %1868 = vmatprep.subr.bf16.mxu0 %v1774
        %1869 = vmatpush1.bf16.msra.mxu0 %v1773
        %1870 = vmatprep.subr.bf16.mxu0 %v1778
        %1871 = vmatpush1.bf16.msra.mxu0 %v1777
        %1872 = vmatprep.subr.bf16.mxu0 %v1782
        %1873 = vmatpush1.bf16.msra.mxu0 %v1781
        %1874 = vmatprep.subr.bf16.mxu0 0
        %1875 = vmatpush1.bf16.msra.mxu0 0
        %1876 = vmatprep.subr.bf16.mxu0 0
        %1877 = vmatpush1.bf16.msra.mxu0 0
        %1878 = vmatprep.subr.bf16.mxu0 0
        %1879 = vmatpush1.bf16.msra.mxu0 0
        %1880 = vmatprep.subr.bf16.mxu0 0
        %1881 = vmatpush1.bf16.msra.mxu0 0
        %1882 = vmatprep.subr.bf16.mxu0 0
        %1883 = vmatpush1.bf16.msra.mxu0 0
        %1884 = vmatprep.subr.bf16.mxu0 0
        %1885 = vmatpush1.bf16.msra.mxu0 0
        %1886 = vmatprep.subr.bf16.mxu0 0
        %1887 = vmatpush1.bf16.msra.mxu0 0
        %1888 = vmatprep.subr.bf16.mxu0 0
        %1889 = vmatpush1.bf16.msra.mxu0 0
        %1890 = vmatprep.mubr.bf16.mxu0 0
        %1891 = vmatmul.mubr.bf16.gmra.mrb[0].mxu0 %v1600
        %v1892 = vpop.f32.mrb[0].mxu0
        %v1893 = vadd.f32 %v1646, %v1892
        %v1894 = vpop.f32.mrb[0].mxu0
        %v1895 = vadd.f32 %v1650, %v1894
        %v1896 = vpop.f32.mrb[0].mxu0
        %v1897 = vadd.f32 %v1646, %v1896
        %v1898 = vpop.f32.mrb[0].mxu0
        %v1899 = vadd.f32 %v1650, %v1898
        %1900 = vdwg.mxu0
        %v1901 = vmul.f32 %v1850, 0.5
        %v1902 = vmul.f32 %v1852, 0.5
        %v1903 = vmul.f32 %v1893, 0.5
        %v1904 = vmul.f32 %v1895, 0.5
        %v1905 = vmul.f32 %v1854, 0.5
        %v1906 = vmul.f32 %v1856, 0.5
        %v1907 = vmul.f32 %v1897, 0.5
        %v1908 = vmul.f32 %v1899, 0.5
        %v1909 = vmul.f32 %v1850, 0.70710677
        %v1910 = vmul.f32 %v1852, 0.70710677
        %v1911 = vmul.f32 %v1893, 0.70710677
        %v1912 = vmul.f32 %v1895, 0.70710677
        %v1913 = vmul.f32 %v1854, 0.70710677
        %v1914 = vmul.f32 %v1856, 0.70710677
        %v1915 = vmul.f32 %v1897, 0.70710677
        %v1916 = vmul.f32 %v1899, 0.70710677
        %v1917 = vand.u32 2147483647, %v1909
        %v1918 = vand.u32 2147483647, %v1910
        %v1919 = vand.u32 2147483647, %v1911
        %v1920 = vand.u32 2147483647, %v1912
        %v1921 = vand.u32 2147483647, %v1913
        %v1922 = vand.u32 2147483647, %v1914
        %v1923 = vand.u32 2147483647, %v1915
        %v1924 = vand.u32 2147483647, %v1916
        %v1925 = vmul.f32 %v1917, 0.3275911
        %v1926 = vmul.f32 %v1918, 0.3275911
        %v1927 = vmul.f32 %v1919, 0.3275911
        %v1928 = vmul.f32 %v1920, 0.3275911
        %v1929 = vmul.f32 %v1921, 0.3275911
        %v1930 = vmul.f32 %v1922, 0.3275911
        %v1931 = vmul.f32 %v1923, 0.3275911
        %v1932 = vmul.f32 %v1924, 0.3275911
        %v1933 = vadd.f32 %v1925, 1.0
        %v1934 = vadd.f32 %v1926, 1.0
        %v1935 = vadd.f32 %v1927, 1.0
        %v1936 = vadd.f32 %v1928, 1.0
        %v1937 = vadd.f32 %v1929, 1.0
        %v1938 = vadd.f32 %v1930, 1.0
        %v1939 = vadd.f32 %v1931, 1.0
        %v1940 = vadd.f32 %v1932, 1.0
        %v1941 = vrcp.pop %v1933
        %v1942 = vmul.f32 1.0, %v1941
        %v1943 = vrcp.pop %v1934
        %v1944 = vmul.f32 1.0, %v1943
        %v1945 = vrcp.pop %v1935
        %v1946 = vmul.f32 1.0, %v1945
        %v1947 = vrcp.pop %v1936
        %v1948 = vmul.f32 1.0, %v1947
        %v1949 = vrcp.pop %v1937
        %v1950 = vmul.f32 1.0, %v1949
        %v1951 = vrcp.pop %v1938
        %v1952 = vmul.f32 1.0, %v1951
        %v1953 = vrcp.pop %v1939
        %v1954 = vmul.f32 1.0, %v1953
        %v1955 = vrcp.pop %v1940
        %v1956 = vmul.f32 1.0, %v1955
        %v1957 = vmul.f32 %v1942, 1.0614054
        %v1958 = vmul.f32 %v1944, 1.0614054
        %v1959 = vmul.f32 %v1946, 1.0614054
        %v1960 = vmul.f32 %v1948, 1.0614054
        %v1961 = vmul.f32 %v1950, 1.0614054
        %v1962 = vmul.f32 %v1952, 1.0614054
        %v1963 = vmul.f32 %v1954, 1.0614054
        %v1964 = vmul.f32 %v1956, 1.0614054
        %v1965 = vsub.f32 %v1957, 1.4531521
        %v1966 = vsub.f32 %v1958, 1.4531521
        %v1967 = vsub.f32 %v1959, 1.4531521
        %v1968 = vsub.f32 %v1960, 1.4531521
        %v1969 = vsub.f32 %v1961, 1.4531521
        %v1970 = vsub.f32 %v1962, 1.4531521
        %v1971 = vsub.f32 %v1963, 1.4531521
        %v1972 = vsub.f32 %v1964, 1.4531521
        %v1973 = vmul.f32 %v1965, %v1942
        %v1974 = vmul.f32 %v1966, %v1944
        %v1975 = vmul.f32 %v1967, %v1946
        %v1976 = vmul.f32 %v1968, %v1948
        %v1977 = vmul.f32 %v1969, %v1950
        %v1978 = vmul.f32 %v1970, %v1952
        %v1979 = vmul.f32 %v1971, %v1954
        %v1980 = vmul.f32 %v1972, %v1956
        %v1981 = vadd.f32 %v1973, 1.4214138
        %v1982 = vadd.f32 %v1974, 1.4214138
        %v1983 = vadd.f32 %v1975, 1.4214138
        %v1984 = vadd.f32 %v1976, 1.4214138
        %v1985 = vadd.f32 %v1977, 1.4214138
        %v1986 = vadd.f32 %v1978, 1.4214138
        %v1987 = vadd.f32 %v1979, 1.4214138
        %v1988 = vadd.f32 %v1980, 1.4214138
        %v1989 = vmul.f32 %v1981, %v1942
        %v1990 = vmul.f32 %v1982, %v1944
        %v1991 = vmul.f32 %v1983, %v1946
        %v1992 = vmul.f32 %v1984, %v1948
        %v1993 = vmul.f32 %v1985, %v1950
        %v1994 = vmul.f32 %v1986, %v1952
        %v1995 = vmul.f32 %v1987, %v1954
        %v1996 = vmul.f32 %v1988, %v1956
        %v1997 = vsub.f32 %v1989, 0.28449672
        %v1998 = vsub.f32 %v1990, 0.28449672
        %v1999 = vsub.f32 %v1991, 0.28449672
        %v2000 = vsub.f32 %v1992, 0.28449672
        %v2001 = vsub.f32 %v1993, 0.28449672
        %v2002 = vsub.f32 %v1994, 0.28449672
        %v2003 = vsub.f32 %v1995, 0.28449672
        %v2004 = vsub.f32 %v1996, 0.28449672
        %v2005 = vmul.f32 %v1997, %v1942
        %v2006 = vmul.f32 %v1998, %v1944
        %v2007 = vmul.f32 %v1999, %v1946
        %v2008 = vmul.f32 %v2000, %v1948
        %v2009 = vmul.f32 %v2001, %v1950
        %v2010 = vmul.f32 %v2002, %v1952
        %v2011 = vmul.f32 %v2003, %v1954
        %v2012 = vmul.f32 %v2004, %v1956
        %v2013 = vadd.f32 %v2005, 0.2548296
        %v2014 = vadd.f32 %v2006, 0.2548296
        %v2015 = vadd.f32 %v2007, 0.2548296
        %v2016 = vadd.f32 %v2008, 0.2548296
        %v2017 = vadd.f32 %v2009, 0.2548296
        %v2018 = vadd.f32 %v2010, 0.2548296
        %v2019 = vadd.f32 %v2011, 0.2548296
        %v2020 = vadd.f32 %v2012, 0.2548296
        %v2021 = vmul.f32 %v2013, %v1942
        %v2022 = vmul.f32 %v2014, %v1944
        %v2023 = vmul.f32 %v2015, %v1946
        %v2024 = vmul.f32 %v2016, %v1948
        %v2025 = vmul.f32 %v2017, %v1950
        %v2026 = vmul.f32 %v2018, %v1952
        %v2027 = vmul.f32 %v2019, %v1954
        %v2028 = vmul.f32 %v2020, %v1956
        %v2029 = vsub.f32 0.0, %v1917
        %v2030 = vsub.f32 0.0, %v1918
        %v2031 = vsub.f32 0.0, %v1919
        %v2032 = vsub.f32 0.0, %v1920
        %v2033 = vsub.f32 0.0, %v1921
        %v2034 = vsub.f32 0.0, %v1922
        %v2035 = vsub.f32 0.0, %v1923
        %v2036 = vsub.f32 0.0, %v1924
        %v2037 = vmul.f32 %v2029, %v1917
        %v2038 = vmul.f32 %v2030, %v1918
        %v2039 = vmul.f32 %v2031, %v1919
        %v2040 = vmul.f32 %v2032, %v1920
        %v2041 = vmul.f32 %v2033, %v1921
        %v2042 = vmul.f32 %v2034, %v1922
        %v2043 = vmul.f32 %v2035, %v1923
        %v2044 = vmul.f32 %v2036, %v1924
        %v2045 = vmul.f32 %v2037, 1.442695
        %v2046 = vpow.pop %v2045
        %v2047 = vmul.f32 %v2038, 1.442695
        %v2048 = vpow.pop %v2047
        %v2049 = vmul.f32 %v2039, 1.442695
        %v2050 = vpow.pop %v2049
        %v2051 = vmul.f32 %v2040, 1.442695
        %v2052 = vpow.pop %v2051
        %v2053 = vmul.f32 %v2041, 1.442695
        %v2054 = vpow.pop %v2053
        %v2055 = vmul.f32 %v2042, 1.442695
        %v2056 = vpow.pop %v2055
        %v2057 = vmul.f32 %v2043, 1.442695
        %v2058 = vpow.pop %v2057
        %v2059 = vmul.f32 %v2044, 1.442695
        %v2060 = vpow.pop %v2059
        %v2061 = vmul.f32 %v2021, %v2046
        %v2062 = vmul.f32 %v2022, %v2048
        %v2063 = vmul.f32 %v2023, %v2050
        %v2064 = vmul.f32 %v2024, %v2052
        %v2065 = vmul.f32 %v2025, %v2054
        %v2066 = vmul.f32 %v2026, %v2056
        %v2067 = vmul.f32 %v2027, %v2058
        %v2068 = vmul.f32 %v2028, %v2060
        %v2069 = vsub.f32 1.0, %v2061
        %v2070 = vsub.f32 1.0, %v2062
        %v2071 = vsub.f32 1.0, %v2063
        %v2072 = vsub.f32 1.0, %v2064
        %v2073 = vsub.f32 1.0, %v2065
        %v2074 = vsub.f32 1.0, %v2066
        %v2075 = vsub.f32 1.0, %v2067
        %v2076 = vsub.f32 1.0, %v2068
        %vm2077 = vcmp.ge.f32.partialorder %v1909, 0.0
        %vm2078 = vcmp.ge.f32.partialorder %v1910, 0.0
        %vm2079 = vcmp.ge.f32.partialorder %v1911, 0.0
        %vm2080 = vcmp.ge.f32.partialorder %v1912, 0.0
        %vm2081 = vcmp.ge.f32.partialorder %v1913, 0.0
        %vm2082 = vcmp.ge.f32.partialorder %v1914, 0.0
        %vm2083 = vcmp.ge.f32.partialorder %v1915, 0.0
        %vm2084 = vcmp.ge.f32.partialorder %v1916, 0.0
        %v2085 = vsub.f32 0.0, %v2069
        %v2086 = vsub.f32 0.0, %v2070
        %v2087 = vsub.f32 0.0, %v2071
        %v2088 = vsub.f32 0.0, %v2072
        %v2089 = vsub.f32 0.0, %v2073
        %v2090 = vsub.f32 0.0, %v2074
        %v2091 = vsub.f32 0.0, %v2075
        %v2092 = vsub.f32 0.0, %v2076
        %v2093 = vsel %vm2077, %v2069, %v2085
        %v2094 = vsel %vm2078, %v2070, %v2086
        %v2095 = vsel %vm2079, %v2071, %v2087
        %v2096 = vsel %vm2080, %v2072, %v2088
        %v2097 = vsel %vm2081, %v2073, %v2089
        %v2098 = vsel %vm2082, %v2074, %v2090
        %v2099 = vsel %vm2083, %v2075, %v2091
        %v2100 = vsel %vm2084, %v2076, %v2092
        %v2101 = vadd.f32 %v2093, 1.0
        %v2102 = vadd.f32 %v2094, 1.0
        %v2103 = vadd.f32 %v2095, 1.0
        %v2104 = vadd.f32 %v2096, 1.0
        %v2105 = vadd.f32 %v2097, 1.0
        %v2106 = vadd.f32 %v2098, 1.0
        %v2107 = vadd.f32 %v2099, 1.0
        %v2108 = vadd.f32 %v2100, 1.0
        %v2109 = vmul.f32 %v1901, %v2101
        %v2110 = vmul.f32 %v1902, %v2102
        %v2111 = vmul.f32 %v1903, %v2103
        %v2112 = vmul.f32 %v1904, %v2104
        %v2113 = vmul.f32 %v1905, %v2105
        %v2114 = vmul.f32 %v1906, %v2106
        %v2115 = vmul.f32 %v1907, %v2107
        %v2116 = vmul.f32 %v1908, %v2108
        %v2117 = vpack.c.bf16 %v2113, %v2109
        %v2118 = vpack.c.bf16 %v2114, %v2110
        %v2119 = vpack.c.bf16 %v2115, %v2111
        %v2120 = vpack.c.bf16 %v2116, %v2112
        %v2121 = vld [vmem:[#allocation7] sm:$0xf]
        %v2122 = vld [vmem:[#allocation7 + $0x4] sm:$0xf]
        %v2123 = vld [vmem:[#allocation7 + $0x8] sm:$0xf]
        %v2124 = vld [vmem:[#allocation7 + $0xc] sm:$0xf]
        %v2125 = vld [vmem:[#allocation7 + $0x10] sm:$0xf]
        %v2126 = vld [vmem:[#allocation7 + $0x14] sm:$0xf]
        %v2127 = vld [vmem:[#allocation7 + $0x18] sm:$0xf]
        %v2128 = vld [vmem:[#allocation7 + $0x1c] sm:$0xf]
        %v2129 = vld [vmem:[#allocation7 + $0x20] sm:$0xf]
        %v2130 = vld [vmem:[#allocation7 + $0x24] sm:$0xf]
        %v2131 = vld [vmem:[#allocation7 + $0x28] sm:$0xf]
        %v2132 = vld [vmem:[#allocation7 + $0x2c] sm:$0xf]
        %v2133 = vld [vmem:[#allocation7 + $0x30] sm:$0xf]
        %v2134 = vld [vmem:[#allocation7 + $0x34] sm:$0xf]
        %v2135 = vld [vmem:[#allocation7 + $0x38] sm:$0xf]
        %v2136 = vld [vmem:[#allocation7 + $0x3c] sm:$0xf]
        %v2137 = vld [vmem:[#allocation7 + $0x40] sm:$0xf]
        %v2138 = vld [vmem:[#allocation7 + $0x44] sm:$0xf]
        %v2139 = vld [vmem:[#allocation7 + $0x48] sm:$0xf]
        %v2140 = vld [vmem:[#allocation7 + $0x4c] sm:$0xf]
        %v2141 = vld [vmem:[#allocation7 + $0x50] sm:$0xf]
        %v2142 = vld [vmem:[#allocation7 + $0x54] sm:$0xf]
        %v2143 = vld [vmem:[#allocation7 + $0x58] sm:$0xf]
        %v2144 = vld [vmem:[#allocation7 + $0x5c] sm:$0xf]
        %v2145 = vld [vmem:[#allocation7 + $0x60] sm:$0xf]
        %v2146 = vld [vmem:[#allocation7 + $0x64] sm:$0xf]
        %v2147 = vld [vmem:[#allocation7 + $0x68] sm:$0xf]
        %v2148 = vld [vmem:[#allocation7 + $0x6c] sm:$0xf]
        %v2149 = vld [vmem:[#allocation7 + $0x70] sm:$0xf]
        %v2150 = vld [vmem:[#allocation7 + $0x74] sm:$0xf]
        %v2151 = vld [vmem:[#allocation7 + $0x78] sm:$0xf]
        %v2152 = vld [vmem:[#allocation7 + $0x7c] sm:$0xf]
        %v2153 = vld [vmem:[#allocation7 + $0x80] sm:$0xf]
        %v2154 = vld [vmem:[#allocation7 + $0x84] sm:$0xf]
        %v2155 = vld [vmem:[#allocation7 + $0x88] sm:$0xf]
        %v2156 = vld [vmem:[#allocation7 + $0x8c] sm:$0xf]
        %v2157 = vld [vmem:[#allocation7 + $0x90] sm:$0xf]
        %v2158 = vld [vmem:[#allocation7 + $0x94] sm:$0xf]
        %v2159 = vld [vmem:[#allocation7 + $0x98] sm:$0xf]
        %v2160 = vld [vmem:[#allocation7 + $0x9c] sm:$0xf]
        %v2161 = vld [vmem:[#allocation7 + $0xa0] sm:$0xf]
        %v2162 = vld [vmem:[#allocation7 + $0xa4] sm:$0xf]
        %v2163 = vld [vmem:[#allocation7 + $0xa8] sm:$0xf]
        %v2164 = vld [vmem:[#allocation7 + $0xac] sm:$0xf]
        %v2165 = vld [vmem:[#allocation7 + $0xb0] sm:$0xf]
        %v2166 = vld [vmem:[#allocation7 + $0xb4] sm:$0xf]
        %v2167 = vld [vmem:[#allocation7 + $0xb8] sm:$0xf]
        %v2168 = vld [vmem:[#allocation7 + $0xbc] sm:$0xf]
        %v2169 = vld [vmem:[#allocation7 + $0xc0] sm:$0xf]
        %v2170 = vld [vmem:[#allocation7 + $0xc4] sm:$0xf]
        %v2171 = vld [vmem:[#allocation7 + $0xc8] sm:$0xf]
        %v2172 = vld [vmem:[#allocation7 + $0xcc] sm:$0xf]
        %v2173 = vld [vmem:[#allocation7 + $0xd0] sm:$0xf]
        %v2174 = vld [vmem:[#allocation7 + $0xd4] sm:$0xf]
        %v2175 = vld [vmem:[#allocation7 + $0xd8] sm:$0xf]
        %v2176 = vld [vmem:[#allocation7 + $0xdc] sm:$0xf]
        %v2177 = vld [vmem:[#allocation7 + $0xe0] sm:$0xf]
        %v2178 = vld [vmem:[#allocation7 + $0xe4] sm:$0xf]
        %v2179 = vld [vmem:[#allocation7 + $0xe8] sm:$0xf]
        %v2180 = vld [vmem:[#allocation7 + $0xec] sm:$0xf]
        %v2181 = vld [vmem:[#allocation7 + $0xf0] sm:$0xf]
        %v2182 = vld [vmem:[#allocation7 + $0xf4] sm:$0xf]
        %v2183 = vld [vmem:[#allocation7 + $0xf8] sm:$0xf]
        %v2184 = vld [vmem:[#allocation7 + $0xfc] sm:$0xf]
        %v2185 = vld [vmem:[%s10] sm:$0x1]
        %v2187 = vlaneseq
        %v2188 = vshrl.u32 %v2187, 7
        %v2189 = vsub.s32 0, %v2188
        %v2190 = vrot.slane %v2185, %v2189
        %v2256 = vunpack.c.l.b16 %v2121
        %v2257 = vunpack.c.l.b16 %v2122
        %v2258 = vunpack.c.l.b16 %v2123
        %v2259 = vunpack.c.l.b16 %v2124
        %v2260 = vunpack.c.l.b16 %v2125
        %v2261 = vunpack.c.l.b16 %v2126
        %v2262 = vunpack.c.l.b16 %v2127
        %v2263 = vunpack.c.l.b16 %v2128
        %v2264 = vunpack.c.l.b16 %v2129
        %v2265 = vunpack.c.l.b16 %v2130
        %v2266 = vunpack.c.l.b16 %v2131
        %v2267 = vunpack.c.l.b16 %v2132
        %v2268 = vunpack.c.l.b16 %v2133
        %v2269 = vunpack.c.l.b16 %v2134
        %v2270 = vunpack.c.l.b16 %v2135
        %v2271 = vunpack.c.l.b16 %v2136
        %v2272 = vunpack.c.l.b16 %v2137
        %v2273 = vunpack.c.l.b16 %v2138
        %v2274 = vunpack.c.l.b16 %v2139
        %v2275 = vunpack.c.l.b16 %v2140
        %v2276 = vunpack.c.l.b16 %v2141
        %v2277 = vunpack.c.l.b16 %v2142
        %v2278 = vunpack.c.l.b16 %v2143
        %v2279 = vunpack.c.l.b16 %v2144
        %v2280 = vunpack.c.l.b16 %v2145
        %v2281 = vunpack.c.l.b16 %v2146
        %v2282 = vunpack.c.l.b16 %v2147
        %v2283 = vunpack.c.l.b16 %v2148
        %v2284 = vunpack.c.l.b16 %v2149
        %v2285 = vunpack.c.l.b16 %v2150
        %v2286 = vunpack.c.l.b16 %v2151
        %v2287 = vunpack.c.l.b16 %v2152
        %v2288 = vunpack.c.l.b16 %v2153
        %v2289 = vunpack.c.l.b16 %v2154
        %v2290 = vunpack.c.l.b16 %v2155
        %v2291 = vunpack.c.l.b16 %v2156
        %v2292 = vunpack.c.l.b16 %v2157
        %v2293 = vunpack.c.l.b16 %v2158
        %v2294 = vunpack.c.l.b16 %v2159
        %v2295 = vunpack.c.l.b16 %v2160
        %v2296 = vunpack.c.l.b16 %v2161
        %v2297 = vunpack.c.l.b16 %v2162
        %v2298 = vunpack.c.l.b16 %v2163
        %v2299 = vunpack.c.l.b16 %v2164
        %v2300 = vunpack.c.l.b16 %v2165
        %v2301 = vunpack.c.l.b16 %v2166
        %v2302 = vunpack.c.l.b16 %v2167
        %v2303 = vunpack.c.l.b16 %v2168
        %v2304 = vunpack.c.l.b16 %v2169
        %v2305 = vunpack.c.l.b16 %v2170
        %v2306 = vunpack.c.l.b16 %v2171
        %v2307 = vunpack.c.l.b16 %v2172
        %v2308 = vunpack.c.l.b16 %v2173
        %v2309 = vunpack.c.l.b16 %v2174
        %v2310 = vunpack.c.l.b16 %v2175
        %v2311 = vunpack.c.l.b16 %v2176
        %v2312 = vunpack.c.l.b16 %v2177
        %v2313 = vunpack.c.l.b16 %v2178
        %v2314 = vunpack.c.l.b16 %v2179
        %v2315 = vunpack.c.l.b16 %v2180
        %v2316 = vunpack.c.l.b16 %v2181
        %v2317 = vunpack.c.l.b16 %v2182
        %v2318 = vunpack.c.l.b16 %v2183
        %v2319 = vunpack.c.l.b16 %v2184
        %v2320 = vpack.c.b16 %v2257, %v2256
        %v2321 = vpack.c.b16 %v2259, %v2258
        %v2322 = vpack.c.b16 %v2261, %v2260
        %v2323 = vpack.c.b16 %v2263, %v2262
        %v2324 = vpack.c.b16 %v2265, %v2264
        %v2325 = vpack.c.b16 %v2267, %v2266
        %v2326 = vpack.c.b16 %v2269, %v2268
        %v2327 = vpack.c.b16 %v2271, %v2270
        %v2328 = vpack.c.b16 %v2273, %v2272
        %v2329 = vpack.c.b16 %v2275, %v2274
        %v2330 = vpack.c.b16 %v2277, %v2276
        %v2331 = vpack.c.b16 %v2279, %v2278
        %v2332 = vpack.c.b16 %v2281, %v2280
        %v2333 = vpack.c.b16 %v2283, %v2282
        %v2334 = vpack.c.b16 %v2285, %v2284
        %v2335 = vpack.c.b16 %v2287, %v2286
        %v2336 = vpack.c.b16 %v2289, %v2288
        %v2337 = vpack.c.b16 %v2291, %v2290
        %v2338 = vpack.c.b16 %v2293, %v2292
        %v2339 = vpack.c.b16 %v2295, %v2294
        %v2340 = vpack.c.b16 %v2297, %v2296
        %v2341 = vpack.c.b16 %v2299, %v2298
        %v2342 = vpack.c.b16 %v2301, %v2300
        %v2343 = vpack.c.b16 %v2303, %v2302
        %v2344 = vpack.c.b16 %v2305, %v2304
        %v2345 = vpack.c.b16 %v2307, %v2306
        %v2346 = vpack.c.b16 %v2309, %v2308
        %v2347 = vpack.c.b16 %v2311, %v2310
        %v2348 = vpack.c.b16 %v2313, %v2312
        %v2349 = vpack.c.b16 %v2315, %v2314
        %v2350 = vpack.c.b16 %v2317, %v2316
        %v2351 = vpack.c.b16 %v2319, %v2318
        %2384 = vmatprep.subr.bf16.mxu0 0
        %2385 = vmatpush1.bf16.msra.mxu0 %v2320
        %2386 = vmatprep.subr.bf16.mxu0 0
        %2387 = vmatpush1.bf16.msra.mxu0 %v2321
        %2388 = vmatprep.subr.bf16.mxu0 0
        %2389 = vmatpush1.bf16.msra.mxu0 %v2322
        %2390 = vmatprep.subr.bf16.mxu0 0
        %2391 = vmatpush1.bf16.msra.mxu0 %v2323
        %2392 = vmatprep.subr.bf16.mxu0 0
        %2393 = vmatpush1.bf16.msra.mxu0 %v2324
        %2394 = vmatprep.subr.bf16.mxu0 0
        %2395 = vmatpush1.bf16.msra.mxu0 %v2325
        %2396 = vmatprep.subr.bf16.mxu0 0
        %2397 = vmatpush1.bf16.msra.mxu0 %v2326
        %2398 = vmatprep.subr.bf16.mxu0 0
        %2399 = vmatpush1.bf16.msra.mxu0 %v2327
        %2400 = vmatprep.subr.bf16.mxu0 0
        %2401 = vmatpush1.bf16.msra.mxu0 %v2328
        %2402 = vmatprep.subr.bf16.mxu0 0
        %2403 = vmatpush1.bf16.msra.mxu0 %v2329
        %2404 = vmatprep.subr.bf16.mxu0 0
        %2405 = vmatpush1.bf16.msra.mxu0 %v2330
        %2406 = vmatprep.subr.bf16.mxu0 0
        %2407 = vmatpush1.bf16.msra.mxu0 %v2331
        %2408 = vmatprep.subr.bf16.mxu0 0
        %2409 = vmatpush1.bf16.msra.mxu0 %v2332
        %2410 = vmatprep.subr.bf16.mxu0 0
        %2411 = vmatpush1.bf16.msra.mxu0 %v2333
        %2412 = vmatprep.subr.bf16.mxu0 0
        %2413 = vmatpush1.bf16.msra.mxu0 %v2334
        %2414 = vmatprep.subr.bf16.mxu0 0
        %2415 = vmatpush1.bf16.msra.mxu0 %v2335
        %2416 = vmatprep.mubr.bf16.mxu0 %v2118
        %2417 = vmatmul.mubr.bf16.gmra.mrb[0].mxu0 %v2117
        %v2418 = vpop.f32.mrb[0].mxu0
        %v2419 = vadd.f32 %v2190, %v2418
        %v2420 = vpop.f32.mrb[0].mxu0
        %v2421 = vpop.f32.mrb[0].mxu0
        %v2422 = vadd.f32 %v2190, %v2421
        %v2423 = vpop.f32.mrb[0].mxu0
        %2424 = vdwg.mxu0
        %2425 = vmatprep.subr.bf16.mxu0 0
        %2426 = vmatpush1.bf16.msra.mxu0 %v2336
        %2427 = vmatprep.subr.bf16.mxu0 0
        %2428 = vmatpush1.bf16.msra.mxu0 %v2337
        %2429 = vmatprep.subr.bf16.mxu0 0
        %2430 = vmatpush1.bf16.msra.mxu0 %v2338
        %2431 = vmatprep.subr.bf16.mxu0 0
        %2432 = vmatpush1.bf16.msra.mxu0 %v2339
        %2433 = vmatprep.subr.bf16.mxu0 0
        %2434 = vmatpush1.bf16.msra.mxu0 %v2340
        %2435 = vmatprep.subr.bf16.mxu0 0
        %2436 = vmatpush1.bf16.msra.mxu0 %v2341
        %2437 = vmatprep.subr.bf16.mxu0 0
        %2438 = vmatpush1.bf16.msra.mxu0 %v2342
        %2439 = vmatprep.subr.bf16.mxu0 0
        %2440 = vmatpush1.bf16.msra.mxu0 %v2343
        %2441 = vmatprep.subr.bf16.mxu0 0
        %2442 = vmatpush1.bf16.msra.mxu0 %v2344
        %2443 = vmatprep.subr.bf16.mxu0 0
        %2444 = vmatpush1.bf16.msra.mxu0 %v2345
        %2445 = vmatprep.subr.bf16.mxu0 0
        %2446 = vmatpush1.bf16.msra.mxu0 %v2346
        %2447 = vmatprep.subr.bf16.mxu0 0
        %2448 = vmatpush1.bf16.msra.mxu0 %v2347
        %2449 = vmatprep.subr.bf16.mxu0 0
        %2450 = vmatpush1.bf16.msra.mxu0 %v2348
        %2451 = vmatprep.subr.bf16.mxu0 0
        %2452 = vmatpush1.bf16.msra.mxu0 %v2349
        %2453 = vmatprep.subr.bf16.mxu0 0
        %2454 = vmatpush1.bf16.msra.mxu0 %v2350
        %2455 = vmatprep.subr.bf16.mxu0 0
        %2456 = vmatpush1.bf16.msra.mxu0 %v2351
        %2457 = vmatprep.mubr.bf16.mxu0 %v2120
        %2458 = vmatmul.mubr.bf16.gmra.mrb[0].mxu0 %v2119
        %v2459 = vpop.f32.mrb[0].mxu0
        %v2460 = vadd.f32 %v2419, %v2459
        %v2461 = vpop.f32.mrb[0].mxu0
        %v2462 = vpop.f32.mrb[0].mxu0
        %v2463 = vadd.f32 %v2422, %v2462
        %v2464 = vpop.f32.mrb[0].mxu0
        %2465 = vdwg.mxu0
        %v2466 = vadd.f32 %v1598, %v2460
        %v2467 = vadd.f32 %v1599, %v2463
        %v2468 = vld [vmem:[%s11] sm:$0x1]
        %v2469 = vld [vmem:[%s12] sm:$0x1]
        %2470 = vadd.xlane.f32.xlu0 %v2466
        %v2471 = vpop.xlane.xlu0 %2470
        %2472 = vadd.xlane.f32.xlu0 %v2467
        %v2473 = vpop.xlane.xlu0 %2472
        %v2474 = vmul.f32 %v2471, %v1565
        %v2475 = vmul.f32 %v2473, %v1565
        %v2476 = vsub.f32 %v2466, %v2474
        %v2477 = vsub.f32 %v2467, %v2475
        %v2478 = vmul.f32 %v2476, %v2476
        %v2479 = vmul.f32 %v2477, %v2477
        %2480 = vadd.xlane.f32.xlu0 %v2478
        %v2481 = vpop.xlane.xlu0 %2480
        %2482 = vadd.xlane.f32.xlu0 %v2479
        %v2483 = vpop.xlane.xlu0 %2482
        %v2484 = vmul.f32 %v2481, %v1565
        %v2485 = vmul.f32 %v2483, %v1565
        %v2486 = vadd.f32 %v2484, 1e-05
        %v2487 = vadd.f32 %v2485, 1e-05
        %v2488 = vrsqrt.pop %v2486
        %v2489 = vrsqrt.pop %v2487
        %v2490 = vmul.f32 %v2476, %v2488
        %v2491 = vmul.f32 %v2477, %v2489
        %v2493 = vlaneseq
        %v2494 = vshrl.u32 %v2493, 7
        %v2495 = vsub.s32 0, %v2494
        %v2496 = vrot.slane %v2468, %v2495
        %v2498 = vmul.f32 %v2490, %v2496
        %v2499 = vmul.f32 %v2491, %v2496
        %v2501 = vlaneseq
        %v2502 = vshrl.u32 %v2501, 7
        %v2503 = vsub.s32 0, %v2502
        %v2504 = vrot.slane %v2469, %v2503
        %v2506 = vadd.f32 %v2498, %v2504
        %v2507 = vadd.f32 %v2499, %v2504
        %v2508 = vpack.c.bf16 %v2507, %v2506
        %s2509 = scalar_lea.vmem [#allocation2], 192
        %v2510 = vld [vmem:[%s2509] sm:$0xff]
        %v2511 = vld [vmem:[%s2509 + $0x8] sm:$0xf]
        %v2512 = vld [vmem:[%s2509 + $0xc] sm:$0xff]
        %v2513 = vld [vmem:[%s2509 + $0x14] sm:$0xf]
        %v2514 = vld [vmem:[%s2509 + $0x18] sm:$0xff]
        %v2515 = vld [vmem:[%s2509 + $0x20] sm:$0xf]
        %v2516 = vld [vmem:[%s2509 + $0x24] sm:$0xff]
        %v2517 = vld [vmem:[%s2509 + $0x2c] sm:$0xf]
        %v2518 = vld [vmem:[%s2509 + $0x30] sm:$0xff]
        %v2519 = vld [vmem:[%s2509 + $0x38] sm:$0xf]
        %v2520 = vld [vmem:[%s2509 + $0x3c] sm:$0xff]
        %v2521 = vld [vmem:[%s2509 + $0x44] sm:$0xf]
        %v2522 = vld [vmem:[%s2509 + $0x48] sm:$0xff]
        %v2523 = vld [vmem:[%s2509 + $0x50] sm:$0xf]
        %v2524 = vld [vmem:[%s2509 + $0x54] sm:$0xff]
        %v2525 = vld [vmem:[%s2509 + $0x5c] sm:$0xf]
        %v2526 = vld [vmem:[%s2509 + $0x60] sm:$0xff]
        %v2527 = vld [vmem:[%s2509 + $0x68] sm:$0xf]
        %v2528 = vld [vmem:[%s2509 + $0x6c] sm:$0xff]
        %v2529 = vld [vmem:[%s2509 + $0x74] sm:$0xf]
        %v2530 = vld [vmem:[%s2509 + $0x78] sm:$0xff]
        %v2531 = vld [vmem:[%s2509 + $0x80] sm:$0xf]
        %v2532 = vld [vmem:[%s2509 + $0x84] sm:$0xff]
        %v2533 = vld [vmem:[%s2509 + $0x8c] sm:$0xf]
        %v2534 = vld [vmem:[%s2509 + $0x90] sm:$0xff]
        %v2535 = vld [vmem:[%s2509 + $0x98] sm:$0xf]
        %v2536 = vld [vmem:[%s2509 + $0x9c] sm:$0xff]
        %v2537 = vld [vmem:[%s2509 + $0xa4] sm:$0xf]
        %v2538 = vld [vmem:[%s2509 + $0xa8] sm:$0xff]
        %v2539 = vld [vmem:[%s2509 + $0xb0] sm:$0xf]
        %v2540 = vld [vmem:[%s2509 + $0xb4] sm:$0xff]
        %v2541 = vld [vmem:[%s2509 + $0xbc] sm:$0xf]
        %s2542 = scalar_lea.vmem %s2, 3
        %v2543 = vld [vmem:[%s2542] sm:$0x7]
        %v2545 = vlaneseq
        %v2546 = vshrl.u32 %v2545, 7
        %v2547 = vsub.s32 0, %v2546
        %v2548 = vrot.slane %v2543, %v2547
        %v2549 = vlaneseq
        %v2550 = vshrl.u32 %v2549, 7
        %v2551 = vsub.s32 1, %v2550
        %v2552 = vrot.slane %v2543, %v2551
        %v2553 = vlaneseq
        %v2554 = vshrl.u32 %v2553, 7
        %v2555 = vsub.s32 2, %v2554
        %v2556 = vrot.slane %v2543, %v2555
        %v2592 = vunpack.c.l.b16 %v2510
        %v2593 = vunpack.c.h.b16 %v2510
        %v2594 = vunpack.c.l.b16 %v2511
        %v2595 = vunpack.c.l.b16 %v2512
        %v2596 = vunpack.c.h.b16 %v2512
        %v2597 = vunpack.c.l.b16 %v2513
        %v2598 = vunpack.c.l.b16 %v2514
        %v2599 = vunpack.c.h.b16 %v2514
        %v2600 = vunpack.c.l.b16 %v2515
        %v2601 = vunpack.c.l.b16 %v2516
        %v2602 = vunpack.c.h.b16 %v2516
        %v2603 = vunpack.c.l.b16 %v2517
        %v2604 = vunpack.c.l.b16 %v2518
        %v2605 = vunpack.c.h.b16 %v2518
        %v2606 = vunpack.c.l.b16 %v2519
        %v2607 = vunpack.c.l.b16 %v2520
        %v2608 = vunpack.c.h.b16 %v2520
        %v2609 = vunpack.c.l.b16 %v2521
        %v2610 = vunpack.c.l.b16 %v2522
        %v2611 = vunpack.c.h.b16 %v2522
        %v2612 = vunpack.c.l.b16 %v2523
        %v2613 = vunpack.c.l.b16 %v2524
        %v2614 = vunpack.c.h.b16 %v2524
        %v2615 = vunpack.c.l.b16 %v2525
        %v2616 = vunpack.c.l.b16 %v2526
        %v2617 = vunpack.c.h.b16 %v2526
        %v2618 = vunpack.c.l.b16 %v2527
        %v2619 = vunpack.c.l.b16 %v2528
        %v2620 = vunpack.c.h.b16 %v2528
        %v2621 = vunpack.c.l.b16 %v2529
        %v2622 = vunpack.c.l.b16 %v2530
        %v2623 = vunpack.c.h.b16 %v2530
        %v2624 = vunpack.c.l.b16 %v2531
        %v2625 = vunpack.c.l.b16 %v2532
        %v2626 = vunpack.c.h.b16 %v2532
        %v2627 = vunpack.c.l.b16 %v2533
        %v2628 = vunpack.c.l.b16 %v2534
        %v2629 = vunpack.c.h.b16 %v2534
        %v2630 = vunpack.c.l.b16 %v2535
        %v2631 = vunpack.c.l.b16 %v2536
        %v2632 = vunpack.c.h.b16 %v2536
        %v2633 = vunpack.c.l.b16 %v2537
        %v2634 = vunpack.c.l.b16 %v2538
        %v2635 = vunpack.c.h.b16 %v2538
        %v2636 = vunpack.c.l.b16 %v2539
        %v2637 = vunpack.c.l.b16 %v2540
        %v2638 = vunpack.c.h.b16 %v2540
        %v2639 = vunpack.c.l.b16 %v2541
        %v2640 = vpack.c.b16 %v2595, %v2592
        %v2641 = vpack.c.b16 %v2596, %v2593
        %v2642 = vpack.c.b16 %v2597, %v2594
        %v2643 = vpack.c.b16 %v2601, %v2598
        %v2644 = vpack.c.b16 %v2602, %v2599
        %v2645 = vpack.c.b16 %v2603, %v2600
        %v2646 = vpack.c.b16 %v2607, %v2604
        %v2647 = vpack.c.b16 %v2608, %v2605
        %v2648 = vpack.c.b16 %v2609, %v2606
        %v2649 = vpack.c.b16 %v2613, %v2610
        %v2650 = vpack.c.b16 %v2614, %v2611
        %v2651 = vpack.c.b16 %v2615, %v2612
        %v2652 = vpack.c.b16 %v2619, %v2616
        %v2653 = vpack.c.b16 %v2620, %v2617
        %v2654 = vpack.c.b16 %v2621, %v2618
        %v2655 = vpack.c.b16 %v2625, %v2622
        %v2656 = vpack.c.b16 %v2626, %v2623
        %v2657 = vpack.c.b16 %v2627, %v2624
        %v2658 = vpack.c.b16 %v2631, %v2628
        %v2659 = vpack.c.b16 %v2632, %v2629
        %v2660 = vpack.c.b16 %v2633, %v2630
        %v2661 = vpack.c.b16 %v2637, %v2634
        %v2662 = vpack.c.b16 %v2638, %v2635
        %v2663 = vpack.c.b16 %v2639, %v2636
        %2688 = vmatprep.subr.bf16.mxu0 %v2641
        %2689 = vmatpush1.bf16.msra.mxu0 %v2640
        %2690 = vmatprep.subr.bf16.mxu0 %v2644
        %2691 = vmatpush1.bf16.msra.mxu0 %v2643
        %2692 = vmatprep.subr.bf16.mxu0 %v2647
        %2693 = vmatpush1.bf16.msra.mxu0 %v2646
        %2694 = vmatprep.subr.bf16.mxu0 %v2650
        %2695 = vmatpush1.bf16.msra.mxu0 %v2649
        %2696 = vmatprep.subr.bf16.mxu0 %v2653
        %2697 = vmatpush1.bf16.msra.mxu0 %v2652
        %2698 = vmatprep.subr.bf16.mxu0 %v2656
        %2699 = vmatpush1.bf16.msra.mxu0 %v2655
        %2700 = vmatprep.subr.bf16.mxu0 %v2659
        %2701 = vmatpush1.bf16.msra.mxu0 %v2658
        %2702 = vmatprep.subr.bf16.mxu0 %v2662
        %2703 = vmatpush1.bf16.msra.mxu0 %v2661
        %2704 = vmatprep.subr.bf16.mxu0 0
        %2705 = vmatpush1.bf16.msra.mxu0 0
        %2706 = vmatprep.subr.bf16.mxu0 0
        %2707 = vmatpush1.bf16.msra.mxu0 0
        %2708 = vmatprep.subr.bf16.mxu0 0
        %2709 = vmatpush1.bf16.msra.mxu0 0
        %2710 = vmatprep.subr.bf16.mxu0 0
        %2711 = vmatpush1.bf16.msra.mxu0 0
        %2712 = vmatprep.subr.bf16.mxu0 0
        %2713 = vmatpush1.bf16.msra.mxu0 0
        %2714 = vmatprep.subr.bf16.mxu0 0
        %2715 = vmatpush1.bf16.msra.mxu0 0
        %2716 = vmatprep.subr.bf16.mxu0 0
        %2717 = vmatpush1.bf16.msra.mxu0 0
        %2718 = vmatprep.subr.bf16.mxu0 0
        %2719 = vmatpush1.bf16.msra.mxu0 0
        %2720 = vmatprep.mubr.bf16.mxu0 0
        %2721 = vmatmul.mubr.bf16.gmra.mrb[0].mxu0 %v2508
        %v2722 = vpop.f32.mrb[0].mxu0
        %v2723 = vadd.f32 %v2548, %v2722
        %v2724 = vpop.f32.mrb[0].mxu0
        %v2725 = vadd.f32 %v2552, %v2724
        %v2726 = vpop.f32.mrb[0].mxu0
        %v2727 = vadd.f32 %v2548, %v2726
        %v2728 = vpop.f32.mrb[0].mxu0
        %v2729 = vadd.f32 %v2552, %v2728
        %2730 = vdwg.mxu0
        %2731 = vmatprep.subr.bf16.mxu0 0
        %2732 = vmatpush1.bf16.msra.mxu0 %v2642
        %2733 = vmatprep.subr.bf16.mxu0 0
        %2734 = vmatpush1.bf16.msra.mxu0 %v2645
        %2735 = vmatprep.subr.bf16.mxu0 0
        %2736 = vmatpush1.bf16.msra.mxu0 %v2648
        %2737 = vmatprep.subr.bf16.mxu0 0
        %2738 = vmatpush1.bf16.msra.mxu0 %v2651
        %2739 = vmatprep.subr.bf16.mxu0 0
        %2740 = vmatpush1.bf16.msra.mxu0 %v2654
        %2741 = vmatprep.subr.bf16.mxu0 0
        %2742 = vmatpush1.bf16.msra.mxu0 %v2657
        %2743 = vmatprep.subr.bf16.mxu0 0
        %2744 = vmatpush1.bf16.msra.mxu0 %v2660
        %2745 = vmatprep.subr.bf16.mxu0 0
        %2746 = vmatpush1.bf16.msra.mxu0 %v2663
        %2747 = vmatprep.subr.bf16.mxu0 0
        %2748 = vmatpush1.bf16.msra.mxu0 0
        %2749 = vmatprep.subr.bf16.mxu0 0
        %2750 = vmatpush1.bf16.msra.mxu0 0
        %2751 = vmatprep.subr.bf16.mxu0 0
        %2752 = vmatpush1.bf16.msra.mxu0 0
        %2753 = vmatprep.subr.bf16.mxu0 0
        %2754 = vmatpush1.bf16.msra.mxu0 0
        %2755 = vmatprep.subr.bf16.mxu0 0
        %2756 = vmatpush1.bf16.msra.mxu0 0
        %2757 = vmatprep.subr.bf16.mxu0 0
        %2758 = vmatpush1.bf16.msra.mxu0 0
        %2759 = vmatprep.subr.bf16.mxu0 0
        %2760 = vmatpush1.bf16.msra.mxu0 0
        %2761 = vmatprep.subr.bf16.mxu0 0
        %2762 = vmatpush1.bf16.msra.mxu0 0
        %2763 = vmatprep.mubr.bf16.mxu0 0
        %2764 = vmatmul.mubr.bf16.gmra.mrb[0].mxu0 %v2508
        %v2765 = vpop.f32.mrb[0].mxu0
        %v2766 = vadd.f32 %v2556, %v2765
        %v2767 = vpop.f32.mrb[0].mxu0
        %v2768 = vpop.f32.mrb[0].mxu0
        %v2769 = vadd.f32 %v2556, %v2768
        %v2770 = vpop.f32.mrb[0].mxu0
        %2771 = vdwg.mxu0
        %s2772 = scalar_lea.vmem [#allocation4], 64
        %v2773 = vld [vmem:[%s2772] sm:$0xf]
        %v2774 = vld [vmem:[%s2772 + $0x4] sm:$0xf]
        %v2775 = vld [vmem:[%s2772 + $0x8] sm:$0xf]
        %v2776 = vld [vmem:[%s2772 + $0xc] sm:$0xf]
        %v2777 = vld [vmem:[%s2772 + $0x10] sm:$0xf]
        %v2778 = vld [vmem:[%s2772 + $0x14] sm:$0xf]
        %v2779 = vld [vmem:[%s2772 + $0x18] sm:$0xf]
        %v2780 = vld [vmem:[%s2772 + $0x1c] sm:$0xf]
        %v2781 = vld [vmem:[%s2772 + $0x20] sm:$0xf]
        %v2782 = vld [vmem:[%s2772 + $0x24] sm:$0xf]
        %v2783 = vld [vmem:[%s2772 + $0x28] sm:$0xf]
        %v2784 = vld [vmem:[%s2772 + $0x2c] sm:$0xf]
        %v2785 = vld [vmem:[%s2772 + $0x30] sm:$0xf]
        %v2786 = vld [vmem:[%s2772 + $0x34] sm:$0xf]
        %v2787 = vld [vmem:[%s2772 + $0x38] sm:$0xf]
        %v2788 = vld [vmem:[%s2772 + $0x3c] sm:$0xf]
        %v2789 = vmul.f32 %v2723, 0.17677669
        %v2790 = vmul.f32 %v2727, 0.17677669
        %v2791 = vpack.c.bf16 %v2790, %v2789
        %v2792 = vpack.c.bf16 %v2729, %v2725
        %v2793 = vpack.c.bf16 %v2769, %v2766
        %v2795 = vsel %vm826, %v2791, 0
        %v2798 = vsel %vm826, %v2792, 0
        %2800 = vmatprep.subr.bf16.mxu0 0
        %2801 = vmatpush1.bf16.xpose.msra.mxu0 %v2798
        %2802 = vmatprep.subr.bf16.mxu0 0
        %2803 = vmatpush1.bf16.xpose.msra.mxu0 0
        %2804 = vmatprep.subr.bf16.mxu0 0
        %2805 = vmatpush1.bf16.xpose.msra.mxu0 0
        %2806 = vmatprep.subr.bf16.mxu0 0
        %2807 = vmatpush1.bf16.xpose.msra.mxu0 0
        %2808 = vmatprep.subr.bf16.mxu0 0
        %2809 = vmatpush1.bf16.xpose.msra.mxu0 0
        %2810 = vmatprep.subr.bf16.mxu0 0
        %2811 = vmatpush1.bf16.xpose.msra.mxu0 0
        %2812 = vmatprep.subr.bf16.mxu0 0
        %2813 = vmatpush1.bf16.xpose.msra.mxu0 0
        %2814 = vmatprep.subr.bf16.mxu0 0
        %2815 = vmatpush1.bf16.xpose.msra.mxu0 0
        %2816 = vmatprep.subr.bf16.mxu0 0
        %2817 = vmatpush1.bf16.xpose.msra.mxu0 0
        %2818 = vmatprep.subr.bf16.mxu0 0
        %2819 = vmatpush1.bf16.xpose.msra.mxu0 0
        %2820 = vmatprep.subr.bf16.mxu0 0
        %2821 = vmatpush1.bf16.xpose.msra.mxu0 0
        %2822 = vmatprep.subr.bf16.mxu0 0
        %2823 = vmatpush1.bf16.xpose.msra.mxu0 0
        %2824 = vmatprep.subr.bf16.mxu0 0
        %2825 = vmatpush1.bf16.xpose.msra.mxu0 0
        %2826 = vmatprep.subr.bf16.mxu0 0
        %2827 = vmatpush1.bf16.xpose.msra.mxu0 0
        %2828 = vmatprep.subr.bf16.mxu0 0
        %2829 = vmatpush1.bf16.xpose.msra.mxu0 0
        %2830 = vmatprep.subr.bf16.mxu0 0
        %2831 = vmatpush1.bf16.xpose.msra.mxu0 0
        %2832 = vmatprep.mubr.bf16.mxu0 0
        %2833 = vmatmul.mubr.bf16.gmra.mrb[0].mxu0 %v2795
        %v2834 = vpop.f32.mrb[0].mxu0
        %v2835 = vadd.f32 %v540, %v2834
        %v2836 = vpop.f32.mrb[0].mxu0
        %v2837 = vpop.f32.mrb[0].mxu0
        %v2838 = vadd.f32 %v540, %v2837
        %v2839 = vpop.f32.mrb[0].mxu0
        %2840 = vdwg.mxu0
        %v2841 = vsel %vm874, %v2835, -inf
        %2842 = vmax.xlane.f32.xlu0 %v2841
        %v2843 = vpop.xlane.xlu0 %2842
        %v2844 = vsel %vm874, %v2838, -inf
        %2845 = vmax.xlane.f32.xlu0 %v2844
        %v2846 = vpop.xlane.xlu0 %2845
        %v2847 = vsub.f32 %v2835, %v2843
        %v2848 = vsub.f32 %v2838, %v2846
        %v2849 = vmul.f32 %v2847, 1.442695
        %v2850 = vpow.pop %v2849
        %v2851 = vmul.f32 %v2848, 1.442695
        %v2852 = vpow.pop %v2851
        %v2853 = vsel %vm874, %v2850, 0.0
        %2854 = vadd.xlane.f32.xlu0 %v2853
        %v2855 = vpop.xlane.xlu0 %2854
        %v2856 = vsel %vm874, %v2852, 0.0
        %2857 = vadd.xlane.f32.xlu0 %v2856
        %v2858 = vpop.xlane.xlu0 %2857
        %v2859 = vrcp.pop %v2855
        %v2860 = vmul.f32 1.0, %v2859
        %v2861 = vrcp.pop %v2858
        %v2862 = vmul.f32 1.0, %v2861
        %v2863 = vmul.f32 %v2850, %v2860
        %v2864 = vmul.f32 %v2852, %v2862
        %v2865 = vpack.c.bf16 %v2864, %v2863
        %v2867 = vsel %vm874, %v2865, 0
        %2869 = vmatprep.subr.bf16.mxu0 0
        %2870 = vmatpush1.bf16.msra.mxu0 %v2793
        %2871 = vmatprep.subr.bf16.mxu0 0
        %2872 = vmatpush1.bf16.msra.mxu0 0
        %2873 = vmatprep.subr.bf16.mxu0 0
        %2874 = vmatpush1.bf16.msra.mxu0 0
        %2875 = vmatprep.subr.bf16.mxu0 0
        %2876 = vmatpush1.bf16.msra.mxu0 0
        %2877 = vmatprep.subr.bf16.mxu0 0
        %2878 = vmatpush1.bf16.msra.mxu0 0
        %2879 = vmatprep.subr.bf16.mxu0 0
        %2880 = vmatpush1.bf16.msra.mxu0 0
        %2881 = vmatprep.subr.bf16.mxu0 0
        %2882 = vmatpush1.bf16.msra.mxu0 0
        %2883 = vmatprep.subr.bf16.mxu0 0
        %2884 = vmatpush1.bf16.msra.mxu0 0
        %2885 = vmatprep.subr.bf16.mxu0 0
        %2886 = vmatpush1.bf16.msra.mxu0 0
        %2887 = vmatprep.subr.bf16.mxu0 0
        %2888 = vmatpush1.bf16.msra.mxu0 0
        %2889 = vmatprep.subr.bf16.mxu0 0
        %2890 = vmatpush1.bf16.msra.mxu0 0
        %2891 = vmatprep.subr.bf16.mxu0 0
        %2892 = vmatpush1.bf16.msra.mxu0 0
        %2893 = vmatprep.subr.bf16.mxu0 0
        %2894 = vmatpush1.bf16.msra.mxu0 0
        %2895 = vmatprep.subr.bf16.mxu0 0
        %2896 = vmatpush1.bf16.msra.mxu0 0
        %2897 = vmatprep.subr.bf16.mxu0 0
        %2898 = vmatpush1.bf16.msra.mxu0 0
        %2899 = vmatprep.subr.bf16.mxu0 0
        %2900 = vmatpush1.bf16.msra.mxu0 0
        %2901 = vmatprep.mubr.bf16.mxu0 0
        %2902 = vmatmul.mubr.bf16.gmra.mrb[0].mxu0 %v2867
        %v2903 = vpop.f32.mrb[0].mxu0
        %v2904 = vadd.f32 0.0, %v2903
        %v2905 = vpop.f32.mrb[0].mxu0
        %v2906 = vpop.f32.mrb[0].mxu0
        %v2907 = vadd.f32 0.0, %v2906
        %v2908 = vpop.f32.mrb[0].mxu0
        %2909 = vdwg.mxu0
        %v2910 = vpack.c.bf16 %v2907, %v2904
        %2912 = vrot.lane.b32.xlu0 %v2791, 96
        %v2913 = vpop.permute.xlu0 %2912
        %2915 = vrot.lane.b32.xlu0 %v2792, 96
        %v2916 = vpop.permute.xlu0 %2915
        %v2918 = vsel %vm826, %v2913, 0
        %v2921 = vsel %vm826, %v2916, 0
        %2923 = vmatprep.subr.bf16.mxu0 0
        %2924 = vmatpush1.bf16.xpose.msra.mxu0 %v2921
        %2925 = vmatprep.subr.bf16.mxu0 0
        %2926 = vmatpush1.bf16.xpose.msra.mxu0 0
        %2927 = vmatprep.subr.bf16.mxu0 0
        %2928 = vmatpush1.bf16.xpose.msra.mxu0 0
        %2929 = vmatprep.subr.bf16.mxu0 0
        %2930 = vmatpush1.bf16.xpose.msra.mxu0 0
        %2931 = vmatprep.subr.bf16.mxu0 0
        %2932 = vmatpush1.bf16.xpose.msra.mxu0 0
        %2933 = vmatprep.subr.bf16.mxu0 0
        %2934 = vmatpush1.bf16.xpose.msra.mxu0 0
        %2935 = vmatprep.subr.bf16.mxu0 0
        %2936 = vmatpush1.bf16.xpose.msra.mxu0 0
        %2937 = vmatprep.subr.bf16.mxu0 0
        %2938 = vmatpush1.bf16.xpose.msra.mxu0 0
        %2939 = vmatprep.subr.bf16.mxu0 0
        %2940 = vmatpush1.bf16.xpose.msra.mxu0 0
        %2941 = vmatprep.subr.bf16.mxu0 0
        %2942 = vmatpush1.bf16.xpose.msra.mxu0 0
        %2943 = vmatprep.subr.bf16.mxu0 0
        %2944 = vmatpush1.bf16.xpose.msra.mxu0 0
        %2945 = vmatprep.subr.bf16.mxu0 0
        %2946 = vmatpush1.bf16.xpose.msra.mxu0 0
        %2947 = vmatprep.subr.bf16.mxu0 0
        %2948 = vmatpush1.bf16.xpose.msra.mxu0 0
        %2949 = vmatprep.subr.bf16.mxu0 0
        %2950 = vmatpush1.bf16.xpose.msra.mxu0 0
        %2951 = vmatprep.subr.bf16.mxu0 0
        %2952 = vmatpush1.bf16.xpose.msra.mxu0 0
        %2953 = vmatprep.subr.bf16.mxu0 0
        %2954 = vmatpush1.bf16.xpose.msra.mxu0 0
        %2955 = vmatprep.mubr.bf16.mxu0 0
        %2956 = vmatmul.mubr.bf16.gmra.mrb[0].mxu0 %v2918
        %v2957 = vpop.f32.mrb[0].mxu0
        %v2958 = vadd.f32 %v540, %v2957
        %v2959 = vpop.f32.mrb[0].mxu0
        %v2960 = vpop.f32.mrb[0].mxu0
        %v2961 = vadd.f32 %v540, %v2960
        %v2962 = vpop.f32.mrb[0].mxu0
        %2963 = vdwg.mxu0
        %v2964 = vsel %vm874, %v2958, -inf
        %2965 = vmax.xlane.f32.xlu0 %v2964
        %v2966 = vpop.xlane.xlu0 %2965
        %v2967 = vsel %vm874, %v2961, -inf
        %2968 = vmax.xlane.f32.xlu0 %v2967
        %v2969 = vpop.xlane.xlu0 %2968
        %v2970 = vsub.f32 %v2958, %v2966
        %v2971 = vsub.f32 %v2961, %v2969
        %v2972 = vmul.f32 %v2970, 1.442695
        %v2973 = vpow.pop %v2972
        %v2974 = vmul.f32 %v2971, 1.442695
        %v2975 = vpow.pop %v2974
        %v2976 = vsel %vm874, %v2973, 0.0
        %2977 = vadd.xlane.f32.xlu0 %v2976
        %v2978 = vpop.xlane.xlu0 %2977
        %v2979 = vsel %vm874, %v2975, 0.0
        %2980 = vadd.xlane.f32.xlu0 %v2979
        %v2981 = vpop.xlane.xlu0 %2980
        %v2982 = vrcp.pop %v2978
        %v2983 = vmul.f32 1.0, %v2982
        %v2984 = vrcp.pop %v2981
        %v2985 = vmul.f32 1.0, %v2984
        %v2986 = vmul.f32 %v2973, %v2983
        %v2987 = vmul.f32 %v2975, %v2985
        %v2988 = vpack.c.bf16 %v2987, %v2986
        %2990 = vrot.lane.b32.xlu0 %v2793, 96
        %v2991 = vpop.permute.xlu0 %2990
        %v2994 = vsel %vm874, %v2988, 0
        %2996 = vmatprep.subr.bf16.mxu0 0
        %2997 = vmatpush1.bf16.msra.mxu0 %v2991
        %2998 = vmatprep.subr.bf16.mxu0 0
        %2999 = vmatpush1.bf16.msra.mxu0 0
        %3000 = vmatprep.subr.bf16.mxu0 0
        %3001 = vmatpush1.bf16.msra.mxu0 0
        %3002 = vmatprep.subr.bf16.mxu0 0
        %3003 = vmatpush1.bf16.msra.mxu0 0
        %3004 = vmatprep.subr.bf16.mxu0 0
        %3005 = vmatpush1.bf16.msra.mxu0 0
        %3006 = vmatprep.subr.bf16.mxu0 0
        %3007 = vmatpush1.bf16.msra.mxu0 0
        %3008 = vmatprep.subr.bf16.mxu0 0
        %3009 = vmatpush1.bf16.msra.mxu0 0
        %3010 = vmatprep.subr.bf16.mxu0 0
        %3011 = vmatpush1.bf16.msra.mxu0 0
        %3012 = vmatprep.subr.bf16.mxu0 0
        %3013 = vmatpush1.bf16.msra.mxu0 0
        %3014 = vmatprep.subr.bf16.mxu0 0
        %3015 = vmatpush1.bf16.msra.mxu0 0
        %3016 = vmatprep.subr.bf16.mxu0 0
        %3017 = vmatpush1.bf16.msra.mxu0 0
        %3018 = vmatprep.subr.bf16.mxu0 0
        %3019 = vmatpush1.bf16.msra.mxu0 0
        %3020 = vmatprep.subr.bf16.mxu0 0
        %3021 = vmatpush1.bf16.msra.mxu0 0
        %3022 = vmatprep.subr.bf16.mxu0 0
        %3023 = vmatpush1.bf16.msra.mxu0 0
        %3024 = vmatprep.subr.bf16.mxu0 0
        %3025 = vmatpush1.bf16.msra.mxu0 0
        %3026 = vmatprep.subr.bf16.mxu0 0
        %3027 = vmatpush1.bf16.msra.mxu0 0
        %3028 = vmatprep.mubr.bf16.mxu0 0
        %3029 = vmatmul.mubr.bf16.gmra.mrb[0].mxu0 %v2994
        %v3030 = vpop.f32.mrb[0].mxu0
        %v3031 = vadd.f32 0.0, %v3030
        %v3032 = vpop.f32.mrb[0].mxu0
        %v3033 = vpop.f32.mrb[0].mxu0
        %v3034 = vadd.f32 0.0, %v3033
        %v3035 = vpop.f32.mrb[0].mxu0
        %3036 = vdwg.mxu0
        %v3037 = vpack.c.bf16 %v3034, %v3031
        %v3042 = vunpack.c.l.b16 %v2777
        %v3043 = vunpack.c.l.b16 %v2778
        %v3044 = vunpack.c.l.b16 %v2779
        %v3045 = vunpack.c.l.b16 %v2780
        %v3046 = vpack.c.b16 %v3043, %v3042
        %v3047 = vpack.c.b16 %v3045, %v3044
        %v3051 = vsel %vm826, %v3037, 0
        %3053 = vmatprep.subr.bf16.mxu0 0
        %3054 = vmatpush1.bf16.msra.mxu0 %v3046
        %3055 = vmatprep.subr.bf16.mxu0 0
        %3056 = vmatpush1.bf16.msra.mxu0 %v3047
        %3057 = vmatprep.subr.bf16.mxu0 0
        %3058 = vmatpush1.bf16.msra.mxu0 0
        %3059 = vmatprep.subr.bf16.mxu0 0
        %3060 = vmatpush1.bf16.msra.mxu0 0
        %3061 = vmatprep.subr.bf16.mxu0 0
        %3062 = vmatpush1.bf16.msra.mxu0 0
        %3063 = vmatprep.subr.bf16.mxu0 0
        %3064 = vmatpush1.bf16.msra.mxu0 0
        %3065 = vmatprep.subr.bf16.mxu0 0
        %3066 = vmatpush1.bf16.msra.mxu0 0
        %3067 = vmatprep.subr.bf16.mxu0 0
        %3068 = vmatpush1.bf16.msra.mxu0 0
        %3069 = vmatprep.subr.bf16.mxu0 0
        %3070 = vmatpush1.bf16.msra.mxu0 0
        %3071 = vmatprep.subr.bf16.mxu0 0
        %3072 = vmatpush1.bf16.msra.mxu0 0
        %3073 = vmatprep.subr.bf16.mxu0 0
        %3074 = vmatpush1.bf16.msra.mxu0 0
        %3075 = vmatprep.subr.bf16.mxu0 0
        %3076 = vmatpush1.bf16.msra.mxu0 0
        %3077 = vmatprep.subr.bf16.mxu0 0
        %3078 = vmatpush1.bf16.msra.mxu0 0
        %3079 = vmatprep.subr.bf16.mxu0 0
        %3080 = vmatpush1.bf16.msra.mxu0 0
        %3081 = vmatprep.subr.bf16.mxu0 0
        %3082 = vmatpush1.bf16.msra.mxu0 0
        %3083 = vmatprep.subr.bf16.mxu0 0
        %3084 = vmatpush1.bf16.msra.mxu0 0
        %3085 = vmatprep.mubr.bf16.mxu0 0
        %3086 = vmatmul.mubr.bf16.gmra.mrb[0].mxu0 %v3051
        %v3087 = vpop.f32.mrb[0].mxu0
        %v3088 = vadd.f32 0.0, %v3087
        %v3089 = vpop.f32.mrb[0].mxu0
        %v3090 = vpop.f32.mrb[0].mxu0
        %v3091 = vadd.f32 0.0, %v3090
        %v3092 = vpop.f32.mrb[0].mxu0
        %3093 = vdwg.mxu0
        %v3098 = vunpack.c.l.b16 %v2773
        %v3099 = vunpack.c.l.b16 %v2774
        %v3100 = vunpack.c.l.b16 %v2775
        %v3101 = vunpack.c.l.b16 %v2776
        %v3102 = vpack.c.b16 %v3099, %v3098
        %v3103 = vpack.c.b16 %v3101, %v3100
        %v3107 = vsel %vm826, %v2910, 0
        %3109 = vmatprep.subr.bf16.mxu0 0
        %3110 = vmatpush1.bf16.msra.mxu0 %v3102
        %3111 = vmatprep.subr.bf16.mxu0 0
        %3112 = vmatpush1.bf16.msra.mxu0 %v3103
        %3113 = vmatprep.subr.bf16.mxu0 0
        %3114 = vmatpush1.bf16.msra.mxu0 0
        %3115 = vmatprep.subr.bf16.mxu0 0
        %3116 = vmatpush1.bf16.msra.mxu0 0
        %3117 = vmatprep.subr.bf16.mxu0 0
        %3118 = vmatpush1.bf16.msra.mxu0 0
        %3119 = vmatprep.subr.bf16.mxu0 0
        %3120 = vmatpush1.bf16.msra.mxu0 0
        %3121 = vmatprep.subr.bf16.mxu0 0
        %3122 = vmatpush1.bf16.msra.mxu0 0
        %3123 = vmatprep.subr.bf16.mxu0 0
        %3124 = vmatpush1.bf16.msra.mxu0 0
        %3125 = vmatprep.subr.bf16.mxu0 0
        %3126 = vmatpush1.bf16.msra.mxu0 0
        %3127 = vmatprep.subr.bf16.mxu0 0
        %3128 = vmatpush1.bf16.msra.mxu0 0
        %3129 = vmatprep.subr.bf16.mxu0 0
        %3130 = vmatpush1.bf16.msra.mxu0 0
        %3131 = vmatprep.subr.bf16.mxu0 0
        %3132 = vmatpush1.bf16.msra.mxu0 0
        %3133 = vmatprep.subr.bf16.mxu0 0
        %3134 = vmatpush1.bf16.msra.mxu0 0
        %3135 = vmatprep.subr.bf16.mxu0 0
        %3136 = vmatpush1.bf16.msra.mxu0 0
        %3137 = vmatprep.subr.bf16.mxu0 0
        %3138 = vmatpush1.bf16.msra.mxu0 0
        %3139 = vmatprep.subr.bf16.mxu0 0
        %3140 = vmatpush1.bf16.msra.mxu0 0
        %3141 = vmatprep.mubr.bf16.mxu0 0
        %3142 = vmatmul.mubr.bf16.gmra.mrb[0].mxu0 %v3107
        %v3143 = vpop.f32.mrb[0].mxu0
        %v3144 = vadd.f32 %v3088, %v3143
        %v3145 = vpop.f32.mrb[0].mxu0
        %v3146 = vpop.f32.mrb[0].mxu0
        %v3147 = vadd.f32 %v3091, %v3146
        %v3148 = vpop.f32.mrb[0].mxu0
        %3149 = vdwg.mxu0
        %3150 = vrot.lane.b32.xlu0 %v2791, 64
        %v3151 = vpop.permute.xlu0 %3150
        %3152 = vrot.lane.b32.xlu0 %v2792, 64
        %v3153 = vpop.permute.xlu0 %3152
        %v3155 = vsel %vm826, %v3151, 0
        %v3158 = vsel %vm826, %v3153, 0
        %3160 = vmatprep.subr.bf16.mxu0 0
        %3161 = vmatpush1.bf16.xpose.msra.mxu0 %v3158
        %3162 = vmatprep.subr.bf16.mxu0 0
        %3163 = vmatpush1.bf16.xpose.msra.mxu0 0
        %3164 = vmatprep.subr.bf16.mxu0 0
        %3165 = vmatpush1.bf16.xpose.msra.mxu0 0
        %3166 = vmatprep.subr.bf16.mxu0 0
        %3167 = vmatpush1.bf16.xpose.msra.mxu0 0
        %3168 = vmatprep.subr.bf16.mxu0 0
        %3169 = vmatpush1.bf16.xpose.msra.mxu0 0
        %3170 = vmatprep.subr.bf16.mxu0 0
        %3171 = vmatpush1.bf16.xpose.msra.mxu0 0
        %3172 = vmatprep.subr.bf16.mxu0 0
        %3173 = vmatpush1.bf16.xpose.msra.mxu0 0
        %3174 = vmatprep.subr.bf16.mxu0 0
        %3175 = vmatpush1.bf16.xpose.msra.mxu0 0
        %3176 = vmatprep.subr.bf16.mxu0 0
        %3177 = vmatpush1.bf16.xpose.msra.mxu0 0
        %3178 = vmatprep.subr.bf16.mxu0 0
        %3179 = vmatpush1.bf16.xpose.msra.mxu0 0
        %3180 = vmatprep.subr.bf16.mxu0 0
        %3181 = vmatpush1.bf16.xpose.msra.mxu0 0
        %3182 = vmatprep.subr.bf16.mxu0 0
        %3183 = vmatpush1.bf16.xpose.msra.mxu0 0
        %3184 = vmatprep.subr.bf16.mxu0 0
        %3185 = vmatpush1.bf16.xpose.msra.mxu0 0
        %3186 = vmatprep.subr.bf16.mxu0 0
        %3187 = vmatpush1.bf16.xpose.msra.mxu0 0
        %3188 = vmatprep.subr.bf16.mxu0 0
        %3189 = vmatpush1.bf16.xpose.msra.mxu0 0
        %3190 = vmatprep.subr.bf16.mxu0 0
        %3191 = vmatpush1.bf16.xpose.msra.mxu0 0
        %3192 = vmatprep.mubr.bf16.mxu0 0
        %3193 = vmatmul.mubr.bf16.gmra.mrb[0].mxu0 %v3155
        %v3194 = vpop.f32.mrb[0].mxu0
        %v3195 = vadd.f32 %v540, %v3194
        %v3196 = vpop.f32.mrb[0].mxu0
        %v3197 = vpop.f32.mrb[0].mxu0
        %v3198 = vadd.f32 %v540, %v3197
        %v3199 = vpop.f32.mrb[0].mxu0
        %3200 = vdwg.mxu0
        %v3201 = vsel %vm874, %v3195, -inf
        %3202 = vmax.xlane.f32.xlu0 %v3201
        %v3203 = vpop.xlane.xlu0 %3202
        %v3204 = vsel %vm874, %v3198, -inf
        %3205 = vmax.xlane.f32.xlu0 %v3204
        %v3206 = vpop.xlane.xlu0 %3205
        %v3207 = vsub.f32 %v3195, %v3203
        %v3208 = vsub.f32 %v3198, %v3206
        %v3209 = vmul.f32 %v3207, 1.442695
        %v3210 = vpow.pop %v3209
        %v3211 = vmul.f32 %v3208, 1.442695
        %v3212 = vpow.pop %v3211
        %v3213 = vsel %vm874, %v3210, 0.0
        %3214 = vadd.xlane.f32.xlu0 %v3213
        %v3215 = vpop.xlane.xlu0 %3214
        %v3216 = vsel %vm874, %v3212, 0.0
        %3217 = vadd.xlane.f32.xlu0 %v3216
        %v3218 = vpop.xlane.xlu0 %3217
        %v3219 = vrcp.pop %v3215
        %v3220 = vmul.f32 1.0, %v3219
        %v3221 = vrcp.pop %v3218
        %v3222 = vmul.f32 1.0, %v3221
        %v3223 = vmul.f32 %v3210, %v3220
        %v3224 = vmul.f32 %v3212, %v3222
        %v3225 = vpack.c.bf16 %v3224, %v3223
        %3226 = vrot.lane.b32.xlu0 %v2793, 64
        %v3227 = vpop.permute.xlu0 %3226
        %v3230 = vsel %vm874, %v3225, 0
        %3232 = vmatprep.subr.bf16.mxu0 0
        %3233 = vmatpush1.bf16.msra.mxu0 %v3227
        %3234 = vmatprep.subr.bf16.mxu0 0
        %3235 = vmatpush1.bf16.msra.mxu0 0
        %3236 = vmatprep.subr.bf16.mxu0 0
        %3237 = vmatpush1.bf16.msra.mxu0 0
        %3238 = vmatprep.subr.bf16.mxu0 0
        %3239 = vmatpush1.bf16.msra.mxu0 0
        %3240 = vmatprep.subr.bf16.mxu0 0
        %3241 = vmatpush1.bf16.msra.mxu0 0
        %3242 = vmatprep.subr.bf16.mxu0 0
        %3243 = vmatpush1.bf16.msra.mxu0 0
        %3244 = vmatprep.subr.bf16.mxu0 0
        %3245 = vmatpush1.bf16.msra.mxu0 0
        %3246 = vmatprep.subr.bf16.mxu0 0
        %3247 = vmatpush1.bf16.msra.mxu0 0
        %3248 = vmatprep.subr.bf16.mxu0 0
        %3249 = vmatpush1.bf16.msra.mxu0 0
        %3250 = vmatprep.subr.bf16.mxu0 0
        %3251 = vmatpush1.bf16.msra.mxu0 0
        %3252 = vmatprep.subr.bf16.mxu0 0
        %3253 = vmatpush1.bf16.msra.mxu0 0
        %3254 = vmatprep.subr.bf16.mxu0 0
        %3255 = vmatpush1.bf16.msra.mxu0 0
        %3256 = vmatprep.subr.bf16.mxu0 0
        %3257 = vmatpush1.bf16.msra.mxu0 0
        %3258 = vmatprep.subr.bf16.mxu0 0
        %3259 = vmatpush1.bf16.msra.mxu0 0
        %3260 = vmatprep.subr.bf16.mxu0 0
        %3261 = vmatpush1.bf16.msra.mxu0 0
        %3262 = vmatprep.subr.bf16.mxu0 0
        %3263 = vmatpush1.bf16.msra.mxu0 0
        %3264 = vmatprep.mubr.bf16.mxu0 0
        %3265 = vmatmul.mubr.bf16.gmra.mrb[0].mxu0 %v3230
        %v3266 = vpop.f32.mrb[0].mxu0
        %v3267 = vadd.f32 0.0, %v3266
        %v3268 = vpop.f32.mrb[0].mxu0
        %v3269 = vpop.f32.mrb[0].mxu0
        %v3270 = vadd.f32 0.0, %v3269
        %v3271 = vpop.f32.mrb[0].mxu0
        %3272 = vdwg.mxu0
        %v3273 = vpack.c.bf16 %v3270, %v3267
        %v3278 = vunpack.c.l.b16 %v2781
        %v3279 = vunpack.c.l.b16 %v2782
        %v3280 = vunpack.c.l.b16 %v2783
        %v3281 = vunpack.c.l.b16 %v2784
        %v3282 = vpack.c.b16 %v3279, %v3278
        %v3283 = vpack.c.b16 %v3281, %v3280
        %v3287 = vsel %vm826, %v3273, 0
        %3289 = vmatprep.subr.bf16.mxu0 0
        %3290 = vmatpush1.bf16.msra.mxu0 %v3282
        %3291 = vmatprep.subr.bf16.mxu0 0
        %3292 = vmatpush1.bf16.msra.mxu0 %v3283
        %3293 = vmatprep.subr.bf16.mxu0 0
        %3294 = vmatpush1.bf16.msra.mxu0 0
        %3295 = vmatprep.subr.bf16.mxu0 0
        %3296 = vmatpush1.bf16.msra.mxu0 0
        %3297 = vmatprep.subr.bf16.mxu0 0
        %3298 = vmatpush1.bf16.msra.mxu0 0
        %3299 = vmatprep.subr.bf16.mxu0 0
        %3300 = vmatpush1.bf16.msra.mxu0 0
        %3301 = vmatprep.subr.bf16.mxu0 0
        %3302 = vmatpush1.bf16.msra.mxu0 0
        %3303 = vmatprep.subr.bf16.mxu0 0
        %3304 = vmatpush1.bf16.msra.mxu0 0
        %3305 = vmatprep.subr.bf16.mxu0 0
        %3306 = vmatpush1.bf16.msra.mxu0 0
        %3307 = vmatprep.subr.bf16.mxu0 0
        %3308 = vmatpush1.bf16.msra.mxu0 0
        %3309 = vmatprep.subr.bf16.mxu0 0
        %3310 = vmatpush1.bf16.msra.mxu0 0
        %3311 = vmatprep.subr.bf16.mxu0 0
        %3312 = vmatpush1.bf16.msra.mxu0 0
        %3313 = vmatprep.subr.bf16.mxu0 0
        %3314 = vmatpush1.bf16.msra.mxu0 0
        %3315 = vmatprep.subr.bf16.mxu0 0
        %3316 = vmatpush1.bf16.msra.mxu0 0
        %3317 = vmatprep.subr.bf16.mxu0 0
        %3318 = vmatpush1.bf16.msra.mxu0 0
        %3319 = vmatprep.subr.bf16.mxu0 0
        %3320 = vmatpush1.bf16.msra.mxu0 0
        %3321 = vmatprep.mubr.bf16.mxu0 0
        %3322 = vmatmul.mubr.bf16.gmra.mrb[0].mxu0 %v3287
        %v3323 = vpop.f32.mrb[0].mxu0
        %v3324 = vadd.f32 0.0, %v3323
        %v3325 = vpop.f32.mrb[0].mxu0
        %v3326 = vpop.f32.mrb[0].mxu0
        %v3327 = vadd.f32 0.0, %v3326
        %v3328 = vpop.f32.mrb[0].mxu0
        %3329 = vdwg.mxu0
        %v3330 = vadd.f32 %v3144, %v3324
        %v3331 = vadd.f32 %v3147, %v3327
        %3332 = vrot.lane.b32.xlu0 %v2791, 32
        %v3333 = vpop.permute.xlu0 %3332
        %3334 = vrot.lane.b32.xlu0 %v2792, 32
        %v3335 = vpop.permute.xlu0 %3334
        %v3337 = vsel %vm826, %v3333, 0
        %v3340 = vsel %vm826, %v3335, 0
        %3342 = vmatprep.subr.bf16.mxu0 0
        %3343 = vmatpush1.bf16.xpose.msra.mxu0 %v3340
        %3344 = vmatprep.subr.bf16.mxu0 0
        %3345 = vmatpush1.bf16.xpose.msra.mxu0 0
        %3346 = vmatprep.subr.bf16.mxu0 0
        %3347 = vmatpush1.bf16.xpose.msra.mxu0 0
        %3348 = vmatprep.subr.bf16.mxu0 0
        %3349 = vmatpush1.bf16.xpose.msra.mxu0 0
        %3350 = vmatprep.subr.bf16.mxu0 0
        %3351 = vmatpush1.bf16.xpose.msra.mxu0 0
        %3352 = vmatprep.subr.bf16.mxu0 0
        %3353 = vmatpush1.bf16.xpose.msra.mxu0 0
        %3354 = vmatprep.subr.bf16.mxu0 0
        %3355 = vmatpush1.bf16.xpose.msra.mxu0 0
        %3356 = vmatprep.subr.bf16.mxu0 0
        %3357 = vmatpush1.bf16.xpose.msra.mxu0 0
        %3358 = vmatprep.subr.bf16.mxu0 0
        %3359 = vmatpush1.bf16.xpose.msra.mxu0 0
        %3360 = vmatprep.subr.bf16.mxu0 0
        %3361 = vmatpush1.bf16.xpose.msra.mxu0 0
        %3362 = vmatprep.subr.bf16.mxu0 0
        %3363 = vmatpush1.bf16.xpose.msra.mxu0 0
        %3364 = vmatprep.subr.bf16.mxu0 0
        %3365 = vmatpush1.bf16.xpose.msra.mxu0 0
        %3366 = vmatprep.subr.bf16.mxu0 0
        %3367 = vmatpush1.bf16.xpose.msra.mxu0 0
        %3368 = vmatprep.subr.bf16.mxu0 0
        %3369 = vmatpush1.bf16.xpose.msra.mxu0 0
        %3370 = vmatprep.subr.bf16.mxu0 0
        %3371 = vmatpush1.bf16.xpose.msra.mxu0 0
        %3372 = vmatprep.subr.bf16.mxu0 0
        %3373 = vmatpush1.bf16.xpose.msra.mxu0 0
        %3374 = vmatprep.mubr.bf16.mxu0 0
        %3375 = vmatmul.mubr.bf16.gmra.mrb[0].mxu0 %v3337
        %v3376 = vpop.f32.mrb[0].mxu0
        %v3377 = vadd.f32 %v540, %v3376
        %v3378 = vpop.f32.mrb[0].mxu0
        %v3379 = vpop.f32.mrb[0].mxu0
        %v3380 = vadd.f32 %v540, %v3379
        %v3381 = vpop.f32.mrb[0].mxu0
        %3382 = vdwg.mxu0
        %v3383 = vsel %vm874, %v3377, -inf
        %3384 = vmax.xlane.f32.xlu0 %v3383
        %v3385 = vpop.xlane.xlu0 %3384
        %v3386 = vsel %vm874, %v3380, -inf
        %3387 = vmax.xlane.f32.xlu0 %v3386
        %v3388 = vpop.xlane.xlu0 %3387
        %v3389 = vsub.f32 %v3377, %v3385
        %v3390 = vsub.f32 %v3380, %v3388
        %v3391 = vmul.f32 %v3389, 1.442695
        %v3392 = vpow.pop %v3391
        %v3393 = vmul.f32 %v3390, 1.442695
        %v3394 = vpow.pop %v3393
        %v3395 = vsel %vm874, %v3392, 0.0
        %3396 = vadd.xlane.f32.xlu0 %v3395
        %v3397 = vpop.xlane.xlu0 %3396
        %v3398 = vsel %vm874, %v3394, 0.0
        %3399 = vadd.xlane.f32.xlu0 %v3398
        %v3400 = vpop.xlane.xlu0 %3399
        %v3401 = vrcp.pop %v3397
        %v3402 = vmul.f32 1.0, %v3401
        %v3403 = vrcp.pop %v3400
        %v3404 = vmul.f32 1.0, %v3403
        %v3405 = vmul.f32 %v3392, %v3402
        %v3406 = vmul.f32 %v3394, %v3404
        %v3407 = vpack.c.bf16 %v3406, %v3405
        %3408 = vrot.lane.b32.xlu0 %v2793, 32
        %v3409 = vpop.permute.xlu0 %3408
        %v3412 = vsel %vm874, %v3407, 0
        %3414 = vmatprep.subr.bf16.mxu0 0
        %3415 = vmatpush1.bf16.msra.mxu0 %v3409
        %3416 = vmatprep.subr.bf16.mxu0 0
        %3417 = vmatpush1.bf16.msra.mxu0 0
        %3418 = vmatprep.subr.bf16.mxu0 0
        %3419 = vmatpush1.bf16.msra.mxu0 0
        %3420 = vmatprep.subr.bf16.mxu0 0
        %3421 = vmatpush1.bf16.msra.mxu0 0
        %3422 = vmatprep.subr.bf16.mxu0 0
        %3423 = vmatpush1.bf16.msra.mxu0 0
        %3424 = vmatprep.subr.bf16.mxu0 0
        %3425 = vmatpush1.bf16.msra.mxu0 0
        %3426 = vmatprep.subr.bf16.mxu0 0
        %3427 = vmatpush1.bf16.msra.mxu0 0
        %3428 = vmatprep.subr.bf16.mxu0 0
        %3429 = vmatpush1.bf16.msra.mxu0 0
        %3430 = vmatprep.subr.bf16.mxu0 0
        %3431 = vmatpush1.bf16.msra.mxu0 0
        %3432 = vmatprep.subr.bf16.mxu0 0
        %3433 = vmatpush1.bf16.msra.mxu0 0
        %3434 = vmatprep.subr.bf16.mxu0 0
        %3435 = vmatpush1.bf16.msra.mxu0 0
        %3436 = vmatprep.subr.bf16.mxu0 0
        %3437 = vmatpush1.bf16.msra.mxu0 0
        %3438 = vmatprep.subr.bf16.mxu0 0
        %3439 = vmatpush1.bf16.msra.mxu0 0
        %3440 = vmatprep.subr.bf16.mxu0 0
        %3441 = vmatpush1.bf16.msra.mxu0 0
        %3442 = vmatprep.subr.bf16.mxu0 0
        %3443 = vmatpush1.bf16.msra.mxu0 0
        %3444 = vmatprep.subr.bf16.mxu0 0
        %3445 = vmatpush1.bf16.msra.mxu0 0
        %3446 = vmatprep.mubr.bf16.mxu0 0
        %3447 = vmatmul.mubr.bf16.gmra.mrb[0].mxu0 %v3412
        %v3448 = vpop.f32.mrb[0].mxu0
        %v3449 = vadd.f32 0.0, %v3448
        %v3450 = vpop.f32.mrb[0].mxu0
        %v3451 = vpop.f32.mrb[0].mxu0
        %v3452 = vadd.f32 0.0, %v3451
        %v3453 = vpop.f32.mrb[0].mxu0
        %3454 = vdwg.mxu0
        %v3455 = vpack.c.bf16 %v3452, %v3449
        %v3460 = vunpack.c.l.b16 %v2785
        %v3461 = vunpack.c.l.b16 %v2786
        %v3462 = vunpack.c.l.b16 %v2787
        %v3463 = vunpack.c.l.b16 %v2788
        %v3464 = vpack.c.b16 %v3461, %v3460
        %v3465 = vpack.c.b16 %v3463, %v3462
        %v3469 = vsel %vm826, %v3455, 0
        %3471 = vmatprep.subr.bf16.mxu0 0
        %3472 = vmatpush1.bf16.msra.mxu0 %v3464
        %3473 = vmatprep.subr.bf16.mxu0 0
        %3474 = vmatpush1.bf16.msra.mxu0 %v3465
        %3475 = vmatprep.subr.bf16.mxu0 0
        %3476 = vmatpush1.bf16.msra.mxu0 0
        %3477 = vmatprep.subr.bf16.mxu0 0
        %3478 = vmatpush1.bf16.msra.mxu0 0
        %3479 = vmatprep.subr.bf16.mxu0 0
        %3480 = vmatpush1.bf16.msra.mxu0 0
        %3481 = vmatprep.subr.bf16.mxu0 0
        %3482 = vmatpush1.bf16.msra.mxu0 0
        %3483 = vmatprep.subr.bf16.mxu0 0
        %3484 = vmatpush1.bf16.msra.mxu0 0
        %3485 = vmatprep.subr.bf16.mxu0 0
        %3486 = vmatpush1.bf16.msra.mxu0 0
        %3487 = vmatprep.subr.bf16.mxu0 0
        %3488 = vmatpush1.bf16.msra.mxu0 0
        %3489 = vmatprep.subr.bf16.mxu0 0
        %3490 = vmatpush1.bf16.msra.mxu0 0
        %3491 = vmatprep.subr.bf16.mxu0 0
        %3492 = vmatpush1.bf16.msra.mxu0 0
        %3493 = vmatprep.subr.bf16.mxu0 0
        %3494 = vmatpush1.bf16.msra.mxu0 0
        %3495 = vmatprep.subr.bf16.mxu0 0
        %3496 = vmatpush1.bf16.msra.mxu0 0
        %3497 = vmatprep.subr.bf16.mxu0 0
        %3498 = vmatpush1.bf16.msra.mxu0 0
        %3499 = vmatprep.subr.bf16.mxu0 0
        %3500 = vmatpush1.bf16.msra.mxu0 0
        %3501 = vmatprep.subr.bf16.mxu0 0
        %3502 = vmatpush1.bf16.msra.mxu0 0
        %3503 = vmatprep.mubr.bf16.mxu0 0
        %3504 = vmatmul.mubr.bf16.gmra.mrb[0].mxu0 %v3469
        %v3505 = vpop.f32.mrb[0].mxu0
        %v3506 = vadd.f32 0.0, %v3505
        %v3507 = vpop.f32.mrb[0].mxu0
        %v3508 = vpop.f32.mrb[0].mxu0
        %v3509 = vadd.f32 0.0, %v3508
        %v3510 = vpop.f32.mrb[0].mxu0
        %3511 = vdwg.mxu0
        %v3512 = vadd.f32 %v3330, %v3506
        %v3513 = vadd.f32 %v3331, %v3509
        %s3514 = scalar_lea.vmem %s4, 1
        %v3515 = vld [vmem:[%s3514] sm:$0x1]
        %v3517 = vlaneseq
        %v3518 = vshrl.u32 %v3517, 7
        %v3519 = vsub.s32 0, %v3518
        %v3520 = vrot.slane %v3515, %v3519
        %v3522 = vadd.f32 %v3512, %v3520
        %v3523 = vadd.f32 %v3513, %v3520
        %v3524 = vadd.f32 %v2506, %v3522
        %v3525 = vadd.f32 %v2507, %v3523
        %s3526 = scalar_lea.vmem %s5, 1
        %v3527 = vld [vmem:[%s3526] sm:$0x1]
        %s3528 = scalar_lea.vmem %s6, 1
        %v3529 = vld [vmem:[%s3528] sm:$0x1]
        %3530 = vadd.xlane.f32.xlu0 %v3524
        %v3531 = vpop.xlane.xlu0 %3530
        %3532 = vadd.xlane.f32.xlu0 %v3525
        %v3533 = vpop.xlane.xlu0 %3532
        %v3534 = vmul.f32 %v3531, %v1565
        %v3535 = vmul.f32 %v3533, %v1565
        %v3536 = vsub.f32 %v3524, %v3534
        %v3537 = vsub.f32 %v3525, %v3535
        %v3538 = vmul.f32 %v3536, %v3536
        %v3539 = vmul.f32 %v3537, %v3537
        %3540 = vadd.xlane.f32.xlu0 %v3538
        %v3541 = vpop.xlane.xlu0 %3540
        %3542 = vadd.xlane.f32.xlu0 %v3539
        %v3543 = vpop.xlane.xlu0 %3542
        %v3544 = vmul.f32 %v3541, %v1565
        %v3545 = vmul.f32 %v3543, %v1565
        %v3546 = vadd.f32 %v3544, 1e-05
        %v3547 = vadd.f32 %v3545, 1e-05
        %v3548 = vrsqrt.pop %v3546
        %v3549 = vrsqrt.pop %v3547
        %v3550 = vmul.f32 %v3536, %v3548
        %v3551 = vmul.f32 %v3537, %v3549
        %v3553 = vlaneseq
        %v3554 = vshrl.u32 %v3553, 7
        %v3555 = vsub.s32 0, %v3554
        %v3556 = vrot.slane %v3527, %v3555
        %v3558 = vmul.f32 %v3550, %v3556
        %v3559 = vmul.f32 %v3551, %v3556
        %v3561 = vlaneseq
        %v3562 = vshrl.u32 %v3561, 7
        %v3563 = vsub.s32 0, %v3562
        %v3564 = vrot.slane %v3529, %v3563
        %v3566 = vadd.f32 %v3558, %v3564
        %v3567 = vadd.f32 %v3559, %v3564
        %v3568 = vpack.c.bf16 %v3567, %v3566
        %s3569 = scalar_lea.vmem [#allocation6], 256
        %v3570 = vld [vmem:[%s3569] sm:$0xff]
        %v3571 = vld [vmem:[%s3569 + $0x8] sm:$0xff]
        %v3572 = vld [vmem:[%s3569 + $0x10] sm:$0xff]
        %v3573 = vld [vmem:[%s3569 + $0x18] sm:$0xff]
        %v3574 = vld [vmem:[%s3569 + $0x20] sm:$0xff]
        %v3575 = vld [vmem:[%s3569 + $0x28] sm:$0xff]
        %v3576 = vld [vmem:[%s3569 + $0x30] sm:$0xff]
        %v3577 = vld [vmem:[%s3569 + $0x38] sm:$0xff]
        %v3578 = vld [vmem:[%s3569 + $0x40] sm:$0xff]
        %v3579 = vld [vmem:[%s3569 + $0x48] sm:$0xff]
        %v3580 = vld [vmem:[%s3569 + $0x50] sm:$0xff]
        %v3581 = vld [vmem:[%s3569 + $0x58] sm:$0xff]
        %v3582 = vld [vmem:[%s3569 + $0x60] sm:$0xff]
        %v3583 = vld [vmem:[%s3569 + $0x68] sm:$0xff]
        %v3584 = vld [vmem:[%s3569 + $0x70] sm:$0xff]
        %v3585 = vld [vmem:[%s3569 + $0x78] sm:$0xff]
        %v3586 = vld [vmem:[%s3569 + $0x80] sm:$0xff]
        %v3587 = vld [vmem:[%s3569 + $0x88] sm:$0xff]
        %v3588 = vld [vmem:[%s3569 + $0x90] sm:$0xff]
        %v3589 = vld [vmem:[%s3569 + $0x98] sm:$0xff]
        %v3590 = vld [vmem:[%s3569 + $0xa0] sm:$0xff]
        %v3591 = vld [vmem:[%s3569 + $0xa8] sm:$0xff]
        %v3592 = vld [vmem:[%s3569 + $0xb0] sm:$0xff]
        %v3593 = vld [vmem:[%s3569 + $0xb8] sm:$0xff]
        %v3594 = vld [vmem:[%s3569 + $0xc0] sm:$0xff]
        %v3595 = vld [vmem:[%s3569 + $0xc8] sm:$0xff]
        %v3596 = vld [vmem:[%s3569 + $0xd0] sm:$0xff]
        %v3597 = vld [vmem:[%s3569 + $0xd8] sm:$0xff]
        %v3598 = vld [vmem:[%s3569 + $0xe0] sm:$0xff]
        %v3599 = vld [vmem:[%s3569 + $0xe8] sm:$0xff]
        %v3600 = vld [vmem:[%s3569 + $0xf0] sm:$0xff]
        %v3601 = vld [vmem:[%s3569 + $0xf8] sm:$0xff]
        %s3602 = scalar_lea.vmem %s8, 4
        %v3603 = vld [vmem:[%s3602] sm:$0xf]
        %v3605 = vlaneseq
        %v3606 = vshrl.u32 %v3605, 7
        %v3607 = vsub.s32 0, %v3606
        %v3608 = vrot.slane %v3603, %v3607
        %v3609 = vlaneseq
        %v3610 = vshrl.u32 %v3609, 7
        %v3611 = vsub.s32 1, %v3610
        %v3612 = vrot.slane %v3603, %v3611
        %v3613 = vlaneseq
        %v3614 = vshrl.u32 %v3613, 7
        %v3615 = vsub.s32 2, %v3614
        %v3616 = vrot.slane %v3603, %v3615
        %v3617 = vlaneseq
        %v3618 = vshrl.u32 %v3617, 7
        %v3619 = vsub.s32 3, %v3618
        %v3620 = vrot.slane %v3603, %v3619
        %v3657 = vunpack.c.l.b16 %v3570
        %v3658 = vunpack.c.h.b16 %v3570
        %v3659 = vunpack.c.l.b16 %v3571
        %v3660 = vunpack.c.h.b16 %v3571
        %v3661 = vunpack.c.l.b16 %v3572
        %v3662 = vunpack.c.h.b16 %v3572
        %v3663 = vunpack.c.l.b16 %v3573
        %v3664 = vunpack.c.h.b16 %v3573
        %v3665 = vunpack.c.l.b16 %v3574
        %v3666 = vunpack.c.h.b16 %v3574
        %v3667 = vunpack.c.l.b16 %v3575
        %v3668 = vunpack.c.h.b16 %v3575
        %v3669 = vunpack.c.l.b16 %v3576
        %v3670 = vunpack.c.h.b16 %v3576
        %v3671 = vunpack.c.l.b16 %v3577
        %v3672 = vunpack.c.h.b16 %v3577
        %v3673 = vunpack.c.l.b16 %v3578
        %v3674 = vunpack.c.h.b16 %v3578
        %v3675 = vunpack.c.l.b16 %v3579
        %v3676 = vunpack.c.h.b16 %v3579
        %v3677 = vunpack.c.l.b16 %v3580
        %v3678 = vunpack.c.h.b16 %v3580
        %v3679 = vunpack.c.l.b16 %v3581
        %v3680 = vunpack.c.h.b16 %v3581
        %v3681 = vunpack.c.l.b16 %v3582
        %v3682 = vunpack.c.h.b16 %v3582
        %v3683 = vunpack.c.l.b16 %v3583
        %v3684 = vunpack.c.h.b16 %v3583
        %v3685 = vunpack.c.l.b16 %v3584
        %v3686 = vunpack.c.h.b16 %v3584
        %v3687 = vunpack.c.l.b16 %v3585
        %v3688 = vunpack.c.h.b16 %v3585
        %v3689 = vunpack.c.l.b16 %v3586
        %v3690 = vunpack.c.h.b16 %v3586
        %v3691 = vunpack.c.l.b16 %v3587
        %v3692 = vunpack.c.h.b16 %v3587
        %v3693 = vunpack.c.l.b16 %v3588
        %v3694 = vunpack.c.h.b16 %v3588
        %v3695 = vunpack.c.l.b16 %v3589
        %v3696 = vunpack.c.h.b16 %v3589
        %v3697 = vunpack.c.l.b16 %v3590
        %v3698 = vunpack.c.h.b16 %v3590
        %v3699 = vunpack.c.l.b16 %v3591
        %v3700 = vunpack.c.h.b16 %v3591
        %v3701 = vunpack.c.l.b16 %v3592
        %v3702 = vunpack.c.h.b16 %v3592
        %v3703 = vunpack.c.l.b16 %v3593
        %v3704 = vunpack.c.h.b16 %v3593
        %v3705 = vunpack.c.l.b16 %v3594
        %v3706 = vunpack.c.h.b16 %v3594
        %v3707 = vunpack.c.l.b16 %v3595
        %v3708 = vunpack.c.h.b16 %v3595
        %v3709 = vunpack.c.l.b16 %v3596
        %v3710 = vunpack.c.h.b16 %v3596
        %v3711 = vunpack.c.l.b16 %v3597
        %v3712 = vunpack.c.h.b16 %v3597
        %v3713 = vunpack.c.l.b16 %v3598
        %v3714 = vunpack.c.h.b16 %v3598
        %v3715 = vunpack.c.l.b16 %v3599
        %v3716 = vunpack.c.h.b16 %v3599
        %v3717 = vunpack.c.l.b16 %v3600
        %v3718 = vunpack.c.h.b16 %v3600
        %v3719 = vunpack.c.l.b16 %v3601
        %v3720 = vunpack.c.h.b16 %v3601
        %v3721 = vpack.c.b16 %v3661, %v3657
        %v3722 = vpack.c.b16 %v3662, %v3658
        %v3723 = vpack.c.b16 %v3663, %v3659
        %v3724 = vpack.c.b16 %v3664, %v3660
        %v3725 = vpack.c.b16 %v3669, %v3665
        %v3726 = vpack.c.b16 %v3670, %v3666
        %v3727 = vpack.c.b16 %v3671, %v3667
        %v3728 = vpack.c.b16 %v3672, %v3668
        %v3729 = vpack.c.b16 %v3677, %v3673
        %v3730 = vpack.c.b16 %v3678, %v3674
        %v3731 = vpack.c.b16 %v3679, %v3675
        %v3732 = vpack.c.b16 %v3680, %v3676
        %v3733 = vpack.c.b16 %v3685, %v3681
        %v3734 = vpack.c.b16 %v3686, %v3682
        %v3735 = vpack.c.b16 %v3687, %v3683
        %v3736 = vpack.c.b16 %v3688, %v3684
        %v3737 = vpack.c.b16 %v3693, %v3689
        %v3738 = vpack.c.b16 %v3694, %v3690
        %v3739 = vpack.c.b16 %v3695, %v3691
        %v3740 = vpack.c.b16 %v3696, %v3692
        %v3741 = vpack.c.b16 %v3701, %v3697
        %v3742 = vpack.c.b16 %v3702, %v3698
        %v3743 = vpack.c.b16 %v3703, %v3699
        %v3744 = vpack.c.b16 %v3704, %v3700
        %v3745 = vpack.c.b16 %v3709, %v3705
        %v3746 = vpack.c.b16 %v3710, %v3706
        %v3747 = vpack.c.b16 %v3711, %v3707
        %v3748 = vpack.c.b16 %v3712, %v3708
        %v3749 = vpack.c.b16 %v3717, %v3713
        %v3750 = vpack.c.b16 %v3718, %v3714
        %v3751 = vpack.c.b16 %v3719, %v3715
        %v3752 = vpack.c.b16 %v3720, %v3716
        %3785 = vmatprep.subr.bf16.mxu0 %v3722
        %3786 = vmatpush1.bf16.msra.mxu0 %v3721
        %3787 = vmatprep.subr.bf16.mxu0 %v3726
        %3788 = vmatpush1.bf16.msra.mxu0 %v3725
        %3789 = vmatprep.subr.bf16.mxu0 %v3730
        %3790 = vmatpush1.bf16.msra.mxu0 %v3729
        %3791 = vmatprep.subr.bf16.mxu0 %v3734
        %3792 = vmatpush1.bf16.msra.mxu0 %v3733
        %3793 = vmatprep.subr.bf16.mxu0 %v3738
        %3794 = vmatpush1.bf16.msra.mxu0 %v3737
        %3795 = vmatprep.subr.bf16.mxu0 %v3742
        %3796 = vmatpush1.bf16.msra.mxu0 %v3741
        %3797 = vmatprep.subr.bf16.mxu0 %v3746
        %3798 = vmatpush1.bf16.msra.mxu0 %v3745
        %3799 = vmatprep.subr.bf16.mxu0 %v3750
        %3800 = vmatpush1.bf16.msra.mxu0 %v3749
        %3801 = vmatprep.subr.bf16.mxu0 0
        %3802 = vmatpush1.bf16.msra.mxu0 0
        %3803 = vmatprep.subr.bf16.mxu0 0
        %3804 = vmatpush1.bf16.msra.mxu0 0
        %3805 = vmatprep.subr.bf16.mxu0 0
        %3806 = vmatpush1.bf16.msra.mxu0 0
        %3807 = vmatprep.subr.bf16.mxu0 0
        %3808 = vmatpush1.bf16.msra.mxu0 0
        %3809 = vmatprep.subr.bf16.mxu0 0
        %3810 = vmatpush1.bf16.msra.mxu0 0
        %3811 = vmatprep.subr.bf16.mxu0 0
        %3812 = vmatpush1.bf16.msra.mxu0 0
        %3813 = vmatprep.subr.bf16.mxu0 0
        %3814 = vmatpush1.bf16.msra.mxu0 0
        %3815 = vmatprep.subr.bf16.mxu0 0
        %3816 = vmatpush1.bf16.msra.mxu0 0
        %3817 = vmatprep.mubr.bf16.mxu0 0
        %3818 = vmatmul.mubr.bf16.gmra.mrb[0].mxu0 %v3568
        %v3819 = vpop.f32.mrb[0].mxu0
        %v3820 = vadd.f32 %v3608, %v3819
        %v3821 = vpop.f32.mrb[0].mxu0
        %v3822 = vadd.f32 %v3612, %v3821
        %v3823 = vpop.f32.mrb[0].mxu0
        %v3824 = vadd.f32 %v3608, %v3823
        %v3825 = vpop.f32.mrb[0].mxu0
        %v3826 = vadd.f32 %v3612, %v3825
        %3827 = vdwg.mxu0
        %3828 = vmatprep.subr.bf16.mxu0 %v3724
        %3829 = vmatpush1.bf16.msra.mxu0 %v3723
        %3830 = vmatprep.subr.bf16.mxu0 %v3728
        %3831 = vmatpush1.bf16.msra.mxu0 %v3727
        %3832 = vmatprep.subr.bf16.mxu0 %v3732
        %3833 = vmatpush1.bf16.msra.mxu0 %v3731
        %3834 = vmatprep.subr.bf16.mxu0 %v3736
        %3835 = vmatpush1.bf16.msra.mxu0 %v3735
        %3836 = vmatprep.subr.bf16.mxu0 %v3740
        %3837 = vmatpush1.bf16.msra.mxu0 %v3739
        %3838 = vmatprep.subr.bf16.mxu0 %v3744
        %3839 = vmatpush1.bf16.msra.mxu0 %v3743
        %3840 = vmatprep.subr.bf16.mxu0 %v3748
        %3841 = vmatpush1.bf16.msra.mxu0 %v3747
        %3842 = vmatprep.subr.bf16.mxu0 %v3752
        %3843 = vmatpush1.bf16.msra.mxu0 %v3751
        %3844 = vmatprep.subr.bf16.mxu0 0
        %3845 = vmatpush1.bf16.msra.mxu0 0
        %3846 = vmatprep.subr.bf16.mxu0 0
        %3847 = vmatpush1.bf16.msra.mxu0 0
        %3848 = vmatprep.subr.bf16.mxu0 0
        %3849 = vmatpush1.bf16.msra.mxu0 0
        %3850 = vmatprep.subr.bf16.mxu0 0
        %3851 = vmatpush1.bf16.msra.mxu0 0
        %3852 = vmatprep.subr.bf16.mxu0 0
        %3853 = vmatpush1.bf16.msra.mxu0 0
        %3854 = vmatprep.subr.bf16.mxu0 0
        %3855 = vmatpush1.bf16.msra.mxu0 0
        %3856 = vmatprep.subr.bf16.mxu0 0
        %3857 = vmatpush1.bf16.msra.mxu0 0
        %3858 = vmatprep.subr.bf16.mxu0 0
        %3859 = vmatpush1.bf16.msra.mxu0 0
        %3860 = vmatprep.mubr.bf16.mxu0 0
        %3861 = vmatmul.mubr.bf16.gmra.mrb[0].mxu0 %v3568
        %v3862 = vpop.f32.mrb[0].mxu0
        %v3863 = vadd.f32 %v3616, %v3862
        %v3864 = vpop.f32.mrb[0].mxu0
        %v3865 = vadd.f32 %v3620, %v3864
        %v3866 = vpop.f32.mrb[0].mxu0
        %v3867 = vadd.f32 %v3616, %v3866
        %v3868 = vpop.f32.mrb[0].mxu0
        %v3869 = vadd.f32 %v3620, %v3868
        %3870 = vdwg.mxu0
        %v3871 = vmul.f32 %v3820, 0.5
        %v3872 = vmul.f32 %v3822, 0.5
        %v3873 = vmul.f32 %v3863, 0.5
        %v3874 = vmul.f32 %v3865, 0.5
        %v3875 = vmul.f32 %v3824, 0.5
        %v3876 = vmul.f32 %v3826, 0.5
        %v3877 = vmul.f32 %v3867, 0.5
        %v3878 = vmul.f32 %v3869, 0.5
        %v3879 = vmul.f32 %v3820, 0.70710677
        %v3880 = vmul.f32 %v3822, 0.70710677
        %v3881 = vmul.f32 %v3863, 0.70710677
        %v3882 = vmul.f32 %v3865, 0.70710677
        %v3883 = vmul.f32 %v3824, 0.70710677
        %v3884 = vmul.f32 %v3826, 0.70710677
        %v3885 = vmul.f32 %v3867, 0.70710677
        %v3886 = vmul.f32 %v3869, 0.70710677
        %v3887 = vand.u32 2147483647, %v3879
        %v3888 = vand.u32 2147483647, %v3880
        %v3889 = vand.u32 2147483647, %v3881
        %v3890 = vand.u32 2147483647, %v3882
        %v3891 = vand.u32 2147483647, %v3883
        %v3892 = vand.u32 2147483647, %v3884
        %v3893 = vand.u32 2147483647, %v3885
        %v3894 = vand.u32 2147483647, %v3886
        %v3895 = vmul.f32 %v3887, 0.3275911
        %v3896 = vmul.f32 %v3888, 0.3275911
        %v3897 = vmul.f32 %v3889, 0.3275911
        %v3898 = vmul.f32 %v3890, 0.3275911
        %v3899 = vmul.f32 %v3891, 0.3275911
        %v3900 = vmul.f32 %v3892, 0.3275911
        %v3901 = vmul.f32 %v3893, 0.3275911
        %v3902 = vmul.f32 %v3894, 0.3275911
        %v3903 = vadd.f32 %v3895, 1.0
        %v3904 = vadd.f32 %v3896, 1.0
        %v3905 = vadd.f32 %v3897, 1.0
        %v3906 = vadd.f32 %v3898, 1.0
        %v3907 = vadd.f32 %v3899, 1.0
        %v3908 = vadd.f32 %v3900, 1.0
        %v3909 = vadd.f32 %v3901, 1.0
        %v3910 = vadd.f32 %v3902, 1.0
        %v3911 = vrcp.pop %v3903
        %v3912 = vmul.f32 1.0, %v3911
        %v3913 = vrcp.pop %v3904
        %v3914 = vmul.f32 1.0, %v3913
        %v3915 = vrcp.pop %v3905
        %v3916 = vmul.f32 1.0, %v3915
        %v3917 = vrcp.pop %v3906
        %v3918 = vmul.f32 1.0, %v3917
        %v3919 = vrcp.pop %v3907
        %v3920 = vmul.f32 1.0, %v3919
        %v3921 = vrcp.pop %v3908
        %v3922 = vmul.f32 1.0, %v3921
        %v3923 = vrcp.pop %v3909
        %v3924 = vmul.f32 1.0, %v3923
        %v3925 = vrcp.pop %v3910
        %v3926 = vmul.f32 1.0, %v3925
        %v3927 = vmul.f32 %v3912, 1.0614054
        %v3928 = vmul.f32 %v3914, 1.0614054
        %v3929 = vmul.f32 %v3916, 1.0614054
        %v3930 = vmul.f32 %v3918, 1.0614054
        %v3931 = vmul.f32 %v3920, 1.0614054
        %v3932 = vmul.f32 %v3922, 1.0614054
        %v3933 = vmul.f32 %v3924, 1.0614054
        %v3934 = vmul.f32 %v3926, 1.0614054
        %v3935 = vsub.f32 %v3927, 1.4531521
        %v3936 = vsub.f32 %v3928, 1.4531521
        %v3937 = vsub.f32 %v3929, 1.4531521
        %v3938 = vsub.f32 %v3930, 1.4531521
        %v3939 = vsub.f32 %v3931, 1.4531521
        %v3940 = vsub.f32 %v3932, 1.4531521
        %v3941 = vsub.f32 %v3933, 1.4531521
        %v3942 = vsub.f32 %v3934, 1.4531521
        %v3943 = vmul.f32 %v3935, %v3912
        %v3944 = vmul.f32 %v3936, %v3914
        %v3945 = vmul.f32 %v3937, %v3916
        %v3946 = vmul.f32 %v3938, %v3918
        %v3947 = vmul.f32 %v3939, %v3920
        %v3948 = vmul.f32 %v3940, %v3922
        %v3949 = vmul.f32 %v3941, %v3924
        %v3950 = vmul.f32 %v3942, %v3926
        %v3951 = vadd.f32 %v3943, 1.4214138
        %v3952 = vadd.f32 %v3944, 1.4214138
        %v3953 = vadd.f32 %v3945, 1.4214138
        %v3954 = vadd.f32 %v3946, 1.4214138
        %v3955 = vadd.f32 %v3947, 1.4214138
        %v3956 = vadd.f32 %v3948, 1.4214138
        %v3957 = vadd.f32 %v3949, 1.4214138
        %v3958 = vadd.f32 %v3950, 1.4214138
        %v3959 = vmul.f32 %v3951, %v3912
        %v3960 = vmul.f32 %v3952, %v3914
        %v3961 = vmul.f32 %v3953, %v3916
        %v3962 = vmul.f32 %v3954, %v3918
        %v3963 = vmul.f32 %v3955, %v3920
        %v3964 = vmul.f32 %v3956, %v3922
        %v3965 = vmul.f32 %v3957, %v3924
        %v3966 = vmul.f32 %v3958, %v3926
        %v3967 = vsub.f32 %v3959, 0.28449672
        %v3968 = vsub.f32 %v3960, 0.28449672
        %v3969 = vsub.f32 %v3961, 0.28449672
        %v3970 = vsub.f32 %v3962, 0.28449672
        %v3971 = vsub.f32 %v3963, 0.28449672
        %v3972 = vsub.f32 %v3964, 0.28449672
        %v3973 = vsub.f32 %v3965, 0.28449672
        %v3974 = vsub.f32 %v3966, 0.28449672
        %v3975 = vmul.f32 %v3967, %v3912
        %v3976 = vmul.f32 %v3968, %v3914
        %v3977 = vmul.f32 %v3969, %v3916
        %v3978 = vmul.f32 %v3970, %v3918
        %v3979 = vmul.f32 %v3971, %v3920
        %v3980 = vmul.f32 %v3972, %v3922
        %v3981 = vmul.f32 %v3973, %v3924
        %v3982 = vmul.f32 %v3974, %v3926
        %v3983 = vadd.f32 %v3975, 0.2548296
        %v3984 = vadd.f32 %v3976, 0.2548296
        %v3985 = vadd.f32 %v3977, 0.2548296
        %v3986 = vadd.f32 %v3978, 0.2548296
        %v3987 = vadd.f32 %v3979, 0.2548296
        %v3988 = vadd.f32 %v3980, 0.2548296
        %v3989 = vadd.f32 %v3981, 0.2548296
        %v3990 = vadd.f32 %v3982, 0.2548296
        %v3991 = vmul.f32 %v3983, %v3912
        %v3992 = vmul.f32 %v3984, %v3914
        %v3993 = vmul.f32 %v3985, %v3916
        %v3994 = vmul.f32 %v3986, %v3918
        %v3995 = vmul.f32 %v3987, %v3920
        %v3996 = vmul.f32 %v3988, %v3922
        %v3997 = vmul.f32 %v3989, %v3924
        %v3998 = vmul.f32 %v3990, %v3926
        %v3999 = vsub.f32 0.0, %v3887
        %v4000 = vsub.f32 0.0, %v3888
        %v4001 = vsub.f32 0.0, %v3889
        %v4002 = vsub.f32 0.0, %v3890
        %v4003 = vsub.f32 0.0, %v3891
        %v4004 = vsub.f32 0.0, %v3892
        %v4005 = vsub.f32 0.0, %v3893
        %v4006 = vsub.f32 0.0, %v3894
        %v4007 = vmul.f32 %v3999, %v3887
        %v4008 = vmul.f32 %v4000, %v3888
        %v4009 = vmul.f32 %v4001, %v3889
        %v4010 = vmul.f32 %v4002, %v3890
        %v4011 = vmul.f32 %v4003, %v3891
        %v4012 = vmul.f32 %v4004, %v3892
        %v4013 = vmul.f32 %v4005, %v3893
        %v4014 = vmul.f32 %v4006, %v3894
        %v4015 = vmul.f32 %v4007, 1.442695
        %v4016 = vpow.pop %v4015
        %v4017 = vmul.f32 %v4008, 1.442695
        %v4018 = vpow.pop %v4017
        %v4019 = vmul.f32 %v4009, 1.442695
        %v4020 = vpow.pop %v4019
        %v4021 = vmul.f32 %v4010, 1.442695
        %v4022 = vpow.pop %v4021
        %v4023 = vmul.f32 %v4011, 1.442695
        %v4024 = vpow.pop %v4023
        %v4025 = vmul.f32 %v4012, 1.442695
        %v4026 = vpow.pop %v4025
        %v4027 = vmul.f32 %v4013, 1.442695
        %v4028 = vpow.pop %v4027
        %v4029 = vmul.f32 %v4014, 1.442695
        %v4030 = vpow.pop %v4029
        %v4031 = vmul.f32 %v3991, %v4016
        %v4032 = vmul.f32 %v3992, %v4018
        %v4033 = vmul.f32 %v3993, %v4020
        %v4034 = vmul.f32 %v3994, %v4022
        %v4035 = vmul.f32 %v3995, %v4024
        %v4036 = vmul.f32 %v3996, %v4026
        %v4037 = vmul.f32 %v3997, %v4028
        %v4038 = vmul.f32 %v3998, %v4030
        %v4039 = vsub.f32 1.0, %v4031
        %v4040 = vsub.f32 1.0, %v4032
        %v4041 = vsub.f32 1.0, %v4033
        %v4042 = vsub.f32 1.0, %v4034
        %v4043 = vsub.f32 1.0, %v4035
        %v4044 = vsub.f32 1.0, %v4036
        %v4045 = vsub.f32 1.0, %v4037
        %v4046 = vsub.f32 1.0, %v4038
        %vm4047 = vcmp.ge.f32.partialorder %v3879, 0.0
        %vm4048 = vcmp.ge.f32.partialorder %v3880, 0.0
        %vm4049 = vcmp.ge.f32.partialorder %v3881, 0.0
        %vm4050 = vcmp.ge.f32.partialorder %v3882, 0.0
        %vm4051 = vcmp.ge.f32.partialorder %v3883, 0.0
        %vm4052 = vcmp.ge.f32.partialorder %v3884, 0.0
        %vm4053 = vcmp.ge.f32.partialorder %v3885, 0.0
        %vm4054 = vcmp.ge.f32.partialorder %v3886, 0.0
        %v4055 = vsub.f32 0.0, %v4039
        %v4056 = vsub.f32 0.0, %v4040
        %v4057 = vsub.f32 0.0, %v4041
        %v4058 = vsub.f32 0.0, %v4042
        %v4059 = vsub.f32 0.0, %v4043
        %v4060 = vsub.f32 0.0, %v4044
        %v4061 = vsub.f32 0.0, %v4045
        %v4062 = vsub.f32 0.0, %v4046
        %v4063 = vsel %vm4047, %v4039, %v4055
        %v4064 = vsel %vm4048, %v4040, %v4056
        %v4065 = vsel %vm4049, %v4041, %v4057
        %v4066 = vsel %vm4050, %v4042, %v4058
        %v4067 = vsel %vm4051, %v4043, %v4059
        %v4068 = vsel %vm4052, %v4044, %v4060
        %v4069 = vsel %vm4053, %v4045, %v4061
        %v4070 = vsel %vm4054, %v4046, %v4062
        %v4071 = vadd.f32 %v4063, 1.0
        %v4072 = vadd.f32 %v4064, 1.0
        %v4073 = vadd.f32 %v4065, 1.0
        %v4074 = vadd.f32 %v4066, 1.0
        %v4075 = vadd.f32 %v4067, 1.0
        %v4076 = vadd.f32 %v4068, 1.0
        %v4077 = vadd.f32 %v4069, 1.0
        %v4078 = vadd.f32 %v4070, 1.0
        %v4079 = vmul.f32 %v3871, %v4071
        %v4080 = vmul.f32 %v3872, %v4072
        %v4081 = vmul.f32 %v3873, %v4073
        %v4082 = vmul.f32 %v3874, %v4074
        %v4083 = vmul.f32 %v3875, %v4075
        %v4084 = vmul.f32 %v3876, %v4076
        %v4085 = vmul.f32 %v3877, %v4077
        %v4086 = vmul.f32 %v3878, %v4078
        %v4087 = vpack.c.bf16 %v4083, %v4079
        %v4088 = vpack.c.bf16 %v4084, %v4080
        %v4089 = vpack.c.bf16 %v4085, %v4081
        %v4090 = vpack.c.bf16 %v4086, %v4082
        %s4091 = scalar_lea.vmem [#allocation7], 256
        %v4092 = vld [vmem:[%s4091] sm:$0xf]
        %v4093 = vld [vmem:[%s4091 + $0x4] sm:$0xf]
        %v4094 = vld [vmem:[%s4091 + $0x8] sm:$0xf]
        %v4095 = vld [vmem:[%s4091 + $0xc] sm:$0xf]
        %v4096 = vld [vmem:[%s4091 + $0x10] sm:$0xf]
        %v4097 = vld [vmem:[%s4091 + $0x14] sm:$0xf]
        %v4098 = vld [vmem:[%s4091 + $0x18] sm:$0xf]
        %v4099 = vld [vmem:[%s4091 + $0x1c] sm:$0xf]
        %v4100 = vld [vmem:[%s4091 + $0x20] sm:$0xf]
        %v4101 = vld [vmem:[%s4091 + $0x24] sm:$0xf]
        %v4102 = vld [vmem:[%s4091 + $0x28] sm:$0xf]
        %v4103 = vld [vmem:[%s4091 + $0x2c] sm:$0xf]
        %v4104 = vld [vmem:[%s4091 + $0x30] sm:$0xf]
        %v4105 = vld [vmem:[%s4091 + $0x34] sm:$0xf]
        %v4106 = vld [vmem:[%s4091 + $0x38] sm:$0xf]
        %v4107 = vld [vmem:[%s4091 + $0x3c] sm:$0xf]
        %v4108 = vld [vmem:[%s4091 + $0x40] sm:$0xf]
        %v4109 = vld [vmem:[%s4091 + $0x44] sm:$0xf]
        %v4110 = vld [vmem:[%s4091 + $0x48] sm:$0xf]
        %v4111 = vld [vmem:[%s4091 + $0x4c] sm:$0xf]
        %v4112 = vld [vmem:[%s4091 + $0x50] sm:$0xf]
        %v4113 = vld [vmem:[%s4091 + $0x54] sm:$0xf]
        %v4114 = vld [vmem:[%s4091 + $0x58] sm:$0xf]
        %v4115 = vld [vmem:[%s4091 + $0x5c] sm:$0xf]
        %v4116 = vld [vmem:[%s4091 + $0x60] sm:$0xf]
        %v4117 = vld [vmem:[%s4091 + $0x64] sm:$0xf]
        %v4118 = vld [vmem:[%s4091 + $0x68] sm:$0xf]
        %v4119 = vld [vmem:[%s4091 + $0x6c] sm:$0xf]
        %v4120 = vld [vmem:[%s4091 + $0x70] sm:$0xf]
        %v4121 = vld [vmem:[%s4091 + $0x74] sm:$0xf]
        %v4122 = vld [vmem:[%s4091 + $0x78] sm:$0xf]
        %v4123 = vld [vmem:[%s4091 + $0x7c] sm:$0xf]
        %v4124 = vld [vmem:[%s4091 + $0x80] sm:$0xf]
        %v4125 = vld [vmem:[%s4091 + $0x84] sm:$0xf]
        %v4126 = vld [vmem:[%s4091 + $0x88] sm:$0xf]
        %v4127 = vld [vmem:[%s4091 + $0x8c] sm:$0xf]
        %v4128 = vld [vmem:[%s4091 + $0x90] sm:$0xf]
        %v4129 = vld [vmem:[%s4091 + $0x94] sm:$0xf]
        %v4130 = vld [vmem:[%s4091 + $0x98] sm:$0xf]
        %v4131 = vld [vmem:[%s4091 + $0x9c] sm:$0xf]
        %v4132 = vld [vmem:[%s4091 + $0xa0] sm:$0xf]
        %v4133 = vld [vmem:[%s4091 + $0xa4] sm:$0xf]
        %v4134 = vld [vmem:[%s4091 + $0xa8] sm:$0xf]
        %v4135 = vld [vmem:[%s4091 + $0xac] sm:$0xf]
        %v4136 = vld [vmem:[%s4091 + $0xb0] sm:$0xf]
        %v4137 = vld [vmem:[%s4091 + $0xb4] sm:$0xf]
        %v4138 = vld [vmem:[%s4091 + $0xb8] sm:$0xf]
        %v4139 = vld [vmem:[%s4091 + $0xbc] sm:$0xf]
        %v4140 = vld [vmem:[%s4091 + $0xc0] sm:$0xf]
        %v4141 = vld [vmem:[%s4091 + $0xc4] sm:$0xf]
        %v4142 = vld [vmem:[%s4091 + $0xc8] sm:$0xf]
        %v4143 = vld [vmem:[%s4091 + $0xcc] sm:$0xf]
        %v4144 = vld [vmem:[%s4091 + $0xd0] sm:$0xf]
        %v4145 = vld [vmem:[%s4091 + $0xd4] sm:$0xf]
        %v4146 = vld [vmem:[%s4091 + $0xd8] sm:$0xf]
        %v4147 = vld [vmem:[%s4091 + $0xdc] sm:$0xf]
        %v4148 = vld [vmem:[%s4091 + $0xe0] sm:$0xf]
        %v4149 = vld [vmem:[%s4091 + $0xe4] sm:$0xf]
        %v4150 = vld [vmem:[%s4091 + $0xe8] sm:$0xf]
        %v4151 = vld [vmem:[%s4091 + $0xec] sm:$0xf]
        %v4152 = vld [vmem:[%s4091 + $0xf0] sm:$0xf]
        %v4153 = vld [vmem:[%s4091 + $0xf4] sm:$0xf]
        %v4154 = vld [vmem:[%s4091 + $0xf8] sm:$0xf]
        %v4155 = vld [vmem:[%s4091 + $0xfc] sm:$0xf]
        %s4156 = scalar_lea.vmem %s10, 1
        %v4157 = vld [vmem:[%s4156] sm:$0x1]
        %v4159 = vlaneseq
        %v4160 = vshrl.u32 %v4159, 7
        %v4161 = vsub.s32 0, %v4160
        %v4162 = vrot.slane %v4157, %v4161
        %v4228 = vunpack.c.l.b16 %v4092
        %v4229 = vunpack.c.l.b16 %v4093
        %v4230 = vunpack.c.l.b16 %v4094
        %v4231 = vunpack.c.l.b16 %v4095
        %v4232 = vunpack.c.l.b16 %v4096
        %v4233 = vunpack.c.l.b16 %v4097
        %v4234 = vunpack.c.l.b16 %v4098
        %v4235 = vunpack.c.l.b16 %v4099
        %v4236 = vunpack.c.l.b16 %v4100
        %v4237 = vunpack.c.l.b16 %v4101
        %v4238 = vunpack.c.l.b16 %v4102
        %v4239 = vunpack.c.l.b16 %v4103
        %v4240 = vunpack.c.l.b16 %v4104
        %v4241 = vunpack.c.l.b16 %v4105
        %v4242 = vunpack.c.l.b16 %v4106
        %v4243 = vunpack.c.l.b16 %v4107
        %v4244 = vunpack.c.l.b16 %v4108
        %v4245 = vunpack.c.l.b16 %v4109
        %v4246 = vunpack.c.l.b16 %v4110
        %v4247 = vunpack.c.l.b16 %v4111
        %v4248 = vunpack.c.l.b16 %v4112
        %v4249 = vunpack.c.l.b16 %v4113
        %v4250 = vunpack.c.l.b16 %v4114
        %v4251 = vunpack.c.l.b16 %v4115
        %v4252 = vunpack.c.l.b16 %v4116
        %v4253 = vunpack.c.l.b16 %v4117
        %v4254 = vunpack.c.l.b16 %v4118
        %v4255 = vunpack.c.l.b16 %v4119
        %v4256 = vunpack.c.l.b16 %v4120
        %v4257 = vunpack.c.l.b16 %v4121
        %v4258 = vunpack.c.l.b16 %v4122
        %v4259 = vunpack.c.l.b16 %v4123
        %v4260 = vunpack.c.l.b16 %v4124
        %v4261 = vunpack.c.l.b16 %v4125
        %v4262 = vunpack.c.l.b16 %v4126
        %v4263 = vunpack.c.l.b16 %v4127
        %v4264 = vunpack.c.l.b16 %v4128
        %v4265 = vunpack.c.l.b16 %v4129
        %v4266 = vunpack.c.l.b16 %v4130
        %v4267 = vunpack.c.l.b16 %v4131
        %v4268 = vunpack.c.l.b16 %v4132
        %v4269 = vunpack.c.l.b16 %v4133
        %v4270 = vunpack.c.l.b16 %v4134
        %v4271 = vunpack.c.l.b16 %v4135
        %v4272 = vunpack.c.l.b16 %v4136
        %v4273 = vunpack.c.l.b16 %v4137
        %v4274 = vunpack.c.l.b16 %v4138
        %v4275 = vunpack.c.l.b16 %v4139
        %v4276 = vunpack.c.l.b16 %v4140
        %v4277 = vunpack.c.l.b16 %v4141
        %v4278 = vunpack.c.l.b16 %v4142
        %v4279 = vunpack.c.l.b16 %v4143
        %v4280 = vunpack.c.l.b16 %v4144
        %v4281 = vunpack.c.l.b16 %v4145
        %v4282 = vunpack.c.l.b16 %v4146
        %v4283 = vunpack.c.l.b16 %v4147
        %v4284 = vunpack.c.l.b16 %v4148
        %v4285 = vunpack.c.l.b16 %v4149
        %v4286 = vunpack.c.l.b16 %v4150
        %v4287 = vunpack.c.l.b16 %v4151
        %v4288 = vunpack.c.l.b16 %v4152
        %v4289 = vunpack.c.l.b16 %v4153
        %v4290 = vunpack.c.l.b16 %v4154
        %v4291 = vunpack.c.l.b16 %v4155
        %v4292 = vpack.c.b16 %v4229, %v4228
        %v4293 = vpack.c.b16 %v4231, %v4230
        %v4294 = vpack.c.b16 %v4233, %v4232
        %v4295 = vpack.c.b16 %v4235, %v4234
        %v4296 = vpack.c.b16 %v4237, %v4236
        %v4297 = vpack.c.b16 %v4239, %v4238
        %v4298 = vpack.c.b16 %v4241, %v4240
        %v4299 = vpack.c.b16 %v4243, %v4242
        %v4300 = vpack.c.b16 %v4245, %v4244
        %v4301 = vpack.c.b16 %v4247, %v4246
        %v4302 = vpack.c.b16 %v4249, %v4248
        %v4303 = vpack.c.b16 %v4251, %v4250
        %v4304 = vpack.c.b16 %v4253, %v4252
        %v4305 = vpack.c.b16 %v4255, %v4254
        %v4306 = vpack.c.b16 %v4257, %v4256
        %v4307 = vpack.c.b16 %v4259, %v4258
        %v4308 = vpack.c.b16 %v4261, %v4260
        %v4309 = vpack.c.b16 %v4263, %v4262
        %v4310 = vpack.c.b16 %v4265, %v4264
        %v4311 = vpack.c.b16 %v4267, %v4266
        %v4312 = vpack.c.b16 %v4269, %v4268
        %v4313 = vpack.c.b16 %v4271, %v4270
        %v4314 = vpack.c.b16 %v4273, %v4272
        %v4315 = vpack.c.b16 %v4275, %v4274
        %v4316 = vpack.c.b16 %v4277, %v4276
        %v4317 = vpack.c.b16 %v4279, %v4278
        %v4318 = vpack.c.b16 %v4281, %v4280
        %v4319 = vpack.c.b16 %v4283, %v4282
        %v4320 = vpack.c.b16 %v4285, %v4284
        %v4321 = vpack.c.b16 %v4287, %v4286
        %v4322 = vpack.c.b16 %v4289, %v4288
        %v4323 = vpack.c.b16 %v4291, %v4290
        %4356 = vmatprep.subr.bf16.mxu0 0
        %4357 = vmatpush1.bf16.msra.mxu0 %v4292
        %4358 = vmatprep.subr.bf16.mxu0 0
        %4359 = vmatpush1.bf16.msra.mxu0 %v4293
        %4360 = vmatprep.subr.bf16.mxu0 0
        %4361 = vmatpush1.bf16.msra.mxu0 %v4294
        %4362 = vmatprep.subr.bf16.mxu0 0
        %4363 = vmatpush1.bf16.msra.mxu0 %v4295
        %4364 = vmatprep.subr.bf16.mxu0 0
        %4365 = vmatpush1.bf16.msra.mxu0 %v4296
        %4366 = vmatprep.subr.bf16.mxu0 0
        %4367 = vmatpush1.bf16.msra.mxu0 %v4297
        %4368 = vmatprep.subr.bf16.mxu0 0
        %4369 = vmatpush1.bf16.msra.mxu0 %v4298
        %4370 = vmatprep.subr.bf16.mxu0 0
        %4371 = vmatpush1.bf16.msra.mxu0 %v4299
        %4372 = vmatprep.subr.bf16.mxu0 0
        %4373 = vmatpush1.bf16.msra.mxu0 %v4300
        %4374 = vmatprep.subr.bf16.mxu0 0
        %4375 = vmatpush1.bf16.msra.mxu0 %v4301
        %4376 = vmatprep.subr.bf16.mxu0 0
        %4377 = vmatpush1.bf16.msra.mxu0 %v4302
        %4378 = vmatprep.subr.bf16.mxu0 0
        %4379 = vmatpush1.bf16.msra.mxu0 %v4303
        %4380 = vmatprep.subr.bf16.mxu0 0
        %4381 = vmatpush1.bf16.msra.mxu0 %v4304
        %4382 = vmatprep.subr.bf16.mxu0 0
        %4383 = vmatpush1.bf16.msra.mxu0 %v4305
        %4384 = vmatprep.subr.bf16.mxu0 0
        %4385 = vmatpush1.bf16.msra.mxu0 %v4306
        %4386 = vmatprep.subr.bf16.mxu0 0
        %4387 = vmatpush1.bf16.msra.mxu0 %v4307
        %4388 = vmatprep.mubr.bf16.mxu0 %v4088
        %4389 = vmatmul.mubr.bf16.gmra.mrb[0].mxu0 %v4087
        %v4390 = vpop.f32.mrb[0].mxu0
        %v4391 = vadd.f32 %v4162, %v4390
        %v4392 = vpop.f32.mrb[0].mxu0
        %v4393 = vpop.f32.mrb[0].mxu0
        %v4394 = vadd.f32 %v4162, %v4393
        %v4395 = vpop.f32.mrb[0].mxu0
        %4396 = vdwg.mxu0
        %4397 = vmatprep.subr.bf16.mxu0 0
        %4398 = vmatpush1.bf16.msra.mxu0 %v4308
        %4399 = vmatprep.subr.bf16.mxu0 0
        %4400 = vmatpush1.bf16.msra.mxu0 %v4309
        %4401 = vmatprep.subr.bf16.mxu0 0
        %4402 = vmatpush1.bf16.msra.mxu0 %v4310
        %4403 = vmatprep.subr.bf16.mxu0 0
        %4404 = vmatpush1.bf16.msra.mxu0 %v4311
        %4405 = vmatprep.subr.bf16.mxu0 0
        %4406 = vmatpush1.bf16.msra.mxu0 %v4312
        %4407 = vmatprep.subr.bf16.mxu0 0
        %4408 = vmatpush1.bf16.msra.mxu0 %v4313
        %4409 = vmatprep.subr.bf16.mxu0 0
        %4410 = vmatpush1.bf16.msra.mxu0 %v4314
        %4411 = vmatprep.subr.bf16.mxu0 0
        %4412 = vmatpush1.bf16.msra.mxu0 %v4315
        %4413 = vmatprep.subr.bf16.mxu0 0
        %4414 = vmatpush1.bf16.msra.mxu0 %v4316
        %4415 = vmatprep.subr.bf16.mxu0 0
        %4416 = vmatpush1.bf16.msra.mxu0 %v4317
        %4417 = vmatprep.subr.bf16.mxu0 0
        %4418 = vmatpush1.bf16.msra.mxu0 %v4318
        %4419 = vmatprep.subr.bf16.mxu0 0
        %4420 = vmatpush1.bf16.msra.mxu0 %v4319
        %4421 = vmatprep.subr.bf16.mxu0 0
        %4422 = vmatpush1.bf16.msra.mxu0 %v4320
        %4423 = vmatprep.subr.bf16.mxu0 0
        %4424 = vmatpush1.bf16.msra.mxu0 %v4321
        %4425 = vmatprep.subr.bf16.mxu0 0
        %4426 = vmatpush1.bf16.msra.mxu0 %v4322
        %4427 = vmatprep.subr.bf16.mxu0 0
        %4428 = vmatpush1.bf16.msra.mxu0 %v4323
        %4429 = vmatprep.mubr.bf16.mxu0 %v4090
        %4430 = vmatmul.mubr.bf16.gmra.mrb[0].mxu0 %v4089
        %v4431 = vpop.f32.mrb[0].mxu0
        %v4432 = vadd.f32 %v4391, %v4431
        %v4433 = vpop.f32.mrb[0].mxu0
        %v4434 = vpop.f32.mrb[0].mxu0
        %v4435 = vadd.f32 %v4394, %v4434
        %v4436 = vpop.f32.mrb[0].mxu0
        %4437 = vdwg.mxu0
        %v4438 = vadd.f32 %v3566, %v4432
        %v4439 = vadd.f32 %v3567, %v4435
        %s4440 = scalar_lea.vmem %s11, 1
        %v4441 = vld [vmem:[%s4440] sm:$0x1]
        %s4442 = scalar_lea.vmem %s12, 1
        %v4443 = vld [vmem:[%s4442] sm:$0x1]
        %4444 = vadd.xlane.f32.xlu0 %v4438
        %v4445 = vpop.xlane.xlu0 %4444
        %4446 = vadd.xlane.f32.xlu0 %v4439
        %v4447 = vpop.xlane.xlu0 %4446
        %v4448 = vmul.f32 %v4445, %v1565
        %v4449 = vmul.f32 %v4447, %v1565
        %v4450 = vsub.f32 %v4438, %v4448
        %v4451 = vsub.f32 %v4439, %v4449
        %v4452 = vmul.f32 %v4450, %v4450
        %v4453 = vmul.f32 %v4451, %v4451
        %4454 = vadd.xlane.f32.xlu0 %v4452
        %v4455 = vpop.xlane.xlu0 %4454
        %4456 = vadd.xlane.f32.xlu0 %v4453
        %v4457 = vpop.xlane.xlu0 %4456
        %v4458 = vmul.f32 %v4455, %v1565
        %v4459 = vmul.f32 %v4457, %v1565
        %v4460 = vadd.f32 %v4458, 1e-05
        %v4461 = vadd.f32 %v4459, 1e-05
        %v4462 = vrsqrt.pop %v4460
        %v4463 = vrsqrt.pop %v4461
        %v4464 = vmul.f32 %v4450, %v4462
        %v4465 = vmul.f32 %v4451, %v4463
        %v4467 = vlaneseq
        %v4468 = vshrl.u32 %v4467, 7
        %v4469 = vsub.s32 0, %v4468
        %v4470 = vrot.slane %v4441, %v4469
        %v4472 = vmul.f32 %v4464, %v4470
        %v4473 = vmul.f32 %v4465, %v4470
        %v4475 = vlaneseq
        %v4476 = vshrl.u32 %v4475, 7
        %v4477 = vsub.s32 0, %v4476
        %v4478 = vrot.slane %v4443, %v4477
        %v4480 = vadd.f32 %v4472, %v4478
        %v4481 = vadd.f32 %v4473, %v4478
        %v4482 = vpack.c.bf16 %v4481, %v4480
        %s4483 = scalar_lea.vmem [#allocation2], 384
        %v4484 = vld [vmem:[%s4483] sm:$0xff]
        %v4485 = vld [vmem:[%s4483 + $0x8] sm:$0xf]
        %v4486 = vld [vmem:[%s4483 + $0xc] sm:$0xff]
        %v4487 = vld [vmem:[%s4483 + $0x14] sm:$0xf]
        %v4488 = vld [vmem:[%s4483 + $0x18] sm:$0xff]
        %v4489 = vld [vmem:[%s4483 + $0x20] sm:$0xf]
        %v4490 = vld [vmem:[%s4483 + $0x24] sm:$0xff]
        %v4491 = vld [vmem:[%s4483 + $0x2c] sm:$0xf]
        %v4492 = vld [vmem:[%s4483 + $0x30] sm:$0xff]
        %v4493 = vld [vmem:[%s4483 + $0x38] sm:$0xf]
        %v4494 = vld [vmem:[%s4483 + $0x3c] sm:$0xff]
        %v4495 = vld [vmem:[%s4483 + $0x44] sm:$0xf]
        %v4496 = vld [vmem:[%s4483 + $0x48] sm:$0xff]
        %v4497 = vld [vmem:[%s4483 + $0x50] sm:$0xf]
        %v4498 = vld [vmem:[%s4483 + $0x54] sm:$0xff]
        %v4499 = vld [vmem:[%s4483 + $0x5c] sm:$0xf]
        %v4500 = vld [vmem:[%s4483 + $0x60] sm:$0xff]
        %v4501 = vld [vmem:[%s4483 + $0x68] sm:$0xf]
        %v4502 = vld [vmem:[%s4483 + $0x6c] sm:$0xff]
        %v4503 = vld [vmem:[%s4483 + $0x74] sm:$0xf]
        %v4504 = vld [vmem:[%s4483 + $0x78] sm:$0xff]
        %v4505 = vld [vmem:[%s4483 + $0x80] sm:$0xf]
        %v4506 = vld [vmem:[%s4483 + $0x84] sm:$0xff]
        %v4507 = vld [vmem:[%s4483 + $0x8c] sm:$0xf]
        %v4508 = vld [vmem:[%s4483 + $0x90] sm:$0xff]
        %v4509 = vld [vmem:[%s4483 + $0x98] sm:$0xf]
        %v4510 = vld [vmem:[%s4483 + $0x9c] sm:$0xff]
        %v4511 = vld [vmem:[%s4483 + $0xa4] sm:$0xf]
        %v4512 = vld [vmem:[%s4483 + $0xa8] sm:$0xff]
        %v4513 = vld [vmem:[%s4483 + $0xb0] sm:$0xf]
        %v4514 = vld [vmem:[%s4483 + $0xb4] sm:$0xff]
        %v4515 = vld [vmem:[%s4483 + $0xbc] sm:$0xf]
        %s4516 = scalar_lea.vmem %s2, 6
        %v4517 = vld [vmem:[%s4516] sm:$0x7]
        %v4519 = vlaneseq
        %v4520 = vshrl.u32 %v4519, 7
        %v4521 = vsub.s32 0, %v4520
        %v4522 = vrot.slane %v4517, %v4521
        %v4523 = vlaneseq
        %v4524 = vshrl.u32 %v4523, 7
        %v4525 = vsub.s32 1, %v4524
        %v4526 = vrot.slane %v4517, %v4525
        %v4527 = vlaneseq
        %v4528 = vshrl.u32 %v4527, 7
        %v4529 = vsub.s32 2, %v4528
        %v4530 = vrot.slane %v4517, %v4529
        %v4566 = vunpack.c.l.b16 %v4484
        %v4567 = vunpack.c.h.b16 %v4484
        %v4568 = vunpack.c.l.b16 %v4485
        %v4569 = vunpack.c.l.b16 %v4486
        %v4570 = vunpack.c.h.b16 %v4486
        %v4571 = vunpack.c.l.b16 %v4487
        %v4572 = vunpack.c.l.b16 %v4488
        %v4573 = vunpack.c.h.b16 %v4488
        %v4574 = vunpack.c.l.b16 %v4489
        %v4575 = vunpack.c.l.b16 %v4490
        %v4576 = vunpack.c.h.b16 %v4490
        %v4577 = vunpack.c.l.b16 %v4491
        %v4578 = vunpack.c.l.b16 %v4492
        %v4579 = vunpack.c.h.b16 %v4492
        %v4580 = vunpack.c.l.b16 %v4493
        %v4581 = vunpack.c.l.b16 %v4494
        %v4582 = vunpack.c.h.b16 %v4494
        %v4583 = vunpack.c.l.b16 %v4495
        %v4584 = vunpack.c.l.b16 %v4496
        %v4585 = vunpack.c.h.b16 %v4496
        %v4586 = vunpack.c.l.b16 %v4497
        %v4587 = vunpack.c.l.b16 %v4498
        %v4588 = vunpack.c.h.b16 %v4498
        %v4589 = vunpack.c.l.b16 %v4499
        %v4590 = vunpack.c.l.b16 %v4500
        %v4591 = vunpack.c.h.b16 %v4500
        %v4592 = vunpack.c.l.b16 %v4501
        %v4593 = vunpack.c.l.b16 %v4502
        %v4594 = vunpack.c.h.b16 %v4502
        %v4595 = vunpack.c.l.b16 %v4503
        %v4596 = vunpack.c.l.b16 %v4504
        %v4597 = vunpack.c.h.b16 %v4504
        %v4598 = vunpack.c.l.b16 %v4505
        %v4599 = vunpack.c.l.b16 %v4506
        %v4600 = vunpack.c.h.b16 %v4506
        %v4601 = vunpack.c.l.b16 %v4507
        %v4602 = vunpack.c.l.b16 %v4508
        %v4603 = vunpack.c.h.b16 %v4508
        %v4604 = vunpack.c.l.b16 %v4509
        %v4605 = vunpack.c.l.b16 %v4510
        %v4606 = vunpack.c.h.b16 %v4510
        %v4607 = vunpack.c.l.b16 %v4511
        %v4608 = vunpack.c.l.b16 %v4512
        %v4609 = vunpack.c.h.b16 %v4512
        %v4610 = vunpack.c.l.b16 %v4513
        %v4611 = vunpack.c.l.b16 %v4514
        %v4612 = vunpack.c.h.b16 %v4514
        %v4613 = vunpack.c.l.b16 %v4515
        %v4614 = vpack.c.b16 %v4569, %v4566
        %v4615 = vpack.c.b16 %v4570, %v4567
        %v4616 = vpack.c.b16 %v4571, %v4568
        %v4617 = vpack.c.b16 %v4575, %v4572
        %v4618 = vpack.c.b16 %v4576, %v4573
        %v4619 = vpack.c.b16 %v4577, %v4574
        %v4620 = vpack.c.b16 %v4581, %v4578
        %v4621 = vpack.c.b16 %v4582, %v4579
        %v4622 = vpack.c.b16 %v4583, %v4580
        %v4623 = vpack.c.b16 %v4587, %v4584
        %v4624 = vpack.c.b16 %v4588, %v4585
        %v4625 = vpack.c.b16 %v4589, %v4586
        %v4626 = vpack.c.b16 %v4593, %v4590
        %v4627 = vpack.c.b16 %v4594, %v4591
        %v4628 = vpack.c.b16 %v4595, %v4592
        %v4629 = vpack.c.b16 %v4599, %v4596
        %v4630 = vpack.c.b16 %v4600, %v4597
        %v4631 = vpack.c.b16 %v4601, %v4598
        %v4632 = vpack.c.b16 %v4605, %v4602
        %v4633 = vpack.c.b16 %v4606, %v4603
        %v4634 = vpack.c.b16 %v4607, %v4604
        %v4635 = vpack.c.b16 %v4611, %v4608
        %v4636 = vpack.c.b16 %v4612, %v4609
        %v4637 = vpack.c.b16 %v4613, %v4610
        %4662 = vmatprep.subr.bf16.mxu0 %v4615
        %4663 = vmatpush1.bf16.msra.mxu0 %v4614
        %4664 = vmatprep.subr.bf16.mxu0 %v4618
        %4665 = vmatpush1.bf16.msra.mxu0 %v4617
        %4666 = vmatprep.subr.bf16.mxu0 %v4621
        %4667 = vmatpush1.bf16.msra.mxu0 %v4620
        %4668 = vmatprep.subr.bf16.mxu0 %v4624
        %4669 = vmatpush1.bf16.msra.mxu0 %v4623
        %4670 = vmatprep.subr.bf16.mxu0 %v4627
        %4671 = vmatpush1.bf16.msra.mxu0 %v4626
        %4672 = vmatprep.subr.bf16.mxu0 %v4630
        %4673 = vmatpush1.bf16.msra.mxu0 %v4629
        %4674 = vmatprep.subr.bf16.mxu0 %v4633
        %4675 = vmatpush1.bf16.msra.mxu0 %v4632
        %4676 = vmatprep.subr.bf16.mxu0 %v4636
        %4677 = vmatpush1.bf16.msra.mxu0 %v4635
        %4678 = vmatprep.subr.bf16.mxu0 0
        %4679 = vmatpush1.bf16.msra.mxu0 0
        %4680 = vmatprep.subr.bf16.mxu0 0
        %4681 = vmatpush1.bf16.msra.mxu0 0
        %4682 = vmatprep.subr.bf16.mxu0 0
        %4683 = vmatpush1.bf16.msra.mxu0 0
        %4684 = vmatprep.subr.bf16.mxu0 0
        %4685 = vmatpush1.bf16.msra.mxu0 0
        %4686 = vmatprep.subr.bf16.mxu0 0
        %4687 = vmatpush1.bf16.msra.mxu0 0
        %4688 = vmatprep.subr.bf16.mxu0 0
        %4689 = vmatpush1.bf16.msra.mxu0 0
        %4690 = vmatprep.subr.bf16.mxu0 0
        %4691 = vmatpush1.bf16.msra.mxu0 0
        %4692 = vmatprep.subr.bf16.mxu0 0
        %4693 = vmatpush1.bf16.msra.mxu0 0
        %4694 = vmatprep.mubr.bf16.mxu0 0
        %4695 = vmatmul.mubr.bf16.gmra.mrb[0].mxu0 %v4482
        %v4696 = vpop.f32.mrb[0].mxu0
        %v4697 = vadd.f32 %v4522, %v4696
        %v4698 = vpop.f32.mrb[0].mxu0
        %v4699 = vadd.f32 %v4526, %v4698
        %v4700 = vpop.f32.mrb[0].mxu0
        %v4701 = vadd.f32 %v4522, %v4700
        %v4702 = vpop.f32.mrb[0].mxu0
        %v4703 = vadd.f32 %v4526, %v4702
        %4704 = vdwg.mxu0
        %4705 = vmatprep.subr.bf16.mxu0 0
        %4706 = vmatpush1.bf16.msra.mxu0 %v4616
        %4707 = vmatprep.subr.bf16.mxu0 0
        %4708 = vmatpush1.bf16.msra.mxu0 %v4619
        %4709 = vmatprep.subr.bf16.mxu0 0
        %4710 = vmatpush1.bf16.msra.mxu0 %v4622
        %4711 = vmatprep.subr.bf16.mxu0 0
        %4712 = vmatpush1.bf16.msra.mxu0 %v4625
        %4713 = vmatprep.subr.bf16.mxu0 0
        %4714 = vmatpush1.bf16.msra.mxu0 %v4628
        %4715 = vmatprep.subr.bf16.mxu0 0
        %4716 = vmatpush1.bf16.msra.mxu0 %v4631
        %4717 = vmatprep.subr.bf16.mxu0 0
        %4718 = vmatpush1.bf16.msra.mxu0 %v4634
        %4719 = vmatprep.subr.bf16.mxu0 0
        %4720 = vmatpush1.bf16.msra.mxu0 %v4637
        %4721 = vmatprep.subr.bf16.mxu0 0
        %4722 = vmatpush1.bf16.msra.mxu0 0
        %4723 = vmatprep.subr.bf16.mxu0 0
        %4724 = vmatpush1.bf16.msra.mxu0 0
        %4725 = vmatprep.subr.bf16.mxu0 0
        %4726 = vmatpush1.bf16.msra.mxu0 0
        %4727 = vmatprep.subr.bf16.mxu0 0
        %4728 = vmatpush1.bf16.msra.mxu0 0
        %4729 = vmatprep.subr.bf16.mxu0 0
        %4730 = vmatpush1.bf16.msra.mxu0 0
        %4731 = vmatprep.subr.bf16.mxu0 0
        %4732 = vmatpush1.bf16.msra.mxu0 0
        %4733 = vmatprep.subr.bf16.mxu0 0
        %4734 = vmatpush1.bf16.msra.mxu0 0
        %4735 = vmatprep.subr.bf16.mxu0 0
        %4736 = vmatpush1.bf16.msra.mxu0 0
        %4737 = vmatprep.mubr.bf16.mxu0 0
        %4738 = vmatmul.mubr.bf16.gmra.mrb[0].mxu0 %v4482
        %v4739 = vpop.f32.mrb[0].mxu0
        %v4740 = vadd.f32 %v4530, %v4739
        %v4741 = vpop.f32.mrb[0].mxu0
        %v4742 = vpop.f32.mrb[0].mxu0
        %v4743 = vadd.f32 %v4530, %v4742
        %v4744 = vpop.f32.mrb[0].mxu0
        %4745 = vdwg.mxu0
        %s4746 = scalar_lea.vmem [#allocation4], 128
        %v4747 = vld [vmem:[%s4746] sm:$0xf]
        %v4748 = vld [vmem:[%s4746 + $0x4] sm:$0xf]
        %v4749 = vld [vmem:[%s4746 + $0x8] sm:$0xf]
        %v4750 = vld [vmem:[%s4746 + $0xc] sm:$0xf]
        %v4751 = vld [vmem:[%s4746 + $0x10] sm:$0xf]
        %v4752 = vld [vmem:[%s4746 + $0x14] sm:$0xf]
        %v4753 = vld [vmem:[%s4746 + $0x18] sm:$0xf]
        %v4754 = vld [vmem:[%s4746 + $0x1c] sm:$0xf]
        %v4755 = vld [vmem:[%s4746 + $0x20] sm:$0xf]
        %v4756 = vld [vmem:[%s4746 + $0x24] sm:$0xf]
        %v4757 = vld [vmem:[%s4746 + $0x28] sm:$0xf]
        %v4758 = vld [vmem:[%s4746 + $0x2c] sm:$0xf]
        %v4759 = vld [vmem:[%s4746 + $0x30] sm:$0xf]
        %v4760 = vld [vmem:[%s4746 + $0x34] sm:$0xf]
        %v4761 = vld [vmem:[%s4746 + $0x38] sm:$0xf]
        %v4762 = vld [vmem:[%s4746 + $0x3c] sm:$0xf]
        %v4763 = vmul.f32 %v4697, 0.17677669
        %v4764 = vmul.f32 %v4701, 0.17677669
        %v4765 = vpack.c.bf16 %v4764, %v4763
        %v4766 = vpack.c.bf16 %v4703, %v4699
        %v4767 = vpack.c.bf16 %v4743, %v4740
        %v4769 = vsel %vm826, %v4765, 0
        %v4772 = vsel %vm826, %v4766, 0
        %4774 = vmatprep.subr.bf16.mxu0 0
        %4775 = vmatpush1.bf16.xpose.msra.mxu0 %v4772
        %4776 = vmatprep.subr.bf16.mxu0 0
        %4777 = vmatpush1.bf16.xpose.msra.mxu0 0
        %4778 = vmatprep.subr.bf16.mxu0 0
        %4779 = vmatpush1.bf16.xpose.msra.mxu0 0
        %4780 = vmatprep.subr.bf16.mxu0 0
        %4781 = vmatpush1.bf16.xpose.msra.mxu0 0
        %4782 = vmatprep.subr.bf16.mxu0 0
        %4783 = vmatpush1.bf16.xpose.msra.mxu0 0
        %4784 = vmatprep.subr.bf16.mxu0 0
        %4785 = vmatpush1.bf16.xpose.msra.mxu0 0
        %4786 = vmatprep.subr.bf16.mxu0 0
        %4787 = vmatpush1.bf16.xpose.msra.mxu0 0
        %4788 = vmatprep.subr.bf16.mxu0 0
        %4789 = vmatpush1.bf16.xpose.msra.mxu0 0
        %4790 = vmatprep.subr.bf16.mxu0 0
        %4791 = vmatpush1.bf16.xpose.msra.mxu0 0
        %4792 = vmatprep.subr.bf16.mxu0 0
        %4793 = vmatpush1.bf16.xpose.msra.mxu0 0
        %4794 = vmatprep.subr.bf16.mxu0 0
        %4795 = vmatpush1.bf16.xpose.msra.mxu0 0
        %4796 = vmatprep.subr.bf16.mxu0 0
        %4797 = vmatpush1.bf16.xpose.msra.mxu0 0
        %4798 = vmatprep.subr.bf16.mxu0 0
        %4799 = vmatpush1.bf16.xpose.msra.mxu0 0
        %4800 = vmatprep.subr.bf16.mxu0 0
        %4801 = vmatpush1.bf16.xpose.msra.mxu0 0
        %4802 = vmatprep.subr.bf16.mxu0 0
        %4803 = vmatpush1.bf16.xpose.msra.mxu0 0
        %4804 = vmatprep.subr.bf16.mxu0 0
        %4805 = vmatpush1.bf16.xpose.msra.mxu0 0
        %4806 = vmatprep.mubr.bf16.mxu0 0
        %4807 = vmatmul.mubr.bf16.gmra.mrb[0].mxu0 %v4769
        %v4808 = vpop.f32.mrb[0].mxu0
        %v4809 = vadd.f32 %v540, %v4808
        %v4810 = vpop.f32.mrb[0].mxu0
        %v4811 = vpop.f32.mrb[0].mxu0
        %v4812 = vadd.f32 %v540, %v4811
        %v4813 = vpop.f32.mrb[0].mxu0
        %4814 = vdwg.mxu0
        %v4815 = vsel %vm874, %v4809, -inf
        %4816 = vmax.xlane.f32.xlu0 %v4815
        %v4817 = vpop.xlane.xlu0 %4816
        %v4818 = vsel %vm874, %v4812, -inf
        %4819 = vmax.xlane.f32.xlu0 %v4818
        %v4820 = vpop.xlane.xlu0 %4819
        %v4821 = vsub.f32 %v4809, %v4817
        %v4822 = vsub.f32 %v4812, %v4820
        %v4823 = vmul.f32 %v4821, 1.442695
        %v4824 = vpow.pop %v4823
        %v4825 = vmul.f32 %v4822, 1.442695
        %v4826 = vpow.pop %v4825
        %v4827 = vsel %vm874, %v4824, 0.0
        %4828 = vadd.xlane.f32.xlu0 %v4827
        %v4829 = vpop.xlane.xlu0 %4828
        %v4830 = vsel %vm874, %v4826, 0.0
        %4831 = vadd.xlane.f32.xlu0 %v4830
        %v4832 = vpop.xlane.xlu0 %4831
        %v4833 = vrcp.pop %v4829
        %v4834 = vmul.f32 1.0, %v4833
        %v4835 = vrcp.pop %v4832
        %v4836 = vmul.f32 1.0, %v4835
        %v4837 = vmul.f32 %v4824, %v4834
        %v4838 = vmul.f32 %v4826, %v4836
        %v4839 = vpack.c.bf16 %v4838, %v4837
        %v4841 = vsel %vm874, %v4839, 0
        %4843 = vmatprep.subr.bf16.mxu0 0
        %4844 = vmatpush1.bf16.msra.mxu0 %v4767
        %4845 = vmatprep.subr.bf16.mxu0 0
        %4846 = vmatpush1.bf16.msra.mxu0 0
        %4847 = vmatprep.subr.bf16.mxu0 0
        %4848 = vmatpush1.bf16.msra.mxu0 0
        %4849 = vmatprep.subr.bf16.mxu0 0
        %4850 = vmatpush1.bf16.msra.mxu0 0
        %4851 = vmatprep.subr.bf16.mxu0 0
        %4852 = vmatpush1.bf16.msra.mxu0 0
        %4853 = vmatprep.subr.bf16.mxu0 0
        %4854 = vmatpush1.bf16.msra.mxu0 0
        %4855 = vmatprep.subr.bf16.mxu0 0
        %4856 = vmatpush1.bf16.msra.mxu0 0
        %4857 = vmatprep.subr.bf16.mxu0 0
        %4858 = vmatpush1.bf16.msra.mxu0 0
        %4859 = vmatprep.subr.bf16.mxu0 0
        %4860 = vmatpush1.bf16.msra.mxu0 0
        %4861 = vmatprep.subr.bf16.mxu0 0
        %4862 = vmatpush1.bf16.msra.mxu0 0
        %4863 = vmatprep.subr.bf16.mxu0 0
        %4864 = vmatpush1.bf16.msra.mxu0 0
        %4865 = vmatprep.subr.bf16.mxu0 0
        %4866 = vmatpush1.bf16.msra.mxu0 0
        %4867 = vmatprep.subr.bf16.mxu0 0
        %4868 = vmatpush1.bf16.msra.mxu0 0
        %4869 = vmatprep.subr.bf16.mxu0 0
        %4870 = vmatpush1.bf16.msra.mxu0 0
        %4871 = vmatprep.subr.bf16.mxu0 0
        %4872 = vmatpush1.bf16.msra.mxu0 0
        %4873 = vmatprep.subr.bf16.mxu0 0
        %4874 = vmatpush1.bf16.msra.mxu0 0
        %4875 = vmatprep.mubr.bf16.mxu0 0
        %4876 = vmatmul.mubr.bf16.gmra.mrb[0].mxu0 %v4841
        %v4877 = vpop.f32.mrb[0].mxu0
        %v4878 = vadd.f32 0.0, %v4877
        %v4879 = vpop.f32.mrb[0].mxu0
        %v4880 = vpop.f32.mrb[0].mxu0
        %v4881 = vadd.f32 0.0, %v4880
        %v4882 = vpop.f32.mrb[0].mxu0
        %4883 = vdwg.mxu0
        %v4884 = vpack.c.bf16 %v4881, %v4878
        %4886 = vrot.lane.b32.xlu0 %v4765, 96
        %v4887 = vpop.permute.xlu0 %4886
        %4889 = vrot.lane.b32.xlu0 %v4766, 96
        %v4890 = vpop.permute.xlu0 %4889
        %v4892 = vsel %vm826, %v4887, 0
        %v4895 = vsel %vm826, %v4890, 0
        %4897 = vmatprep.subr.bf16.mxu0 0
        %4898 = vmatpush1.bf16.xpose.msra.mxu0 %v4895
        %4899 = vmatprep.subr.bf16.mxu0 0
        %4900 = vmatpush1.bf16.xpose.msra.mxu0 0
        %4901 = vmatprep.subr.bf16.mxu0 0
        %4902 = vmatpush1.bf16.xpose.msra.mxu0 0
        %4903 = vmatprep.subr.bf16.mxu0 0
        %4904 = vmatpush1.bf16.xpose.msra.mxu0 0
        %4905 = vmatprep.subr.bf16.mxu0 0
        %4906 = vmatpush1.bf16.xpose.msra.mxu0 0
        %4907 = vmatprep.subr.bf16.mxu0 0
        %4908 = vmatpush1.bf16.xpose.msra.mxu0 0
        %4909 = vmatprep.subr.bf16.mxu0 0
        %4910 = vmatpush1.bf16.xpose.msra.mxu0 0
        %4911 = vmatprep.subr.bf16.mxu0 0
        %4912 = vmatpush1.bf16.xpose.msra.mxu0 0
        %4913 = vmatprep.subr.bf16.mxu0 0
        %4914 = vmatpush1.bf16.xpose.msra.mxu0 0
        %4915 = vmatprep.subr.bf16.mxu0 0
        %4916 = vmatpush1.bf16.xpose.msra.mxu0 0
        %4917 = vmatprep.subr.bf16.mxu0 0
        %4918 = vmatpush1.bf16.xpose.msra.mxu0 0
        %4919 = vmatprep.subr.bf16.mxu0 0
        %4920 = vmatpush1.bf16.xpose.msra.mxu0 0
        %4921 = vmatprep.subr.bf16.mxu0 0
        %4922 = vmatpush1.bf16.xpose.msra.mxu0 0
        %4923 = vmatprep.subr.bf16.mxu0 0
        %4924 = vmatpush1.bf16.xpose.msra.mxu0 0
        %4925 = vmatprep.subr.bf16.mxu0 0
        %4926 = vmatpush1.bf16.xpose.msra.mxu0 0
        %4927 = vmatprep.subr.bf16.mxu0 0
        %4928 = vmatpush1.bf16.xpose.msra.mxu0 0
        %4929 = vmatprep.mubr.bf16.mxu0 0
        %4930 = vmatmul.mubr.bf16.gmra.mrb[0].mxu0 %v4892
        %v4931 = vpop.f32.mrb[0].mxu0
        %v4932 = vadd.f32 %v540, %v4931
        %v4933 = vpop.f32.mrb[0].mxu0
        %v4934 = vpop.f32.mrb[0].mxu0
        %v4935 = vadd.f32 %v540, %v4934
        %v4936 = vpop.f32.mrb[0].mxu0
        %4937 = vdwg.mxu0
        %v4938 = vsel %vm874, %v4932, -inf
        %4939 = vmax.xlane.f32.xlu0 %v4938
        %v4940 = vpop.xlane.xlu0 %4939
        %v4941 = vsel %vm874, %v4935, -inf
        %4942 = vmax.xlane.f32.xlu0 %v4941
        %v4943 = vpop.xlane.xlu0 %4942
        %v4944 = vsub.f32 %v4932, %v4940
        %v4945 = vsub.f32 %v4935, %v4943
        %v4946 = vmul.f32 %v4944, 1.442695
        %v4947 = vpow.pop %v4946
        %v4948 = vmul.f32 %v4945, 1.442695
        %v4949 = vpow.pop %v4948
        %v4950 = vsel %vm874, %v4947, 0.0
        %4951 = vadd.xlane.f32.xlu0 %v4950
        %v4952 = vpop.xlane.xlu0 %4951
        %v4953 = vsel %vm874, %v4949, 0.0
        %4954 = vadd.xlane.f32.xlu0 %v4953
        %v4955 = vpop.xlane.xlu0 %4954
        %v4956 = vrcp.pop %v4952
        %v4957 = vmul.f32 1.0, %v4956
        %v4958 = vrcp.pop %v4955
        %v4959 = vmul.f32 1.0, %v4958
        %v4960 = vmul.f32 %v4947, %v4957
        %v4961 = vmul.f32 %v4949, %v4959
        %v4962 = vpack.c.bf16 %v4961, %v4960
        %4964 = vrot.lane.b32.xlu0 %v4767, 96
        %v4965 = vpop.permute.xlu0 %4964
        %v4968 = vsel %vm874, %v4962, 0
        %4970 = vmatprep.subr.bf16.mxu0 0
        %4971 = vmatpush1.bf16.msra.mxu0 %v4965
        %4972 = vmatprep.subr.bf16.mxu0 0
        %4973 = vmatpush1.bf16.msra.mxu0 0
        %4974 = vmatprep.subr.bf16.mxu0 0
        %4975 = vmatpush1.bf16.msra.mxu0 0
        %4976 = vmatprep.subr.bf16.mxu0 0
        %4977 = vmatpush1.bf16.msra.mxu0 0
        %4978 = vmatprep.subr.bf16.mxu0 0
        %4979 = vmatpush1.bf16.msra.mxu0 0
        %4980 = vmatprep.subr.bf16.mxu0 0
        %4981 = vmatpush1.bf16.msra.mxu0 0
        %4982 = vmatprep.subr.bf16.mxu0 0
        %4983 = vmatpush1.bf16.msra.mxu0 0
        %4984 = vmatprep.subr.bf16.mxu0 0
        %4985 = vmatpush1.bf16.msra.mxu0 0
        %4986 = vmatprep.subr.bf16.mxu0 0
        %4987 = vmatpush1.bf16.msra.mxu0 0
        %4988 = vmatprep.subr.bf16.mxu0 0
        %4989 = vmatpush1.bf16.msra.mxu0 0
        %4990 = vmatprep.subr.bf16.mxu0 0
        %4991 = vmatpush1.bf16.msra.mxu0 0
        %4992 = vmatprep.subr.bf16.mxu0 0
        %4993 = vmatpush1.bf16.msra.mxu0 0
        %4994 = vmatprep.subr.bf16.mxu0 0
        %4995 = vmatpush1.bf16.msra.mxu0 0
        %4996 = vmatprep.subr.bf16.mxu0 0
        %4997 = vmatpush1.bf16.msra.mxu0 0
        %4998 = vmatprep.subr.bf16.mxu0 0
        %4999 = vmatpush1.bf16.msra.mxu0 0
        %5000 = vmatprep.subr.bf16.mxu0 0
        %5001 = vmatpush1.bf16.msra.mxu0 0
        %5002 = vmatprep.mubr.bf16.mxu0 0
        %5003 = vmatmul.mubr.bf16.gmra.mrb[0].mxu0 %v4968
        %v5004 = vpop.f32.mrb[0].mxu0
        %v5005 = vadd.f32 0.0, %v5004
        %v5006 = vpop.f32.mrb[0].mxu0
        %v5007 = vpop.f32.mrb[0].mxu0
        %v5008 = vadd.f32 0.0, %v5007
        %v5009 = vpop.f32.mrb[0].mxu0
        %5010 = vdwg.mxu0
        %v5011 = vpack.c.bf16 %v5008, %v5005
        %v5016 = vunpack.c.l.b16 %v4751
        %v5017 = vunpack.c.l.b16 %v4752
        %v5018 = vunpack.c.l.b16 %v4753
        %v5019 = vunpack.c.l.b16 %v4754
        %v5020 = vpack.c.b16 %v5017, %v5016
        %v5021 = vpack.c.b16 %v5019, %v5018
        %v5025 = vsel %vm826, %v5011, 0
        %5027 = vmatprep.subr.bf16.mxu0 0
        %5028 = vmatpush1.bf16.msra.mxu0 %v5020
        %5029 = vmatprep.subr.bf16.mxu0 0
        %5030 = vmatpush1.bf16.msra.mxu0 %v5021
        %5031 = vmatprep.subr.bf16.mxu0 0
        %5032 = vmatpush1.bf16.msra.mxu0 0
        %5033 = vmatprep.subr.bf16.mxu0 0
        %5034 = vmatpush1.bf16.msra.mxu0 0
        %5035 = vmatprep.subr.bf16.mxu0 0
        %5036 = vmatpush1.bf16.msra.mxu0 0
        %5037 = vmatprep.subr.bf16.mxu0 0
        %5038 = vmatpush1.bf16.msra.mxu0 0
        %5039 = vmatprep.subr.bf16.mxu0 0
        %5040 = vmatpush1.bf16.msra.mxu0 0
        %5041 = vmatprep.subr.bf16.mxu0 0
        %5042 = vmatpush1.bf16.msra.mxu0 0
        %5043 = vmatprep.subr.bf16.mxu0 0
        %5044 = vmatpush1.bf16.msra.mxu0 0
        %5045 = vmatprep.subr.bf16.mxu0 0
        %5046 = vmatpush1.bf16.msra.mxu0 0
        %5047 = vmatprep.subr.bf16.mxu0 0
        %5048 = vmatpush1.bf16.msra.mxu0 0
        %5049 = vmatprep.subr.bf16.mxu0 0
        %5050 = vmatpush1.bf16.msra.mxu0 0
        %5051 = vmatprep.subr.bf16.mxu0 0
        %5052 = vmatpush1.bf16.msra.mxu0 0
        %5053 = vmatprep.subr.bf16.mxu0 0
        %5054 = vmatpush1.bf16.msra.mxu0 0
        %5055 = vmatprep.subr.bf16.mxu0 0
        %5056 = vmatpush1.bf16.msra.mxu0 0
        %5057 = vmatprep.subr.bf16.mxu0 0
        %5058 = vmatpush1.bf16.msra.mxu0 0
        %5059 = vmatprep.mubr.bf16.mxu0 0
        %5060 = vmatmul.mubr.bf16.gmra.mrb[0].mxu0 %v5025
        %v5061 = vpop.f32.mrb[0].mxu0
        %v5062 = vadd.f32 0.0, %v5061
        %v5063 = vpop.f32.mrb[0].mxu0
        %v5064 = vpop.f32.mrb[0].mxu0
        %v5065 = vadd.f32 0.0, %v5064
        %v5066 = vpop.f32.mrb[0].mxu0
        %5067 = vdwg.mxu0
        %v5072 = vunpack.c.l.b16 %v4747
        %v5073 = vunpack.c.l.b16 %v4748
        %v5074 = vunpack.c.l.b16 %v4749
        %v5075 = vunpack.c.l.b16 %v4750
        %v5076 = vpack.c.b16 %v5073, %v5072
        %v5077 = vpack.c.b16 %v5075, %v5074
        %v5081 = vsel %vm826, %v4884, 0
        %5083 = vmatprep.subr.bf16.mxu0 0
        %5084 = vmatpush1.bf16.msra.mxu0 %v5076
        %5085 = vmatprep.subr.bf16.mxu0 0
        %5086 = vmatpush1.bf16.msra.mxu0 %v5077
        %5087 = vmatprep.subr.bf16.mxu0 0
        %5088 = vmatpush1.bf16.msra.mxu0 0
        %5089 = vmatprep.subr.bf16.mxu0 0
        %5090 = vmatpush1.bf16.msra.mxu0 0
        %5091 = vmatprep.subr.bf16.mxu0 0
        %5092 = vmatpush1.bf16.msra.mxu0 0
        %5093 = vmatprep.subr.bf16.mxu0 0
        %5094 = vmatpush1.bf16.msra.mxu0 0
        %5095 = vmatprep.subr.bf16.mxu0 0
        %5096 = vmatpush1.bf16.msra.mxu0 0
        %5097 = vmatprep.subr.bf16.mxu0 0
        %5098 = vmatpush1.bf16.msra.mxu0 0
        %5099 = vmatprep.subr.bf16.mxu0 0
        %5100 = vmatpush1.bf16.msra.mxu0 0
        %5101 = vmatprep.subr.bf16.mxu0 0
        %5102 = vmatpush1.bf16.msra.mxu0 0
        %5103 = vmatprep.subr.bf16.mxu0 0
        %5104 = vmatpush1.bf16.msra.mxu0 0
        %5105 = vmatprep.subr.bf16.mxu0 0
        %5106 = vmatpush1.bf16.msra.mxu0 0
        %5107 = vmatprep.subr.bf16.mxu0 0
        %5108 = vmatpush1.bf16.msra.mxu0 0
        %5109 = vmatprep.subr.bf16.mxu0 0
        %5110 = vmatpush1.bf16.msra.mxu0 0
        %5111 = vmatprep.subr.bf16.mxu0 0
        %5112 = vmatpush1.bf16.msra.mxu0 0
        %5113 = vmatprep.subr.bf16.mxu0 0
        %5114 = vmatpush1.bf16.msra.mxu0 0
        %5115 = vmatprep.mubr.bf16.mxu0 0
        %5116 = vmatmul.mubr.bf16.gmra.mrb[0].mxu0 %v5081
        %v5117 = vpop.f32.mrb[0].mxu0
        %v5118 = vadd.f32 %v5062, %v5117
        %v5119 = vpop.f32.mrb[0].mxu0
        %v5120 = vpop.f32.mrb[0].mxu0
        %v5121 = vadd.f32 %v5065, %v5120
        %v5122 = vpop.f32.mrb[0].mxu0
        %5123 = vdwg.mxu0
        %5124 = vrot.lane.b32.xlu0 %v4765, 64
        %v5125 = vpop.permute.xlu0 %5124
        %5126 = vrot.lane.b32.xlu0 %v4766, 64
        %v5127 = vpop.permute.xlu0 %5126
        %v5129 = vsel %vm826, %v5125, 0
        %v5132 = vsel %vm826, %v5127, 0
        %5134 = vmatprep.subr.bf16.mxu0 0
        %5135 = vmatpush1.bf16.xpose.msra.mxu0 %v5132
        %5136 = vmatprep.subr.bf16.mxu0 0
        %5137 = vmatpush1.bf16.xpose.msra.mxu0 0
        %5138 = vmatprep.subr.bf16.mxu0 0
        %5139 = vmatpush1.bf16.xpose.msra.mxu0 0
        %5140 = vmatprep.subr.bf16.mxu0 0
        %5141 = vmatpush1.bf16.xpose.msra.mxu0 0
        %5142 = vmatprep.subr.bf16.mxu0 0
        %5143 = vmatpush1.bf16.xpose.msra.mxu0 0
        %5144 = vmatprep.subr.bf16.mxu0 0
        %5145 = vmatpush1.bf16.xpose.msra.mxu0 0
        %5146 = vmatprep.subr.bf16.mxu0 0
        %5147 = vmatpush1.bf16.xpose.msra.mxu0 0
        %5148 = vmatprep.subr.bf16.mxu0 0
        %5149 = vmatpush1.bf16.xpose.msra.mxu0 0
        %5150 = vmatprep.subr.bf16.mxu0 0
        %5151 = vmatpush1.bf16.xpose.msra.mxu0 0
        %5152 = vmatprep.subr.bf16.mxu0 0
        %5153 = vmatpush1.bf16.xpose.msra.mxu0 0
        %5154 = vmatprep.subr.bf16.mxu0 0
        %5155 = vmatpush1.bf16.xpose.msra.mxu0 0
        %5156 = vmatprep.subr.bf16.mxu0 0
        %5157 = vmatpush1.bf16.xpose.msra.mxu0 0
        %5158 = vmatprep.subr.bf16.mxu0 0
        %5159 = vmatpush1.bf16.xpose.msra.mxu0 0
        %5160 = vmatprep.subr.bf16.mxu0 0
        %5161 = vmatpush1.bf16.xpose.msra.mxu0 0
        %5162 = vmatprep.subr.bf16.mxu0 0
        %5163 = vmatpush1.bf16.xpose.msra.mxu0 0
        %5164 = vmatprep.subr.bf16.mxu0 0
        %5165 = vmatpush1.bf16.xpose.msra.mxu0 0
        %5166 = vmatprep.mubr.bf16.mxu0 0
        %5167 = vmatmul.mubr.bf16.gmra.mrb[0].mxu0 %v5129
        %v5168 = vpop.f32.mrb[0].mxu0
        %v5169 = vadd.f32 %v540, %v5168
        %v5170 = vpop.f32.mrb[0].mxu0
        %v5171 = vpop.f32.mrb[0].mxu0
        %v5172 = vadd.f32 %v540, %v5171
        %v5173 = vpop.f32.mrb[0].mxu0
        %5174 = vdwg.mxu0
        %v5175 = vsel %vm874, %v5169, -inf
        %5176 = vmax.xlane.f32.xlu0 %v5175
        %v5177 = vpop.xlane.xlu0 %5176
        %v5178 = vsel %vm874, %v5172, -inf
        %5179 = vmax.xlane.f32.xlu0 %v5178
        %v5180 = vpop.xlane.xlu0 %5179
        %v5181 = vsub.f32 %v5169, %v5177
        %v5182 = vsub.f32 %v5172, %v5180
        %v5183 = vmul.f32 %v5181, 1.442695
        %v5184 = vpow.pop %v5183
        %v5185 = vmul.f32 %v5182, 1.442695
        %v5186 = vpow.pop %v5185
        %v5187 = vsel %vm874, %v5184, 0.0
        %5188 = vadd.xlane.f32.xlu0 %v5187
        %v5189 = vpop.xlane.xlu0 %5188
        %v5190 = vsel %vm874, %v5186, 0.0
        %5191 = vadd.xlane.f32.xlu0 %v5190
        %v5192 = vpop.xlane.xlu0 %5191
        %v5193 = vrcp.pop %v5189
        %v5194 = vmul.f32 1.0, %v5193
        %v5195 = vrcp.pop %v5192
        %v5196 = vmul.f32 1.0, %v5195
        %v5197 = vmul.f32 %v5184, %v5194
        %v5198 = vmul.f32 %v5186, %v5196
        %v5199 = vpack.c.bf16 %v5198, %v5197
        %5200 = vrot.lane.b32.xlu0 %v4767, 64
        %v5201 = vpop.permute.xlu0 %5200
        %v5204 = vsel %vm874, %v5199, 0
        %5206 = vmatprep.subr.bf16.mxu0 0
        %5207 = vmatpush1.bf16.msra.mxu0 %v5201
        %5208 = vmatprep.subr.bf16.mxu0 0
        %5209 = vmatpush1.bf16.msra.mxu0 0
        %5210 = vmatprep.subr.bf16.mxu0 0
        %5211 = vmatpush1.bf16.msra.mxu0 0
        %5212 = vmatprep.subr.bf16.mxu0 0
        %5213 = vmatpush1.bf16.msra.mxu0 0
        %5214 = vmatprep.subr.bf16.mxu0 0
        %5215 = vmatpush1.bf16.msra.mxu0 0
        %5216 = vmatprep.subr.bf16.mxu0 0
        %5217 = vmatpush1.bf16.msra.mxu0 0
        %5218 = vmatprep.subr.bf16.mxu0 0
        %5219 = vmatpush1.bf16.msra.mxu0 0
        %5220 = vmatprep.subr.bf16.mxu0 0
        %5221 = vmatpush1.bf16.msra.mxu0 0
        %5222 = vmatprep.subr.bf16.mxu0 0
        %5223 = vmatpush1.bf16.msra.mxu0 0
        %5224 = vmatprep.subr.bf16.mxu0 0
        %5225 = vmatpush1.bf16.msra.mxu0 0
        %5226 = vmatprep.subr.bf16.mxu0 0
        %5227 = vmatpush1.bf16.msra.mxu0 0
        %5228 = vmatprep.subr.bf16.mxu0 0
        %5229 = vmatpush1.bf16.msra.mxu0 0
        %5230 = vmatprep.subr.bf16.mxu0 0
        %5231 = vmatpush1.bf16.msra.mxu0 0
        %5232 = vmatprep.subr.bf16.mxu0 0
        %5233 = vmatpush1.bf16.msra.mxu0 0
        %5234 = vmatprep.subr.bf16.mxu0 0
        %5235 = vmatpush1.bf16.msra.mxu0 0
        %5236 = vmatprep.subr.bf16.mxu0 0
        %5237 = vmatpush1.bf16.msra.mxu0 0
        %5238 = vmatprep.mubr.bf16.mxu0 0
        %5239 = vmatmul.mubr.bf16.gmra.mrb[0].mxu0 %v5204
        %v5240 = vpop.f32.mrb[0].mxu0
        %v5241 = vadd.f32 0.0, %v5240
        %v5242 = vpop.f32.mrb[0].mxu0
        %v5243 = vpop.f32.mrb[0].mxu0
        %v5244 = vadd.f32 0.0, %v5243
        %v5245 = vpop.f32.mrb[0].mxu0
        %5246 = vdwg.mxu0
        %v5247 = vpack.c.bf16 %v5244, %v5241
        %v5252 = vunpack.c.l.b16 %v4755
        %v5253 = vunpack.c.l.b16 %v4756
        %v5254 = vunpack.c.l.b16 %v4757
        %v5255 = vunpack.c.l.b16 %v4758
        %v5256 = vpack.c.b16 %v5253, %v5252
        %v5257 = vpack.c.b16 %v5255, %v5254
        %v5261 = vsel %vm826, %v5247, 0
        %5263 = vmatprep.subr.bf16.mxu0 0
        %5264 = vmatpush1.bf16.msra.mxu0 %v5256
        %5265 = vmatprep.subr.bf16.mxu0 0
        %5266 = vmatpush1.bf16.msra.mxu0 %v5257
        %5267 = vmatprep.subr.bf16.mxu0 0
        %5268 = vmatpush1.bf16.msra.mxu0 0
        %5269 = vmatprep.subr.bf16.mxu0 0
        %5270 = vmatpush1.bf16.msra.mxu0 0
        %5271 = vmatprep.subr.bf16.mxu0 0
        %5272 = vmatpush1.bf16.msra.mxu0 0
        %5273 = vmatprep.subr.bf16.mxu0 0
        %5274 = vmatpush1.bf16.msra.mxu0 0
        %5275 = vmatprep.subr.bf16.mxu0 0
        %5276 = vmatpush1.bf16.msra.mxu0 0
        %5277 = vmatprep.subr.bf16.mxu0 0
        %5278 = vmatpush1.bf16.msra.mxu0 0
        %5279 = vmatprep.subr.bf16.mxu0 0
        %5280 = vmatpush1.bf16.msra.mxu0 0
        %5281 = vmatprep.subr.bf16.mxu0 0
        %5282 = vmatpush1.bf16.msra.mxu0 0
        %5283 = vmatprep.subr.bf16.mxu0 0
        %5284 = vmatpush1.bf16.msra.mxu0 0
        %5285 = vmatprep.subr.bf16.mxu0 0
        %5286 = vmatpush1.bf16.msra.mxu0 0
        %5287 = vmatprep.subr.bf16.mxu0 0
        %5288 = vmatpush1.bf16.msra.mxu0 0
        %5289 = vmatprep.subr.bf16.mxu0 0
        %5290 = vmatpush1.bf16.msra.mxu0 0
        %5291 = vmatprep.subr.bf16.mxu0 0
        %5292 = vmatpush1.bf16.msra.mxu0 0
        %5293 = vmatprep.subr.bf16.mxu0 0
        %5294 = vmatpush1.bf16.msra.mxu0 0
        %5295 = vmatprep.mubr.bf16.mxu0 0
        %5296 = vmatmul.mubr.bf16.gmra.mrb[0].mxu0 %v5261
        %v5297 = vpop.f32.mrb[0].mxu0
        %v5298 = vadd.f32 0.0, %v5297
        %v5299 = vpop.f32.mrb[0].mxu0
        %v5300 = vpop.f32.mrb[0].mxu0
        %v5301 = vadd.f32 0.0, %v5300
        %v5302 = vpop.f32.mrb[0].mxu0
        %5303 = vdwg.mxu0
        %v5304 = vadd.f32 %v5118, %v5298
        %v5305 = vadd.f32 %v5121, %v5301
        %5306 = vrot.lane.b32.xlu0 %v4765, 32
        %v5307 = vpop.permute.xlu0 %5306
        %5308 = vrot.lane.b32.xlu0 %v4766, 32
        %v5309 = vpop.permute.xlu0 %5308
        %v5311 = vsel %vm826, %v5307, 0
        %v5314 = vsel %vm826, %v5309, 0
        %5316 = vmatprep.subr.bf16.mxu0 0
        %5317 = vmatpush1.bf16.xpose.msra.mxu0 %v5314
        %5318 = vmatprep.subr.bf16.mxu0 0
        %5319 = vmatpush1.bf16.xpose.msra.mxu0 0
        %5320 = vmatprep.subr.bf16.mxu0 0
        %5321 = vmatpush1.bf16.xpose.msra.mxu0 0
        %5322 = vmatprep.subr.bf16.mxu0 0
        %5323 = vmatpush1.bf16.xpose.msra.mxu0 0
        %5324 = vmatprep.subr.bf16.mxu0 0
        %5325 = vmatpush1.bf16.xpose.msra.mxu0 0
        %5326 = vmatprep.subr.bf16.mxu0 0
        %5327 = vmatpush1.bf16.xpose.msra.mxu0 0
        %5328 = vmatprep.subr.bf16.mxu0 0
        %5329 = vmatpush1.bf16.xpose.msra.mxu0 0
        %5330 = vmatprep.subr.bf16.mxu0 0
        %5331 = vmatpush1.bf16.xpose.msra.mxu0 0
        %5332 = vmatprep.subr.bf16.mxu0 0
        %5333 = vmatpush1.bf16.xpose.msra.mxu0 0
        %5334 = vmatprep.subr.bf16.mxu0 0
        %5335 = vmatpush1.bf16.xpose.msra.mxu0 0
        %5336 = vmatprep.subr.bf16.mxu0 0
        %5337 = vmatpush1.bf16.xpose.msra.mxu0 0
        %5338 = vmatprep.subr.bf16.mxu0 0
        %5339 = vmatpush1.bf16.xpose.msra.mxu0 0
        %5340 = vmatprep.subr.bf16.mxu0 0
        %5341 = vmatpush1.bf16.xpose.msra.mxu0 0
        %5342 = vmatprep.subr.bf16.mxu0 0
        %5343 = vmatpush1.bf16.xpose.msra.mxu0 0
        %5344 = vmatprep.subr.bf16.mxu0 0
        %5345 = vmatpush1.bf16.xpose.msra.mxu0 0
        %5346 = vmatprep.subr.bf16.mxu0 0
        %5347 = vmatpush1.bf16.xpose.msra.mxu0 0
        %5348 = vmatprep.mubr.bf16.mxu0 0
        %5349 = vmatmul.mubr.bf16.gmra.mrb[0].mxu0 %v5311
        %v5350 = vpop.f32.mrb[0].mxu0
        %v5351 = vadd.f32 %v540, %v5350
        %v5352 = vpop.f32.mrb[0].mxu0
        %v5353 = vpop.f32.mrb[0].mxu0
        %v5354 = vadd.f32 %v540, %v5353
        %v5355 = vpop.f32.mrb[0].mxu0
        %5356 = vdwg.mxu0
        %v5357 = vsel %vm874, %v5351, -inf
        %5358 = vmax.xlane.f32.xlu0 %v5357
        %v5359 = vpop.xlane.xlu0 %5358
        %v5360 = vsel %vm874, %v5354, -inf
        %5361 = vmax.xlane.f32.xlu0 %v5360
        %v5362 = vpop.xlane.xlu0 %5361
        %v5363 = vsub.f32 %v5351, %v5359
        %v5364 = vsub.f32 %v5354, %v5362
        %v5365 = vmul.f32 %v5363, 1.442695
        %v5366 = vpow.pop %v5365
        %v5367 = vmul.f32 %v5364, 1.442695
        %v5368 = vpow.pop %v5367
        %v5369 = vsel %vm874, %v5366, 0.0
        %5370 = vadd.xlane.f32.xlu0 %v5369
        %v5371 = vpop.xlane.xlu0 %5370
        %v5372 = vsel %vm874, %v5368, 0.0
        %5373 = vadd.xlane.f32.xlu0 %v5372
        %v5374 = vpop.xlane.xlu0 %5373
        %v5375 = vrcp.pop %v5371
        %v5376 = vmul.f32 1.0, %v5375
        %v5377 = vrcp.pop %v5374
        %v5378 = vmul.f32 1.0, %v5377
        %v5379 = vmul.f32 %v5366, %v5376
        %v5380 = vmul.f32 %v5368, %v5378
        %v5381 = vpack.c.bf16 %v5380, %v5379
        %5382 = vrot.lane.b32.xlu0 %v4767, 32
        %v5383 = vpop.permute.xlu0 %5382
        %v5386 = vsel %vm874, %v5381, 0
        %5388 = vmatprep.subr.bf16.mxu0 0
        %5389 = vmatpush1.bf16.msra.mxu0 %v5383
        %5390 = vmatprep.subr.bf16.mxu0 0
        %5391 = vmatpush1.bf16.msra.mxu0 0
        %5392 = vmatprep.subr.bf16.mxu0 0
        %5393 = vmatpush1.bf16.msra.mxu0 0
        %5394 = vmatprep.subr.bf16.mxu0 0
        %5395 = vmatpush1.bf16.msra.mxu0 0
        %5396 = vmatprep.subr.bf16.mxu0 0
        %5397 = vmatpush1.bf16.msra.mxu0 0
        %5398 = vmatprep.subr.bf16.mxu0 0
        %5399 = vmatpush1.bf16.msra.mxu0 0
        %5400 = vmatprep.subr.bf16.mxu0 0
        %5401 = vmatpush1.bf16.msra.mxu0 0
        %5402 = vmatprep.subr.bf16.mxu0 0
        %5403 = vmatpush1.bf16.msra.mxu0 0
        %5404 = vmatprep.subr.bf16.mxu0 0
        %5405 = vmatpush1.bf16.msra.mxu0 0
        %5406 = vmatprep.subr.bf16.mxu0 0
        %5407 = vmatpush1.bf16.msra.mxu0 0
        %5408 = vmatprep.subr.bf16.mxu0 0
        %5409 = vmatpush1.bf16.msra.mxu0 0
        %5410 = vmatprep.subr.bf16.mxu0 0
        %5411 = vmatpush1.bf16.msra.mxu0 0
        %5412 = vmatprep.subr.bf16.mxu0 0
        %5413 = vmatpush1.bf16.msra.mxu0 0
        %5414 = vmatprep.subr.bf16.mxu0 0
        %5415 = vmatpush1.bf16.msra.mxu0 0
        %5416 = vmatprep.subr.bf16.mxu0 0
        %5417 = vmatpush1.bf16.msra.mxu0 0
        %5418 = vmatprep.subr.bf16.mxu0 0
        %5419 = vmatpush1.bf16.msra.mxu0 0
        %5420 = vmatprep.mubr.bf16.mxu0 0
        %5421 = vmatmul.mubr.bf16.gmra.mrb[0].mxu0 %v5386
        %v5422 = vpop.f32.mrb[0].mxu0
        %v5423 = vadd.f32 0.0, %v5422
        %v5424 = vpop.f32.mrb[0].mxu0
        %v5425 = vpop.f32.mrb[0].mxu0
        %v5426 = vadd.f32 0.0, %v5425
        %v5427 = vpop.f32.mrb[0].mxu0
        %5428 = vdwg.mxu0
        %v5429 = vpack.c.bf16 %v5426, %v5423
        %v5434 = vunpack.c.l.b16 %v4759
        %v5435 = vunpack.c.l.b16 %v4760
        %v5436 = vunpack.c.l.b16 %v4761
        %v5437 = vunpack.c.l.b16 %v4762
        %v5438 = vpack.c.b16 %v5435, %v5434
        %v5439 = vpack.c.b16 %v5437, %v5436
        %v5443 = vsel %vm826, %v5429, 0
        %5445 = vmatprep.subr.bf16.mxu0 0
        %5446 = vmatpush1.bf16.msra.mxu0 %v5438
        %5447 = vmatprep.subr.bf16.mxu0 0
        %5448 = vmatpush1.bf16.msra.mxu0 %v5439
        %5449 = vmatprep.subr.bf16.mxu0 0
        %5450 = vmatpush1.bf16.msra.mxu0 0
        %5451 = vmatprep.subr.bf16.mxu0 0
        %5452 = vmatpush1.bf16.msra.mxu0 0
        %5453 = vmatprep.subr.bf16.mxu0 0
        %5454 = vmatpush1.bf16.msra.mxu0 0
        %5455 = vmatprep.subr.bf16.mxu0 0
        %5456 = vmatpush1.bf16.msra.mxu0 0
        %5457 = vmatprep.subr.bf16.mxu0 0
        %5458 = vmatpush1.bf16.msra.mxu0 0
        %5459 = vmatprep.subr.bf16.mxu0 0
        %5460 = vmatpush1.bf16.msra.mxu0 0
        %5461 = vmatprep.subr.bf16.mxu0 0
        %5462 = vmatpush1.bf16.msra.mxu0 0
        %5463 = vmatprep.subr.bf16.mxu0 0
        %5464 = vmatpush1.bf16.msra.mxu0 0
        %5465 = vmatprep.subr.bf16.mxu0 0
        %5466 = vmatpush1.bf16.msra.mxu0 0
        %5467 = vmatprep.subr.bf16.mxu0 0
        %5468 = vmatpush1.bf16.msra.mxu0 0
        %5469 = vmatprep.subr.bf16.mxu0 0
        %5470 = vmatpush1.bf16.msra.mxu0 0
        %5471 = vmatprep.subr.bf16.mxu0 0
        %5472 = vmatpush1.bf16.msra.mxu0 0
        %5473 = vmatprep.subr.bf16.mxu0 0
        %5474 = vmatpush1.bf16.msra.mxu0 0
        %5475 = vmatprep.subr.bf16.mxu0 0
        %5476 = vmatpush1.bf16.msra.mxu0 0
        %5477 = vmatprep.mubr.bf16.mxu0 0
        %5478 = vmatmul.mubr.bf16.gmra.mrb[0].mxu0 %v5443
        %v5479 = vpop.f32.mrb[0].mxu0
        %v5480 = vadd.f32 0.0, %v5479
        %v5481 = vpop.f32.mrb[0].mxu0
        %v5482 = vpop.f32.mrb[0].mxu0
        %v5483 = vadd.f32 0.0, %v5482
        %v5484 = vpop.f32.mrb[0].mxu0
        %5485 = vdwg.mxu0
        %v5486 = vadd.f32 %v5304, %v5480
        %v5487 = vadd.f32 %v5305, %v5483
        %s5488 = scalar_lea.vmem %s4, 2
        %v5489 = vld [vmem:[%s5488] sm:$0x1]
        %v5491 = vlaneseq
        %v5492 = vshrl.u32 %v5491, 7
        %v5493 = vsub.s32 0, %v5492
        %v5494 = vrot.slane %v5489, %v5493
        %v5496 = vadd.f32 %v5486, %v5494
        %v5497 = vadd.f32 %v5487, %v5494
        %v5498 = vadd.f32 %v4480, %v5496
        %v5499 = vadd.f32 %v4481, %v5497
        %s5500 = scalar_lea.vmem %s5, 2
        %v5501 = vld [vmem:[%s5500] sm:$0x1]
        %s5502 = scalar_lea.vmem %s6, 2
        %v5503 = vld [vmem:[%s5502] sm:$0x1]
        %5504 = vadd.xlane.f32.xlu0 %v5498
        %v5505 = vpop.xlane.xlu0 %5504
        %5506 = vadd.xlane.f32.xlu0 %v5499
        %v5507 = vpop.xlane.xlu0 %5506
        %v5508 = vmul.f32 %v5505, %v1565
        %v5509 = vmul.f32 %v5507, %v1565
        %v5510 = vsub.f32 %v5498, %v5508
        %v5511 = vsub.f32 %v5499, %v5509
        %v5512 = vmul.f32 %v5510, %v5510
        %v5513 = vmul.f32 %v5511, %v5511
        %5514 = vadd.xlane.f32.xlu0 %v5512
        %v5515 = vpop.xlane.xlu0 %5514
        %5516 = vadd.xlane.f32.xlu0 %v5513
        %v5517 = vpop.xlane.xlu0 %5516
        %v5518 = vmul.f32 %v5515, %v1565
        %v5519 = vmul.f32 %v5517, %v1565
        %v5520 = vadd.f32 %v5518, 1e-05
        %v5521 = vadd.f32 %v5519, 1e-05
        %v5522 = vrsqrt.pop %v5520
        %v5523 = vrsqrt.pop %v5521
        %v5524 = vmul.f32 %v5510, %v5522
        %v5525 = vmul.f32 %v5511, %v5523
        %v5527 = vlaneseq
        %v5528 = vshrl.u32 %v5527, 7
        %v5529 = vsub.s32 0, %v5528
        %v5530 = vrot.slane %v5501, %v5529
        %v5532 = vmul.f32 %v5524, %v5530
        %v5533 = vmul.f32 %v5525, %v5530
        %v5535 = vlaneseq
        %v5536 = vshrl.u32 %v5535, 7
        %v5537 = vsub.s32 0, %v5536
        %v5538 = vrot.slane %v5503, %v5537
        %v5540 = vadd.f32 %v5532, %v5538
        %v5541 = vadd.f32 %v5533, %v5538
        %v5542 = vpack.c.bf16 %v5541, %v5540
        %s5543 = scalar_lea.vmem [#allocation6], 512
        %v5544 = vld [vmem:[%s5543] sm:$0xff]
        %v5545 = vld [vmem:[%s5543 + $0x8] sm:$0xff]
        %v5546 = vld [vmem:[%s5543 + $0x10] sm:$0xff]
        %v5547 = vld [vmem:[%s5543 + $0x18] sm:$0xff]
        %v5548 = vld [vmem:[%s5543 + $0x20] sm:$0xff]
        %v5549 = vld [vmem:[%s5543 + $0x28] sm:$0xff]
        %v5550 = vld [vmem:[%s5543 + $0x30] sm:$0xff]
        %v5551 = vld [vmem:[%s5543 + $0x38] sm:$0xff]
        %v5552 = vld [vmem:[%s5543 + $0x40] sm:$0xff]
        %v5553 = vld [vmem:[%s5543 + $0x48] sm:$0xff]
        %v5554 = vld [vmem:[%s5543 + $0x50] sm:$0xff]
        %v5555 = vld [vmem:[%s5543 + $0x58] sm:$0xff]
        %v5556 = vld [vmem:[%s5543 + $0x60] sm:$0xff]
        %v5557 = vld [vmem:[%s5543 + $0x68] sm:$0xff]
        %v5558 = vld [vmem:[%s5543 + $0x70] sm:$0xff]
        %v5559 = vld [vmem:[%s5543 + $0x78] sm:$0xff]
        %v5560 = vld [vmem:[%s5543 + $0x80] sm:$0xff]
        %v5561 = vld [vmem:[%s5543 + $0x88] sm:$0xff]
        %v5562 = vld [vmem:[%s5543 + $0x90] sm:$0xff]
        %v5563 = vld [vmem:[%s5543 + $0x98] sm:$0xff]
        %v5564 = vld [vmem:[%s5543 + $0xa0] sm:$0xff]
        %v5565 = vld [vmem:[%s5543 + $0xa8] sm:$0xff]
        %v5566 = vld [vmem:[%s5543 + $0xb0] sm:$0xff]
        %v5567 = vld [vmem:[%s5543 + $0xb8] sm:$0xff]
        %v5568 = vld [vmem:[%s5543 + $0xc0] sm:$0xff]
        %v5569 = vld [vmem:[%s5543 + $0xc8] sm:$0xff]
        %v5570 = vld [vmem:[%s5543 + $0xd0] sm:$0xff]
        %v5571 = vld [vmem:[%s5543 + $0xd8] sm:$0xff]
        %v5572 = vld [vmem:[%s5543 + $0xe0] sm:$0xff]
        %v5573 = vld [vmem:[%s5543 + $0xe8] sm:$0xff]
        %v5574 = vld [vmem:[%s5543 + $0xf0] sm:$0xff]
        %v5575 = vld [vmem:[%s5543 + $0xf8] sm:$0xff]
        %s5576 = scalar_lea.vmem %s8, 8
        %v5577 = vld [vmem:[%s5576] sm:$0xf]
        %v5579 = vlaneseq
        %v5580 = vshrl.u32 %v5579, 7
        %v5581 = vsub.s32 0, %v5580
        %v5582 = vrot.slane %v5577, %v5581
        %v5583 = vlaneseq
        %v5584 = vshrl.u32 %v5583, 7
        %v5585 = vsub.s32 1, %v5584
        %v5586 = vrot.slane %v5577, %v5585
        %v5587 = vlaneseq
        %v5588 = vshrl.u32 %v5587, 7
        %v5589 = vsub.s32 2, %v5588
        %v5590 = vrot.slane %v5577, %v5589
        %v5591 = vlaneseq
        %v5592 = vshrl.u32 %v5591, 7
        %v5593 = vsub.s32 3, %v5592
        %v5594 = vrot.slane %v5577, %v5593
        %v5631 = vunpack.c.l.b16 %v5544
        %v5632 = vunpack.c.h.b16 %v5544
        %v5633 = vunpack.c.l.b16 %v5545
        %v5634 = vunpack.c.h.b16 %v5545
        %v5635 = vunpack.c.l.b16 %v5546
        %v5636 = vunpack.c.h.b16 %v5546
        %v5637 = vunpack.c.l.b16 %v5547
        %v5638 = vunpack.c.h.b16 %v5547
        %v5639 = vunpack.c.l.b16 %v5548
        %v5640 = vunpack.c.h.b16 %v5548
        %v5641 = vunpack.c.l.b16 %v5549
        %v5642 = vunpack.c.h.b16 %v5549
        %v5643 = vunpack.c.l.b16 %v5550
        %v5644 = vunpack.c.h.b16 %v5550
        %v5645 = vunpack.c.l.b16 %v5551
        %v5646 = vunpack.c.h.b16 %v5551
        %v5647 = vunpack.c.l.b16 %v5552
        %v5648 = vunpack.c.h.b16 %v5552
        %v5649 = vunpack.c.l.b16 %v5553
        %v5650 = vunpack.c.h.b16 %v5553
        %v5651 = vunpack.c.l.b16 %v5554
        %v5652 = vunpack.c.h.b16 %v5554
        %v5653 = vunpack.c.l.b16 %v5555
        %v5654 = vunpack.c.h.b16 %v5555
        %v5655 = vunpack.c.l.b16 %v5556
        %v5656 = vunpack.c.h.b16 %v5556
        %v5657 = vunpack.c.l.b16 %v5557
        %v5658 = vunpack.c.h.b16 %v5557
        %v5659 = vunpack.c.l.b16 %v5558
        %v5660 = vunpack.c.h.b16 %v5558
        %v5661 = vunpack.c.l.b16 %v5559
        %v5662 = vunpack.c.h.b16 %v5559
        %v5663 = vunpack.c.l.b16 %v5560
        %v5664 = vunpack.c.h.b16 %v5560
        %v5665 = vunpack.c.l.b16 %v5561
        %v5666 = vunpack.c.h.b16 %v5561
        %v5667 = vunpack.c.l.b16 %v5562
        %v5668 = vunpack.c.h.b16 %v5562
        %v5669 = vunpack.c.l.b16 %v5563
        %v5670 = vunpack.c.h.b16 %v5563
        %v5671 = vunpack.c.l.b16 %v5564
        %v5672 = vunpack.c.h.b16 %v5564
        %v5673 = vunpack.c.l.b16 %v5565
        %v5674 = vunpack.c.h.b16 %v5565
        %v5675 = vunpack.c.l.b16 %v5566
        %v5676 = vunpack.c.h.b16 %v5566
        %v5677 = vunpack.c.l.b16 %v5567
        %v5678 = vunpack.c.h.b16 %v5567
        %v5679 = vunpack.c.l.b16 %v5568
        %v5680 = vunpack.c.h.b16 %v5568
        %v5681 = vunpack.c.l.b16 %v5569
        %v5682 = vunpack.c.h.b16 %v5569
        %v5683 = vunpack.c.l.b16 %v5570
        %v5684 = vunpack.c.h.b16 %v5570
        %v5685 = vunpack.c.l.b16 %v5571
        %v5686 = vunpack.c.h.b16 %v5571
        %v5687 = vunpack.c.l.b16 %v5572
        %v5688 = vunpack.c.h.b16 %v5572
        %v5689 = vunpack.c.l.b16 %v5573
        %v5690 = vunpack.c.h.b16 %v5573
        %v5691 = vunpack.c.l.b16 %v5574
        %v5692 = vunpack.c.h.b16 %v5574
        %v5693 = vunpack.c.l.b16 %v5575
        %v5694 = vunpack.c.h.b16 %v5575
        %v5695 = vpack.c.b16 %v5635, %v5631
        %v5696 = vpack.c.b16 %v5636, %v5632
        %v5697 = vpack.c.b16 %v5637, %v5633
        %v5698 = vpack.c.b16 %v5638, %v5634
        %v5699 = vpack.c.b16 %v5643, %v5639
        %v5700 = vpack.c.b16 %v5644, %v5640
        %v5701 = vpack.c.b16 %v5645, %v5641
        %v5702 = vpack.c.b16 %v5646, %v5642
        %v5703 = vpack.c.b16 %v5651, %v5647
        %v5704 = vpack.c.b16 %v5652, %v5648
        %v5705 = vpack.c.b16 %v5653, %v5649
        %v5706 = vpack.c.b16 %v5654, %v5650
        %v5707 = vpack.c.b16 %v5659, %v5655
        %v5708 = vpack.c.b16 %v5660, %v5656
        %v5709 = vpack.c.b16 %v5661, %v5657
        %v5710 = vpack.c.b16 %v5662, %v5658
        %v5711 = vpack.c.b16 %v5667, %v5663
        %v5712 = vpack.c.b16 %v5668, %v5664
        %v5713 = vpack.c.b16 %v5669, %v5665
        %v5714 = vpack.c.b16 %v5670, %v5666
        %v5715 = vpack.c.b16 %v5675, %v5671
        %v5716 = vpack.c.b16 %v5676, %v5672
        %v5717 = vpack.c.b16 %v5677, %v5673
        %v5718 = vpack.c.b16 %v5678, %v5674
        %v5719 = vpack.c.b16 %v5683, %v5679
        %v5720 = vpack.c.b16 %v5684, %v5680
        %v5721 = vpack.c.b16 %v5685, %v5681
        %v5722 = vpack.c.b16 %v5686, %v5682
        %v5723 = vpack.c.b16 %v5691, %v5687
        %v5724 = vpack.c.b16 %v5692, %v5688
        %v5725 = vpack.c.b16 %v5693, %v5689
        %v5726 = vpack.c.b16 %v5694, %v5690
        %5759 = vmatprep.subr.bf16.mxu0 %v5696
        %5760 = vmatpush1.bf16.msra.mxu0 %v5695
        %5761 = vmatprep.subr.bf16.mxu0 %v5700
        %5762 = vmatpush1.bf16.msra.mxu0 %v5699
        %5763 = vmatprep.subr.bf16.mxu0 %v5704
        %5764 = vmatpush1.bf16.msra.mxu0 %v5703
        %5765 = vmatprep.subr.bf16.mxu0 %v5708
        %5766 = vmatpush1.bf16.msra.mxu0 %v5707
        %5767 = vmatprep.subr.bf16.mxu0 %v5712
        %5768 = vmatpush1.bf16.msra.mxu0 %v5711
        %5769 = vmatprep.subr.bf16.mxu0 %v5716
        %5770 = vmatpush1.bf16.msra.mxu0 %v5715
        %5771 = vmatprep.subr.bf16.mxu0 %v5720
        %5772 = vmatpush1.bf16.msra.mxu0 %v5719
        %5773 = vmatprep.subr.bf16.mxu0 %v5724
        %5774 = vmatpush1.bf16.msra.mxu0 %v5723
        %5775 = vmatprep.subr.bf16.mxu0 0
        %5776 = vmatpush1.bf16.msra.mxu0 0
        %5777 = vmatprep.subr.bf16.mxu0 0
        %5778 = vmatpush1.bf16.msra.mxu0 0
        %5779 = vmatprep.subr.bf16.mxu0 0
        %5780 = vmatpush1.bf16.msra.mxu0 0
        %5781 = vmatprep.subr.bf16.mxu0 0
        %5782 = vmatpush1.bf16.msra.mxu0 0
        %5783 = vmatprep.subr.bf16.mxu0 0
        %5784 = vmatpush1.bf16.msra.mxu0 0
        %5785 = vmatprep.subr.bf16.mxu0 0
        %5786 = vmatpush1.bf16.msra.mxu0 0
        %5787 = vmatprep.subr.bf16.mxu0 0
        %5788 = vmatpush1.bf16.msra.mxu0 0
        %5789 = vmatprep.subr.bf16.mxu0 0
        %5790 = vmatpush1.bf16.msra.mxu0 0
        %5791 = vmatprep.mubr.bf16.mxu0 0
        %5792 = vmatmul.mubr.bf16.gmra.mrb[0].mxu0 %v5542
        %v5793 = vpop.f32.mrb[0].mxu0
        %v5794 = vadd.f32 %v5582, %v5793
        %v5795 = vpop.f32.mrb[0].mxu0
        %v5796 = vadd.f32 %v5586, %v5795
        %v5797 = vpop.f32.mrb[0].mxu0
        %v5798 = vadd.f32 %v5582, %v5797
        %v5799 = vpop.f32.mrb[0].mxu0
        %v5800 = vadd.f32 %v5586, %v5799
        %5801 = vdwg.mxu0
        %5802 = vmatprep.subr.bf16.mxu0 %v5698
        %5803 = vmatpush1.bf16.msra.mxu0 %v5697
        %5804 = vmatprep.subr.bf16.mxu0 %v5702
        %5805 = vmatpush1.bf16.msra.mxu0 %v5701
        %5806 = vmatprep.subr.bf16.mxu0 %v5706
        %5807 = vmatpush1.bf16.msra.mxu0 %v5705
        %5808 = vmatprep.subr.bf16.mxu0 %v5710
        %5809 = vmatpush1.bf16.msra.mxu0 %v5709
        %5810 = vmatprep.subr.bf16.mxu0 %v5714
        %5811 = vmatpush1.bf16.msra.mxu0 %v5713
        %5812 = vmatprep.subr.bf16.mxu0 %v5718
        %5813 = vmatpush1.bf16.msra.mxu0 %v5717
        %5814 = vmatprep.subr.bf16.mxu0 %v5722
        %5815 = vmatpush1.bf16.msra.mxu0 %v5721
        %5816 = vmatprep.subr.bf16.mxu0 %v5726
        %5817 = vmatpush1.bf16.msra.mxu0 %v5725
        %5818 = vmatprep.subr.bf16.mxu0 0
        %5819 = vmatpush1.bf16.msra.mxu0 0
        %5820 = vmatprep.subr.bf16.mxu0 0
        %5821 = vmatpush1.bf16.msra.mxu0 0
        %5822 = vmatprep.subr.bf16.mxu0 0
        %5823 = vmatpush1.bf16.msra.mxu0 0
        %5824 = vmatprep.subr.bf16.mxu0 0
        %5825 = vmatpush1.bf16.msra.mxu0 0
        %5826 = vmatprep.subr.bf16.mxu0 0
        %5827 = vmatpush1.bf16.msra.mxu0 0
        %5828 = vmatprep.subr.bf16.mxu0 0
        %5829 = vmatpush1.bf16.msra.mxu0 0
        %5830 = vmatprep.subr.bf16.mxu0 0
        %5831 = vmatpush1.bf16.msra.mxu0 0
        %5832 = vmatprep.subr.bf16.mxu0 0
        %5833 = vmatpush1.bf16.msra.mxu0 0
        %5834 = vmatprep.mubr.bf16.mxu0 0
        %5835 = vmatmul.mubr.bf16.gmra.mrb[0].mxu0 %v5542
        %v5836 = vpop.f32.mrb[0].mxu0
        %v5837 = vadd.f32 %v5590, %v5836
        %v5838 = vpop.f32.mrb[0].mxu0
        %v5839 = vadd.f32 %v5594, %v5838
        %v5840 = vpop.f32.mrb[0].mxu0
        %v5841 = vadd.f32 %v5590, %v5840
        %v5842 = vpop.f32.mrb[0].mxu0
        %v5843 = vadd.f32 %v5594, %v5842
        %5844 = vdwg.mxu0
        %v5845 = vmul.f32 %v5794, 0.5
        %v5846 = vmul.f32 %v5796, 0.5
        %v5847 = vmul.f32 %v5837, 0.5
        %v5848 = vmul.f32 %v5839, 0.5
        %v5849 = vmul.f32 %v5798, 0.5
        %v5850 = vmul.f32 %v5800, 0.5
        %v5851 = vmul.f32 %v5841, 0.5
        %v5852 = vmul.f32 %v5843, 0.5
        %v5853 = vmul.f32 %v5794, 0.70710677
        %v5854 = vmul.f32 %v5796, 0.70710677
        %v5855 = vmul.f32 %v5837, 0.70710677
        %v5856 = vmul.f32 %v5839, 0.70710677
        %v5857 = vmul.f32 %v5798, 0.70710677
        %v5858 = vmul.f32 %v5800, 0.70710677
        %v5859 = vmul.f32 %v5841, 0.70710677
        %v5860 = vmul.f32 %v5843, 0.70710677
        %v5861 = vand.u32 2147483647, %v5853
        %v5862 = vand.u32 2147483647, %v5854
        %v5863 = vand.u32 2147483647, %v5855
        %v5864 = vand.u32 2147483647, %v5856
        %v5865 = vand.u32 2147483647, %v5857
        %v5866 = vand.u32 2147483647, %v5858
        %v5867 = vand.u32 2147483647, %v5859
        %v5868 = vand.u32 2147483647, %v5860
        %v5869 = vmul.f32 %v5861, 0.3275911
        %v5870 = vmul.f32 %v5862, 0.3275911
        %v5871 = vmul.f32 %v5863, 0.3275911
        %v5872 = vmul.f32 %v5864, 0.3275911
        %v5873 = vmul.f32 %v5865, 0.3275911
        %v5874 = vmul.f32 %v5866, 0.3275911
        %v5875 = vmul.f32 %v5867, 0.3275911
        %v5876 = vmul.f32 %v5868, 0.3275911
        %v5877 = vadd.f32 %v5869, 1.0
        %v5878 = vadd.f32 %v5870, 1.0
        %v5879 = vadd.f32 %v5871, 1.0
        %v5880 = vadd.f32 %v5872, 1.0
        %v5881 = vadd.f32 %v5873, 1.0
        %v5882 = vadd.f32 %v5874, 1.0
        %v5883 = vadd.f32 %v5875, 1.0
        %v5884 = vadd.f32 %v5876, 1.0
        %v5885 = vrcp.pop %v5877
        %v5886 = vmul.f32 1.0, %v5885
        %v5887 = vrcp.pop %v5878
        %v5888 = vmul.f32 1.0, %v5887
        %v5889 = vrcp.pop %v5879
        %v5890 = vmul.f32 1.0, %v5889
        %v5891 = vrcp.pop %v5880
        %v5892 = vmul.f32 1.0, %v5891
        %v5893 = vrcp.pop %v5881
        %v5894 = vmul.f32 1.0, %v5893
        %v5895 = vrcp.pop %v5882
        %v5896 = vmul.f32 1.0, %v5895
        %v5897 = vrcp.pop %v5883
        %v5898 = vmul.f32 1.0, %v5897
        %v5899 = vrcp.pop %v5884
        %v5900 = vmul.f32 1.0, %v5899
        %v5901 = vmul.f32 %v5886, 1.0614054
        %v5902 = vmul.f32 %v5888, 1.0614054
        %v5903 = vmul.f32 %v5890, 1.0614054
        %v5904 = vmul.f32 %v5892, 1.0614054
        %v5905 = vmul.f32 %v5894, 1.0614054
        %v5906 = vmul.f32 %v5896, 1.0614054
        %v5907 = vmul.f32 %v5898, 1.0614054
        %v5908 = vmul.f32 %v5900, 1.0614054
        %v5909 = vsub.f32 %v5901, 1.4531521
        %v5910 = vsub.f32 %v5902, 1.4531521
        %v5911 = vsub.f32 %v5903, 1.4531521
        %v5912 = vsub.f32 %v5904, 1.4531521
        %v5913 = vsub.f32 %v5905, 1.4531521
        %v5914 = vsub.f32 %v5906, 1.4531521
        %v5915 = vsub.f32 %v5907, 1.4531521
        %v5916 = vsub.f32 %v5908, 1.4531521
        %v5917 = vmul.f32 %v5909, %v5886
        %v5918 = vmul.f32 %v5910, %v5888
        %v5919 = vmul.f32 %v5911, %v5890
        %v5920 = vmul.f32 %v5912, %v5892
        %v5921 = vmul.f32 %v5913, %v5894
        %v5922 = vmul.f32 %v5914, %v5896
        %v5923 = vmul.f32 %v5915, %v5898
        %v5924 = vmul.f32 %v5916, %v5900
        %v5925 = vadd.f32 %v5917, 1.4214138
        %v5926 = vadd.f32 %v5918, 1.4214138
        %v5927 = vadd.f32 %v5919, 1.4214138
        %v5928 = vadd.f32 %v5920, 1.4214138
        %v5929 = vadd.f32 %v5921, 1.4214138
        %v5930 = vadd.f32 %v5922, 1.4214138
        %v5931 = vadd.f32 %v5923, 1.4214138
        %v5932 = vadd.f32 %v5924, 1.4214138
        %v5933 = vmul.f32 %v5925, %v5886
        %v5934 = vmul.f32 %v5926, %v5888
        %v5935 = vmul.f32 %v5927, %v5890
        %v5936 = vmul.f32 %v5928, %v5892
        %v5937 = vmul.f32 %v5929, %v5894
        %v5938 = vmul.f32 %v5930, %v5896
        %v5939 = vmul.f32 %v5931, %v5898
        %v5940 = vmul.f32 %v5932, %v5900
        %v5941 = vsub.f32 %v5933, 0.28449672
        %v5942 = vsub.f32 %v5934, 0.28449672
        %v5943 = vsub.f32 %v5935, 0.28449672
        %v5944 = vsub.f32 %v5936, 0.28449672
        %v5945 = vsub.f32 %v5937, 0.28449672
        %v5946 = vsub.f32 %v5938, 0.28449672
        %v5947 = vsub.f32 %v5939, 0.28449672
        %v5948 = vsub.f32 %v5940, 0.28449672
        %v5949 = vmul.f32 %v5941, %v5886
        %v5950 = vmul.f32 %v5942, %v5888
        %v5951 = vmul.f32 %v5943, %v5890
        %v5952 = vmul.f32 %v5944, %v5892
        %v5953 = vmul.f32 %v5945, %v5894
        %v5954 = vmul.f32 %v5946, %v5896
        %v5955 = vmul.f32 %v5947, %v5898
        %v5956 = vmul.f32 %v5948, %v5900
        %v5957 = vadd.f32 %v5949, 0.2548296
        %v5958 = vadd.f32 %v5950, 0.2548296
        %v5959 = vadd.f32 %v5951, 0.2548296
        %v5960 = vadd.f32 %v5952, 0.2548296
        %v5961 = vadd.f32 %v5953, 0.2548296
        %v5962 = vadd.f32 %v5954, 0.2548296
        %v5963 = vadd.f32 %v5955, 0.2548296
        %v5964 = vadd.f32 %v5956, 0.2548296
        %v5965 = vmul.f32 %v5957, %v5886
        %v5966 = vmul.f32 %v5958, %v5888
        %v5967 = vmul.f32 %v5959, %v5890
        %v5968 = vmul.f32 %v5960, %v5892
        %v5969 = vmul.f32 %v5961, %v5894
        %v5970 = vmul.f32 %v5962, %v5896
        %v5971 = vmul.f32 %v5963, %v5898
        %v5972 = vmul.f32 %v5964, %v5900
        %v5973 = vsub.f32 0.0, %v5861
        %v5974 = vsub.f32 0.0, %v5862
        %v5975 = vsub.f32 0.0, %v5863
        %v5976 = vsub.f32 0.0, %v5864
        %v5977 = vsub.f32 0.0, %v5865
        %v5978 = vsub.f32 0.0, %v5866
        %v5979 = vsub.f32 0.0, %v5867
        %v5980 = vsub.f32 0.0, %v5868
        %v5981 = vmul.f32 %v5973, %v5861
        %v5982 = vmul.f32 %v5974, %v5862
        %v5983 = vmul.f32 %v5975, %v5863
        %v5984 = vmul.f32 %v5976, %v5864
        %v5985 = vmul.f32 %v5977, %v5865
        %v5986 = vmul.f32 %v5978, %v5866
        %v5987 = vmul.f32 %v5979, %v5867
        %v5988 = vmul.f32 %v5980, %v5868
        %v5989 = vmul.f32 %v5981, 1.442695
        %v5990 = vpow.pop %v5989
        %v5991 = vmul.f32 %v5982, 1.442695
        %v5992 = vpow.pop %v5991
        %v5993 = vmul.f32 %v5983, 1.442695
        %v5994 = vpow.pop %v5993
        %v5995 = vmul.f32 %v5984, 1.442695
        %v5996 = vpow.pop %v5995
        %v5997 = vmul.f32 %v5985, 1.442695
        %v5998 = vpow.pop %v5997
        %v5999 = vmul.f32 %v5986, 1.442695
        %v6000 = vpow.pop %v5999
        %v6001 = vmul.f32 %v5987, 1.442695
        %v6002 = vpow.pop %v6001
        %v6003 = vmul.f32 %v5988, 1.442695
        %v6004 = vpow.pop %v6003
        %v6005 = vmul.f32 %v5965, %v5990
        %v6006 = vmul.f32 %v5966, %v5992
        %v6007 = vmul.f32 %v5967, %v5994
        %v6008 = vmul.f32 %v5968, %v5996
        %v6009 = vmul.f32 %v5969, %v5998
        %v6010 = vmul.f32 %v5970, %v6000
        %v6011 = vmul.f32 %v5971, %v6002
        %v6012 = vmul.f32 %v5972, %v6004
        %v6013 = vsub.f32 1.0, %v6005
        %v6014 = vsub.f32 1.0, %v6006
        %v6015 = vsub.f32 1.0, %v6007
        %v6016 = vsub.f32 1.0, %v6008
        %v6017 = vsub.f32 1.0, %v6009
        %v6018 = vsub.f32 1.0, %v6010
        %v6019 = vsub.f32 1.0, %v6011
        %v6020 = vsub.f32 1.0, %v6012
        %vm6021 = vcmp.ge.f32.partialorder %v5853, 0.0
        %vm6022 = vcmp.ge.f32.partialorder %v5854, 0.0
        %vm6023 = vcmp.ge.f32.partialorder %v5855, 0.0
        %vm6024 = vcmp.ge.f32.partialorder %v5856, 0.0
        %vm6025 = vcmp.ge.f32.partialorder %v5857, 0.0
        %vm6026 = vcmp.ge.f32.partialorder %v5858, 0.0
        %vm6027 = vcmp.ge.f32.partialorder %v5859, 0.0
        %vm6028 = vcmp.ge.f32.partialorder %v5860, 0.0
        %v6029 = vsub.f32 0.0, %v6013
        %v6030 = vsub.f32 0.0, %v6014
        %v6031 = vsub.f32 0.0, %v6015
        %v6032 = vsub.f32 0.0, %v6016
        %v6033 = vsub.f32 0.0, %v6017
        %v6034 = vsub.f32 0.0, %v6018
        %v6035 = vsub.f32 0.0, %v6019
        %v6036 = vsub.f32 0.0, %v6020
        %v6037 = vsel %vm6021, %v6013, %v6029
        %v6038 = vsel %vm6022, %v6014, %v6030
        %v6039 = vsel %vm6023, %v6015, %v6031
        %v6040 = vsel %vm6024, %v6016, %v6032
        %v6041 = vsel %vm6025, %v6017, %v6033
        %v6042 = vsel %vm6026, %v6018, %v6034
        %v6043 = vsel %vm6027, %v6019, %v6035
        %v6044 = vsel %vm6028, %v6020, %v6036
        %v6045 = vadd.f32 %v6037, 1.0
        %v6046 = vadd.f32 %v6038, 1.0
        %v6047 = vadd.f32 %v6039, 1.0
        %v6048 = vadd.f32 %v6040, 1.0
        %v6049 = vadd.f32 %v6041, 1.0
        %v6050 = vadd.f32 %v6042, 1.0
        %v6051 = vadd.f32 %v6043, 1.0
        %v6052 = vadd.f32 %v6044, 1.0
        %v6053 = vmul.f32 %v5845, %v6045
        %v6054 = vmul.f32 %v5846, %v6046
        %v6055 = vmul.f32 %v5847, %v6047
        %v6056 = vmul.f32 %v5848, %v6048
        %v6057 = vmul.f32 %v5849, %v6049
        %v6058 = vmul.f32 %v5850, %v6050
        %v6059 = vmul.f32 %v5851, %v6051
        %v6060 = vmul.f32 %v5852, %v6052
        %v6061 = vpack.c.bf16 %v6057, %v6053
        %v6062 = vpack.c.bf16 %v6058, %v6054
        %v6063 = vpack.c.bf16 %v6059, %v6055
        %v6064 = vpack.c.bf16 %v6060, %v6056
        %s6065 = scalar_lea.vmem [#allocation7], 512
        %v6066 = vld [vmem:[%s6065] sm:$0xf]
        %v6067 = vld [vmem:[%s6065 + $0x4] sm:$0xf]
        %v6068 = vld [vmem:[%s6065 + $0x8] sm:$0xf]
        %v6069 = vld [vmem:[%s6065 + $0xc] sm:$0xf]
        %v6070 = vld [vmem:[%s6065 + $0x10] sm:$0xf]
        %v6071 = vld [vmem:[%s6065 + $0x14] sm:$0xf]
        %v6072 = vld [vmem:[%s6065 + $0x18] sm:$0xf]
        %v6073 = vld [vmem:[%s6065 + $0x1c] sm:$0xf]
        %v6074 = vld [vmem:[%s6065 + $0x20] sm:$0xf]
        %v6075 = vld [vmem:[%s6065 + $0x24] sm:$0xf]
        %v6076 = vld [vmem:[%s6065 + $0x28] sm:$0xf]
        %v6077 = vld [vmem:[%s6065 + $0x2c] sm:$0xf]
        %v6078 = vld [vmem:[%s6065 + $0x30] sm:$0xf]
        %v6079 = vld [vmem:[%s6065 + $0x34] sm:$0xf]
        %v6080 = vld [vmem:[%s6065 + $0x38] sm:$0xf]
        %v6081 = vld [vmem:[%s6065 + $0x3c] sm:$0xf]
        %v6082 = vld [vmem:[%s6065 + $0x40] sm:$0xf]
        %v6083 = vld [vmem:[%s6065 + $0x44] sm:$0xf]
        %v6084 = vld [vmem:[%s6065 + $0x48] sm:$0xf]
        %v6085 = vld [vmem:[%s6065 + $0x4c] sm:$0xf]
        %v6086 = vld [vmem:[%s6065 + $0x50] sm:$0xf]
        %v6087 = vld [vmem:[%s6065 + $0x54] sm:$0xf]
        %v6088 = vld [vmem:[%s6065 + $0x58] sm:$0xf]
        %v6089 = vld [vmem:[%s6065 + $0x5c] sm:$0xf]
        %v6090 = vld [vmem:[%s6065 + $0x60] sm:$0xf]
        %v6091 = vld [vmem:[%s6065 + $0x64] sm:$0xf]
        %v6092 = vld [vmem:[%s6065 + $0x68] sm:$0xf]
        %v6093 = vld [vmem:[%s6065 + $0x6c] sm:$0xf]
        %v6094 = vld [vmem:[%s6065 + $0x70] sm:$0xf]
        %v6095 = vld [vmem:[%s6065 + $0x74] sm:$0xf]
        %v6096 = vld [vmem:[%s6065 + $0x78] sm:$0xf]
        %v6097 = vld [vmem:[%s6065 + $0x7c] sm:$0xf]
        %v6098 = vld [vmem:[%s6065 + $0x80] sm:$0xf]
        %v6099 = vld [vmem:[%s6065 + $0x84] sm:$0xf]
        %v6100 = vld [vmem:[%s6065 + $0x88] sm:$0xf]
        %v6101 = vld [vmem:[%s6065 + $0x8c] sm:$0xf]
        %v6102 = vld [vmem:[%s6065 + $0x90] sm:$0xf]
        %v6103 = vld [vmem:[%s6065 + $0x94] sm:$0xf]
        %v6104 = vld [vmem:[%s6065 + $0x98] sm:$0xf]
        %v6105 = vld [vmem:[%s6065 + $0x9c] sm:$0xf]
        %v6106 = vld [vmem:[%s6065 + $0xa0] sm:$0xf]
        %v6107 = vld [vmem:[%s6065 + $0xa4] sm:$0xf]
        %v6108 = vld [vmem:[%s6065 + $0xa8] sm:$0xf]
        %v6109 = vld [vmem:[%s6065 + $0xac] sm:$0xf]
        %v6110 = vld [vmem:[%s6065 + $0xb0] sm:$0xf]
        %v6111 = vld [vmem:[%s6065 + $0xb4] sm:$0xf]
        %v6112 = vld [vmem:[%s6065 + $0xb8] sm:$0xf]
        %v6113 = vld [vmem:[%s6065 + $0xbc] sm:$0xf]
        %v6114 = vld [vmem:[%s6065 + $0xc0] sm:$0xf]
        %v6115 = vld [vmem:[%s6065 + $0xc4] sm:$0xf]
        %v6116 = vld [vmem:[%s6065 + $0xc8] sm:$0xf]
        %v6117 = vld [vmem:[%s6065 + $0xcc] sm:$0xf]
        %v6118 = vld [vmem:[%s6065 + $0xd0] sm:$0xf]
        %v6119 = vld [vmem:[%s6065 + $0xd4] sm:$0xf]
        %v6120 = vld [vmem:[%s6065 + $0xd8] sm:$0xf]
        %v6121 = vld [vmem:[%s6065 + $0xdc] sm:$0xf]
        %v6122 = vld [vmem:[%s6065 + $0xe0] sm:$0xf]
        %v6123 = vld [vmem:[%s6065 + $0xe4] sm:$0xf]
        %v6124 = vld [vmem:[%s6065 + $0xe8] sm:$0xf]
        %v6125 = vld [vmem:[%s6065 + $0xec] sm:$0xf]
        %v6126 = vld [vmem:[%s6065 + $0xf0] sm:$0xf]
        %v6127 = vld [vmem:[%s6065 + $0xf4] sm:$0xf]
        %v6128 = vld [vmem:[%s6065 + $0xf8] sm:$0xf]
        %v6129 = vld [vmem:[%s6065 + $0xfc] sm:$0xf]
        %s6130 = scalar_lea.vmem %s10, 2
        %v6131 = vld [vmem:[%s6130] sm:$0x1]
        %v6133 = vlaneseq
        %v6134 = vshrl.u32 %v6133, 7
        %v6135 = vsub.s32 0, %v6134
        %v6136 = vrot.slane %v6131, %v6135
        %v6202 = vunpack.c.l.b16 %v6066
        %v6203 = vunpack.c.l.b16 %v6067
        %v6204 = vunpack.c.l.b16 %v6068
        %v6205 = vunpack.c.l.b16 %v6069
        %v6206 = vunpack.c.l.b16 %v6070
        %v6207 = vunpack.c.l.b16 %v6071
        %v6208 = vunpack.c.l.b16 %v6072
        %v6209 = vunpack.c.l.b16 %v6073
        %v6210 = vunpack.c.l.b16 %v6074
        %v6211 = vunpack.c.l.b16 %v6075
        %v6212 = vunpack.c.l.b16 %v6076
        %v6213 = vunpack.c.l.b16 %v6077
        %v6214 = vunpack.c.l.b16 %v6078
        %v6215 = vunpack.c.l.b16 %v6079
        %v6216 = vunpack.c.l.b16 %v6080
        %v6217 = vunpack.c.l.b16 %v6081
        %v6218 = vunpack.c.l.b16 %v6082
        %v6219 = vunpack.c.l.b16 %v6083
        %v6220 = vunpack.c.l.b16 %v6084
        %v6221 = vunpack.c.l.b16 %v6085
        %v6222 = vunpack.c.l.b16 %v6086
        %v6223 = vunpack.c.l.b16 %v6087
        %v6224 = vunpack.c.l.b16 %v6088
        %v6225 = vunpack.c.l.b16 %v6089
        %v6226 = vunpack.c.l.b16 %v6090
        %v6227 = vunpack.c.l.b16 %v6091
        %v6228 = vunpack.c.l.b16 %v6092
        %v6229 = vunpack.c.l.b16 %v6093
        %v6230 = vunpack.c.l.b16 %v6094
        %v6231 = vunpack.c.l.b16 %v6095
        %v6232 = vunpack.c.l.b16 %v6096
        %v6233 = vunpack.c.l.b16 %v6097
        %v6234 = vunpack.c.l.b16 %v6098
        %v6235 = vunpack.c.l.b16 %v6099
        %v6236 = vunpack.c.l.b16 %v6100
        %v6237 = vunpack.c.l.b16 %v6101
        %v6238 = vunpack.c.l.b16 %v6102
        %v6239 = vunpack.c.l.b16 %v6103
        %v6240 = vunpack.c.l.b16 %v6104
        %v6241 = vunpack.c.l.b16 %v6105
        %v6242 = vunpack.c.l.b16 %v6106
        %v6243 = vunpack.c.l.b16 %v6107
        %v6244 = vunpack.c.l.b16 %v6108
        %v6245 = vunpack.c.l.b16 %v6109
        %v6246 = vunpack.c.l.b16 %v6110
        %v6247 = vunpack.c.l.b16 %v6111
        %v6248 = vunpack.c.l.b16 %v6112
        %v6249 = vunpack.c.l.b16 %v6113
        %v6250 = vunpack.c.l.b16 %v6114
        %v6251 = vunpack.c.l.b16 %v6115
        %v6252 = vunpack.c.l.b16 %v6116
        %v6253 = vunpack.c.l.b16 %v6117
        %v6254 = vunpack.c.l.b16 %v6118
        %v6255 = vunpack.c.l.b16 %v6119
        %v6256 = vunpack.c.l.b16 %v6120
        %v6257 = vunpack.c.l.b16 %v6121
        %v6258 = vunpack.c.l.b16 %v6122
        %v6259 = vunpack.c.l.b16 %v6123
        %v6260 = vunpack.c.l.b16 %v6124
        %v6261 = vunpack.c.l.b16 %v6125
        %v6262 = vunpack.c.l.b16 %v6126
        %v6263 = vunpack.c.l.b16 %v6127
        %v6264 = vunpack.c.l.b16 %v6128
        %v6265 = vunpack.c.l.b16 %v6129
        %v6266 = vpack.c.b16 %v6203, %v6202
        %v6267 = vpack.c.b16 %v6205, %v6204
        %v6268 = vpack.c.b16 %v6207, %v6206
        %v6269 = vpack.c.b16 %v6209, %v6208
        %v6270 = vpack.c.b16 %v6211, %v6210
        %v6271 = vpack.c.b16 %v6213, %v6212
        %v6272 = vpack.c.b16 %v6215, %v6214
        %v6273 = vpack.c.b16 %v6217, %v6216
        %v6274 = vpack.c.b16 %v6219, %v6218
        %v6275 = vpack.c.b16 %v6221, %v6220
        %v6276 = vpack.c.b16 %v6223, %v6222
        %v6277 = vpack.c.b16 %v6225, %v6224
        %v6278 = vpack.c.b16 %v6227, %v6226
        %v6279 = vpack.c.b16 %v6229, %v6228
        %v6280 = vpack.c.b16 %v6231, %v6230
        %v6281 = vpack.c.b16 %v6233, %v6232
        %v6282 = vpack.c.b16 %v6235, %v6234
        %v6283 = vpack.c.b16 %v6237, %v6236
        %v6284 = vpack.c.b16 %v6239, %v6238
        %v6285 = vpack.c.b16 %v6241, %v6240
        %v6286 = vpack.c.b16 %v6243, %v6242
        %v6287 = vpack.c.b16 %v6245, %v6244
        %v6288 = vpack.c.b16 %v6247, %v6246
        %v6289 = vpack.c.b16 %v6249, %v6248
        %v6290 = vpack.c.b16 %v6251, %v6250
        %v6291 = vpack.c.b16 %v6253, %v6252
        %v6292 = vpack.c.b16 %v6255, %v6254
        %v6293 = vpack.c.b16 %v6257, %v6256
        %v6294 = vpack.c.b16 %v6259, %v6258
        %v6295 = vpack.c.b16 %v6261, %v6260
        %v6296 = vpack.c.b16 %v6263, %v6262
        %v6297 = vpack.c.b16 %v6265, %v6264
        %6330 = vmatprep.subr.bf16.mxu0 0
        %6331 = vmatpush1.bf16.msra.mxu0 %v6266
        %6332 = vmatprep.subr.bf16.mxu0 0
        %6333 = vmatpush1.bf16.msra.mxu0 %v6267
        %6334 = vmatprep.subr.bf16.mxu0 0
        %6335 = vmatpush1.bf16.msra.mxu0 %v6268
        %6336 = vmatprep.subr.bf16.mxu0 0
        %6337 = vmatpush1.bf16.msra.mxu0 %v6269
        %6338 = vmatprep.subr.bf16.mxu0 0
        %6339 = vmatpush1.bf16.msra.mxu0 %v6270
        %6340 = vmatprep.subr.bf16.mxu0 0
        %6341 = vmatpush1.bf16.msra.mxu0 %v6271
        %6342 = vmatprep.subr.bf16.mxu0 0
        %6343 = vmatpush1.bf16.msra.mxu0 %v6272
        %6344 = vmatprep.subr.bf16.mxu0 0
        %6345 = vmatpush1.bf16.msra.mxu0 %v6273
        %6346 = vmatprep.subr.bf16.mxu0 0
        %6347 = vmatpush1.bf16.msra.mxu0 %v6274
        %6348 = vmatprep.subr.bf16.mxu0 0
        %6349 = vmatpush1.bf16.msra.mxu0 %v6275
        %6350 = vmatprep.subr.bf16.mxu0 0
        %6351 = vmatpush1.bf16.msra.mxu0 %v6276
        %6352 = vmatprep.subr.bf16.mxu0 0
        %6353 = vmatpush1.bf16.msra.mxu0 %v6277
        %6354 = vmatprep.subr.bf16.mxu0 0
        %6355 = vmatpush1.bf16.msra.mxu0 %v6278
        %6356 = vmatprep.subr.bf16.mxu0 0
        %6357 = vmatpush1.bf16.msra.mxu0 %v6279
        %6358 = vmatprep.subr.bf16.mxu0 0
        %6359 = vmatpush1.bf16.msra.mxu0 %v6280
        %6360 = vmatprep.subr.bf16.mxu0 0
        %6361 = vmatpush1.bf16.msra.mxu0 %v6281
        %6362 = vmatprep.mubr.bf16.mxu0 %v6062
        %6363 = vmatmul.mubr.bf16.gmra.mrb[0].mxu0 %v6061
        %v6364 = vpop.f32.mrb[0].mxu0
        %v6365 = vadd.f32 %v6136, %v6364
        %v6366 = vpop.f32.mrb[0].mxu0
        %v6367 = vpop.f32.mrb[0].mxu0
        %v6368 = vadd.f32 %v6136, %v6367
        %v6369 = vpop.f32.mrb[0].mxu0
        %6370 = vdwg.mxu0
        %6371 = vmatprep.subr.bf16.mxu0 0
        %6372 = vmatpush1.bf16.msra.mxu0 %v6282
        %6373 = vmatprep.subr.bf16.mxu0 0
        %6374 = vmatpush1.bf16.msra.mxu0 %v6283
        %6375 = vmatprep.subr.bf16.mxu0 0
        %6376 = vmatpush1.bf16.msra.mxu0 %v6284
        %6377 = vmatprep.subr.bf16.mxu0 0
        %6378 = vmatpush1.bf16.msra.mxu0 %v6285
        %6379 = vmatprep.subr.bf16.mxu0 0
        %6380 = vmatpush1.bf16.msra.mxu0 %v6286
        %6381 = vmatprep.subr.bf16.mxu0 0
        %6382 = vmatpush1.bf16.msra.mxu0 %v6287
        %6383 = vmatprep.subr.bf16.mxu0 0
        %6384 = vmatpush1.bf16.msra.mxu0 %v6288
        %6385 = vmatprep.subr.bf16.mxu0 0
        %6386 = vmatpush1.bf16.msra.mxu0 %v6289
        %6387 = vmatprep.subr.bf16.mxu0 0
        %6388 = vmatpush1.bf16.msra.mxu0 %v6290
        %6389 = vmatprep.subr.bf16.mxu0 0
        %6390 = vmatpush1.bf16.msra.mxu0 %v6291
        %6391 = vmatprep.subr.bf16.mxu0 0
        %6392 = vmatpush1.bf16.msra.mxu0 %v6292
        %6393 = vmatprep.subr.bf16.mxu0 0
        %6394 = vmatpush1.bf16.msra.mxu0 %v6293
        %6395 = vmatprep.subr.bf16.mxu0 0
        %6396 = vmatpush1.bf16.msra.mxu0 %v6294
        %6397 = vmatprep.subr.bf16.mxu0 0
        %6398 = vmatpush1.bf16.msra.mxu0 %v6295
        %6399 = vmatprep.subr.bf16.mxu0 0
        %6400 = vmatpush1.bf16.msra.mxu0 %v6296
        %6401 = vmatprep.subr.bf16.mxu0 0
        %6402 = vmatpush1.bf16.msra.mxu0 %v6297
        %6403 = vmatprep.mubr.bf16.mxu0 %v6064
        %6404 = vmatmul.mubr.bf16.gmra.mrb[0].mxu0 %v6063
        %v6405 = vpop.f32.mrb[0].mxu0
        %v6406 = vadd.f32 %v6365, %v6405
        %v6407 = vpop.f32.mrb[0].mxu0
        %v6408 = vpop.f32.mrb[0].mxu0
        %v6409 = vadd.f32 %v6368, %v6408
        %v6410 = vpop.f32.mrb[0].mxu0
        %6411 = vdwg.mxu0
        %v6412 = vadd.f32 %v5540, %v6406
        %v6413 = vadd.f32 %v5541, %v6409
        %s6414 = scalar_lea.vmem %s11, 2
        %v6415 = vld [vmem:[%s6414] sm:$0x1]
        %s6416 = scalar_lea.vmem %s12, 2
        %v6417 = vld [vmem:[%s6416] sm:$0x1]
        %6418 = vadd.xlane.f32.xlu0 %v6412
        %v6419 = vpop.xlane.xlu0 %6418
        %6420 = vadd.xlane.f32.xlu0 %v6413
        %v6421 = vpop.xlane.xlu0 %6420
        %v6422 = vmul.f32 %v6419, %v1565
        %v6423 = vmul.f32 %v6421, %v1565
        %v6424 = vsub.f32 %v6412, %v6422
        %v6425 = vsub.f32 %v6413, %v6423
        %v6426 = vmul.f32 %v6424, %v6424
        %v6427 = vmul.f32 %v6425, %v6425
        %6428 = vadd.xlane.f32.xlu0 %v6426
        %v6429 = vpop.xlane.xlu0 %6428
        %6430 = vadd.xlane.f32.xlu0 %v6427
        %v6431 = vpop.xlane.xlu0 %6430
        %v6432 = vmul.f32 %v6429, %v1565
        %v6433 = vmul.f32 %v6431, %v1565
        %v6434 = vadd.f32 %v6432, 1e-05
        %v6435 = vadd.f32 %v6433, 1e-05
        %v6436 = vrsqrt.pop %v6434
        %v6437 = vrsqrt.pop %v6435
        %v6438 = vmul.f32 %v6424, %v6436
        %v6439 = vmul.f32 %v6425, %v6437
        %v6441 = vlaneseq
        %v6442 = vshrl.u32 %v6441, 7
        %v6443 = vsub.s32 0, %v6442
        %v6444 = vrot.slane %v6415, %v6443
        %v6446 = vmul.f32 %v6438, %v6444
        %v6447 = vmul.f32 %v6439, %v6444
        %v6449 = vlaneseq
        %v6450 = vshrl.u32 %v6449, 7
        %v6451 = vsub.s32 0, %v6450
        %v6452 = vrot.slane %v6417, %v6451
        %v6454 = vadd.f32 %v6446, %v6452
        %v6455 = vadd.f32 %v6447, %v6452
        %v6456 = vpack.c.bf16 %v6455, %v6454
        %s6457 = scalar_lea.vmem [#allocation2], 576
        %v6458 = vld [vmem:[%s6457] sm:$0xff]
        %v6459 = vld [vmem:[%s6457 + $0x8] sm:$0xf]
        %v6460 = vld [vmem:[%s6457 + $0xc] sm:$0xff]
        %v6461 = vld [vmem:[%s6457 + $0x14] sm:$0xf]
        %v6462 = vld [vmem:[%s6457 + $0x18] sm:$0xff]
        %v6463 = vld [vmem:[%s6457 + $0x20] sm:$0xf]
        %v6464 = vld [vmem:[%s6457 + $0x24] sm:$0xff]
        %v6465 = vld [vmem:[%s6457 + $0x2c] sm:$0xf]
        %v6466 = vld [vmem:[%s6457 + $0x30] sm:$0xff]
        %v6467 = vld [vmem:[%s6457 + $0x38] sm:$0xf]
        %v6468 = vld [vmem:[%s6457 + $0x3c] sm:$0xff]
        %v6469 = vld [vmem:[%s6457 + $0x44] sm:$0xf]
        %v6470 = vld [vmem:[%s6457 + $0x48] sm:$0xff]
        %v6471 = vld [vmem:[%s6457 + $0x50] sm:$0xf]
        %v6472 = vld [vmem:[%s6457 + $0x54] sm:$0xff]
        %v6473 = vld [vmem:[%s6457 + $0x5c] sm:$0xf]
        %v6474 = vld [vmem:[%s6457 + $0x60] sm:$0xff]
        %v6475 = vld [vmem:[%s6457 + $0x68] sm:$0xf]
        %v6476 = vld [vmem:[%s6457 + $0x6c] sm:$0xff]
        %v6477 = vld [vmem:[%s6457 + $0x74] sm:$0xf]
        %v6478 = vld [vmem:[%s6457 + $0x78] sm:$0xff]
        %v6479 = vld [vmem:[%s6457 + $0x80] sm:$0xf]
        %v6480 = vld [vmem:[%s6457 + $0x84] sm:$0xff]
        %v6481 = vld [vmem:[%s6457 + $0x8c] sm:$0xf]
        %v6482 = vld [vmem:[%s6457 + $0x90] sm:$0xff]
        %v6483 = vld [vmem:[%s6457 + $0x98] sm:$0xf]
        %v6484 = vld [vmem:[%s6457 + $0x9c] sm:$0xff]
        %v6485 = vld [vmem:[%s6457 + $0xa4] sm:$0xf]
        %v6486 = vld [vmem:[%s6457 + $0xa8] sm:$0xff]
        %v6487 = vld [vmem:[%s6457 + $0xb0] sm:$0xf]
        %v6488 = vld [vmem:[%s6457 + $0xb4] sm:$0xff]
        %v6489 = vld [vmem:[%s6457 + $0xbc] sm:$0xf]
        %s6490 = scalar_lea.vmem %s2, 9
        %v6491 = vld [vmem:[%s6490] sm:$0x7]
        %v6493 = vlaneseq
        %v6494 = vshrl.u32 %v6493, 7
        %v6495 = vsub.s32 0, %v6494
        %v6496 = vrot.slane %v6491, %v6495
        %v6497 = vlaneseq
        %v6498 = vshrl.u32 %v6497, 7
        %v6499 = vsub.s32 1, %v6498
        %v6500 = vrot.slane %v6491, %v6499
        %v6501 = vlaneseq
        %v6502 = vshrl.u32 %v6501, 7
        %v6503 = vsub.s32 2, %v6502
        %v6504 = vrot.slane %v6491, %v6503
        %v6540 = vunpack.c.l.b16 %v6458
        %v6541 = vunpack.c.h.b16 %v6458
        %v6542 = vunpack.c.l.b16 %v6459
        %v6543 = vunpack.c.l.b16 %v6460
        %v6544 = vunpack.c.h.b16 %v6460
        %v6545 = vunpack.c.l.b16 %v6461
        %v6546 = vunpack.c.l.b16 %v6462
        %v6547 = vunpack.c.h.b16 %v6462
        %v6548 = vunpack.c.l.b16 %v6463
        %v6549 = vunpack.c.l.b16 %v6464
        %v6550 = vunpack.c.h.b16 %v6464
        %v6551 = vunpack.c.l.b16 %v6465
        %v6552 = vunpack.c.l.b16 %v6466
        %v6553 = vunpack.c.h.b16 %v6466
        %v6554 = vunpack.c.l.b16 %v6467
        %v6555 = vunpack.c.l.b16 %v6468
        %v6556 = vunpack.c.h.b16 %v6468
        %v6557 = vunpack.c.l.b16 %v6469
        %v6558 = vunpack.c.l.b16 %v6470
        %v6559 = vunpack.c.h.b16 %v6470
        %v6560 = vunpack.c.l.b16 %v6471
        %v6561 = vunpack.c.l.b16 %v6472
        %v6562 = vunpack.c.h.b16 %v6472
        %v6563 = vunpack.c.l.b16 %v6473
        %v6564 = vunpack.c.l.b16 %v6474
        %v6565 = vunpack.c.h.b16 %v6474
        %v6566 = vunpack.c.l.b16 %v6475
        %v6567 = vunpack.c.l.b16 %v6476
        %v6568 = vunpack.c.h.b16 %v6476
        %v6569 = vunpack.c.l.b16 %v6477
        %v6570 = vunpack.c.l.b16 %v6478
        %v6571 = vunpack.c.h.b16 %v6478
        %v6572 = vunpack.c.l.b16 %v6479
        %v6573 = vunpack.c.l.b16 %v6480
        %v6574 = vunpack.c.h.b16 %v6480
        %v6575 = vunpack.c.l.b16 %v6481
        %v6576 = vunpack.c.l.b16 %v6482
        %v6577 = vunpack.c.h.b16 %v6482
        %v6578 = vunpack.c.l.b16 %v6483
        %v6579 = vunpack.c.l.b16 %v6484
        %v6580 = vunpack.c.h.b16 %v6484
        %v6581 = vunpack.c.l.b16 %v6485
        %v6582 = vunpack.c.l.b16 %v6486
        %v6583 = vunpack.c.h.b16 %v6486
        %v6584 = vunpack.c.l.b16 %v6487
        %v6585 = vunpack.c.l.b16 %v6488
        %v6586 = vunpack.c.h.b16 %v6488
        %v6587 = vunpack.c.l.b16 %v6489
        %v6588 = vpack.c.b16 %v6543, %v6540
        %v6589 = vpack.c.b16 %v6544, %v6541
        %v6590 = vpack.c.b16 %v6545, %v6542
        %v6591 = vpack.c.b16 %v6549, %v6546
        %v6592 = vpack.c.b16 %v6550, %v6547
        %v6593 = vpack.c.b16 %v6551, %v6548
        %v6594 = vpack.c.b16 %v6555, %v6552
        %v6595 = vpack.c.b16 %v6556, %v6553
        %v6596 = vpack.c.b16 %v6557, %v6554
        %v6597 = vpack.c.b16 %v6561, %v6558
        %v6598 = vpack.c.b16 %v6562, %v6559
        %v6599 = vpack.c.b16 %v6563, %v6560
        %v6600 = vpack.c.b16 %v6567, %v6564
        %v6601 = vpack.c.b16 %v6568, %v6565
        %v6602 = vpack.c.b16 %v6569, %v6566
        %v6603 = vpack.c.b16 %v6573, %v6570
        %v6604 = vpack.c.b16 %v6574, %v6571
        %v6605 = vpack.c.b16 %v6575, %v6572
        %v6606 = vpack.c.b16 %v6579, %v6576
        %v6607 = vpack.c.b16 %v6580, %v6577
        %v6608 = vpack.c.b16 %v6581, %v6578
        %v6609 = vpack.c.b16 %v6585, %v6582
        %v6610 = vpack.c.b16 %v6586, %v6583
        %v6611 = vpack.c.b16 %v6587, %v6584
        %6636 = vmatprep.subr.bf16.mxu0 %v6589
        %6637 = vmatpush1.bf16.msra.mxu0 %v6588
        %6638 = vmatprep.subr.bf16.mxu0 %v6592
        %6639 = vmatpush1.bf16.msra.mxu0 %v6591
        %6640 = vmatprep.subr.bf16.mxu0 %v6595
        %6641 = vmatpush1.bf16.msra.mxu0 %v6594
        %6642 = vmatprep.subr.bf16.mxu0 %v6598
        %6643 = vmatpush1.bf16.msra.mxu0 %v6597
        %6644 = vmatprep.subr.bf16.mxu0 %v6601
        %6645 = vmatpush1.bf16.msra.mxu0 %v6600
        %6646 = vmatprep.subr.bf16.mxu0 %v6604
        %6647 = vmatpush1.bf16.msra.mxu0 %v6603
        %6648 = vmatprep.subr.bf16.mxu0 %v6607
        %6649 = vmatpush1.bf16.msra.mxu0 %v6606
        %6650 = vmatprep.subr.bf16.mxu0 %v6610
        %6651 = vmatpush1.bf16.msra.mxu0 %v6609
        %6652 = vmatprep.subr.bf16.mxu0 0
        %6653 = vmatpush1.bf16.msra.mxu0 0
        %6654 = vmatprep.subr.bf16.mxu0 0
        %6655 = vmatpush1.bf16.msra.mxu0 0
        %6656 = vmatprep.subr.bf16.mxu0 0
        %6657 = vmatpush1.bf16.msra.mxu0 0
        %6658 = vmatprep.subr.bf16.mxu0 0
        %6659 = vmatpush1.bf16.msra.mxu0 0
        %6660 = vmatprep.subr.bf16.mxu0 0
        %6661 = vmatpush1.bf16.msra.mxu0 0
        %6662 = vmatprep.subr.bf16.mxu0 0
        %6663 = vmatpush1.bf16.msra.mxu0 0
        %6664 = vmatprep.subr.bf16.mxu0 0
        %6665 = vmatpush1.bf16.msra.mxu0 0
        %6666 = vmatprep.subr.bf16.mxu0 0
        %6667 = vmatpush1.bf16.msra.mxu0 0
        %6668 = vmatprep.mubr.bf16.mxu0 0
        %6669 = vmatmul.mubr.bf16.gmra.mrb[0].mxu0 %v6456
        %v6670 = vpop.f32.mrb[0].mxu0
        %v6671 = vadd.f32 %v6496, %v6670
        %v6672 = vpop.f32.mrb[0].mxu0
        %v6673 = vadd.f32 %v6500, %v6672
        %v6674 = vpop.f32.mrb[0].mxu0
        %v6675 = vadd.f32 %v6496, %v6674
        %v6676 = vpop.f32.mrb[0].mxu0
        %v6677 = vadd.f32 %v6500, %v6676
        %6678 = vdwg.mxu0
        %6679 = vmatprep.subr.bf16.mxu0 0
        %6680 = vmatpush1.bf16.msra.mxu0 %v6590
        %6681 = vmatprep.subr.bf16.mxu0 0
        %6682 = vmatpush1.bf16.msra.mxu0 %v6593
        %6683 = vmatprep.subr.bf16.mxu0 0
        %6684 = vmatpush1.bf16.msra.mxu0 %v6596
        %6685 = vmatprep.subr.bf16.mxu0 0
        %6686 = vmatpush1.bf16.msra.mxu0 %v6599
        %6687 = vmatprep.subr.bf16.mxu0 0
        %6688 = vmatpush1.bf16.msra.mxu0 %v6602
        %6689 = vmatprep.subr.bf16.mxu0 0
        %6690 = vmatpush1.bf16.msra.mxu0 %v6605
        %6691 = vmatprep.subr.bf16.mxu0 0
        %6692 = vmatpush1.bf16.msra.mxu0 %v6608
        %6693 = vmatprep.subr.bf16.mxu0 0
        %6694 = vmatpush1.bf16.msra.mxu0 %v6611
        %6695 = vmatprep.subr.bf16.mxu0 0
        %6696 = vmatpush1.bf16.msra.mxu0 0
        %6697 = vmatprep.subr.bf16.mxu0 0
        %6698 = vmatpush1.bf16.msra.mxu0 0
        %6699 = vmatprep.subr.bf16.mxu0 0
        %6700 = vmatpush1.bf16.msra.mxu0 0
        %6701 = vmatprep.subr.bf16.mxu0 0
        %6702 = vmatpush1.bf16.msra.mxu0 0
        %6703 = vmatprep.subr.bf16.mxu0 0
        %6704 = vmatpush1.bf16.msra.mxu0 0
        %6705 = vmatprep.subr.bf16.mxu0 0
        %6706 = vmatpush1.bf16.msra.mxu0 0
        %6707 = vmatprep.subr.bf16.mxu0 0
        %6708 = vmatpush1.bf16.msra.mxu0 0
        %6709 = vmatprep.subr.bf16.mxu0 0
        %6710 = vmatpush1.bf16.msra.mxu0 0
        %6711 = vmatprep.mubr.bf16.mxu0 0
        %6712 = vmatmul.mubr.bf16.gmra.mrb[0].mxu0 %v6456
        %v6713 = vpop.f32.mrb[0].mxu0
        %v6714 = vadd.f32 %v6504, %v6713
        %v6715 = vpop.f32.mrb[0].mxu0
        %v6716 = vpop.f32.mrb[0].mxu0
        %v6717 = vadd.f32 %v6504, %v6716
        %v6718 = vpop.f32.mrb[0].mxu0
        %6719 = vdwg.mxu0
        %s6720 = scalar_lea.vmem [#allocation4], 192
        %v6721 = vld [vmem:[%s6720] sm:$0xf]
        %v6722 = vld [vmem:[%s6720 + $0x4] sm:$0xf]
        %v6723 = vld [vmem:[%s6720 + $0x8] sm:$0xf]
        %v6724 = vld [vmem:[%s6720 + $0xc] sm:$0xf]
        %v6725 = vld [vmem:[%s6720 + $0x10] sm:$0xf]
        %v6726 = vld [vmem:[%s6720 + $0x14] sm:$0xf]
        %v6727 = vld [vmem:[%s6720 + $0x18] sm:$0xf]
        %v6728 = vld [vmem:[%s6720 + $0x1c] sm:$0xf]
        %v6729 = vld [vmem:[%s6720 + $0x20] sm:$0xf]
        %v6730 = vld [vmem:[%s6720 + $0x24] sm:$0xf]
        %v6731 = vld [vmem:[%s6720 + $0x28] sm:$0xf]
        %v6732 = vld [vmem:[%s6720 + $0x2c] sm:$0xf]
        %v6733 = vld [vmem:[%s6720 + $0x30] sm:$0xf]
        %v6734 = vld [vmem:[%s6720 + $0x34] sm:$0xf]
        %v6735 = vld [vmem:[%s6720 + $0x38] sm:$0xf]
        %v6736 = vld [vmem:[%s6720 + $0x3c] sm:$0xf]
        %v6737 = vmul.f32 %v6671, 0.17677669
        %v6738 = vmul.f32 %v6675, 0.17677669
        %v6739 = vpack.c.bf16 %v6738, %v6737
        %v6740 = vpack.c.bf16 %v6677, %v6673
        %v6741 = vpack.c.bf16 %v6717, %v6714
        %v6743 = vsel %vm826, %v6739, 0
        %v6746 = vsel %vm826, %v6740, 0
        %6748 = vmatprep.subr.bf16.mxu0 0
        %6749 = vmatpush1.bf16.xpose.msra.mxu0 %v6746
        %6750 = vmatprep.subr.bf16.mxu0 0
        %6751 = vmatpush1.bf16.xpose.msra.mxu0 0
        %6752 = vmatprep.subr.bf16.mxu0 0
        %6753 = vmatpush1.bf16.xpose.msra.mxu0 0
        %6754 = vmatprep.subr.bf16.mxu0 0
        %6755 = vmatpush1.bf16.xpose.msra.mxu0 0
        %6756 = vmatprep.subr.bf16.mxu0 0
        %6757 = vmatpush1.bf16.xpose.msra.mxu0 0
        %6758 = vmatprep.subr.bf16.mxu0 0
        %6759 = vmatpush1.bf16.xpose.msra.mxu0 0
        %6760 = vmatprep.subr.bf16.mxu0 0
        %6761 = vmatpush1.bf16.xpose.msra.mxu0 0
        %6762 = vmatprep.subr.bf16.mxu0 0
        %6763 = vmatpush1.bf16.xpose.msra.mxu0 0
        %6764 = vmatprep.subr.bf16.mxu0 0
        %6765 = vmatpush1.bf16.xpose.msra.mxu0 0
        %6766 = vmatprep.subr.bf16.mxu0 0
        %6767 = vmatpush1.bf16.xpose.msra.mxu0 0
        %6768 = vmatprep.subr.bf16.mxu0 0
        %6769 = vmatpush1.bf16.xpose.msra.mxu0 0
        %6770 = vmatprep.subr.bf16.mxu0 0
        %6771 = vmatpush1.bf16.xpose.msra.mxu0 0
        %6772 = vmatprep.subr.bf16.mxu0 0
        %6773 = vmatpush1.bf16.xpose.msra.mxu0 0
        %6774 = vmatprep.subr.bf16.mxu0 0
        %6775 = vmatpush1.bf16.xpose.msra.mxu0 0
        %6776 = vmatprep.subr.bf16.mxu0 0
        %6777 = vmatpush1.bf16.xpose.msra.mxu0 0
        %6778 = vmatprep.subr.bf16.mxu0 0
        %6779 = vmatpush1.bf16.xpose.msra.mxu0 0
        %6780 = vmatprep.mubr.bf16.mxu0 0
        %6781 = vmatmul.mubr.bf16.gmra.mrb[0].mxu0 %v6743
        %v6782 = vpop.f32.mrb[0].mxu0
        %v6783 = vadd.f32 %v540, %v6782
        %v6784 = vpop.f32.mrb[0].mxu0
        %v6785 = vpop.f32.mrb[0].mxu0
        %v6786 = vadd.f32 %v540, %v6785
        %v6787 = vpop.f32.mrb[0].mxu0
        %6788 = vdwg.mxu0
        %v6789 = vsel %vm874, %v6783, -inf
        %6790 = vmax.xlane.f32.xlu0 %v6789
        %v6791 = vpop.xlane.xlu0 %6790
        %v6792 = vsel %vm874, %v6786, -inf
        %6793 = vmax.xlane.f32.xlu0 %v6792
        %v6794 = vpop.xlane.xlu0 %6793
        %v6795 = vsub.f32 %v6783, %v6791
        %v6796 = vsub.f32 %v6786, %v6794
        %v6797 = vmul.f32 %v6795, 1.442695
        %v6798 = vpow.pop %v6797
        %v6799 = vmul.f32 %v6796, 1.442695
        %v6800 = vpow.pop %v6799
        %v6801 = vsel %vm874, %v6798, 0.0
        %6802 = vadd.xlane.f32.xlu0 %v6801
        %v6803 = vpop.xlane.xlu0 %6802
        %v6804 = vsel %vm874, %v6800, 0.0
        %6805 = vadd.xlane.f32.xlu0 %v6804
        %v6806 = vpop.xlane.xlu0 %6805
        %v6807 = vrcp.pop %v6803
        %v6808 = vmul.f32 1.0, %v6807
        %v6809 = vrcp.pop %v6806
        %v6810 = vmul.f32 1.0, %v6809
        %v6811 = vmul.f32 %v6798, %v6808
        %v6812 = vmul.f32 %v6800, %v6810
        %v6813 = vadd.f32 %v6811, 0.0
        %v6814 = vadd.f32 %v6812, 0.0
        %v6815 = vpack.c.bf16 %v6812, %v6811
        %v6817 = vsel %vm874, %v6815, 0
        %6819 = vmatprep.subr.bf16.mxu0 0
        %6820 = vmatpush1.bf16.msra.mxu0 %v6741
        %6821 = vmatprep.subr.bf16.mxu0 0
        %6822 = vmatpush1.bf16.msra.mxu0 0
        %6823 = vmatprep.subr.bf16.mxu0 0
        %6824 = vmatpush1.bf16.msra.mxu0 0
        %6825 = vmatprep.subr.bf16.mxu0 0
        %6826 = vmatpush1.bf16.msra.mxu0 0
        %6827 = vmatprep.subr.bf16.mxu0 0
        %6828 = vmatpush1.bf16.msra.mxu0 0
        %6829 = vmatprep.subr.bf16.mxu0 0
        %6830 = vmatpush1.bf16.msra.mxu0 0
        %6831 = vmatprep.subr.bf16.mxu0 0
        %6832 = vmatpush1.bf16.msra.mxu0 0
        %6833 = vmatprep.subr.bf16.mxu0 0
        %6834 = vmatpush1.bf16.msra.mxu0 0
        %6835 = vmatprep.subr.bf16.mxu0 0
        %6836 = vmatpush1.bf16.msra.mxu0 0
        %6837 = vmatprep.subr.bf16.mxu0 0
        %6838 = vmatpush1.bf16.msra.mxu0 0
        %6839 = vmatprep.subr.bf16.mxu0 0
        %6840 = vmatpush1.bf16.msra.mxu0 0
        %6841 = vmatprep.subr.bf16.mxu0 0
        %6842 = vmatpush1.bf16.msra.mxu0 0
        %6843 = vmatprep.subr.bf16.mxu0 0
        %6844 = vmatpush1.bf16.msra.mxu0 0
        %6845 = vmatprep.subr.bf16.mxu0 0
        %6846 = vmatpush1.bf16.msra.mxu0 0
        %6847 = vmatprep.subr.bf16.mxu0 0
        %6848 = vmatpush1.bf16.msra.mxu0 0
        %6849 = vmatprep.subr.bf16.mxu0 0
        %6850 = vmatpush1.bf16.msra.mxu0 0
        %6851 = vmatprep.mubr.bf16.mxu0 0
        %6852 = vmatmul.mubr.bf16.gmra.mrb[0].mxu0 %v6817
        %v6853 = vpop.f32.mrb[0].mxu0
        %v6854 = vadd.f32 0.0, %v6853
        %v6855 = vpop.f32.mrb[0].mxu0
        %v6856 = vpop.f32.mrb[0].mxu0
        %v6857 = vadd.f32 0.0, %v6856
        %v6858 = vpop.f32.mrb[0].mxu0
        %6859 = vdwg.mxu0
        %v6860 = vpack.c.bf16 %v6857, %v6854
        %6862 = vrot.lane.b32.xlu0 %v6739, 96
        %v6863 = vpop.permute.xlu0 %6862
        %6865 = vrot.lane.b32.xlu0 %v6740, 96
        %v6866 = vpop.permute.xlu0 %6865
        %v6868 = vsel %vm826, %v6863, 0
        %v6871 = vsel %vm826, %v6866, 0
        %6873 = vmatprep.subr.bf16.mxu0 0
        %6874 = vmatpush1.bf16.xpose.msra.mxu0 %v6871
        %6875 = vmatprep.subr.bf16.mxu0 0
        %6876 = vmatpush1.bf16.xpose.msra.mxu0 0
        %6877 = vmatprep.subr.bf16.mxu0 0
        %6878 = vmatpush1.bf16.xpose.msra.mxu0 0
        %6879 = vmatprep.subr.bf16.mxu0 0
        %6880 = vmatpush1.bf16.xpose.msra.mxu0 0
        %6881 = vmatprep.subr.bf16.mxu0 0
        %6882 = vmatpush1.bf16.xpose.msra.mxu0 0
        %6883 = vmatprep.subr.bf16.mxu0 0
        %6884 = vmatpush1.bf16.xpose.msra.mxu0 0
        %6885 = vmatprep.subr.bf16.mxu0 0
        %6886 = vmatpush1.bf16.xpose.msra.mxu0 0
        %6887 = vmatprep.subr.bf16.mxu0 0
        %6888 = vmatpush1.bf16.xpose.msra.mxu0 0
        %6889 = vmatprep.subr.bf16.mxu0 0
        %6890 = vmatpush1.bf16.xpose.msra.mxu0 0
        %6891 = vmatprep.subr.bf16.mxu0 0
        %6892 = vmatpush1.bf16.xpose.msra.mxu0 0
        %6893 = vmatprep.subr.bf16.mxu0 0
        %6894 = vmatpush1.bf16.xpose.msra.mxu0 0
        %6895 = vmatprep.subr.bf16.mxu0 0
        %6896 = vmatpush1.bf16.xpose.msra.mxu0 0
        %6897 = vmatprep.subr.bf16.mxu0 0
        %6898 = vmatpush1.bf16.xpose.msra.mxu0 0
        %6899 = vmatprep.subr.bf16.mxu0 0
        %6900 = vmatpush1.bf16.xpose.msra.mxu0 0
        %6901 = vmatprep.subr.bf16.mxu0 0
        %6902 = vmatpush1.bf16.xpose.msra.mxu0 0
        %6903 = vmatprep.subr.bf16.mxu0 0
        %6904 = vmatpush1.bf16.xpose.msra.mxu0 0
        %6905 = vmatprep.mubr.bf16.mxu0 0
        %6906 = vmatmul.mubr.bf16.gmra.mrb[0].mxu0 %v6868
        %v6907 = vpop.f32.mrb[0].mxu0
        %v6908 = vadd.f32 %v540, %v6907
        %v6909 = vpop.f32.mrb[0].mxu0
        %v6910 = vpop.f32.mrb[0].mxu0
        %v6911 = vadd.f32 %v540, %v6910
        %v6912 = vpop.f32.mrb[0].mxu0
        %6913 = vdwg.mxu0
        %v6914 = vsel %vm874, %v6908, -inf
        %6915 = vmax.xlane.f32.xlu0 %v6914
        %v6916 = vpop.xlane.xlu0 %6915
        %v6917 = vsel %vm874, %v6911, -inf
        %6918 = vmax.xlane.f32.xlu0 %v6917
        %v6919 = vpop.xlane.xlu0 %6918
        %v6920 = vsub.f32 %v6908, %v6916
        %v6921 = vsub.f32 %v6911, %v6919
        %v6922 = vmul.f32 %v6920, 1.442695
        %v6923 = vpow.pop %v6922
        %v6924 = vmul.f32 %v6921, 1.442695
        %v6925 = vpow.pop %v6924
        %v6926 = vsel %vm874, %v6923, 0.0
        %6927 = vadd.xlane.f32.xlu0 %v6926
        %v6928 = vpop.xlane.xlu0 %6927
        %v6929 = vsel %vm874, %v6925, 0.0
        %6930 = vadd.xlane.f32.xlu0 %v6929
        %v6931 = vpop.xlane.xlu0 %6930
        %v6932 = vrcp.pop %v6928
        %v6933 = vmul.f32 1.0, %v6932
        %v6934 = vrcp.pop %v6931
        %v6935 = vmul.f32 1.0, %v6934
        %v6936 = vmul.f32 %v6923, %v6933
        %v6937 = vmul.f32 %v6925, %v6935
        %v6938 = vadd.f32 %v6813, %v6936
        %v6939 = vadd.f32 %v6814, %v6937
        %v6940 = vpack.c.bf16 %v6937, %v6936
        %6942 = vrot.lane.b32.xlu0 %v6741, 96
        %v6943 = vpop.permute.xlu0 %6942
        %v6946 = vsel %vm874, %v6940, 0
        %6948 = vmatprep.subr.bf16.mxu0 0
        %6949 = vmatpush1.bf16.msra.mxu0 %v6943
        %6950 = vmatprep.subr.bf16.mxu0 0
        %6951 = vmatpush1.bf16.msra.mxu0 0
        %6952 = vmatprep.subr.bf16.mxu0 0
        %6953 = vmatpush1.bf16.msra.mxu0 0
        %6954 = vmatprep.subr.bf16.mxu0 0
        %6955 = vmatpush1.bf16.msra.mxu0 0
        %6956 = vmatprep.subr.bf16.mxu0 0
        %6957 = vmatpush1.bf16.msra.mxu0 0
        %6958 = vmatprep.subr.bf16.mxu0 0
        %6959 = vmatpush1.bf16.msra.mxu0 0
        %6960 = vmatprep.subr.bf16.mxu0 0
        %6961 = vmatpush1.bf16.msra.mxu0 0
        %6962 = vmatprep.subr.bf16.mxu0 0
        %6963 = vmatpush1.bf16.msra.mxu0 0
        %6964 = vmatprep.subr.bf16.mxu0 0
        %6965 = vmatpush1.bf16.msra.mxu0 0
        %6966 = vmatprep.subr.bf16.mxu0 0
        %6967 = vmatpush1.bf16.msra.mxu0 0
        %6968 = vmatprep.subr.bf16.mxu0 0
        %6969 = vmatpush1.bf16.msra.mxu0 0
        %6970 = vmatprep.subr.bf16.mxu0 0
        %6971 = vmatpush1.bf16.msra.mxu0 0
        %6972 = vmatprep.subr.bf16.mxu0 0
        %6973 = vmatpush1.bf16.msra.mxu0 0
        %6974 = vmatprep.subr.bf16.mxu0 0
        %6975 = vmatpush1.bf16.msra.mxu0 0
        %6976 = vmatprep.subr.bf16.mxu0 0
        %6977 = vmatpush1.bf16.msra.mxu0 0
        %6978 = vmatprep.subr.bf16.mxu0 0
        %6979 = vmatpush1.bf16.msra.mxu0 0
        %6980 = vmatprep.mubr.bf16.mxu0 0
        %6981 = vmatmul.mubr.bf16.gmra.mrb[0].mxu0 %v6946
        %v6982 = vpop.f32.mrb[0].mxu0
        %v6983 = vadd.f32 0.0, %v6982
        %v6984 = vpop.f32.mrb[0].mxu0
        %v6985 = vpop.f32.mrb[0].mxu0
        %v6986 = vadd.f32 0.0, %v6985
        %v6987 = vpop.f32.mrb[0].mxu0
        %6988 = vdwg.mxu0
        %v6989 = vpack.c.bf16 %v6986, %v6983
        %v6994 = vunpack.c.l.b16 %v6725
        %v6995 = vunpack.c.l.b16 %v6726
        %v6996 = vunpack.c.l.b16 %v6727
        %v6997 = vunpack.c.l.b16 %v6728
        %v6998 = vpack.c.b16 %v6995, %v6994
        %v6999 = vpack.c.b16 %v6997, %v6996
        %v7003 = vsel %vm826, %v6989, 0
        %7005 = vmatprep.subr.bf16.mxu0 0
        %7006 = vmatpush1.bf16.msra.mxu0 %v6998
        %7007 = vmatprep.subr.bf16.mxu0 0
        %7008 = vmatpush1.bf16.msra.mxu0 %v6999
        %7009 = vmatprep.subr.bf16.mxu0 0
        %7010 = vmatpush1.bf16.msra.mxu0 0
        %7011 = vmatprep.subr.bf16.mxu0 0
        %7012 = vmatpush1.bf16.msra.mxu0 0
        %7013 = vmatprep.subr.bf16.mxu0 0
        %7014 = vmatpush1.bf16.msra.mxu0 0
        %7015 = vmatprep.subr.bf16.mxu0 0
        %7016 = vmatpush1.bf16.msra.mxu0 0
        %7017 = vmatprep.subr.bf16.mxu0 0
        %7018 = vmatpush1.bf16.msra.mxu0 0
        %7019 = vmatprep.subr.bf16.mxu0 0
        %7020 = vmatpush1.bf16.msra.mxu0 0
        %7021 = vmatprep.subr.bf16.mxu0 0
        %7022 = vmatpush1.bf16.msra.mxu0 0
        %7023 = vmatprep.subr.bf16.mxu0 0
        %7024 = vmatpush1.bf16.msra.mxu0 0
        %7025 = vmatprep.subr.bf16.mxu0 0
        %7026 = vmatpush1.bf16.msra.mxu0 0
        %7027 = vmatprep.subr.bf16.mxu0 0
        %7028 = vmatpush1.bf16.msra.mxu0 0
        %7029 = vmatprep.subr.bf16.mxu0 0
        %7030 = vmatpush1.bf16.msra.mxu0 0
        %7031 = vmatprep.subr.bf16.mxu0 0
        %7032 = vmatpush1.bf16.msra.mxu0 0
        %7033 = vmatprep.subr.bf16.mxu0 0
        %7034 = vmatpush1.bf16.msra.mxu0 0
        %7035 = vmatprep.subr.bf16.mxu0 0
        %7036 = vmatpush1.bf16.msra.mxu0 0
        %7037 = vmatprep.mubr.bf16.mxu0 0
        %7038 = vmatmul.mubr.bf16.gmra.mrb[0].mxu0 %v7003
        %v7039 = vpop.f32.mrb[0].mxu0
        %v7040 = vadd.f32 0.0, %v7039
        %v7041 = vpop.f32.mrb[0].mxu0
        %v7042 = vpop.f32.mrb[0].mxu0
        %v7043 = vadd.f32 0.0, %v7042
        %v7044 = vpop.f32.mrb[0].mxu0
        %7045 = vdwg.mxu0
        %v7050 = vunpack.c.l.b16 %v6721
        %v7051 = vunpack.c.l.b16 %v6722
        %v7052 = vunpack.c.l.b16 %v6723
        %v7053 = vunpack.c.l.b16 %v6724
        %v7054 = vpack.c.b16 %v7051, %v7050
        %v7055 = vpack.c.b16 %v7053, %v7052
        %v7059 = vsel %vm826, %v6860, 0
        %7061 = vmatprep.subr.bf16.mxu0 0
        %7062 = vmatpush1.bf16.msra.mxu0 %v7054
        %7063 = vmatprep.subr.bf16.mxu0 0
        %7064 = vmatpush1.bf16.msra.mxu0 %v7055
        %7065 = vmatprep.subr.bf16.mxu0 0
        %7066 = vmatpush1.bf16.msra.mxu0 0
        %7067 = vmatprep.subr.bf16.mxu0 0
        %7068 = vmatpush1.bf16.msra.mxu0 0
        %7069 = vmatprep.subr.bf16.mxu0 0
        %7070 = vmatpush1.bf16.msra.mxu0 0
        %7071 = vmatprep.subr.bf16.mxu0 0
        %7072 = vmatpush1.bf16.msra.mxu0 0
        %7073 = vmatprep.subr.bf16.mxu0 0
        %7074 = vmatpush1.bf16.msra.mxu0 0
        %7075 = vmatprep.subr.bf16.mxu0 0
        %7076 = vmatpush1.bf16.msra.mxu0 0
        %7077 = vmatprep.subr.bf16.mxu0 0
        %7078 = vmatpush1.bf16.msra.mxu0 0
        %7079 = vmatprep.subr.bf16.mxu0 0
        %7080 = vmatpush1.bf16.msra.mxu0 0
        %7081 = vmatprep.subr.bf16.mxu0 0
        %7082 = vmatpush1.bf16.msra.mxu0 0
        %7083 = vmatprep.subr.bf16.mxu0 0
        %7084 = vmatpush1.bf16.msra.mxu0 0
        %7085 = vmatprep.subr.bf16.mxu0 0
        %7086 = vmatpush1.bf16.msra.mxu0 0
        %7087 = vmatprep.subr.bf16.mxu0 0
        %7088 = vmatpush1.bf16.msra.mxu0 0
        %7089 = vmatprep.subr.bf16.mxu0 0
        %7090 = vmatpush1.bf16.msra.mxu0 0
        %7091 = vmatprep.subr.bf16.mxu0 0
        %7092 = vmatpush1.bf16.msra.mxu0 0
        %7093 = vmatprep.mubr.bf16.mxu0 0
        %7094 = vmatmul.mubr.bf16.gmra.mrb[0].mxu0 %v7059
        %v7095 = vpop.f32.mrb[0].mxu0
        %v7096 = vadd.f32 %v7040, %v7095
        %v7097 = vpop.f32.mrb[0].mxu0
        %v7098 = vpop.f32.mrb[0].mxu0
        %v7099 = vadd.f32 %v7043, %v7098
        %v7100 = vpop.f32.mrb[0].mxu0
        %7101 = vdwg.mxu0
        %7102 = vrot.lane.b32.xlu0 %v6739, 64
        %v7103 = vpop.permute.xlu0 %7102
        %7104 = vrot.lane.b32.xlu0 %v6740, 64
        %v7105 = vpop.permute.xlu0 %7104
        %v7107 = vsel %vm826, %v7103, 0
        %v7110 = vsel %vm826, %v7105, 0
        %7112 = vmatprep.subr.bf16.mxu0 0
        %7113 = vmatpush1.bf16.xpose.msra.mxu0 %v7110
        %7114 = vmatprep.subr.bf16.mxu0 0
        %7115 = vmatpush1.bf16.xpose.msra.mxu0 0
        %7116 = vmatprep.subr.bf16.mxu0 0
        %7117 = vmatpush1.bf16.xpose.msra.mxu0 0
        %7118 = vmatprep.subr.bf16.mxu0 0
        %7119 = vmatpush1.bf16.xpose.msra.mxu0 0
        %7120 = vmatprep.subr.bf16.mxu0 0
        %7121 = vmatpush1.bf16.xpose.msra.mxu0 0
        %7122 = vmatprep.subr.bf16.mxu0 0
        %7123 = vmatpush1.bf16.xpose.msra.mxu0 0
        %7124 = vmatprep.subr.bf16.mxu0 0
        %7125 = vmatpush1.bf16.xpose.msra.mxu0 0
        %7126 = vmatprep.subr.bf16.mxu0 0
        %7127 = vmatpush1.bf16.xpose.msra.mxu0 0
        %7128 = vmatprep.subr.bf16.mxu0 0
        %7129 = vmatpush1.bf16.xpose.msra.mxu0 0
        %7130 = vmatprep.subr.bf16.mxu0 0
        %7131 = vmatpush1.bf16.xpose.msra.mxu0 0
        %7132 = vmatprep.subr.bf16.mxu0 0
        %7133 = vmatpush1.bf16.xpose.msra.mxu0 0
        %7134 = vmatprep.subr.bf16.mxu0 0
        %7135 = vmatpush1.bf16.xpose.msra.mxu0 0
        %7136 = vmatprep.subr.bf16.mxu0 0
        %7137 = vmatpush1.bf16.xpose.msra.mxu0 0
        %7138 = vmatprep.subr.bf16.mxu0 0
        %7139 = vmatpush1.bf16.xpose.msra.mxu0 0
        %7140 = vmatprep.subr.bf16.mxu0 0
        %7141 = vmatpush1.bf16.xpose.msra.mxu0 0
        %7142 = vmatprep.subr.bf16.mxu0 0
        %7143 = vmatpush1.bf16.xpose.msra.mxu0 0
        %7144 = vmatprep.mubr.bf16.mxu0 0
        %7145 = vmatmul.mubr.bf16.gmra.mrb[0].mxu0 %v7107
        %v7146 = vpop.f32.mrb[0].mxu0
        %v7147 = vadd.f32 %v540, %v7146
        %v7148 = vpop.f32.mrb[0].mxu0
        %v7149 = vpop.f32.mrb[0].mxu0
        %v7150 = vadd.f32 %v540, %v7149
        %v7151 = vpop.f32.mrb[0].mxu0
        %7152 = vdwg.mxu0
        %v7153 = vsel %vm874, %v7147, -inf
        %7154 = vmax.xlane.f32.xlu0 %v7153
        %v7155 = vpop.xlane.xlu0 %7154
        %v7156 = vsel %vm874, %v7150, -inf
        %7157 = vmax.xlane.f32.xlu0 %v7156
        %v7158 = vpop.xlane.xlu0 %7157
        %v7159 = vsub.f32 %v7147, %v7155
        %v7160 = vsub.f32 %v7150, %v7158
        %v7161 = vmul.f32 %v7159, 1.442695
        %v7162 = vpow.pop %v7161
        %v7163 = vmul.f32 %v7160, 1.442695
        %v7164 = vpow.pop %v7163
        %v7165 = vsel %vm874, %v7162, 0.0
        %7166 = vadd.xlane.f32.xlu0 %v7165
        %v7167 = vpop.xlane.xlu0 %7166
        %v7168 = vsel %vm874, %v7164, 0.0
        %7169 = vadd.xlane.f32.xlu0 %v7168
        %v7170 = vpop.xlane.xlu0 %7169
        %v7171 = vrcp.pop %v7167
        %v7172 = vmul.f32 1.0, %v7171
        %v7173 = vrcp.pop %v7170
        %v7174 = vmul.f32 1.0, %v7173
        %v7175 = vmul.f32 %v7162, %v7172
        %v7176 = vmul.f32 %v7164, %v7174
        %v7177 = vadd.f32 %v6938, %v7175
        %v7178 = vadd.f32 %v6939, %v7176
        %v7179 = vpack.c.bf16 %v7176, %v7175
        %7180 = vrot.lane.b32.xlu0 %v6741, 64
        %v7181 = vpop.permute.xlu0 %7180
        %v7184 = vsel %vm874, %v7179, 0
        %7186 = vmatprep.subr.bf16.mxu0 0
        %7187 = vmatpush1.bf16.msra.mxu0 %v7181
        %7188 = vmatprep.subr.bf16.mxu0 0
        %7189 = vmatpush1.bf16.msra.mxu0 0
        %7190 = vmatprep.subr.bf16.mxu0 0
        %7191 = vmatpush1.bf16.msra.mxu0 0
        %7192 = vmatprep.subr.bf16.mxu0 0
        %7193 = vmatpush1.bf16.msra.mxu0 0
        %7194 = vmatprep.subr.bf16.mxu0 0
        %7195 = vmatpush1.bf16.msra.mxu0 0
        %7196 = vmatprep.subr.bf16.mxu0 0
        %7197 = vmatpush1.bf16.msra.mxu0 0
        %7198 = vmatprep.subr.bf16.mxu0 0
        %7199 = vmatpush1.bf16.msra.mxu0 0
        %7200 = vmatprep.subr.bf16.mxu0 0
        %7201 = vmatpush1.bf16.msra.mxu0 0
        %7202 = vmatprep.subr.bf16.mxu0 0
        %7203 = vmatpush1.bf16.msra.mxu0 0
        %7204 = vmatprep.subr.bf16.mxu0 0
        %7205 = vmatpush1.bf16.msra.mxu0 0
        %7206 = vmatprep.subr.bf16.mxu0 0
        %7207 = vmatpush1.bf16.msra.mxu0 0
        %7208 = vmatprep.subr.bf16.mxu0 0
        %7209 = vmatpush1.bf16.msra.mxu0 0
        %7210 = vmatprep.subr.bf16.mxu0 0
        %7211 = vmatpush1.bf16.msra.mxu0 0
        %7212 = vmatprep.subr.bf16.mxu0 0
        %7213 = vmatpush1.bf16.msra.mxu0 0
        %7214 = vmatprep.subr.bf16.mxu0 0
        %7215 = vmatpush1.bf16.msra.mxu0 0
        %7216 = vmatprep.subr.bf16.mxu0 0
        %7217 = vmatpush1.bf16.msra.mxu0 0
        %7218 = vmatprep.mubr.bf16.mxu0 0
        %7219 = vmatmul.mubr.bf16.gmra.mrb[0].mxu0 %v7184
        %v7220 = vpop.f32.mrb[0].mxu0
        %v7221 = vadd.f32 0.0, %v7220
        %v7222 = vpop.f32.mrb[0].mxu0
        %v7223 = vpop.f32.mrb[0].mxu0
        %v7224 = vadd.f32 0.0, %v7223
        %v7225 = vpop.f32.mrb[0].mxu0
        %7226 = vdwg.mxu0
        %v7227 = vpack.c.bf16 %v7224, %v7221
        %v7232 = vunpack.c.l.b16 %v6729
        %v7233 = vunpack.c.l.b16 %v6730
        %v7234 = vunpack.c.l.b16 %v6731
        %v7235 = vunpack.c.l.b16 %v6732
        %v7236 = vpack.c.b16 %v7233, %v7232
        %v7237 = vpack.c.b16 %v7235, %v7234
        %v7241 = vsel %vm826, %v7227, 0
        %7243 = vmatprep.subr.bf16.mxu0 0
        %7244 = vmatpush1.bf16.msra.mxu0 %v7236
        %7245 = vmatprep.subr.bf16.mxu0 0
        %7246 = vmatpush1.bf16.msra.mxu0 %v7237
        %7247 = vmatprep.subr.bf16.mxu0 0
        %7248 = vmatpush1.bf16.msra.mxu0 0
        %7249 = vmatprep.subr.bf16.mxu0 0
        %7250 = vmatpush1.bf16.msra.mxu0 0
        %7251 = vmatprep.subr.bf16.mxu0 0
        %7252 = vmatpush1.bf16.msra.mxu0 0
        %7253 = vmatprep.subr.bf16.mxu0 0
        %7254 = vmatpush1.bf16.msra.mxu0 0
        %7255 = vmatprep.subr.bf16.mxu0 0
        %7256 = vmatpush1.bf16.msra.mxu0 0
        %7257 = vmatprep.subr.bf16.mxu0 0
        %7258 = vmatpush1.bf16.msra.mxu0 0
        %7259 = vmatprep.subr.bf16.mxu0 0
        %7260 = vmatpush1.bf16.msra.mxu0 0
        %7261 = vmatprep.subr.bf16.mxu0 0
        %7262 = vmatpush1.bf16.msra.mxu0 0
        %7263 = vmatprep.subr.bf16.mxu0 0
        %7264 = vmatpush1.bf16.msra.mxu0 0
        %7265 = vmatprep.subr.bf16.mxu0 0
        %7266 = vmatpush1.bf16.msra.mxu0 0
        %7267 = vmatprep.subr.bf16.mxu0 0
        %7268 = vmatpush1.bf16.msra.mxu0 0
        %7269 = vmatprep.subr.bf16.mxu0 0
        %7270 = vmatpush1.bf16.msra.mxu0 0
        %7271 = vmatprep.subr.bf16.mxu0 0
        %7272 = vmatpush1.bf16.msra.mxu0 0
        %7273 = vmatprep.subr.bf16.mxu0 0
        %7274 = vmatpush1.bf16.msra.mxu0 0
        %7275 = vmatprep.mubr.bf16.mxu0 0
        %7276 = vmatmul.mubr.bf16.gmra.mrb[0].mxu0 %v7241
        %v7277 = vpop.f32.mrb[0].mxu0
        %v7278 = vadd.f32 0.0, %v7277
        %v7279 = vpop.f32.mrb[0].mxu0
        %v7280 = vpop.f32.mrb[0].mxu0
        %v7281 = vadd.f32 0.0, %v7280
        %v7282 = vpop.f32.mrb[0].mxu0
        %7283 = vdwg.mxu0
        %v7284 = vadd.f32 %v7096, %v7278
        %v7285 = vadd.f32 %v7099, %v7281
        %7286 = vrot.lane.b32.xlu0 %v6739, 32
        %v7287 = vpop.permute.xlu0 %7286
        %7288 = vrot.lane.b32.xlu0 %v6740, 32
        %v7289 = vpop.permute.xlu0 %7288
        %v7291 = vsel %vm826, %v7287, 0
        %v7294 = vsel %vm826, %v7289, 0
        %7296 = vmatprep.subr.bf16.mxu0 0
        %7297 = vmatpush1.bf16.xpose.msra.mxu0 %v7294
        %7298 = vmatprep.subr.bf16.mxu0 0
        %7299 = vmatpush1.bf16.xpose.msra.mxu0 0
        %7300 = vmatprep.subr.bf16.mxu0 0
        %7301 = vmatpush1.bf16.xpose.msra.mxu0 0
        %7302 = vmatprep.subr.bf16.mxu0 0
        %7303 = vmatpush1.bf16.xpose.msra.mxu0 0
        %7304 = vmatprep.subr.bf16.mxu0 0
        %7305 = vmatpush1.bf16.xpose.msra.mxu0 0
        %7306 = vmatprep.subr.bf16.mxu0 0
        %7307 = vmatpush1.bf16.xpose.msra.mxu0 0
        %7308 = vmatprep.subr.bf16.mxu0 0
        %7309 = vmatpush1.bf16.xpose.msra.mxu0 0
        %7310 = vmatprep.subr.bf16.mxu0 0
        %7311 = vmatpush1.bf16.xpose.msra.mxu0 0
        %7312 = vmatprep.subr.bf16.mxu0 0
        %7313 = vmatpush1.bf16.xpose.msra.mxu0 0
        %7314 = vmatprep.subr.bf16.mxu0 0
        %7315 = vmatpush1.bf16.xpose.msra.mxu0 0
        %7316 = vmatprep.subr.bf16.mxu0 0
        %7317 = vmatpush1.bf16.xpose.msra.mxu0 0
        %7318 = vmatprep.subr.bf16.mxu0 0
        %7319 = vmatpush1.bf16.xpose.msra.mxu0 0
        %7320 = vmatprep.subr.bf16.mxu0 0
        %7321 = vmatpush1.bf16.xpose.msra.mxu0 0
        %7322 = vmatprep.subr.bf16.mxu0 0
        %7323 = vmatpush1.bf16.xpose.msra.mxu0 0
        %7324 = vmatprep.subr.bf16.mxu0 0
        %7325 = vmatpush1.bf16.xpose.msra.mxu0 0
        %7326 = vmatprep.subr.bf16.mxu0 0
        %7327 = vmatpush1.bf16.xpose.msra.mxu0 0
        %7328 = vmatprep.mubr.bf16.mxu0 0
        %7329 = vmatmul.mubr.bf16.gmra.mrb[0].mxu0 %v7291
        %v7330 = vpop.f32.mrb[0].mxu0
        %v7331 = vadd.f32 %v540, %v7330
        %v7332 = vpop.f32.mrb[0].mxu0
        %v7333 = vpop.f32.mrb[0].mxu0
        %v7334 = vadd.f32 %v540, %v7333
        %v7335 = vpop.f32.mrb[0].mxu0
        %7336 = vdwg.mxu0
        %v7337 = vsel %vm874, %v7331, -inf
        %7338 = vmax.xlane.f32.xlu0 %v7337
        %v7339 = vpop.xlane.xlu0 %7338
        %v7340 = vsel %vm874, %v7334, -inf
        %7341 = vmax.xlane.f32.xlu0 %v7340
        %v7342 = vpop.xlane.xlu0 %7341
        %v7343 = vsub.f32 %v7331, %v7339
        %v7344 = vsub.f32 %v7334, %v7342
        %v7345 = vmul.f32 %v7343, 1.442695
        %v7346 = vpow.pop %v7345
        %v7347 = vmul.f32 %v7344, 1.442695
        %v7348 = vpow.pop %v7347
        %v7349 = vsel %vm874, %v7346, 0.0
        %7350 = vadd.xlane.f32.xlu0 %v7349
        %v7351 = vpop.xlane.xlu0 %7350
        %v7352 = vsel %vm874, %v7348, 0.0
        %7353 = vadd.xlane.f32.xlu0 %v7352
        %v7354 = vpop.xlane.xlu0 %7353
        %v7355 = vrcp.pop %v7351
        %v7356 = vmul.f32 1.0, %v7355
        %v7357 = vrcp.pop %v7354
        %v7358 = vmul.f32 1.0, %v7357
        %v7359 = vmul.f32 %v7346, %v7356
        %v7360 = vmul.f32 %v7348, %v7358
        %v7361 = vadd.f32 %v7177, %v7359
        %v7362 = vadd.f32 %v7178, %v7360
        %v7363 = vpack.c.bf16 %v7360, %v7359
        %7364 = vrot.lane.b32.xlu0 %v6741, 32
        %v7365 = vpop.permute.xlu0 %7364
        %v7368 = vsel %vm874, %v7363, 0
        %7370 = vmatprep.subr.bf16.mxu0 0
        %7371 = vmatpush1.bf16.msra.mxu0 %v7365
        %7372 = vmatprep.subr.bf16.mxu0 0
        %7373 = vmatpush1.bf16.msra.mxu0 0
        %7374 = vmatprep.subr.bf16.mxu0 0
        %7375 = vmatpush1.bf16.msra.mxu0 0
        %7376 = vmatprep.subr.bf16.mxu0 0
        %7377 = vmatpush1.bf16.msra.mxu0 0
        %7378 = vmatprep.subr.bf16.mxu0 0
        %7379 = vmatpush1.bf16.msra.mxu0 0
        %7380 = vmatprep.subr.bf16.mxu0 0
        %7381 = vmatpush1.bf16.msra.mxu0 0
        %7382 = vmatprep.subr.bf16.mxu0 0
        %7383 = vmatpush1.bf16.msra.mxu0 0
        %7384 = vmatprep.subr.bf16.mxu0 0
        %7385 = vmatpush1.bf16.msra.mxu0 0
        %7386 = vmatprep.subr.bf16.mxu0 0
        %7387 = vmatpush1.bf16.msra.mxu0 0
        %7388 = vmatprep.subr.bf16.mxu0 0
        %7389 = vmatpush1.bf16.msra.mxu0 0
        %7390 = vmatprep.subr.bf16.mxu0 0
        %7391 = vmatpush1.bf16.msra.mxu0 0
        %7392 = vmatprep.subr.bf16.mxu0 0
        %7393 = vmatpush1.bf16.msra.mxu0 0
        %7394 = vmatprep.subr.bf16.mxu0 0
        %7395 = vmatpush1.bf16.msra.mxu0 0
        %7396 = vmatprep.subr.bf16.mxu0 0
        %7397 = vmatpush1.bf16.msra.mxu0 0
        %7398 = vmatprep.subr.bf16.mxu0 0
        %7399 = vmatpush1.bf16.msra.mxu0 0
        %7400 = vmatprep.subr.bf16.mxu0 0
        %7401 = vmatpush1.bf16.msra.mxu0 0
        %7402 = vmatprep.mubr.bf16.mxu0 0
        %7403 = vmatmul.mubr.bf16.gmra.mrb[0].mxu0 %v7368
        %v7404 = vpop.f32.mrb[0].mxu0
        %v7405 = vadd.f32 0.0, %v7404
        %v7406 = vpop.f32.mrb[0].mxu0
        %v7407 = vpop.f32.mrb[0].mxu0
        %v7408 = vadd.f32 0.0, %v7407
        %v7409 = vpop.f32.mrb[0].mxu0
        %7410 = vdwg.mxu0
        %v7411 = vpack.c.bf16 %v7408, %v7405
        %v7416 = vunpack.c.l.b16 %v6733
        %v7417 = vunpack.c.l.b16 %v6734
        %v7418 = vunpack.c.l.b16 %v6735
        %v7419 = vunpack.c.l.b16 %v6736
        %v7420 = vpack.c.b16 %v7417, %v7416
        %v7421 = vpack.c.b16 %v7419, %v7418
        %v7425 = vsel %vm826, %v7411, 0
        %7427 = vmatprep.subr.bf16.mxu0 0
        %7428 = vmatpush1.bf16.msra.mxu0 %v7420
        %7429 = vmatprep.subr.bf16.mxu0 0
        %7430 = vmatpush1.bf16.msra.mxu0 %v7421
        %7431 = vmatprep.subr.bf16.mxu0 0
        %7432 = vmatpush1.bf16.msra.mxu0 0
        %7433 = vmatprep.subr.bf16.mxu0 0
        %7434 = vmatpush1.bf16.msra.mxu0 0
        %7435 = vmatprep.subr.bf16.mxu0 0
        %7436 = vmatpush1.bf16.msra.mxu0 0
        %7437 = vmatprep.subr.bf16.mxu0 0
        %7438 = vmatpush1.bf16.msra.mxu0 0
        %7439 = vmatprep.subr.bf16.mxu0 0
        %7440 = vmatpush1.bf16.msra.mxu0 0
        %7441 = vmatprep.subr.bf16.mxu0 0
        %7442 = vmatpush1.bf16.msra.mxu0 0
        %7443 = vmatprep.subr.bf16.mxu0 0
        %7444 = vmatpush1.bf16.msra.mxu0 0
        %7445 = vmatprep.subr.bf16.mxu0 0
        %7446 = vmatpush1.bf16.msra.mxu0 0
        %7447 = vmatprep.subr.bf16.mxu0 0
        %7448 = vmatpush1.bf16.msra.mxu0 0
        %7449 = vmatprep.subr.bf16.mxu0 0
        %7450 = vmatpush1.bf16.msra.mxu0 0
        %7451 = vmatprep.subr.bf16.mxu0 0
        %7452 = vmatpush1.bf16.msra.mxu0 0
        %7453 = vmatprep.subr.bf16.mxu0 0
        %7454 = vmatpush1.bf16.msra.mxu0 0
        %7455 = vmatprep.subr.bf16.mxu0 0
        %7456 = vmatpush1.bf16.msra.mxu0 0
        %7457 = vmatprep.subr.bf16.mxu0 0
        %7458 = vmatpush1.bf16.msra.mxu0 0
        %7459 = vmatprep.mubr.bf16.mxu0 0
        %7460 = vmatmul.mubr.bf16.gmra.mrb[0].mxu0 %v7425
        %v7461 = vpop.f32.mrb[0].mxu0
        %v7462 = vadd.f32 0.0, %v7461
        %v7463 = vpop.f32.mrb[0].mxu0
        %v7464 = vpop.f32.mrb[0].mxu0
        %v7465 = vadd.f32 0.0, %v7464
        %v7466 = vpop.f32.mrb[0].mxu0
        %7467 = vdwg.mxu0
        %v7468 = vadd.f32 %v7284, %v7462
        %v7469 = vadd.f32 %v7285, %v7465
        %s7470 = scalar_lea.vmem %s4, 3
        %v7471 = vld [vmem:[%s7470] sm:$0x1]
        %v7473 = vlaneseq
        %v7474 = vshrl.u32 %v7473, 7
        %v7475 = vsub.s32 0, %v7474
        %v7476 = vrot.slane %v7471, %v7475
        %v7478 = vadd.f32 %v7468, %v7476
        %v7479 = vadd.f32 %v7469, %v7476
        %v7480 = vadd.f32 %v6454, %v7478
        %v7481 = vadd.f32 %v6455, %v7479
        %s7482 = scalar_lea.vmem %s5, 3
        %v7483 = vld [vmem:[%s7482] sm:$0x1]
        %s7484 = scalar_lea.vmem %s6, 3
        %v7485 = vld [vmem:[%s7484] sm:$0x1]
        %7486 = vadd.xlane.f32.xlu0 %v7480
        %v7487 = vpop.xlane.xlu0 %7486
        %7488 = vadd.xlane.f32.xlu0 %v7481
        %v7489 = vpop.xlane.xlu0 %7488
        %v7490 = vmul.f32 %v7487, %v1565
        %v7491 = vmul.f32 %v7489, %v1565
        %v7492 = vsub.f32 %v7480, %v7490
        %v7493 = vsub.f32 %v7481, %v7491
        %v7494 = vmul.f32 %v7492, %v7492
        %v7495 = vmul.f32 %v7493, %v7493
        %7496 = vadd.xlane.f32.xlu0 %v7494
        %v7497 = vpop.xlane.xlu0 %7496
        %7498 = vadd.xlane.f32.xlu0 %v7495
        %v7499 = vpop.xlane.xlu0 %7498
        %v7500 = vmul.f32 %v7497, %v1565
        %v7501 = vmul.f32 %v7499, %v1565
        %v7502 = vadd.f32 %v7500, 1e-05
        %v7503 = vadd.f32 %v7501, 1e-05
        %v7504 = vrsqrt.pop %v7502
        %v7505 = vrsqrt.pop %v7503
        %v7506 = vmul.f32 %v7492, %v7504
        %v7507 = vmul.f32 %v7493, %v7505
        %v7509 = vlaneseq
        %v7510 = vshrl.u32 %v7509, 7
        %v7511 = vsub.s32 0, %v7510
        %v7512 = vrot.slane %v7483, %v7511
        %v7514 = vmul.f32 %v7506, %v7512
        %v7515 = vmul.f32 %v7507, %v7512
        %v7517 = vlaneseq
        %v7518 = vshrl.u32 %v7517, 7
        %v7519 = vsub.s32 0, %v7518
        %v7520 = vrot.slane %v7485, %v7519
        %v7522 = vadd.f32 %v7514, %v7520
        %v7523 = vadd.f32 %v7515, %v7520
        %v7524 = vpack.c.bf16 %v7523, %v7522
        %s7525 = scalar_lea.vmem [#allocation6], 768
        %v7526 = vld [vmem:[%s7525] sm:$0xff]
        %v7527 = vld [vmem:[%s7525 + $0x8] sm:$0xff]
        %v7528 = vld [vmem:[%s7525 + $0x10] sm:$0xff]
        %v7529 = vld [vmem:[%s7525 + $0x18] sm:$0xff]
        %v7530 = vld [vmem:[%s7525 + $0x20] sm:$0xff]
        %v7531 = vld [vmem:[%s7525 + $0x28] sm:$0xff]
        %v7532 = vld [vmem:[%s7525 + $0x30] sm:$0xff]
        %v7533 = vld [vmem:[%s7525 + $0x38] sm:$0xff]
        %v7534 = vld [vmem:[%s7525 + $0x40] sm:$0xff]
        %v7535 = vld [vmem:[%s7525 + $0x48] sm:$0xff]
        %v7536 = vld [vmem:[%s7525 + $0x50] sm:$0xff]
        %v7537 = vld [vmem:[%s7525 + $0x58] sm:$0xff]
        %v7538 = vld [vmem:[%s7525 + $0x60] sm:$0xff]
        %v7539 = vld [vmem:[%s7525 + $0x68] sm:$0xff]
        %v7540 = vld [vmem:[%s7525 + $0x70] sm:$0xff]
        %v7541 = vld [vmem:[%s7525 + $0x78] sm:$0xff]
        %v7542 = vld [vmem:[%s7525 + $0x80] sm:$0xff]
        %v7543 = vld [vmem:[%s7525 + $0x88] sm:$0xff]
        %v7544 = vld [vmem:[%s7525 + $0x90] sm:$0xff]
        %v7545 = vld [vmem:[%s7525 + $0x98] sm:$0xff]
        %v7546 = vld [vmem:[%s7525 + $0xa0] sm:$0xff]
        %v7547 = vld [vmem:[%s7525 + $0xa8] sm:$0xff]
        %v7548 = vld [vmem:[%s7525 + $0xb0] sm:$0xff]
        %v7549 = vld [vmem:[%s7525 + $0xb8] sm:$0xff]
        %v7550 = vld [vmem:[%s7525 + $0xc0] sm:$0xff]
        %v7551 = vld [vmem:[%s7525 + $0xc8] sm:$0xff]
        %v7552 = vld [vmem:[%s7525 + $0xd0] sm:$0xff]
        %v7553 = vld [vmem:[%s7525 + $0xd8] sm:$0xff]
        %v7554 = vld [vmem:[%s7525 + $0xe0] sm:$0xff]
        %v7555 = vld [vmem:[%s7525 + $0xe8] sm:$0xff]
        %v7556 = vld [vmem:[%s7525 + $0xf0] sm:$0xff]
        %v7557 = vld [vmem:[%s7525 + $0xf8] sm:$0xff]
        %s7558 = scalar_lea.vmem %s8, 12
        %v7559 = vld [vmem:[%s7558] sm:$0xf]
        %v7561 = vlaneseq
        %v7562 = vshrl.u32 %v7561, 7
        %v7563 = vsub.s32 0, %v7562
        %v7564 = vrot.slane %v7559, %v7563
        %v7565 = vlaneseq
        %v7566 = vshrl.u32 %v7565, 7
        %v7567 = vsub.s32 1, %v7566
        %v7568 = vrot.slane %v7559, %v7567
        %v7569 = vlaneseq
        %v7570 = vshrl.u32 %v7569, 7
        %v7571 = vsub.s32 2, %v7570
        %v7572 = vrot.slane %v7559, %v7571
        %v7573 = vlaneseq
        %v7574 = vshrl.u32 %v7573, 7
        %v7575 = vsub.s32 3, %v7574
        %v7576 = vrot.slane %v7559, %v7575
        %v7613 = vunpack.c.l.b16 %v7526
        %v7614 = vunpack.c.h.b16 %v7526
        %v7615 = vunpack.c.l.b16 %v7527
        %v7616 = vunpack.c.h.b16 %v7527
        %v7617 = vunpack.c.l.b16 %v7528
        %v7618 = vunpack.c.h.b16 %v7528
        %v7619 = vunpack.c.l.b16 %v7529
        %v7620 = vunpack.c.h.b16 %v7529
        %v7621 = vunpack.c.l.b16 %v7530
        %v7622 = vunpack.c.h.b16 %v7530
        %v7623 = vunpack.c.l.b16 %v7531
        %v7624 = vunpack.c.h.b16 %v7531
        %v7625 = vunpack.c.l.b16 %v7532
        %v7626 = vunpack.c.h.b16 %v7532
        %v7627 = vunpack.c.l.b16 %v7533
        %v7628 = vunpack.c.h.b16 %v7533
        %v7629 = vunpack.c.l.b16 %v7534
        %v7630 = vunpack.c.h.b16 %v7534
        %v7631 = vunpack.c.l.b16 %v7535
        %v7632 = vunpack.c.h.b16 %v7535
        %v7633 = vunpack.c.l.b16 %v7536
        %v7634 = vunpack.c.h.b16 %v7536
        %v7635 = vunpack.c.l.b16 %v7537
        %v7636 = vunpack.c.h.b16 %v7537
        %v7637 = vunpack.c.l.b16 %v7538
        %v7638 = vunpack.c.h.b16 %v7538
        %v7639 = vunpack.c.l.b16 %v7539
        %v7640 = vunpack.c.h.b16 %v7539
        %v7641 = vunpack.c.l.b16 %v7540
        %v7642 = vunpack.c.h.b16 %v7540
        %v7643 = vunpack.c.l.b16 %v7541
        %v7644 = vunpack.c.h.b16 %v7541
        %v7645 = vunpack.c.l.b16 %v7542
        %v7646 = vunpack.c.h.b16 %v7542
        %v7647 = vunpack.c.l.b16 %v7543
        %v7648 = vunpack.c.h.b16 %v7543
        %v7649 = vunpack.c.l.b16 %v7544
        %v7650 = vunpack.c.h.b16 %v7544
        %v7651 = vunpack.c.l.b16 %v7545
        %v7652 = vunpack.c.h.b16 %v7545
        %v7653 = vunpack.c.l.b16 %v7546
        %v7654 = vunpack.c.h.b16 %v7546
        %v7655 = vunpack.c.l.b16 %v7547
        %v7656 = vunpack.c.h.b16 %v7547
        %v7657 = vunpack.c.l.b16 %v7548
        %v7658 = vunpack.c.h.b16 %v7548
        %v7659 = vunpack.c.l.b16 %v7549
        %v7660 = vunpack.c.h.b16 %v7549
        %v7661 = vunpack.c.l.b16 %v7550
        %v7662 = vunpack.c.h.b16 %v7550
        %v7663 = vunpack.c.l.b16 %v7551
        %v7664 = vunpack.c.h.b16 %v7551
        %v7665 = vunpack.c.l.b16 %v7552
        %v7666 = vunpack.c.h.b16 %v7552
        %v7667 = vunpack.c.l.b16 %v7553
        %v7668 = vunpack.c.h.b16 %v7553
        %v7669 = vunpack.c.l.b16 %v7554
        %v7670 = vunpack.c.h.b16 %v7554
        %v7671 = vunpack.c.l.b16 %v7555
        %v7672 = vunpack.c.h.b16 %v7555
        %v7673 = vunpack.c.l.b16 %v7556
        %v7674 = vunpack.c.h.b16 %v7556
        %v7675 = vunpack.c.l.b16 %v7557
        %v7676 = vunpack.c.h.b16 %v7557
        %v7677 = vpack.c.b16 %v7617, %v7613
        %v7678 = vpack.c.b16 %v7618, %v7614
        %v7679 = vpack.c.b16 %v7619, %v7615
        %v7680 = vpack.c.b16 %v7620, %v7616
        %v7681 = vpack.c.b16 %v7625, %v7621
        %v7682 = vpack.c.b16 %v7626, %v7622
        %v7683 = vpack.c.b16 %v7627, %v7623
        %v7684 = vpack.c.b16 %v7628, %v7624
        %v7685 = vpack.c.b16 %v7633, %v7629
        %v7686 = vpack.c.b16 %v7634, %v7630
        %v7687 = vpack.c.b16 %v7635, %v7631
        %v7688 = vpack.c.b16 %v7636, %v7632
        %v7689 = vpack.c.b16 %v7641, %v7637
        %v7690 = vpack.c.b16 %v7642, %v7638
        %v7691 = vpack.c.b16 %v7643, %v7639
        %v7692 = vpack.c.b16 %v7644, %v7640
        %v7693 = vpack.c.b16 %v7649, %v7645
        %v7694 = vpack.c.b16 %v7650, %v7646
        %v7695 = vpack.c.b16 %v7651, %v7647
        %v7696 = vpack.c.b16 %v7652, %v7648
        %v7697 = vpack.c.b16 %v7657, %v7653
        %v7698 = vpack.c.b16 %v7658, %v7654
        %v7699 = vpack.c.b16 %v7659, %v7655
        %v7700 = vpack.c.b16 %v7660, %v7656
        %v7701 = vpack.c.b16 %v7665, %v7661
        %v7702 = vpack.c.b16 %v7666, %v7662
        %v7703 = vpack.c.b16 %v7667, %v7663
        %v7704 = vpack.c.b16 %v7668, %v7664
        %v7705 = vpack.c.b16 %v7673, %v7669
        %v7706 = vpack.c.b16 %v7674, %v7670
        %v7707 = vpack.c.b16 %v7675, %v7671
        %v7708 = vpack.c.b16 %v7676, %v7672
        %7741 = vmatprep.subr.bf16.mxu0 %v7678
        %7742 = vmatpush1.bf16.msra.mxu0 %v7677
        %7743 = vmatprep.subr.bf16.mxu0 %v7682
        %7744 = vmatpush1.bf16.msra.mxu0 %v7681
        %7745 = vmatprep.subr.bf16.mxu0 %v7686
        %7746 = vmatpush1.bf16.msra.mxu0 %v7685
        %7747 = vmatprep.subr.bf16.mxu0 %v7690
        %7748 = vmatpush1.bf16.msra.mxu0 %v7689
        %7749 = vmatprep.subr.bf16.mxu0 %v7694
        %7750 = vmatpush1.bf16.msra.mxu0 %v7693
        %7751 = vmatprep.subr.bf16.mxu0 %v7698
        %7752 = vmatpush1.bf16.msra.mxu0 %v7697
        %7753 = vmatprep.subr.bf16.mxu0 %v7702
        %7754 = vmatpush1.bf16.msra.mxu0 %v7701
        %7755 = vmatprep.subr.bf16.mxu0 %v7706
        %7756 = vmatpush1.bf16.msra.mxu0 %v7705
        %7757 = vmatprep.subr.bf16.mxu0 0
        %7758 = vmatpush1.bf16.msra.mxu0 0
        %7759 = vmatprep.subr.bf16.mxu0 0
        %7760 = vmatpush1.bf16.msra.mxu0 0
        %7761 = vmatprep.subr.bf16.mxu0 0
        %7762 = vmatpush1.bf16.msra.mxu0 0
        %7763 = vmatprep.subr.bf16.mxu0 0
        %7764 = vmatpush1.bf16.msra.mxu0 0
        %7765 = vmatprep.subr.bf16.mxu0 0
        %7766 = vmatpush1.bf16.msra.mxu0 0
        %7767 = vmatprep.subr.bf16.mxu0 0
        %7768 = vmatpush1.bf16.msra.mxu0 0
        %7769 = vmatprep.subr.bf16.mxu0 0
        %7770 = vmatpush1.bf16.msra.mxu0 0
        %7771 = vmatprep.subr.bf16.mxu0 0
        %7772 = vmatpush1.bf16.msra.mxu0 0
        %7773 = vmatprep.mubr.bf16.mxu0 0
        %7774 = vmatmul.mubr.bf16.gmra.mrb[0].mxu0 %v7524
        %v7775 = vpop.f32.mrb[0].mxu0
        %v7776 = vadd.f32 %v7564, %v7775
        %v7777 = vpop.f32.mrb[0].mxu0
        %v7778 = vadd.f32 %v7568, %v7777
        %v7779 = vpop.f32.mrb[0].mxu0
        %v7780 = vadd.f32 %v7564, %v7779
        %v7781 = vpop.f32.mrb[0].mxu0
        %v7782 = vadd.f32 %v7568, %v7781
        %7783 = vdwg.mxu0
        %7784 = vmatprep.subr.bf16.mxu0 %v7680
        %7785 = vmatpush1.bf16.msra.mxu0 %v7679
        %7786 = vmatprep.subr.bf16.mxu0 %v7684
        %7787 = vmatpush1.bf16.msra.mxu0 %v7683
        %7788 = vmatprep.subr.bf16.mxu0 %v7688
        %7789 = vmatpush1.bf16.msra.mxu0 %v7687
        %7790 = vmatprep.subr.bf16.mxu0 %v7692
        %7791 = vmatpush1.bf16.msra.mxu0 %v7691
        %7792 = vmatprep.subr.bf16.mxu0 %v7696
        %7793 = vmatpush1.bf16.msra.mxu0 %v7695
        %7794 = vmatprep.subr.bf16.mxu0 %v7700
        %7795 = vmatpush1.bf16.msra.mxu0 %v7699
        %7796 = vmatprep.subr.bf16.mxu0 %v7704
        %7797 = vmatpush1.bf16.msra.mxu0 %v7703
        %7798 = vmatprep.subr.bf16.mxu0 %v7708
        %7799 = vmatpush1.bf16.msra.mxu0 %v7707
        %7800 = vmatprep.subr.bf16.mxu0 0
        %7801 = vmatpush1.bf16.msra.mxu0 0
        %7802 = vmatprep.subr.bf16.mxu0 0
        %7803 = vmatpush1.bf16.msra.mxu0 0
        %7804 = vmatprep.subr.bf16.mxu0 0
        %7805 = vmatpush1.bf16.msra.mxu0 0
        %7806 = vmatprep.subr.bf16.mxu0 0
        %7807 = vmatpush1.bf16.msra.mxu0 0
        %7808 = vmatprep.subr.bf16.mxu0 0
        %7809 = vmatpush1.bf16.msra.mxu0 0
        %7810 = vmatprep.subr.bf16.mxu0 0
        %7811 = vmatpush1.bf16.msra.mxu0 0
        %7812 = vmatprep.subr.bf16.mxu0 0
        %7813 = vmatpush1.bf16.msra.mxu0 0
        %7814 = vmatprep.subr.bf16.mxu0 0
        %7815 = vmatpush1.bf16.msra.mxu0 0
        %7816 = vmatprep.mubr.bf16.mxu0 0
        %7817 = vmatmul.mubr.bf16.gmra.mrb[0].mxu0 %v7524
        %v7818 = vpop.f32.mrb[0].mxu0
        %v7819 = vadd.f32 %v7572, %v7818
        %v7820 = vpop.f32.mrb[0].mxu0
        %v7821 = vadd.f32 %v7576, %v7820
        %v7822 = vpop.f32.mrb[0].mxu0
        %v7823 = vadd.f32 %v7572, %v7822
        %v7824 = vpop.f32.mrb[0].mxu0
        %v7825 = vadd.f32 %v7576, %v7824
        %7826 = vdwg.mxu0
        %v7827 = vmul.f32 %v7776, 0.5
        %v7828 = vmul.f32 %v7778, 0.5
        %v7829 = vmul.f32 %v7819, 0.5
        %v7830 = vmul.f32 %v7821, 0.5
        %v7831 = vmul.f32 %v7780, 0.5
        %v7832 = vmul.f32 %v7782, 0.5
        %v7833 = vmul.f32 %v7823, 0.5
        %v7834 = vmul.f32 %v7825, 0.5
        %v7835 = vmul.f32 %v7776, 0.70710677
        %v7836 = vmul.f32 %v7778, 0.70710677
        %v7837 = vmul.f32 %v7819, 0.70710677
        %v7838 = vmul.f32 %v7821, 0.70710677
        %v7839 = vmul.f32 %v7780, 0.70710677
        %v7840 = vmul.f32 %v7782, 0.70710677
        %v7841 = vmul.f32 %v7823, 0.70710677
        %v7842 = vmul.f32 %v7825, 0.70710677
        %v7843 = vand.u32 2147483647, %v7835
        %v7844 = vand.u32 2147483647, %v7836
        %v7845 = vand.u32 2147483647, %v7837
        %v7846 = vand.u32 2147483647, %v7838
        %v7847 = vand.u32 2147483647, %v7839
        %v7848 = vand.u32 2147483647, %v7840
        %v7849 = vand.u32 2147483647, %v7841
        %v7850 = vand.u32 2147483647, %v7842
        %v7851 = vmul.f32 %v7843, 0.3275911
        %v7852 = vmul.f32 %v7844, 0.3275911
        %v7853 = vmul.f32 %v7845, 0.3275911
        %v7854 = vmul.f32 %v7846, 0.3275911
        %v7855 = vmul.f32 %v7847, 0.3275911
        %v7856 = vmul.f32 %v7848, 0.3275911
        %v7857 = vmul.f32 %v7849, 0.3275911
        %v7858 = vmul.f32 %v7850, 0.3275911
        %v7859 = vadd.f32 %v7851, 1.0
        %v7860 = vadd.f32 %v7852, 1.0
        %v7861 = vadd.f32 %v7853, 1.0
        %v7862 = vadd.f32 %v7854, 1.0
        %v7863 = vadd.f32 %v7855, 1.0
        %v7864 = vadd.f32 %v7856, 1.0
        %v7865 = vadd.f32 %v7857, 1.0
        %v7866 = vadd.f32 %v7858, 1.0
        %v7867 = vrcp.pop %v7859
        %v7868 = vmul.f32 1.0, %v7867
        %v7869 = vrcp.pop %v7860
        %v7870 = vmul.f32 1.0, %v7869
        %v7871 = vrcp.pop %v7861
        %v7872 = vmul.f32 1.0, %v7871
        %v7873 = vrcp.pop %v7862
        %v7874 = vmul.f32 1.0, %v7873
        %v7875 = vrcp.pop %v7863
        %v7876 = vmul.f32 1.0, %v7875
        %v7877 = vrcp.pop %v7864
        %v7878 = vmul.f32 1.0, %v7877
        %v7879 = vrcp.pop %v7865
        %v7880 = vmul.f32 1.0, %v7879
        %v7881 = vrcp.pop %v7866
        %v7882 = vmul.f32 1.0, %v7881
        %v7883 = vmul.f32 %v7868, 1.0614054
        %v7884 = vmul.f32 %v7870, 1.0614054
        %v7885 = vmul.f32 %v7872, 1.0614054
        %v7886 = vmul.f32 %v7874, 1.0614054
        %v7887 = vmul.f32 %v7876, 1.0614054
        %v7888 = vmul.f32 %v7878, 1.0614054
        %v7889 = vmul.f32 %v7880, 1.0614054
        %v7890 = vmul.f32 %v7882, 1.0614054
        %v7891 = vsub.f32 %v7883, 1.4531521
        %v7892 = vsub.f32 %v7884, 1.4531521
        %v7893 = vsub.f32 %v7885, 1.4531521
        %v7894 = vsub.f32 %v7886, 1.4531521
        %v7895 = vsub.f32 %v7887, 1.4531521
        %v7896 = vsub.f32 %v7888, 1.4531521
        %v7897 = vsub.f32 %v7889, 1.4531521
        %v7898 = vsub.f32 %v7890, 1.4531521
        %v7899 = vmul.f32 %v7891, %v7868
        %v7900 = vmul.f32 %v7892, %v7870
        %v7901 = vmul.f32 %v7893, %v7872
        %v7902 = vmul.f32 %v7894, %v7874
        %v7903 = vmul.f32 %v7895, %v7876
        %v7904 = vmul.f32 %v7896, %v7878
        %v7905 = vmul.f32 %v7897, %v7880
        %v7906 = vmul.f32 %v7898, %v7882
        %v7907 = vadd.f32 %v7899, 1.4214138
        %v7908 = vadd.f32 %v7900, 1.4214138
        %v7909 = vadd.f32 %v7901, 1.4214138
        %v7910 = vadd.f32 %v7902, 1.4214138
        %v7911 = vadd.f32 %v7903, 1.4214138
        %v7912 = vadd.f32 %v7904, 1.4214138
        %v7913 = vadd.f32 %v7905, 1.4214138
        %v7914 = vadd.f32 %v7906, 1.4214138
        %v7915 = vmul.f32 %v7907, %v7868
        %v7916 = vmul.f32 %v7908, %v7870
        %v7917 = vmul.f32 %v7909, %v7872
        %v7918 = vmul.f32 %v7910, %v7874
        %v7919 = vmul.f32 %v7911, %v7876
        %v7920 = vmul.f32 %v7912, %v7878
        %v7921 = vmul.f32 %v7913, %v7880
        %v7922 = vmul.f32 %v7914, %v7882
        %v7923 = vsub.f32 %v7915, 0.28449672
        %v7924 = vsub.f32 %v7916, 0.28449672
        %v7925 = vsub.f32 %v7917, 0.28449672
        %v7926 = vsub.f32 %v7918, 0.28449672
        %v7927 = vsub.f32 %v7919, 0.28449672
        %v7928 = vsub.f32 %v7920, 0.28449672
        %v7929 = vsub.f32 %v7921, 0.28449672
        %v7930 = vsub.f32 %v7922, 0.28449672
        %v7931 = vmul.f32 %v7923, %v7868
        %v7932 = vmul.f32 %v7924, %v7870
        %v7933 = vmul.f32 %v7925, %v7872
        %v7934 = vmul.f32 %v7926, %v7874
        %v7935 = vmul.f32 %v7927, %v7876
        %v7936 = vmul.f32 %v7928, %v7878
        %v7937 = vmul.f32 %v7929, %v7880
        %v7938 = vmul.f32 %v7930, %v7882
        %v7939 = vadd.f32 %v7931, 0.2548296
        %v7940 = vadd.f32 %v7932, 0.2548296
        %v7941 = vadd.f32 %v7933, 0.2548296
        %v7942 = vadd.f32 %v7934, 0.2548296
        %v7943 = vadd.f32 %v7935, 0.2548296
        %v7944 = vadd.f32 %v7936, 0.2548296
        %v7945 = vadd.f32 %v7937, 0.2548296
        %v7946 = vadd.f32 %v7938, 0.2548296
        %v7947 = vmul.f32 %v7939, %v7868
        %v7948 = vmul.f32 %v7940, %v7870
        %v7949 = vmul.f32 %v7941, %v7872
        %v7950 = vmul.f32 %v7942, %v7874
        %v7951 = vmul.f32 %v7943, %v7876
        %v7952 = vmul.f32 %v7944, %v7878
        %v7953 = vmul.f32 %v7945, %v7880
        %v7954 = vmul.f32 %v7946, %v7882
        %v7955 = vsub.f32 0.0, %v7843
        %v7956 = vsub.f32 0.0, %v7844
        %v7957 = vsub.f32 0.0, %v7845
        %v7958 = vsub.f32 0.0, %v7846
        %v7959 = vsub.f32 0.0, %v7847
        %v7960 = vsub.f32 0.0, %v7848
        %v7961 = vsub.f32 0.0, %v7849
        %v7962 = vsub.f32 0.0, %v7850
        %v7963 = vmul.f32 %v7955, %v7843
        %v7964 = vmul.f32 %v7956, %v7844
        %v7965 = vmul.f32 %v7957, %v7845
        %v7966 = vmul.f32 %v7958, %v7846
        %v7967 = vmul.f32 %v7959, %v7847
        %v7968 = vmul.f32 %v7960, %v7848
        %v7969 = vmul.f32 %v7961, %v7849
        %v7970 = vmul.f32 %v7962, %v7850
        %v7971 = vmul.f32 %v7963, 1.442695
        %v7972 = vpow.pop %v7971
        %v7973 = vmul.f32 %v7964, 1.442695
        %v7974 = vpow.pop %v7973
        %v7975 = vmul.f32 %v7965, 1.442695
        %v7976 = vpow.pop %v7975
        %v7977 = vmul.f32 %v7966, 1.442695
        %v7978 = vpow.pop %v7977
        %v7979 = vmul.f32 %v7967, 1.442695
        %v7980 = vpow.pop %v7979
        %v7981 = vmul.f32 %v7968, 1.442695
        %v7982 = vpow.pop %v7981
        %v7983 = vmul.f32 %v7969, 1.442695
        %v7984 = vpow.pop %v7983
        %v7985 = vmul.f32 %v7970, 1.442695
        %v7986 = vpow.pop %v7985
        %v7987 = vmul.f32 %v7947, %v7972
        %v7988 = vmul.f32 %v7948, %v7974
        %v7989 = vmul.f32 %v7949, %v7976
        %v7990 = vmul.f32 %v7950, %v7978
        %v7991 = vmul.f32 %v7951, %v7980
        %v7992 = vmul.f32 %v7952, %v7982
        %v7993 = vmul.f32 %v7953, %v7984
        %v7994 = vmul.f32 %v7954, %v7986
        %v7995 = vsub.f32 1.0, %v7987
        %v7996 = vsub.f32 1.0, %v7988
        %v7997 = vsub.f32 1.0, %v7989
        %v7998 = vsub.f32 1.0, %v7990
        %v7999 = vsub.f32 1.0, %v7991
        %v8000 = vsub.f32 1.0, %v7992
        %v8001 = vsub.f32 1.0, %v7993
        %v8002 = vsub.f32 1.0, %v7994
        %vm8003 = vcmp.ge.f32.partialorder %v7835, 0.0
        %vm8004 = vcmp.ge.f32.partialorder %v7836, 0.0
        %vm8005 = vcmp.ge.f32.partialorder %v7837, 0.0
        %vm8006 = vcmp.ge.f32.partialorder %v7838, 0.0
        %vm8007 = vcmp.ge.f32.partialorder %v7839, 0.0
        %vm8008 = vcmp.ge.f32.partialorder %v7840, 0.0
        %vm8009 = vcmp.ge.f32.partialorder %v7841, 0.0
        %vm8010 = vcmp.ge.f32.partialorder %v7842, 0.0
        %v8011 = vsub.f32 0.0, %v7995
        %v8012 = vsub.f32 0.0, %v7996
        %v8013 = vsub.f32 0.0, %v7997
        %v8014 = vsub.f32 0.0, %v7998
        %v8015 = vsub.f32 0.0, %v7999
        %v8016 = vsub.f32 0.0, %v8000
        %v8017 = vsub.f32 0.0, %v8001
        %v8018 = vsub.f32 0.0, %v8002
        %v8019 = vsel %vm8003, %v7995, %v8011
        %v8020 = vsel %vm8004, %v7996, %v8012
        %v8021 = vsel %vm8005, %v7997, %v8013
        %v8022 = vsel %vm8006, %v7998, %v8014
        %v8023 = vsel %vm8007, %v7999, %v8015
        %v8024 = vsel %vm8008, %v8000, %v8016
        %v8025 = vsel %vm8009, %v8001, %v8017
        %v8026 = vsel %vm8010, %v8002, %v8018
        %v8027 = vadd.f32 %v8019, 1.0
        %v8028 = vadd.f32 %v8020, 1.0
        %v8029 = vadd.f32 %v8021, 1.0
        %v8030 = vadd.f32 %v8022, 1.0
        %v8031 = vadd.f32 %v8023, 1.0
        %v8032 = vadd.f32 %v8024, 1.0
        %v8033 = vadd.f32 %v8025, 1.0
        %v8034 = vadd.f32 %v8026, 1.0
        %v8035 = vmul.f32 %v7827, %v8027
        %v8036 = vmul.f32 %v7828, %v8028
        %v8037 = vmul.f32 %v7829, %v8029
        %v8038 = vmul.f32 %v7830, %v8030
        %v8039 = vmul.f32 %v7831, %v8031
        %v8040 = vmul.f32 %v7832, %v8032
        %v8041 = vmul.f32 %v7833, %v8033
        %v8042 = vmul.f32 %v7834, %v8034
        %v8043 = vpack.c.bf16 %v8039, %v8035
        %v8044 = vpack.c.bf16 %v8040, %v8036
        %v8045 = vpack.c.bf16 %v8041, %v8037
        %v8046 = vpack.c.bf16 %v8042, %v8038
        %s8047 = scalar_lea.vmem [#allocation7], 768
        %v8048 = vld [vmem:[%s8047] sm:$0xf]
        %v8049 = vld [vmem:[%s8047 + $0x4] sm:$0xf]
        %v8050 = vld [vmem:[%s8047 + $0x8] sm:$0xf]
        %v8051 = vld [vmem:[%s8047 + $0xc] sm:$0xf]
        %v8052 = vld [vmem:[%s8047 + $0x10] sm:$0xf]
        %v8053 = vld [vmem:[%s8047 + $0x14] sm:$0xf]
        %v8054 = vld [vmem:[%s8047 + $0x18] sm:$0xf]
        %v8055 = vld [vmem:[%s8047 + $0x1c] sm:$0xf]
        %v8056 = vld [vmem:[%s8047 + $0x20] sm:$0xf]
        %v8057 = vld [vmem:[%s8047 + $0x24] sm:$0xf]
        %v8058 = vld [vmem:[%s8047 + $0x28] sm:$0xf]
        %v8059 = vld [vmem:[%s8047 + $0x2c] sm:$0xf]
        %v8060 = vld [vmem:[%s8047 + $0x30] sm:$0xf]
        %v8061 = vld [vmem:[%s8047 + $0x34] sm:$0xf]
        %v8062 = vld [vmem:[%s8047 + $0x38] sm:$0xf]
        %v8063 = vld [vmem:[%s8047 + $0x3c] sm:$0xf]
        %v8064 = vld [vmem:[%s8047 + $0x40] sm:$0xf]
        %v8065 = vld [vmem:[%s8047 + $0x44] sm:$0xf]
        %v8066 = vld [vmem:[%s8047 + $0x48] sm:$0xf]
        %v8067 = vld [vmem:[%s8047 + $0x4c] sm:$0xf]
        %v8068 = vld [vmem:[%s8047 + $0x50] sm:$0xf]
        %v8069 = vld [vmem:[%s8047 + $0x54] sm:$0xf]
        %v8070 = vld [vmem:[%s8047 + $0x58] sm:$0xf]
        %v8071 = vld [vmem:[%s8047 + $0x5c] sm:$0xf]
        %v8072 = vld [vmem:[%s8047 + $0x60] sm:$0xf]
        %v8073 = vld [vmem:[%s8047 + $0x64] sm:$0xf]
        %v8074 = vld [vmem:[%s8047 + $0x68] sm:$0xf]
        %v8075 = vld [vmem:[%s8047 + $0x6c] sm:$0xf]
        %v8076 = vld [vmem:[%s8047 + $0x70] sm:$0xf]
        %v8077 = vld [vmem:[%s8047 + $0x74] sm:$0xf]
        %v8078 = vld [vmem:[%s8047 + $0x78] sm:$0xf]
        %v8079 = vld [vmem:[%s8047 + $0x7c] sm:$0xf]
        %v8080 = vld [vmem:[%s8047 + $0x80] sm:$0xf]
        %v8081 = vld [vmem:[%s8047 + $0x84] sm:$0xf]
        %v8082 = vld [vmem:[%s8047 + $0x88] sm:$0xf]
        %v8083 = vld [vmem:[%s8047 + $0x8c] sm:$0xf]
        %v8084 = vld [vmem:[%s8047 + $0x90] sm:$0xf]
        %v8085 = vld [vmem:[%s8047 + $0x94] sm:$0xf]
        %v8086 = vld [vmem:[%s8047 + $0x98] sm:$0xf]
        %v8087 = vld [vmem:[%s8047 + $0x9c] sm:$0xf]
        %v8088 = vld [vmem:[%s8047 + $0xa0] sm:$0xf]
        %v8089 = vld [vmem:[%s8047 + $0xa4] sm:$0xf]
        %v8090 = vld [vmem:[%s8047 + $0xa8] sm:$0xf]
        %v8091 = vld [vmem:[%s8047 + $0xac] sm:$0xf]
        %v8092 = vld [vmem:[%s8047 + $0xb0] sm:$0xf]
        %v8093 = vld [vmem:[%s8047 + $0xb4] sm:$0xf]
        %v8094 = vld [vmem:[%s8047 + $0xb8] sm:$0xf]
        %v8095 = vld [vmem:[%s8047 + $0xbc] sm:$0xf]
        %v8096 = vld [vmem:[%s8047 + $0xc0] sm:$0xf]
        %v8097 = vld [vmem:[%s8047 + $0xc4] sm:$0xf]
        %v8098 = vld [vmem:[%s8047 + $0xc8] sm:$0xf]
        %v8099 = vld [vmem:[%s8047 + $0xcc] sm:$0xf]
        %v8100 = vld [vmem:[%s8047 + $0xd0] sm:$0xf]
        %v8101 = vld [vmem:[%s8047 + $0xd4] sm:$0xf]
        %v8102 = vld [vmem:[%s8047 + $0xd8] sm:$0xf]
        %v8103 = vld [vmem:[%s8047 + $0xdc] sm:$0xf]
        %v8104 = vld [vmem:[%s8047 + $0xe0] sm:$0xf]
        %v8105 = vld [vmem:[%s8047 + $0xe4] sm:$0xf]
        %v8106 = vld [vmem:[%s8047 + $0xe8] sm:$0xf]
        %v8107 = vld [vmem:[%s8047 + $0xec] sm:$0xf]
        %v8108 = vld [vmem:[%s8047 + $0xf0] sm:$0xf]
        %v8109 = vld [vmem:[%s8047 + $0xf4] sm:$0xf]
        %v8110 = vld [vmem:[%s8047 + $0xf8] sm:$0xf]
        %v8111 = vld [vmem:[%s8047 + $0xfc] sm:$0xf]
        %s8112 = scalar_lea.vmem %s10, 3
        %v8113 = vld [vmem:[%s8112] sm:$0x1]
        %v8115 = vlaneseq
        %v8116 = vshrl.u32 %v8115, 7
        %v8117 = vsub.s32 0, %v8116
        %v8118 = vrot.slane %v8113, %v8117
        %v8184 = vunpack.c.l.b16 %v8048
        %v8185 = vunpack.c.l.b16 %v8049
        %v8186 = vunpack.c.l.b16 %v8050
        %v8187 = vunpack.c.l.b16 %v8051
        %v8188 = vunpack.c.l.b16 %v8052
        %v8189 = vunpack.c.l.b16 %v8053
        %v8190 = vunpack.c.l.b16 %v8054
        %v8191 = vunpack.c.l.b16 %v8055
        %v8192 = vunpack.c.l.b16 %v8056
        %v8193 = vunpack.c.l.b16 %v8057
        %v8194 = vunpack.c.l.b16 %v8058
        %v8195 = vunpack.c.l.b16 %v8059
        %v8196 = vunpack.c.l.b16 %v8060
        %v8197 = vunpack.c.l.b16 %v8061
        %v8198 = vunpack.c.l.b16 %v8062
        %v8199 = vunpack.c.l.b16 %v8063
        %v8200 = vunpack.c.l.b16 %v8064
        %v8201 = vunpack.c.l.b16 %v8065
        %v8202 = vunpack.c.l.b16 %v8066
        %v8203 = vunpack.c.l.b16 %v8067
        %v8204 = vunpack.c.l.b16 %v8068
        %v8205 = vunpack.c.l.b16 %v8069
        %v8206 = vunpack.c.l.b16 %v8070
        %v8207 = vunpack.c.l.b16 %v8071
        %v8208 = vunpack.c.l.b16 %v8072
        %v8209 = vunpack.c.l.b16 %v8073
        %v8210 = vunpack.c.l.b16 %v8074
        %v8211 = vunpack.c.l.b16 %v8075
        %v8212 = vunpack.c.l.b16 %v8076
        %v8213 = vunpack.c.l.b16 %v8077
        %v8214 = vunpack.c.l.b16 %v8078
        %v8215 = vunpack.c.l.b16 %v8079
        %v8216 = vunpack.c.l.b16 %v8080
        %v8217 = vunpack.c.l.b16 %v8081
        %v8218 = vunpack.c.l.b16 %v8082
        %v8219 = vunpack.c.l.b16 %v8083
        %v8220 = vunpack.c.l.b16 %v8084
        %v8221 = vunpack.c.l.b16 %v8085
        %v8222 = vunpack.c.l.b16 %v8086
        %v8223 = vunpack.c.l.b16 %v8087
        %v8224 = vunpack.c.l.b16 %v8088
        %v8225 = vunpack.c.l.b16 %v8089
        %v8226 = vunpack.c.l.b16 %v8090
        %v8227 = vunpack.c.l.b16 %v8091
        %v8228 = vunpack.c.l.b16 %v8092
        %v8229 = vunpack.c.l.b16 %v8093
        %v8230 = vunpack.c.l.b16 %v8094
        %v8231 = vunpack.c.l.b16 %v8095
        %v8232 = vunpack.c.l.b16 %v8096
        %v8233 = vunpack.c.l.b16 %v8097
        %v8234 = vunpack.c.l.b16 %v8098
        %v8235 = vunpack.c.l.b16 %v8099
        %v8236 = vunpack.c.l.b16 %v8100
        %v8237 = vunpack.c.l.b16 %v8101
        %v8238 = vunpack.c.l.b16 %v8102
        %v8239 = vunpack.c.l.b16 %v8103
        %v8240 = vunpack.c.l.b16 %v8104
        %v8241 = vunpack.c.l.b16 %v8105
        %v8242 = vunpack.c.l.b16 %v8106
        %v8243 = vunpack.c.l.b16 %v8107
        %v8244 = vunpack.c.l.b16 %v8108
        %v8245 = vunpack.c.l.b16 %v8109
        %v8246 = vunpack.c.l.b16 %v8110
        %v8247 = vunpack.c.l.b16 %v8111
        %v8248 = vpack.c.b16 %v8185, %v8184
        %v8249 = vpack.c.b16 %v8187, %v8186
        %v8250 = vpack.c.b16 %v8189, %v8188
        %v8251 = vpack.c.b16 %v8191, %v8190
        %v8252 = vpack.c.b16 %v8193, %v8192
        %v8253 = vpack.c.b16 %v8195, %v8194
        %v8254 = vpack.c.b16 %v8197, %v8196
        %v8255 = vpack.c.b16 %v8199, %v8198
        %v8256 = vpack.c.b16 %v8201, %v8200
        %v8257 = vpack.c.b16 %v8203, %v8202
        %v8258 = vpack.c.b16 %v8205, %v8204
        %v8259 = vpack.c.b16 %v8207, %v8206
        %v8260 = vpack.c.b16 %v8209, %v8208
        %v8261 = vpack.c.b16 %v8211, %v8210
        %v8262 = vpack.c.b16 %v8213, %v8212
        %v8263 = vpack.c.b16 %v8215, %v8214
        %v8264 = vpack.c.b16 %v8217, %v8216
        %v8265 = vpack.c.b16 %v8219, %v8218
        %v8266 = vpack.c.b16 %v8221, %v8220
        %v8267 = vpack.c.b16 %v8223, %v8222
        %v8268 = vpack.c.b16 %v8225, %v8224
        %v8269 = vpack.c.b16 %v8227, %v8226
        %v8270 = vpack.c.b16 %v8229, %v8228
        %v8271 = vpack.c.b16 %v8231, %v8230
        %v8272 = vpack.c.b16 %v8233, %v8232
        %v8273 = vpack.c.b16 %v8235, %v8234
        %v8274 = vpack.c.b16 %v8237, %v8236
        %v8275 = vpack.c.b16 %v8239, %v8238
        %v8276 = vpack.c.b16 %v8241, %v8240
        %v8277 = vpack.c.b16 %v8243, %v8242
        %v8278 = vpack.c.b16 %v8245, %v8244
        %v8279 = vpack.c.b16 %v8247, %v8246
        %8312 = vmatprep.subr.bf16.mxu0 0
        %8313 = vmatpush1.bf16.msra.mxu0 %v8248
        %8314 = vmatprep.subr.bf16.mxu0 0
        %8315 = vmatpush1.bf16.msra.mxu0 %v8249
        %8316 = vmatprep.subr.bf16.mxu0 0
        %8317 = vmatpush1.bf16.msra.mxu0 %v8250
        %8318 = vmatprep.subr.bf16.mxu0 0
        %8319 = vmatpush1.bf16.msra.mxu0 %v8251
        %8320 = vmatprep.subr.bf16.mxu0 0
        %8321 = vmatpush1.bf16.msra.mxu0 %v8252
        %8322 = vmatprep.subr.bf16.mxu0 0
        %8323 = vmatpush1.bf16.msra.mxu0 %v8253
        %8324 = vmatprep.subr.bf16.mxu0 0
        %8325 = vmatpush1.bf16.msra.mxu0 %v8254
        %8326 = vmatprep.subr.bf16.mxu0 0
        %8327 = vmatpush1.bf16.msra.mxu0 %v8255
        %8328 = vmatprep.subr.bf16.mxu0 0
        %8329 = vmatpush1.bf16.msra.mxu0 %v8256
        %8330 = vmatprep.subr.bf16.mxu0 0
        %8331 = vmatpush1.bf16.msra.mxu0 %v8257
        %8332 = vmatprep.subr.bf16.mxu0 0
        %8333 = vmatpush1.bf16.msra.mxu0 %v8258
        %8334 = vmatprep.subr.bf16.mxu0 0
        %8335 = vmatpush1.bf16.msra.mxu0 %v8259
        %8336 = vmatprep.subr.bf16.mxu0 0
        %8337 = vmatpush1.bf16.msra.mxu0 %v8260
        %8338 = vmatprep.subr.bf16.mxu0 0
        %8339 = vmatpush1.bf16.msra.mxu0 %v8261
        %8340 = vmatprep.subr.bf16.mxu0 0
        %8341 = vmatpush1.bf16.msra.mxu0 %v8262
        %8342 = vmatprep.subr.bf16.mxu0 0
        %8343 = vmatpush1.bf16.msra.mxu0 %v8263
        %8344 = vmatprep.mubr.bf16.mxu0 %v8044
        %8345 = vmatmul.mubr.bf16.gmra.mrb[0].mxu0 %v8043
        %v8346 = vpop.f32.mrb[0].mxu0
        %v8347 = vadd.f32 %v8118, %v8346
        %v8348 = vpop.f32.mrb[0].mxu0
        %v8349 = vpop.f32.mrb[0].mxu0
        %v8350 = vpop.f32.mrb[0].mxu0
        %8351 = vdwg.mxu0
        %8352 = vmatprep.subr.bf16.mxu0 0
        %8353 = vmatpush1.bf16.msra.mxu0 %v8264
        %8354 = vmatprep.subr.bf16.mxu0 0
        %8355 = vmatpush1.bf16.msra.mxu0 %v8265
        %8356 = vmatprep.subr.bf16.mxu0 0
        %8357 = vmatpush1.bf16.msra.mxu0 %v8266
        %8358 = vmatprep.subr.bf16.mxu0 0
        %8359 = vmatpush1.bf16.msra.mxu0 %v8267
        %8360 = vmatprep.subr.bf16.mxu0 0
        %8361 = vmatpush1.bf16.msra.mxu0 %v8268
        %8362 = vmatprep.subr.bf16.mxu0 0
        %8363 = vmatpush1.bf16.msra.mxu0 %v8269
        %8364 = vmatprep.subr.bf16.mxu0 0
        %8365 = vmatpush1.bf16.msra.mxu0 %v8270
        %8366 = vmatprep.subr.bf16.mxu0 0
        %8367 = vmatpush1.bf16.msra.mxu0 %v8271
        %8368 = vmatprep.subr.bf16.mxu0 0
        %8369 = vmatpush1.bf16.msra.mxu0 %v8272
        %8370 = vmatprep.subr.bf16.mxu0 0
        %8371 = vmatpush1.bf16.msra.mxu0 %v8273
        %8372 = vmatprep.subr.bf16.mxu0 0
        %8373 = vmatpush1.bf16.msra.mxu0 %v8274
        %8374 = vmatprep.subr.bf16.mxu0 0
        %8375 = vmatpush1.bf16.msra.mxu0 %v8275
        %8376 = vmatprep.subr.bf16.mxu0 0
        %8377 = vmatpush1.bf16.msra.mxu0 %v8276
        %8378 = vmatprep.subr.bf16.mxu0 0
        %8379 = vmatpush1.bf16.msra.mxu0 %v8277
        %8380 = vmatprep.subr.bf16.mxu0 0
        %8381 = vmatpush1.bf16.msra.mxu0 %v8278
        %8382 = vmatprep.subr.bf16.mxu0 0
        %8383 = vmatpush1.bf16.msra.mxu0 %v8279
        %8384 = vmatprep.mubr.bf16.mxu0 %v8046
        %8385 = vmatmul.mubr.bf16.gmra.mrb[0].mxu0 %v8045
        %v8386 = vpop.f32.mrb[0].mxu0
        %v8387 = vadd.f32 %v8347, %v8386
        %v8388 = vpop.f32.mrb[0].mxu0
        %v8389 = vpop.f32.mrb[0].mxu0
        %v8390 = vpop.f32.mrb[0].mxu0
        %8391 = vdwg.mxu0
        %v8392 = vadd.f32 %v7522, %v8387
        %s8393 = scalar_lea.vmem %s11, 3
        %v8394 = vld [vmem:[%s8393] sm:$0x1]
        %s8395 = scalar_lea.vmem %s12, 3
        %v8396 = vld [vmem:[%s8395] sm:$0x1]
        %8397 = vadd.xlane.f32.xlu0 %v8392
        %v8398 = vpop.xlane.xlu0 %8397
        %v8399 = vmul.f32 %v8398, %v1565
        %v8400 = vsub.f32 %v8392, %v8399
        %v8401 = vmul.f32 %v8400, %v8400
        %8402 = vadd.xlane.f32.xlu0 %v8401
        %v8403 = vpop.xlane.xlu0 %8402
        %v8404 = vmul.f32 %v8403, %v1565
        %v8405 = vadd.f32 %v8404, 1e-05
        %v8406 = vrsqrt.pop %v8405
        %v8407 = vmul.f32 %v8400, %v8406
        %v8409 = vlaneseq
        %v8410 = vshrl.u32 %v8409, 7
        %v8411 = vsub.s32 0, %v8410
        %v8412 = vrot.slane %v8394, %v8411
        %v8414 = vmul.f32 %v8407, %v8412
        %v8416 = vlaneseq
        %v8417 = vshrl.u32 %v8416, 7
        %v8418 = vsub.s32 0, %v8417
        %v8419 = vrot.slane %v8396, %v8418
        %v8421 = vadd.f32 %v8414, %v8419
        %8422 = vst [vmem:[%s530] sm:$0x1] %v8421
        %v8423 = vmul.f32 %v7361, 0.25
        %v8424 = vmul.f32 %v7362, 0.25
        %8425 = vst.msk [vmem:[%s535] sm:$0xff] %vm874, %v8423
        %8426 = vst.msk [vmem:[%s535 + $0x8] sm:$0xff] %vm874, %v8424
        %p8427 = scmp.lt.s32.totalorder %s29, 1
        %s8428 = scalar_select %p8427, %s29, 1
        %s8429 = scalar_lea.vmem %s13, %s8428
        %p8430 = scmp.lt.s32.totalorder %s29, 1
        %s8431 = scalar_select %p8430, %s29, 1
        %s8432 = smul.addr %s8431, 2
        %s8433 = smul.addr %s8432, 8
        %s8434 = scalar_lea.vmem %s14, %s8433
        // Predicated region
        $region89: #{deconformer_forward.3} parent=71 // pred_check
          %p8435 = pneg %p325
        $region90: #{deconformer_forward.3} parent=71 // pred_check_branch
          %8437 = sbr.rel (%p8435) target = $region92
        $region91: #{deconformer_forward.3} parent=71 // pred_region
          _
        $region92: #{deconformer_forward.3} parent=71 // pred_fallthru
          _
        // Predicated region
        $region93: #{deconformer_forward.3} parent=71 // pred_check
          %p8438 = pneg %p351
        $region94: #{deconformer_forward.3} parent=71 // pred_check_branch
          %8440 = sbr.rel (%p8438) target = $region96
        $region95: #{deconformer_forward.3} parent=71 // pred_region
          _
        $region96: #{deconformer_forward.3} parent=71 // pred_fallthru
          _
      $region72: #{deconformer_forward.3} parent=5 // pred_fallthru
        _
      %p8441 = scmp.le.s32.totalorder 2, %s24
      // Predicated region
      $region97: #{deconformer_forward.3} parent=5 // pred_check
        %p8442 = pneg %p8441
      $region98: #{deconformer_forward.3} parent=5 // pred_check_branch
        %8444 = sbr.rel (%p8442) target = $region100
      $region99: #{deconformer_forward.3} parent=5 // pred_region
        %s8445 = ssub.s32 %s24, 2
        // Predicated region
        $region101: #{deconformer_forward.3} parent=99 // pred_check
          %p8446 = pneg %p331
        $region102: #{deconformer_forward.3} parent=99 // pred_check_branch
          %8448 = sbr.rel (%p8446) target = $region104
        $region103: #{deconformer_forward.3} parent=99 // pred_region
          %p8449 = scmp.lt.s32.totalorder %s30, 1
          %s8450 = scalar_select %p8449, %s30, 1
          %s8451 = scalar_lea.vmem %s13, %s8450
        $region104: #{deconformer_forward.3} parent=99 // pred_fallthru
          _
        // Predicated region
        $region105: #{deconformer_forward.3} parent=99 // pred_check
          %p8452 = pneg %p357
        $region106: #{deconformer_forward.3} parent=99 // pred_check_branch
          %8454 = sbr.rel (%p8452) target = $region108
        $region107: #{deconformer_forward.3} parent=99 // pred_region
          %p8455 = scmp.lt.s32.totalorder %s30, 1
          %s8456 = scalar_select %p8455, %s30, 1
          %s8457 = smul.addr %s8456, 2
          %s8458 = smul.addr %s8457, 8
          %s8459 = scalar_lea.vmem %s14, %s8458
        $region108: #{deconformer_forward.3} parent=99 // pred_fallthru
          _
      $region100: #{deconformer_forward.3} parent=5 // pred_fallthru
        _
    $region6: #{deconformer_forward.3} parent=1 // loop_footer
      %s28 = sadd.s32 1, %s24
    $region7: #{deconformer_forward.3} parent=1 // loop_footer_branch
      %23 = sbr.rel target = $region3
    $region8: #{deconformer_forward.3} parent=1 // loop_exit
      _
    %8460 = vsyncpa [#allocation3], 1
    %s8461 = scalar_lea.sflag [#allocation3], 1
    %8462 = vsyncpa %s8461, 1
    %8463 = vsyncpa [#allocation5], 1
    %8464 = vsyncpa [#allocation8], 1

</llo_original>
